<compile_context>
chip_gen: v7x
topology: tpu7x:2x2x1
jax: 0.10.0
libtpu: 0.0.40
codegen_flags: <defaults>
</compile_context>

<pallas_src>
import jax
import jax.numpy as jnp
from jax import lax
from jax.experimental import pallas as pl
from jax.experimental.pallas import tpu as pltpu

_EPS = 1e-5      # nn.BatchNorm2d default eps


def _bn_relu_train(y, gamma, beta, inv_m):
    """Training-mode BatchNorm2d (batch stats, biased var) + ReLU on (M, C) f32.
    Two-pass (mean, then centered variance) to avoid E[y^2]-mean^2 cancellation."""
    mean = jnp.sum(y, axis=0, keepdims=True) * inv_m          # (1, C)
    yc = y - mean
    var = jnp.sum(yc * yc, axis=0, keepdims=True) * inv_m     # biased variance
    scale = gamma * lax.rsqrt(var + _EPS)                     # rsqrt -> EUP slot
    return jnp.maximum(yc * scale + beta, 0.0)


def encoder_block_kernel(xcol_ref, w1_ref, g1_ref, be1_ref,
                         w2_ref, g2_ref, be2_ref, out_ref, slab_ref):
    N, Hp2, W, K1 = xcol_ref.shape            # K1 = 3*Cin (dx packed wrapper-side)
    H = Hp2 - 2
    Co = w1_ref.shape[2]
    M = N * H * W
    inv_m = 1.0 / M

    # ---- conv1: 3 accumulating MXU matmuls (one per dy tap), K = 3*Cin -----------------
    xcol = xcol_ref[...]                      # (N, H+2, W, 3*Cin) bf16
    y1 = None
    for dy in range(3):
        lhs = xcol[:, dy:dy + H, :, :].reshape(M, K1)          # aligned major-axis slice
        part = jnp.dot(lhs, w1_ref[dy], preferred_element_type=jnp.float32)
        y1 = part if y1 is None else y1 + part

    a1 = _bn_relu_train(y1, g1_ref[...], be1_ref[...], inv_m)  # (M, Co) f32

    # ---- re-pad via persistent VMEM scratch slab (no concat copy passes) ----------------
    # At scale only the 1-pixel ring needs zeroing; here one bulk zero is cheaper/simpler.
    slab_ref[...] = jnp.zeros(slab_ref.shape, slab_ref.dtype)
    slab_ref[:, 1:H + 1, 1:W + 1, :] = a1.reshape(N, H, W, Co)

    # ---- conv2: 9 accumulating matmuls over padded-slab windows (f32 operands) ----------
    y2 = None
    for dy in range(3):
        for dx in range(3):
            tap = slab_ref[:, dy:dy + H, dx:dx + W, :].reshape(M, Co)
            part = jnp.dot(tap, w2_ref[dy * 3 + dx], preferred_element_type=jnp.float32)
            y2 = part if y2 is None else y2 + part

    a2 = _bn_relu_train(y2, g2_ref[...], be2_ref[...], inv_m)

    out_ref[...] = a2.reshape(N, H, W, Co)    # exact Cout-sized f32 output slab


def encoder_block_pallas(x_nchw, params):
    """x_nchw: (N, Cin, H, W) float32 -> (N, Cout, H, W) float32."""
    # conv biases b1/b2 are NOT used: training-mode BN's batch-mean subtraction cancels a
    # per-channel bias exactly, so the forward output is numerically identical without them.
    w1, b1, g1, be1, w2, b2, g2, be2 = params
    N, Cin, H, W = x_nchw.shape
    Cout = w1.shape[0]

    # NCHW -> NHWC, zero-pad spatially by 1, pack the dx taps into the lane/K dim so conv1
    # in-kernel needs only 3 aligned dy-shifted matmuls with K = 3*Cin (no 128-lane padding).
    x = jnp.transpose(x_nchw, (0, 2, 3, 1)).astype(jnp.bfloat16)
    xpad = jnp.pad(x, ((0, 0), (1, 1), (1, 1), (0, 0)))                  # (N, H+2, W+2, Cin)
    xcol = jnp.concatenate([xpad[:, :, dx:dx + W, :] for dx in range(3)],
                           axis=-1)                                      # (N, H+2, W, 3*Cin)

    # conv1 weights: OIHW -> (dy, dx*Cin + c, o), bf16 MXU operands.
    w1p = jnp.transpose(w1, (2, 3, 1, 0)).reshape(3, 3 * Cin, Cout).astype(jnp.bfloat16)
    # conv2 weights: OIHW -> (dy*3+dx, ci, co).  Conv2 stays in f32 (mid activation is never
    # quantized to bf16); switch to bf16 operands at large Cout if the error budget allows.
    w2p = jnp.transpose(w2, (2, 3, 1, 0)).reshape(9, Cout, Cout).astype(jnp.float32)

    vec = lambda v: v.astype(jnp.float32).reshape(1, Cout)

    vmem = pl.BlockSpec(memory_space=pltpu.MemorySpace.VMEM)
    out_nhwc = pl.pallas_call(
        encoder_block_kernel,
        out_shape=jax.ShapeDtypeStruct((N, H, W, Cout), jnp.float32),
        in_specs=[vmem] * 7,
        out_specs=vmem,
        scratch_shapes=[pltpu.VMEM((N, H + 2, W + 2, Cout), jnp.float32)],
    )(xcol, w1p, vec(g1), vec(be1), w2p, vec(g2), vec(be2))

    return jnp.transpose(out_nhwc, (0, 3, 1, 2))                         # back to NCHW


def encoder_block_ref(x, params):
    """Pure-JAX f32 reference mirroring the PyTorch forward (training-mode BN)."""
    w1, b1, g1, be1, w2, b2, g2, be2 = params

    def conv(x, w, b):
        y = lax.conv_general_dilated(
            x, w, window_strides=(1, 1), padding=((1, 1), (1, 1)),
            dimension_numbers=('NCHW', 'OIHW', 'NCHW'),
            precision=lax.Precision.HIGHEST)
        return y + b.reshape(1, -1, 1, 1)

    def bn_relu(y, g, be):
        mean = jnp.mean(y, axis=(0, 2, 3), keepdims=True)
        var = jnp.mean((y - mean) ** 2, axis=(0, 2, 3), keepdims=True)
        yn = (y - mean) / jnp.sqrt(var + _EPS)
        return jnp.maximum(yn * g.reshape(1, -1, 1, 1) + be.reshape(1, -1, 1, 1), 0.0)

    x = bn_relu(conv(x, w1, b1), g1, be1)
    x = bn_relu(conv(x, w2, b2), g2, be2)
    return x


if __name__ == "__main__":
    N, Cin, Cout, H, W = 2, 4, 8, 16, 16
    key = jax.random.PRNGKey(0)
    ks = jax.random.split(key, 9)

    x = jax.random.normal(ks[0], (N, Cin, H, W), jnp.float32)
    # deterministic synthetic parameters (shapes from EncoderBlock.__init__)
    w1 = 0.1 * jax.random.normal(ks[1], (Cout, Cin, 3, 3), jnp.float32)
    b1 = 0.1 * jax.random.normal(ks[2], (Cout,), jnp.float32)
    g1 = 1.0 + 0.1 * jax.random.normal(ks[3], (Cout,), jnp.float32)   # bn.weight
    be1 = 0.1 * jax.random.normal(ks[4], (Cout,), jnp.float32)        # bn.bias
    w2 = 0.1 * jax.random.normal(ks[5], (Cout, Cout, 3, 3), jnp.float32)
    b2 = 0.1 * jax.random.normal(ks[6], (Cout,), jnp.float32)
    g2 = 1.0 + 0.1 * jax.random.normal(ks[7], (Cout,), jnp.float32)   # bn2.weight
    be2 = 0.1 * jax.random.normal(ks[8], (Cout,), jnp.float32)        # bn2.bias
    params = (w1, b1, g1, be1, w2, b2, g2, be2)

    out = jax.block_until_ready(encoder_block_pallas(x, params))
    ref = jax.block_until_ready(encoder_block_ref(x, params))

    assert out.shape == (N, Cout, H, W), out.shape
    err = float(jnp.max(jnp.abs(out - ref)))
    # bf16 conv1 operands (f32 accumulation) vs. f32 HIGHEST-precision reference
    assert err < 5e-2, f"max abs err {err}"
    print("KERNEL_OK")
</pallas_src>

<mosaic_0001>
module attributes {stable_mosaic.version = 11 : i64} {
  func.func @encoder_block_kernel(%arg0: memref<2x18x16x12xbf16, #tpu.memory_space<vmem>>, %arg1: memref<3x12x8xbf16, #tpu.memory_space<vmem>>, %arg2: memref<1x8xf32, #tpu.memory_space<vmem>>, %arg3: memref<1x8xf32, #tpu.memory_space<vmem>>, %arg4: memref<9x8x8xf32, #tpu.memory_space<vmem>>, %arg5: memref<1x8xf32, #tpu.memory_space<vmem>>, %arg6: memref<1x8xf32, #tpu.memory_space<vmem>>, %arg7: memref<2x16x16x8xf32, #tpu.memory_space<vmem>>, %arg8: memref<2x18x18x8xf32, #tpu.memory_space<vmem>>) attributes {dimension_semantics = [], scalar_prefetch = 0 : i64, scratch_operands = 1 : i64, tpu.core_type = #tpu.core_type<tc>} {
    %c0 = arith.constant 0 : index
    %c0_0 = arith.constant 0 : index
    %c0_1 = arith.constant 0 : index
    %c0_2 = arith.constant 0 : index
    %0 = vector.load %arg0[%c0, %c0_0, %c0_1, %c0_2] : memref<2x18x16x12xbf16, #tpu.memory_space<vmem>>, vector<2x18x16x12xbf16>
    %1 = vector.extract_strided_slice %0 {offsets = [0, 0, 0, 0], sizes = [2, 16, 16, 12], strides = [1, 1, 1, 1]} : vector<2x18x16x12xbf16> to vector<2x16x16x12xbf16>
    %2 = vector.shape_cast %1 : vector<2x16x16x12xbf16> to vector<512x12xbf16>
    %c0_3 = arith.constant 0 : index
    %c0_4 = arith.constant 0 : index
    %c0_5 = arith.constant 0 : index
    %3 = vector.load %arg1[%c0_3, %c0_4, %c0_5] : memref<3x12x8xbf16, #tpu.memory_space<vmem>>, vector<1x12x8xbf16>
    %4 = vector.shape_cast %3 : vector<1x12x8xbf16> to vector<12x8xbf16>
    %cst = arith.constant dense<0.000000e+00> : vector<512x8xf32>
    %5 = tpu.matmul %2, %4, %cst {dimension_numbers = #tpu.dot_dimension_numbers<[1], [0], [0], [1], [0, 0, 1, 1], [], []>} : vector<512x12xbf16>, vector<12x8xbf16>, vector<512x8xf32> -> vector<512x8xf32>
    %6 = vector.extract_strided_slice %0 {offsets = [0, 1, 0, 0], sizes = [2, 16, 16, 12], strides = [1, 1, 1, 1]} : vector<2x18x16x12xbf16> to vector<2x16x16x12xbf16>
    %7 = vector.shape_cast %6 : vector<2x16x16x12xbf16> to vector<512x12xbf16>
    %c1 = arith.constant 1 : index
    %c0_6 = arith.constant 0 : index
    %c0_7 = arith.constant 0 : index
    %8 = vector.load %arg1[%c1, %c0_6, %c0_7] : memref<3x12x8xbf16, #tpu.memory_space<vmem>>, vector<1x12x8xbf16>
    %9 = vector.shape_cast %8 : vector<1x12x8xbf16> to vector<12x8xbf16>
    %cst_8 = arith.constant dense<0.000000e+00> : vector<512x8xf32>
    %10 = tpu.matmul %7, %9, %cst_8 {dimension_numbers = #tpu.dot_dimension_numbers<[1], [0], [0], [1], [0, 0, 1, 1], [], []>} : vector<512x12xbf16>, vector<12x8xbf16>, vector<512x8xf32> -> vector<512x8xf32>
    %11 = arith.addf %5, %10 : vector<512x8xf32>
    %12 = vector.extract_strided_slice %0 {offsets = [0, 2, 0, 0], sizes = [2, 16, 16, 12], strides = [1, 1, 1, 1]} : vector<2x18x16x12xbf16> to vector<2x16x16x12xbf16>
    %13 = vector.shape_cast %12 : vector<2x16x16x12xbf16> to vector<512x12xbf16>
    %c2 = arith.constant 2 : index
    %c0_9 = arith.constant 0 : index
    %c0_10 = arith.constant 0 : index
    %14 = vector.load %arg1[%c2, %c0_9, %c0_10] : memref<3x12x8xbf16, #tpu.memory_space<vmem>>, vector<1x12x8xbf16>
    %15 = vector.shape_cast %14 : vector<1x12x8xbf16> to vector<12x8xbf16>
    %cst_11 = arith.constant dense<0.000000e+00> : vector<512x8xf32>
    %16 = tpu.matmul %13, %15, %cst_11 {dimension_numbers = #tpu.dot_dimension_numbers<[1], [0], [0], [1], [0, 0, 1, 1], [], []>} : vector<512x12xbf16>, vector<12x8xbf16>, vector<512x8xf32> -> vector<512x8xf32>
    %17 = arith.addf %11, %16 : vector<512x8xf32>
    %c0_12 = arith.constant 0 : index
    %c0_13 = arith.constant 0 : index
    %18 = vector.load %arg2[%c0_12, %c0_13] : memref<1x8xf32, #tpu.memory_space<vmem>>, vector<1x8xf32>
    %c0_14 = arith.constant 0 : index
    %c0_15 = arith.constant 0 : index
    %19 = vector.load %arg3[%c0_14, %c0_15] : memref<1x8xf32, #tpu.memory_space<vmem>>, vector<1x8xf32>
    %cst_16 = arith.constant dense<0.000000e+00> : vector<8xf32>
    %20 = vector.multi_reduction <add>, %17, %cst_16 [0] : vector<512x8xf32> to vector<8xf32>
    %21 = vector.shape_cast %20 : vector<8xf32> to vector<1x8xf32>
    %cst_17 = arith.constant 0.001953125 : f32
    %22 = vector.broadcast %cst_17 : f32 to vector<1x8xf32>
    %23 = arith.mulf %21, %22 : vector<1x8xf32>
    %24 = vector.broadcast %23 : vector<1x8xf32> to vector<512x8xf32>
    %25 = arith.subf %17, %24 : vector<512x8xf32>
    %26 = arith.mulf %25, %25 : vector<512x8xf32>
    %cst_18 = arith.constant dense<0.000000e+00> : vector<8xf32>
    %27 = vector.multi_reduction <add>, %26, %cst_18 [0] : vector<512x8xf32> to vector<8xf32>
    %28 = vector.shape_cast %27 : vector<8xf32> to vector<1x8xf32>
    %cst_19 = arith.constant 0.001953125 : f32
    %29 = vector.broadcast %cst_19 : f32 to vector<1x8xf32>
    %30 = arith.mulf %28, %29 : vector<1x8xf32>
    %cst_20 = arith.constant 9.99999974E-6 : f32
    %31 = vector.broadcast %cst_20 : f32 to vector<1x8xf32>
    %32 = arith.addf %30, %31 : vector<1x8xf32>
    %33 = math.rsqrt %32 : vector<1x8xf32>
    %34 = arith.mulf %18, %33 : vector<1x8xf32>
    %35 = vector.broadcast %34 : vector<1x8xf32> to vector<512x8xf32>
    %36 = arith.mulf %25, %35 : vector<512x8xf32>
    %37 = vector.broadcast %19 : vector<1x8xf32> to vector<512x8xf32>
    %38 = arith.addf %36, %37 : vector<512x8xf32>
    %cst_21 = arith.constant 0.000000e+00 : f32
    %39 = vector.broadcast %cst_21 : f32 to vector<512x8xf32>
    %40 = arith.maximumf %38, %39 : vector<512x8xf32>
    %cst_22 = arith.constant 0.000000e+00 : f32
    %41 = vector.broadcast %cst_22 : f32 to vector<2x18x18x8xf32>
    %c0_23 = arith.constant 0 : index
    %c0_24 = arith.constant 0 : index
    %c0_25 = arith.constant 0 : index
    %c0_26 = arith.constant 0 : index
    %42 = vector.load %arg8[%c0_23, %c0_24, %c0_25, %c0_26] : memref<2x18x18x8xf32, #tpu.memory_space<vmem>>, vector<2x18x18x8xf32>
    tpu.vector_store %arg8[%c0_23, %c0_24, %c0_25, %c0_26], %41 {strides = array<i32>} : memref<2x18x18x8xf32, #tpu.memory_space<vmem>>, vector<2x18x18x8xf32>,
    %43 = vector.shape_cast %40 : vector<512x8xf32> to vector<2x16x16x8xf32>
    %c0_27 = arith.constant 0 : index
    %c1_28 = arith.constant 1 : index
    %c1_29 = arith.constant 1 : index
    %c0_30 = arith.constant 0 : index
    %44 = vector.load %arg8[%c0_27, %c1_28, %c1_29, %c0_30] : memref<2x18x18x8xf32, #tpu.memory_space<vmem>>, vector<2x16x16x8xf32>
    tpu.vector_store %arg8[%c0_27, %c1_28, %c1_29, %c0_30], %43 {strides = array<i32>} : memref<2x18x18x8xf32, #tpu.memory_space<vmem>>, vector<2x16x16x8xf32>,
    %c0_31 = arith.constant 0 : index
    %c0_32 = arith.constant 0 : index
    %c0_33 = arith.constant 0 : index
    %c0_34 = arith.constant 0 : index
    %45 = vector.load %arg8[%c0_31, %c0_32, %c0_33, %c0_34] : memref<2x18x18x8xf32, #tpu.memory_space<vmem>>, vector<2x16x16x8xf32>
    %46 = vector.shape_cast %45 : vector<2x16x16x8xf32> to vector<512x8xf32>
    %c0_35 = arith.constant 0 : index
    %c0_36 = arith.constant 0 : index
    %c0_37 = arith.constant 0 : index
    %47 = vector.load %arg4[%c0_35, %c0_36, %c0_37] : memref<9x8x8xf32, #tpu.memory_space<vmem>>, vector<1x8x8xf32>
    %48 = vector.shape_cast %47 : vector<1x8x8xf32> to vector<8x8xf32>
    %cst_38 = arith.constant dense<0.000000e+00> : vector<512x8xf32>
    %49 = tpu.matmul %46, %48, %cst_38 {dimension_numbers = #tpu.dot_dimension_numbers<[1], [0], [0], [1], [0, 0, 1, 1], [], []>} : vector<512x8xf32>, vector<8x8xf32>, vector<512x8xf32> -> vector<512x8xf32>
    %c0_39 = arith.constant 0 : index
    %c0_40 = arith.constant 0 : index
    %c1_41 = arith.constant 1 : index
    %c0_42 = arith.constant 0 : index
    %50 = vector.load %arg8[%c0_39, %c0_40, %c1_41, %c0_42] : memref<2x18x18x8xf32, #tpu.memory_space<vmem>>, vector<2x16x16x8xf32>
    %51 = vector.shape_cast %50 : vector<2x16x16x8xf32> to vector<512x8xf32>
    %c1_43 = arith.constant 1 : index
    %c0_44 = arith.constant 0 : index
    %c0_45 = arith.constant 0 : index
    %52 = vector.load %arg4[%c1_43, %c0_44, %c0_45] : memref<9x8x8xf32, #tpu.memory_space<vmem>>, vector<1x8x8xf32>
    %53 = vector.shape_cast %52 : vector<1x8x8xf32> to vector<8x8xf32>
    %cst_46 = arith.constant dense<0.000000e+00> : vector<512x8xf32>
    %54 = tpu.matmul %51, %53, %cst_46 {dimension_numbers = #tpu.dot_dimension_numbers<[1], [0], [0], [1], [0, 0, 1, 1], [], []>} : vector<512x8xf32>, vector<8x8xf32>, vector<512x8xf32> -> vector<512x8xf32>
    %55 = arith.addf %49, %54 : vector<512x8xf32>
    %c0_47 = arith.constant 0 : index
    %c0_48 = arith.constant 0 : index
    %c2_49 = arith.constant 2 : index
    %c0_50 = arith.constant 0 : index
    %56 = vector.load %arg8[%c0_47, %c0_48, %c2_49, %c0_50] : memref<2x18x18x8xf32, #tpu.memory_space<vmem>>, vector<2x16x16x8xf32>
    %57 = vector.shape_cast %56 : vector<2x16x16x8xf32> to vector<512x8xf32>
    %c2_51 = arith.constant 2 : index
    %c0_52 = arith.constant 0 : index
    %c0_53 = arith.constant 0 : index
    %58 = vector.load %arg4[%c2_51, %c0_52, %c0_53] : memref<9x8x8xf32, #tpu.memory_space<vmem>>, vector<1x8x8xf32>
    %59 = vector.shape_cast %58 : vector<1x8x8xf32> to vector<8x8xf32>
    %cst_54 = arith.constant dense<0.000000e+00> : vector<512x8xf32>
    %60 = tpu.matmul %57, %59, %cst_54 {dimension_numbers = #tpu.dot_dimension_numbers<[1], [0], [0], [1], [0, 0, 1, 1], [], []>} : vector<512x8xf32>, vector<8x8xf32>, vector<512x8xf32> -> vector<512x8xf32>
    %61 = arith.addf %55, %60 : vector<512x8xf32>
    %c0_55 = arith.constant 0 : index
    %c1_56 = arith.constant 1 : index
    %c0_57 = arith.constant 0 : index
    %c0_58 = arith.constant 0 : index
    %62 = vector.load %arg8[%c0_55, %c1_56, %c0_57, %c0_58] : memref<2x18x18x8xf32, #tpu.memory_space<vmem>>, vector<2x16x16x8xf32>
    %63 = vector.shape_cast %62 : vector<2x16x16x8xf32> to vector<512x8xf32>
    %c3 = arith.constant 3 : index
    %c0_59 = arith.constant 0 : index
    %c0_60 = arith.constant 0 : index
    %64 = vector.load %arg4[%c3, %c0_59, %c0_60] : memref<9x8x8xf32, #tpu.memory_space<vmem>>, vector<1x8x8xf32>
    %65 = vector.shape_cast %64 : vector<1x8x8xf32> to vector<8x8xf32>
    %cst_61 = arith.constant dense<0.000000e+00> : vector<512x8xf32>
    %66 = tpu.matmul %63, %65, %cst_61 {dimension_numbers = #tpu.dot_dimension_numbers<[1], [0], [0], [1], [0, 0, 1, 1], [], []>} : vector<512x8xf32>, vector<8x8xf32>, vector<512x8xf32> -> vector<512x8xf32>
    %67 = arith.addf %61, %66 : vector<512x8xf32>
    %c0_62 = arith.constant 0 : index
    %c1_63 = arith.constant 1 : index
    %c1_64 = arith.constant 1 : index
    %c0_65 = arith.constant 0 : index
    %68 = vector.load %arg8[%c0_62, %c1_63, %c1_64, %c0_65] : memref<2x18x18x8xf32, #tpu.memory_space<vmem>>, vector<2x16x16x8xf32>
    %69 = vector.shape_cast %68 : vector<2x16x16x8xf32> to vector<512x8xf32>
    %c4 = arith.constant 4 : index
    %c0_66 = arith.constant 0 : index
    %c0_67 = arith.constant 0 : index
    %70 = vector.load %arg4[%c4, %c0_66, %c0_67] : memref<9x8x8xf32, #tpu.memory_space<vmem>>, vector<1x8x8xf32>
    %71 = vector.shape_cast %70 : vector<1x8x8xf32> to vector<8x8xf32>
    %cst_68 = arith.constant dense<0.000000e+00> : vector<512x8xf32>
    %72 = tpu.matmul %69, %71, %cst_68 {dimension_numbers = #tpu.dot_dimension_numbers<[1], [0], [0], [1], [0, 0, 1, 1], [], []>} : vector<512x8xf32>, vector<8x8xf32>, vector<512x8xf32> -> vector<512x8xf32>
    %73 = arith.addf %67, %72 : vector<512x8xf32>
    %c0_69 = arith.constant 0 : index
    %c1_70 = arith.constant 1 : index
    %c2_71 = arith.constant 2 : index
    %c0_72 = arith.constant 0 : index
    %74 = vector.load %arg8[%c0_69, %c1_70, %c2_71, %c0_72] : memref<2x18x18x8xf32, #tpu.memory_space<vmem>>, vector<2x16x16x8xf32>
    %75 = vector.shape_cast %74 : vector<2x16x16x8xf32> to vector<512x8xf32>
    %c5 = arith.constant 5 : index
    %c0_73 = arith.constant 0 : index
    %c0_74 = arith.constant 0 : index
    %76 = vector.load %arg4[%c5, %c0_73, %c0_74] : memref<9x8x8xf32, #tpu.memory_space<vmem>>, vector<1x8x8xf32>
    %77 = vector.shape_cast %76 : vector<1x8x8xf32> to vector<8x8xf32>
    %cst_75 = arith.constant dense<0.000000e+00> : vector<512x8xf32>
    %78 = tpu.matmul %75, %77, %cst_75 {dimension_numbers = #tpu.dot_dimension_numbers<[1], [0], [0], [1], [0, 0, 1, 1], [], []>} : vector<512x8xf32>, vector<8x8xf32>, vector<512x8xf32> -> vector<512x8xf32>
    %79 = arith.addf %73, %78 : vector<512x8xf32>
    %c0_76 = arith.constant 0 : index
    %c2_77 = arith.constant 2 : index
    %c0_78 = arith.constant 0 : index
    %c0_79 = arith.constant 0 : index
    %80 = vector.load %arg8[%c0_76, %c2_77, %c0_78, %c0_79] : memref<2x18x18x8xf32, #tpu.memory_space<vmem>>, vector<2x16x16x8xf32>
    %81 = vector.shape_cast %80 : vector<2x16x16x8xf32> to vector<512x8xf32>
    %c6 = arith.constant 6 : index
    %c0_80 = arith.constant 0 : index
    %c0_81 = arith.constant 0 : index
    %82 = vector.load %arg4[%c6, %c0_80, %c0_81] : memref<9x8x8xf32, #tpu.memory_space<vmem>>, vector<1x8x8xf32>
    %83 = vector.shape_cast %82 : vector<1x8x8xf32> to vector<8x8xf32>
    %cst_82 = arith.constant dense<0.000000e+00> : vector<512x8xf32>
    %84 = tpu.matmul %81, %83, %cst_82 {dimension_numbers = #tpu.dot_dimension_numbers<[1], [0], [0], [1], [0, 0, 1, 1], [], []>} : vector<512x8xf32>, vector<8x8xf32>, vector<512x8xf32> -> vector<512x8xf32>
    %85 = arith.addf %79, %84 : vector<512x8xf32>
    %c0_83 = arith.constant 0 : index
    %c2_84 = arith.constant 2 : index
    %c1_85 = arith.constant 1 : index
    %c0_86 = arith.constant 0 : index
    %86 = vector.load %arg8[%c0_83, %c2_84, %c1_85, %c0_86] : memref<2x18x18x8xf32, #tpu.memory_space<vmem>>, vector<2x16x16x8xf32>
    %87 = vector.shape_cast %86 : vector<2x16x16x8xf32> to vector<512x8xf32>
    %c7 = arith.constant 7 : index
    %c0_87 = arith.constant 0 : index
    %c0_88 = arith.constant 0 : index
    %88 = vector.load %arg4[%c7, %c0_87, %c0_88] : memref<9x8x8xf32, #tpu.memory_space<vmem>>, vector<1x8x8xf32>
    %89 = vector.shape_cast %88 : vector<1x8x8xf32> to vector<8x8xf32>
    %cst_89 = arith.constant dense<0.000000e+00> : vector<512x8xf32>
    %90 = tpu.matmul %87, %89, %cst_89 {dimension_numbers = #tpu.dot_dimension_numbers<[1], [0], [0], [1], [0, 0, 1, 1], [], []>} : vector<512x8xf32>, vector<8x8xf32>, vector<512x8xf32> -> vector<512x8xf32>
    %91 = arith.addf %85, %90 : vector<512x8xf32>
    %c0_90 = arith.constant 0 : index
    %c2_91 = arith.constant 2 : index
    %c2_92 = arith.constant 2 : index
    %c0_93 = arith.constant 0 : index
    %92 = vector.load %arg8[%c0_90, %c2_91, %c2_92, %c0_93] : memref<2x18x18x8xf32, #tpu.memory_space<vmem>>, vector<2x16x16x8xf32>
    %93 = vector.shape_cast %92 : vector<2x16x16x8xf32> to vector<512x8xf32>
    %c8 = arith.constant 8 : index
    %c0_94 = arith.constant 0 : index
    %c0_95 = arith.constant 0 : index
    %94 = vector.load %arg4[%c8, %c0_94, %c0_95] : memref<9x8x8xf32, #tpu.memory_space<vmem>>, vector<1x8x8xf32>
    %95 = vector.shape_cast %94 : vector<1x8x8xf32> to vector<8x8xf32>
    %cst_96 = arith.constant dense<0.000000e+00> : vector<512x8xf32>
    %96 = tpu.matmul %93, %95, %cst_96 {dimension_numbers = #tpu.dot_dimension_numbers<[1], [0], [0], [1], [0, 0, 1, 1], [], []>} : vector<512x8xf32>, vector<8x8xf32>, vector<512x8xf32> -> vector<512x8xf32>
    %97 = arith.addf %91, %96 : vector<512x8xf32>
    %c0_97 = arith.constant 0 : index
    %c0_98 = arith.constant 0 : index
    %98 = vector.load %arg5[%c0_97, %c0_98] : memref<1x8xf32, #tpu.memory_space<vmem>>, vector<1x8xf32>
    %c0_99 = arith.constant 0 : index
    %c0_100 = arith.constant 0 : index
    %99 = vector.load %arg6[%c0_99, %c0_100] : memref<1x8xf32, #tpu.memory_space<vmem>>, vector<1x8xf32>
    %cst_101 = arith.constant dense<0.000000e+00> : vector<8xf32>
    %100 = vector.multi_reduction <add>, %97, %cst_101 [0] : vector<512x8xf32> to vector<8xf32>
    %101 = vector.shape_cast %100 : vector<8xf32> to vector<1x8xf32>
    %cst_102 = arith.constant 0.001953125 : f32
    %102 = vector.broadcast %cst_102 : f32 to vector<1x8xf32>
    %103 = arith.mulf %101, %102 : vector<1x8xf32>
    %104 = vector.broadcast %103 : vector<1x8xf32> to vector<512x8xf32>
    %105 = arith.subf %97, %104 : vector<512x8xf32>
    %106 = arith.mulf %105, %105 : vector<512x8xf32>
    %cst_103 = arith.constant dense<0.000000e+00> : vector<8xf32>
    %107 = vector.multi_reduction <add>, %106, %cst_103 [0] : vector<512x8xf32> to vector<8xf32>
    %108 = vector.shape_cast %107 : vector<8xf32> to vector<1x8xf32>
    %cst_104 = arith.constant 0.001953125 : f32
    %109 = vector.broadcast %cst_104 : f32 to vector<1x8xf32>
    %110 = arith.mulf %108, %109 : vector<1x8xf32>
    %cst_105 = arith.constant 9.99999974E-6 : f32
    %111 = vector.broadcast %cst_105 : f32 to vector<1x8xf32>
    %112 = arith.addf %110, %111 : vector<1x8xf32>
    %113 = math.rsqrt %112 : vector<1x8xf32>
    %114 = arith.mulf %98, %113 : vector<1x8xf32>
    %115 = vector.broadcast %114 : vector<1x8xf32> to vector<512x8xf32>
    %116 = arith.mulf %105, %115 : vector<512x8xf32>
    %117 = vector.broadcast %99 : vector<1x8xf32> to vector<512x8xf32>
    %118 = arith.addf %116, %117 : vector<512x8xf32>
    %cst_106 = arith.constant 0.000000e+00 : f32
    %119 = vector.broadcast %cst_106 : f32 to vector<512x8xf32>
    %120 = arith.maximumf %118, %119 : vector<512x8xf32>
    %121 = vector.shape_cast %120 : vector<512x8xf32> to vector<2x16x16x8xf32>
    %c0_107 = arith.constant 0 : index
    %c0_108 = arith.constant 0 : index
    %c0_109 = arith.constant 0 : index
    %c0_110 = arith.constant 0 : index
    %122 = vector.load %arg7[%c0_107, %c0_108, %c0_109, %c0_110] : memref<2x16x16x8xf32, #tpu.memory_space<vmem>>, vector<2x16x16x8xf32>
    tpu.vector_store %arg7[%c0_107, %c0_108, %c0_109, %c0_110], %121 {strides = array<i32>} : memref<2x16x16x8xf32, #tpu.memory_space<vmem>>, vector<2x16x16x8xf32>,
    return
  }
}

</mosaic_0001>

<llo_original>
// kernel: tpu_custom_call.1
$region0: #{tpu_custom_call.1}
  #allocation0 [shape = 'u32[]', space=smem, size = 0x4, offset = 0x4, fixed_abs, tag = 'smem constant byte address 0x4 - core index']
  #allocation1 [shape = 'u32[144,128]{1,0:T(1,128)}', space=vmem, size = 0x12000, scoped, tag = 'internal scratch']
  #allocation2 [shape = 'f32[2,18,18,8]{3,2,1,0:T(8,128)}', space=vmem, size = 0x6c000, scoped, tag = 'scratch operand']
  %s0 = inlined_call_operand.vmem [shape: bf16[2,18,16,12], index: 0, kind: input, shape index: {}]
  %s1 = inlined_call_operand.vmem [shape: bf16[3,12,8], index: 1, kind: input, shape index: {}]
  %s2 = inlined_call_operand.vmem [shape: f32[1,8], index: 2, kind: input, shape index: {}]
  %s3 = inlined_call_operand.vmem [shape: f32[1,8], index: 3, kind: input, shape index: {}]
  %s4 = inlined_call_operand.vmem [shape: f32[9,8,8], index: 4, kind: input, shape index: {}]
  %s5 = inlined_call_operand.vmem [shape: f32[1,8], index: 5, kind: input, shape index: {}]
  %s6 = inlined_call_operand.vmem [shape: f32[1,8], index: 6, kind: input, shape index: {}]
  %s7 = inlined_call_operand.vmem [shape: f32[2,16,16,8], index: 7, kind: output, shape index: {}]
  %s8 = sld [smem:[#allocation0]]
  $region38: #{tpu_custom_call.1} parent=0
    _
  %s10 = ssub.s32 1, %s8
  %s11 = scalar_select 0, %s10, %s8
  // Predicated region
  $region2: #{tpu_custom_call.1} parent=0 // pred_check
    _
  $region3: #{tpu_custom_call.1} parent=0 // pred_check_branch
    %13 = sbr.rel (0) target = $region5
  $region4: #{tpu_custom_call.1} parent=0 // pred_region
    _
  $region5: #{tpu_custom_call.1} parent=0 // pred_fallthru
    _
  // Predicated region
  $region6: #{tpu_custom_call.1} parent=0 // pred_check
    _
  $region7: #{tpu_custom_call.1} parent=0 // pred_check_branch
    %15 = sbr.rel (0) target = $region9
  $region8: #{tpu_custom_call.1} parent=0 // pred_region
    _
  $region9: #{tpu_custom_call.1} parent=0 // pred_fallthru
    _
  // Predicated region
  $region10: #{tpu_custom_call.1} parent=0 // pred_check
    _
  $region11: #{tpu_custom_call.1} parent=0 // pred_check_branch
    %17 = sbr.rel (0) target = $region13
  $region12: #{tpu_custom_call.1} parent=0 // pred_region
    _
  $region13: #{tpu_custom_call.1} parent=0 // pred_fallthru
    _
  // Predicated region
  $region14: #{tpu_custom_call.1} parent=0 // pred_check
    _
  $region15: #{tpu_custom_call.1} parent=0 // pred_check_branch
    %19 = sbr.rel (0) target = $region17
  $region16: #{tpu_custom_call.1} parent=0 // pred_region
    _
  $region17: #{tpu_custom_call.1} parent=0 // pred_fallthru
    _
  // Predicated region
  $region18: #{tpu_custom_call.1} parent=0 // pred_check
    _
  $region19: #{tpu_custom_call.1} parent=0 // pred_check_branch
    %21 = sbr.rel (0) target = $region21
  $region20: #{tpu_custom_call.1} parent=0 // pred_region
    _
  $region21: #{tpu_custom_call.1} parent=0 // pred_fallthru
    _
  // Predicated region
  $region22: #{tpu_custom_call.1} parent=0 // pred_check
    _
  $region23: #{tpu_custom_call.1} parent=0 // pred_check_branch
    %23 = sbr.rel (0) target = $region25
  $region24: #{tpu_custom_call.1} parent=0 // pred_region
    _
  $region25: #{tpu_custom_call.1} parent=0 // pred_fallthru
    _
  // Predicated region
  $region26: #{tpu_custom_call.1} parent=0 // pred_check
    _
  $region27: #{tpu_custom_call.1} parent=0 // pred_check_branch
    %25 = sbr.rel (0) target = $region29
  $region28: #{tpu_custom_call.1} parent=0 // pred_region
    _
  $region29: #{tpu_custom_call.1} parent=0 // pred_fallthru
    _
  %v27 = vld [vmem:[%s0] sm:$0xf]
  %v28 = vld [vmem:[%s0 + $0x4] sm:$0xf]
  %v29 = vld [vmem:[%s0 + $0x8] sm:$0xf]
  %v30 = vld [vmem:[%s0 + $0xc] sm:$0xf]
  %v31 = vld [vmem:[%s0 + $0x10] sm:$0xf]
  %v32 = vld [vmem:[%s0 + $0x14] sm:$0xf]
  %v33 = vld [vmem:[%s0 + $0x18] sm:$0xf]
  %v34 = vld [vmem:[%s0 + $0x1c] sm:$0xf]
  %v35 = vld [vmem:[%s0 + $0x20] sm:$0xf]
  %v36 = vld [vmem:[%s0 + $0x24] sm:$0xf]
  %v37 = vld [vmem:[%s0 + $0x28] sm:$0xf]
  %v38 = vld [vmem:[%s0 + $0x2c] sm:$0xf]
  %v39 = vld [vmem:[%s0 + $0x30] sm:$0xf]
  %v40 = vld [vmem:[%s0 + $0x34] sm:$0xf]
  %v41 = vld [vmem:[%s0 + $0x38] sm:$0xf]
  %v42 = vld [vmem:[%s0 + $0x3c] sm:$0xf]
  %v43 = vld [vmem:[%s0 + $0x40] sm:$0xf]
  %v44 = vld [vmem:[%s0 + $0x44] sm:$0xf]
  %v45 = vld [vmem:[%s0 + $0x48] sm:$0xf]
  %v46 = vld [vmem:[%s0 + $0x4c] sm:$0xf]
  %v47 = vld [vmem:[%s0 + $0x50] sm:$0xf]
  %v48 = vld [vmem:[%s0 + $0x54] sm:$0xf]
  %v49 = vld [vmem:[%s0 + $0x58] sm:$0xf]
  %v50 = vld [vmem:[%s0 + $0x5c] sm:$0xf]
  %v51 = vld [vmem:[%s0 + $0x60] sm:$0xf]
  %v52 = vld [vmem:[%s0 + $0x64] sm:$0xf]
  %v53 = vld [vmem:[%s0 + $0x68] sm:$0xf]
  %v54 = vld [vmem:[%s0 + $0x6c] sm:$0xf]
  %v55 = vld [vmem:[%s0 + $0x70] sm:$0xf]
  %v56 = vld [vmem:[%s0 + $0x74] sm:$0xf]
  %v57 = vld [vmem:[%s0 + $0x78] sm:$0xf]
  %v58 = vld [vmem:[%s0 + $0x7c] sm:$0xf]
  %v59 = vld [vmem:[%s0 + $0x80] sm:$0xf]
  %v60 = vld [vmem:[%s0 + $0x84] sm:$0xf]
  %v61 = vld [vmem:[%s0 + $0x88] sm:$0xf]
  %v62 = vld [vmem:[%s0 + $0x8c] sm:$0xf]
  %v63 = vld [vmem:[%s0 + $0x90] sm:$0xf]
  %v64 = vld [vmem:[%s0 + $0x94] sm:$0xf]
  %v65 = vld [vmem:[%s0 + $0x98] sm:$0xf]
  %v66 = vld [vmem:[%s0 + $0x9c] sm:$0xf]
  %v67 = vld [vmem:[%s0 + $0xa0] sm:$0xf]
  %v68 = vld [vmem:[%s0 + $0xa4] sm:$0xf]
  %v69 = vld [vmem:[%s0 + $0xa8] sm:$0xf]
  %v70 = vld [vmem:[%s0 + $0xac] sm:$0xf]
  %v71 = vld [vmem:[%s0 + $0xb0] sm:$0xf]
  %v72 = vld [vmem:[%s0 + $0xb4] sm:$0xf]
  %v73 = vld [vmem:[%s0 + $0xb8] sm:$0xf]
  %v74 = vld [vmem:[%s0 + $0xbc] sm:$0xf]
  %v75 = vld [vmem:[%s0 + $0xc0] sm:$0xf]
  %v76 = vld [vmem:[%s0 + $0xc4] sm:$0xf]
  %v77 = vld [vmem:[%s0 + $0xc8] sm:$0xf]
  %v78 = vld [vmem:[%s0 + $0xcc] sm:$0xf]
  %v79 = vld [vmem:[%s0 + $0xd0] sm:$0xf]
  %v80 = vld [vmem:[%s0 + $0xd4] sm:$0xf]
  %v81 = vld [vmem:[%s0 + $0xd8] sm:$0xf]
  %v82 = vld [vmem:[%s0 + $0xdc] sm:$0xf]
  %v83 = vld [vmem:[%s0 + $0xe0] sm:$0xf]
  %v84 = vld [vmem:[%s0 + $0xe4] sm:$0xf]
  %v85 = vld [vmem:[%s0 + $0xe8] sm:$0xf]
  %v86 = vld [vmem:[%s0 + $0xec] sm:$0xf]
  %v87 = vld [vmem:[%s0 + $0xf0] sm:$0xf]
  %v88 = vld [vmem:[%s0 + $0xf4] sm:$0xf]
  %v89 = vld [vmem:[%s0 + $0xf8] sm:$0xf]
  %v90 = vld [vmem:[%s0 + $0xfc] sm:$0xf]
  %v91 = vld [vmem:[%s0 + $0x100] sm:$0xf]
  %v92 = vld [vmem:[%s0 + $0x104] sm:$0xf]
  %v93 = vld [vmem:[%s0 + $0x108] sm:$0xf]
  %v94 = vld [vmem:[%s0 + $0x10c] sm:$0xf]
  %v95 = vld [vmem:[%s0 + $0x110] sm:$0xf]
  %v96 = vld [vmem:[%s0 + $0x114] sm:$0xf]
  %v97 = vld [vmem:[%s0 + $0x118] sm:$0xf]
  %v98 = vld [vmem:[%s0 + $0x11c] sm:$0xf]
  %v99 = vld [vmem:[%s1] sm:$0xf]
  %v100 = vld [vmem:[%s1 + $0x4] sm:$0x3]
  %s101 = scalar_lea.vmem %s1, 8
  %v102 = vld [vmem:[%s101] sm:$0xf]
  %v103 = vld [vmem:[%s101 + $0x4] sm:$0x3]
  %v168 = vunpack.c.l.b16 %v29
  %v169 = vunpack.c.l.b16 %v30
  %v170 = vunpack.c.l.b16 %v31
  %v171 = vunpack.c.l.b16 %v32
  %v172 = vunpack.c.l.b16 %v33
  %v173 = vunpack.c.l.b16 %v34
  %v174 = vunpack.c.l.b16 %v35
  %v175 = vunpack.c.l.b16 %v36
  %v176 = vunpack.c.l.b16 %v37
  %v177 = vunpack.c.l.b16 %v38
  %v178 = vunpack.c.l.b16 %v39
  %v179 = vunpack.c.l.b16 %v40
  %v180 = vunpack.c.l.b16 %v41
  %v181 = vunpack.c.l.b16 %v42
  %v182 = vunpack.c.l.b16 %v43
  %v183 = vunpack.c.l.b16 %v44
  %v184 = vunpack.c.l.b16 %v45
  %v185 = vunpack.c.l.b16 %v46
  %v186 = vunpack.c.l.b16 %v47
  %v187 = vunpack.c.l.b16 %v48
  %v188 = vunpack.c.l.b16 %v49
  %v189 = vunpack.c.l.b16 %v50
  %v190 = vunpack.c.l.b16 %v51
  %v191 = vunpack.c.l.b16 %v52
  %v192 = vunpack.c.l.b16 %v53
  %v193 = vunpack.c.l.b16 %v54
  %v194 = vunpack.c.l.b16 %v55
  %v195 = vunpack.c.l.b16 %v56
  %v196 = vunpack.c.l.b16 %v57
  %v197 = vunpack.c.l.b16 %v58
  %v198 = vunpack.c.l.b16 %v59
  %v199 = vunpack.c.l.b16 %v60
  %v200 = vunpack.c.l.b16 %v65
  %v201 = vunpack.c.l.b16 %v66
  %v202 = vunpack.c.l.b16 %v67
  %v203 = vunpack.c.l.b16 %v68
  %v204 = vunpack.c.l.b16 %v69
  %v205 = vunpack.c.l.b16 %v70
  %v206 = vunpack.c.l.b16 %v71
  %v207 = vunpack.c.l.b16 %v72
  %v208 = vunpack.c.l.b16 %v73
  %v209 = vunpack.c.l.b16 %v74
  %v210 = vunpack.c.l.b16 %v75
  %v211 = vunpack.c.l.b16 %v76
  %v212 = vunpack.c.l.b16 %v77
  %v213 = vunpack.c.l.b16 %v78
  %v214 = vunpack.c.l.b16 %v79
  %v215 = vunpack.c.l.b16 %v80
  %v216 = vunpack.c.l.b16 %v81
  %v217 = vunpack.c.l.b16 %v82
  %v218 = vunpack.c.l.b16 %v83
  %v219 = vunpack.c.l.b16 %v84
  %v220 = vunpack.c.l.b16 %v85
  %v221 = vunpack.c.l.b16 %v86
  %v222 = vunpack.c.l.b16 %v87
  %v223 = vunpack.c.l.b16 %v88
  %v224 = vunpack.c.l.b16 %v89
  %v225 = vunpack.c.l.b16 %v90
  %v226 = vunpack.c.l.b16 %v91
  %v227 = vunpack.c.l.b16 %v92
  %v228 = vunpack.c.l.b16 %v93
  %v229 = vunpack.c.l.b16 %v94
  %v230 = vunpack.c.l.b16 %v95
  %v231 = vunpack.c.l.b16 %v96
  %v232 = vpack.c.b16 %v169, %v168
  %v233 = vpack.c.b16 %v171, %v170
  %v234 = vpack.c.b16 %v173, %v172
  %v235 = vpack.c.b16 %v175, %v174
  %v236 = vpack.c.b16 %v177, %v176
  %v237 = vpack.c.b16 %v179, %v178
  %v238 = vpack.c.b16 %v181, %v180
  %v239 = vpack.c.b16 %v183, %v182
  %v240 = vpack.c.b16 %v185, %v184
  %v241 = vpack.c.b16 %v187, %v186
  %v242 = vpack.c.b16 %v189, %v188
  %v243 = vpack.c.b16 %v191, %v190
  %v244 = vpack.c.b16 %v193, %v192
  %v245 = vpack.c.b16 %v195, %v194
  %v246 = vpack.c.b16 %v197, %v196
  %v247 = vpack.c.b16 %v199, %v198
  %v248 = vpack.c.b16 %v201, %v200
  %v249 = vpack.c.b16 %v203, %v202
  %v250 = vpack.c.b16 %v205, %v204
  %v251 = vpack.c.b16 %v207, %v206
  %v252 = vpack.c.b16 %v209, %v208
  %v253 = vpack.c.b16 %v211, %v210
  %v254 = vpack.c.b16 %v213, %v212
  %v255 = vpack.c.b16 %v215, %v214
  %v256 = vpack.c.b16 %v217, %v216
  %v257 = vpack.c.b16 %v219, %v218
  %v258 = vpack.c.b16 %v221, %v220
  %v259 = vpack.c.b16 %v223, %v222
  %v260 = vpack.c.b16 %v225, %v224
  %v261 = vpack.c.b16 %v227, %v226
  %v262 = vpack.c.b16 %v229, %v228
  %v263 = vpack.c.b16 %v231, %v230
  %v266 = vunpack.c.l.b16 %v102
  %v267 = vunpack.c.l.b16 %v103
  %v268 = vpack.c.b16 %v267, %v266
  %vm269 = vcmask 97280
  %v271 = vsel %vm269, %v232, 0
  %v274 = vsel %vm269, %v233, 0
  %v277 = vsel %vm269, %v234, 0
  %v280 = vsel %vm269, %v235, 0
  %v283 = vsel %vm269, %v236, 0
  %v286 = vsel %vm269, %v237, 0
  %v289 = vsel %vm269, %v238, 0
  %v292 = vsel %vm269, %v239, 0
  %v295 = vsel %vm269, %v240, 0
  %v298 = vsel %vm269, %v241, 0
  %v301 = vsel %vm269, %v242, 0
  %v304 = vsel %vm269, %v243, 0
  %v307 = vsel %vm269, %v244, 0
  %v310 = vsel %vm269, %v245, 0
  %v313 = vsel %vm269, %v246, 0
  %v316 = vsel %vm269, %v247, 0
  %v319 = vsel %vm269, %v248, 0
  %v322 = vsel %vm269, %v249, 0
  %v325 = vsel %vm269, %v250, 0
  %v328 = vsel %vm269, %v251, 0
  %v331 = vsel %vm269, %v252, 0
  %v334 = vsel %vm269, %v253, 0
  %v337 = vsel %vm269, %v254, 0
  %v340 = vsel %vm269, %v255, 0
  %v343 = vsel %vm269, %v256, 0
  %v346 = vsel %vm269, %v257, 0
  %v349 = vsel %vm269, %v258, 0
  %v352 = vsel %vm269, %v259, 0
  %v355 = vsel %vm269, %v260, 0
  %v358 = vsel %vm269, %v261, 0
  %v361 = vsel %vm269, %v262, 0
  %v364 = vsel %vm269, %v263, 0
  %vm366 = vcmask 1045504
  %v368 = vsel %vm366, %v268, 0
  %370 = vmatprep.subr.bf16.mxu0 0
  %371 = vmatpush1.bf16.msra.mxu0 %v368
  %372 = vmatprep.subr.bf16.mxu0 0
  %373 = vmatpush1.bf16.msra.mxu0 0
  %374 = vmatprep.subr.bf16.mxu0 0
  %375 = vmatpush1.bf16.msra.mxu0 0
  %376 = vmatprep.subr.bf16.mxu0 0
  %377 = vmatpush1.bf16.msra.mxu0 0
  %378 = vmatprep.subr.bf16.mxu0 0
  %379 = vmatpush1.bf16.msra.mxu0 0
  %380 = vmatprep.subr.bf16.mxu0 0
  %381 = vmatpush1.bf16.msra.mxu0 0
  %382 = vmatprep.subr.bf16.mxu0 0
  %383 = vmatpush1.bf16.msra.mxu0 0
  %384 = vmatprep.subr.bf16.mxu0 0
  %385 = vmatpush1.bf16.msra.mxu0 0
  %386 = vmatprep.subr.bf16.mxu0 0
  %387 = vmatpush1.bf16.msra.mxu0 0
  %388 = vmatprep.subr.bf16.mxu0 0
  %389 = vmatpush1.bf16.msra.mxu0 0
  %390 = vmatprep.subr.bf16.mxu0 0
  %391 = vmatpush1.bf16.msra.mxu0 0
  %392 = vmatprep.subr.bf16.mxu0 0
  %393 = vmatpush1.bf16.msra.mxu0 0
  %394 = vmatprep.subr.bf16.mxu0 0
  %395 = vmatpush1.bf16.msra.mxu0 0
  %396 = vmatprep.subr.bf16.mxu0 0
  %397 = vmatpush1.bf16.msra.mxu0 0
  %398 = vmatprep.subr.bf16.mxu0 0
  %399 = vmatpush1.bf16.msra.mxu0 0
  %400 = vmatprep.subr.bf16.mxu0 0
  %401 = vmatpush1.bf16.msra.mxu0 0
  %402 = vmatprep.mubr.bf16.mxu0 0
  %403 = vmatmul.mubr.bf16.gmra.mrb[0].mxu0 %v271
  %v404 = vpop.f32.mrb[0].mxu0
  %v405 = vadd.f32 0.0, %v404
  %v406 = vpop.f32.mrb[0].mxu0
  %v407 = vpop.f32.mrb[0].mxu0
  %v408 = vadd.f32 0.0, %v407
  %v409 = vpop.f32.mrb[0].mxu0
  %410 = vmatprep.mubr.bf16.mxu0 0
  %411 = vmatmul.mubr.bf16.gmra.mrb[0].mxu0 %v274
  %v412 = vpop.f32.mrb[0].mxu0
  %v413 = vadd.f32 0.0, %v412
  %v414 = vpop.f32.mrb[0].mxu0
  %v415 = vpop.f32.mrb[0].mxu0
  %v416 = vadd.f32 0.0, %v415
  %v417 = vpop.f32.mrb[0].mxu0
  %418 = vmatprep.mubr.bf16.mxu0 0
  %419 = vmatmul.mubr.bf16.gmra.mrb[0].mxu0 %v277
  %v420 = vpop.f32.mrb[0].mxu0
  %v421 = vadd.f32 0.0, %v420
  %v422 = vpop.f32.mrb[0].mxu0
  %v423 = vpop.f32.mrb[0].mxu0
  %v424 = vadd.f32 0.0, %v423
  %v425 = vpop.f32.mrb[0].mxu0
  %426 = vmatprep.mubr.bf16.mxu0 0
  %427 = vmatmul.mubr.bf16.gmra.mrb[0].mxu0 %v280
  %v428 = vpop.f32.mrb[0].mxu0
  %v429 = vadd.f32 0.0, %v428
  %v430 = vpop.f32.mrb[0].mxu0
  %v431 = vpop.f32.mrb[0].mxu0
  %v432 = vadd.f32 0.0, %v431
  %v433 = vpop.f32.mrb[0].mxu0
  %434 = vmatprep.mubr.bf16.mxu0 0
  %435 = vmatmul.mubr.bf16.gmra.mrb[0].mxu0 %v283
  %v436 = vpop.f32.mrb[0].mxu0
  %v437 = vadd.f32 0.0, %v436
  %v438 = vpop.f32.mrb[0].mxu0
  %v439 = vpop.f32.mrb[0].mxu0
  %v440 = vadd.f32 0.0, %v439
  %v441 = vpop.f32.mrb[0].mxu0
  %442 = vmatprep.mubr.bf16.mxu0 0
  %443 = vmatmul.mubr.bf16.gmra.mrb[0].mxu0 %v286
  %v444 = vpop.f32.mrb[0].mxu0
  %v445 = vadd.f32 0.0, %v444
  %v446 = vpop.f32.mrb[0].mxu0
  %v447 = vpop.f32.mrb[0].mxu0
  %v448 = vadd.f32 0.0, %v447
  %v449 = vpop.f32.mrb[0].mxu0
  %450 = vmatprep.mubr.bf16.mxu0 0
  %451 = vmatmul.mubr.bf16.gmra.mrb[0].mxu0 %v289
  %v452 = vpop.f32.mrb[0].mxu0
  %v453 = vadd.f32 0.0, %v452
  %v454 = vpop.f32.mrb[0].mxu0
  %v455 = vpop.f32.mrb[0].mxu0
  %v456 = vadd.f32 0.0, %v455
  %v457 = vpop.f32.mrb[0].mxu0
  %458 = vmatprep.mubr.bf16.mxu0 0
  %459 = vmatmul.mubr.bf16.gmra.mrb[0].mxu0 %v292
  %v460 = vpop.f32.mrb[0].mxu0
  %v461 = vadd.f32 0.0, %v460
  %v462 = vpop.f32.mrb[0].mxu0
  %v463 = vpop.f32.mrb[0].mxu0
  %v464 = vadd.f32 0.0, %v463
  %v465 = vpop.f32.mrb[0].mxu0
  %466 = vmatprep.mubr.bf16.mxu0 0
  %467 = vmatmul.mubr.bf16.gmra.mrb[0].mxu0 %v295
  %v468 = vpop.f32.mrb[0].mxu0
  %v469 = vadd.f32 0.0, %v468
  %v470 = vpop.f32.mrb[0].mxu0
  %v471 = vpop.f32.mrb[0].mxu0
  %v472 = vadd.f32 0.0, %v471
  %v473 = vpop.f32.mrb[0].mxu0
  %474 = vmatprep.mubr.bf16.mxu0 0
  %475 = vmatmul.mubr.bf16.gmra.mrb[0].mxu0 %v298
  %v476 = vpop.f32.mrb[0].mxu0
  %v477 = vadd.f32 0.0, %v476
  %v478 = vpop.f32.mrb[0].mxu0
  %v479 = vpop.f32.mrb[0].mxu0
  %v480 = vadd.f32 0.0, %v479
  %v481 = vpop.f32.mrb[0].mxu0
  %482 = vmatprep.mubr.bf16.mxu0 0
  %483 = vmatmul.mubr.bf16.gmra.mrb[0].mxu0 %v301
  %v484 = vpop.f32.mrb[0].mxu0
  %v485 = vadd.f32 0.0, %v484
  %v486 = vpop.f32.mrb[0].mxu0
  %v487 = vpop.f32.mrb[0].mxu0
  %v488 = vadd.f32 0.0, %v487
  %v489 = vpop.f32.mrb[0].mxu0
  %490 = vmatprep.mubr.bf16.mxu0 0
  %491 = vmatmul.mubr.bf16.gmra.mrb[0].mxu0 %v304
  %v492 = vpop.f32.mrb[0].mxu0
  %v493 = vadd.f32 0.0, %v492
  %v494 = vpop.f32.mrb[0].mxu0
  %v495 = vpop.f32.mrb[0].mxu0
  %v496 = vadd.f32 0.0, %v495
  %v497 = vpop.f32.mrb[0].mxu0
  %498 = vmatprep.mubr.bf16.mxu0 0
  %499 = vmatmul.mubr.bf16.gmra.mrb[0].mxu0 %v307
  %v500 = vpop.f32.mrb[0].mxu0
  %v501 = vadd.f32 0.0, %v500
  %v502 = vpop.f32.mrb[0].mxu0
  %v503 = vpop.f32.mrb[0].mxu0
  %v504 = vadd.f32 0.0, %v503
  %v505 = vpop.f32.mrb[0].mxu0
  %506 = vmatprep.mubr.bf16.mxu0 0
  %507 = vmatmul.mubr.bf16.gmra.mrb[0].mxu0 %v310
  %v508 = vpop.f32.mrb[0].mxu0
  %v509 = vadd.f32 0.0, %v508
  %v510 = vpop.f32.mrb[0].mxu0
  %v511 = vpop.f32.mrb[0].mxu0
  %v512 = vadd.f32 0.0, %v511
  %v513 = vpop.f32.mrb[0].mxu0
  %514 = vmatprep.mubr.bf16.mxu0 0
  %515 = vmatmul.mubr.bf16.gmra.mrb[0].mxu0 %v313
  %v516 = vpop.f32.mrb[0].mxu0
  %v517 = vadd.f32 0.0, %v516
  %v518 = vpop.f32.mrb[0].mxu0
  %v519 = vpop.f32.mrb[0].mxu0
  %v520 = vadd.f32 0.0, %v519
  %v521 = vpop.f32.mrb[0].mxu0
  %522 = vmatprep.mubr.bf16.mxu0 0
  %523 = vmatmul.mubr.bf16.gmra.mrb[0].mxu0 %v316
  %v524 = vpop.f32.mrb[0].mxu0
  %v525 = vadd.f32 0.0, %v524
  %v526 = vpop.f32.mrb[0].mxu0
  %v527 = vpop.f32.mrb[0].mxu0
  %v528 = vadd.f32 0.0, %v527
  %v529 = vpop.f32.mrb[0].mxu0
  %530 = vmatprep.mubr.bf16.mxu0 0
  %531 = vmatmul.mubr.bf16.gmra.mrb[0].mxu0 %v319
  %v532 = vpop.f32.mrb[0].mxu0
  %v533 = vadd.f32 0.0, %v532
  %v534 = vpop.f32.mrb[0].mxu0
  %v535 = vpop.f32.mrb[0].mxu0
  %v536 = vadd.f32 0.0, %v535
  %v537 = vpop.f32.mrb[0].mxu0
  %538 = vmatprep.mubr.bf16.mxu0 0
  %539 = vmatmul.mubr.bf16.gmra.mrb[0].mxu0 %v322
  %v540 = vpop.f32.mrb[0].mxu0
  %v541 = vadd.f32 0.0, %v540
  %v542 = vpop.f32.mrb[0].mxu0
  %v543 = vpop.f32.mrb[0].mxu0
  %v544 = vadd.f32 0.0, %v543
  %v545 = vpop.f32.mrb[0].mxu0
  %546 = vmatprep.mubr.bf16.mxu0 0
  %547 = vmatmul.mubr.bf16.gmra.mrb[0].mxu0 %v325
  %v548 = vpop.f32.mrb[0].mxu0
  %v549 = vadd.f32 0.0, %v548
  %v550 = vpop.f32.mrb[0].mxu0
  %v551 = vpop.f32.mrb[0].mxu0
  %v552 = vadd.f32 0.0, %v551
  %v553 = vpop.f32.mrb[0].mxu0
  %554 = vmatprep.mubr.bf16.mxu0 0
  %555 = vmatmul.mubr.bf16.gmra.mrb[0].mxu0 %v328
  %v556 = vpop.f32.mrb[0].mxu0
  %v557 = vadd.f32 0.0, %v556
  %v558 = vpop.f32.mrb[0].mxu0
  %v559 = vpop.f32.mrb[0].mxu0
  %v560 = vadd.f32 0.0, %v559
  %v561 = vpop.f32.mrb[0].mxu0
  %562 = vmatprep.mubr.bf16.mxu0 0
  %563 = vmatmul.mubr.bf16.gmra.mrb[0].mxu0 %v331
  %v564 = vpop.f32.mrb[0].mxu0
  %v565 = vadd.f32 0.0, %v564
  %v566 = vpop.f32.mrb[0].mxu0
  %v567 = vpop.f32.mrb[0].mxu0
  %v568 = vadd.f32 0.0, %v567
  %v569 = vpop.f32.mrb[0].mxu0
  %570 = vmatprep.mubr.bf16.mxu0 0
  %571 = vmatmul.mubr.bf16.gmra.mrb[0].mxu0 %v334
  %v572 = vpop.f32.mrb[0].mxu0
  %v573 = vadd.f32 0.0, %v572
  %v574 = vpop.f32.mrb[0].mxu0
  %v575 = vpop.f32.mrb[0].mxu0
  %v576 = vadd.f32 0.0, %v575
  %v577 = vpop.f32.mrb[0].mxu0
  %578 = vmatprep.mubr.bf16.mxu0 0
  %579 = vmatmul.mubr.bf16.gmra.mrb[0].mxu0 %v337
  %v580 = vpop.f32.mrb[0].mxu0
  %v581 = vadd.f32 0.0, %v580
  %v582 = vpop.f32.mrb[0].mxu0
  %v583 = vpop.f32.mrb[0].mxu0
  %v584 = vadd.f32 0.0, %v583
  %v585 = vpop.f32.mrb[0].mxu0
  %586 = vmatprep.mubr.bf16.mxu0 0
  %587 = vmatmul.mubr.bf16.gmra.mrb[0].mxu0 %v340
  %v588 = vpop.f32.mrb[0].mxu0
  %v589 = vadd.f32 0.0, %v588
  %v590 = vpop.f32.mrb[0].mxu0
  %v591 = vpop.f32.mrb[0].mxu0
  %v592 = vadd.f32 0.0, %v591
  %v593 = vpop.f32.mrb[0].mxu0
  %594 = vmatprep.mubr.bf16.mxu0 0
  %595 = vmatmul.mubr.bf16.gmra.mrb[0].mxu0 %v343
  %v596 = vpop.f32.mrb[0].mxu0
  %v597 = vadd.f32 0.0, %v596
  %v598 = vpop.f32.mrb[0].mxu0
  %v599 = vpop.f32.mrb[0].mxu0
  %v600 = vadd.f32 0.0, %v599
  %v601 = vpop.f32.mrb[0].mxu0
  %602 = vmatprep.mubr.bf16.mxu0 0
  %603 = vmatmul.mubr.bf16.gmra.mrb[0].mxu0 %v346
  %v604 = vpop.f32.mrb[0].mxu0
  %v605 = vadd.f32 0.0, %v604
  %v606 = vpop.f32.mrb[0].mxu0
  %v607 = vpop.f32.mrb[0].mxu0
  %v608 = vadd.f32 0.0, %v607
  %v609 = vpop.f32.mrb[0].mxu0
  %610 = vmatprep.mubr.bf16.mxu0 0
  %611 = vmatmul.mubr.bf16.gmra.mrb[0].mxu0 %v349
  %v612 = vpop.f32.mrb[0].mxu0
  %v613 = vadd.f32 0.0, %v612
  %v614 = vpop.f32.mrb[0].mxu0
  %v615 = vpop.f32.mrb[0].mxu0
  %v616 = vadd.f32 0.0, %v615
  %v617 = vpop.f32.mrb[0].mxu0
  %618 = vmatprep.mubr.bf16.mxu0 0
  %619 = vmatmul.mubr.bf16.gmra.mrb[0].mxu0 %v352
  %v620 = vpop.f32.mrb[0].mxu0
  %v621 = vadd.f32 0.0, %v620
  %v622 = vpop.f32.mrb[0].mxu0
  %v623 = vpop.f32.mrb[0].mxu0
  %v624 = vadd.f32 0.0, %v623
  %v625 = vpop.f32.mrb[0].mxu0
  %626 = vmatprep.mubr.bf16.mxu0 0
  %627 = vmatmul.mubr.bf16.gmra.mrb[0].mxu0 %v355
  %v628 = vpop.f32.mrb[0].mxu0
  %v629 = vadd.f32 0.0, %v628
  %v630 = vpop.f32.mrb[0].mxu0
  %v631 = vpop.f32.mrb[0].mxu0
  %v632 = vadd.f32 0.0, %v631
  %v633 = vpop.f32.mrb[0].mxu0
  %634 = vmatprep.mubr.bf16.mxu0 0
  %635 = vmatmul.mubr.bf16.gmra.mrb[0].mxu0 %v358
  %v636 = vpop.f32.mrb[0].mxu0
  %v637 = vadd.f32 0.0, %v636
  %v638 = vpop.f32.mrb[0].mxu0
  %v639 = vpop.f32.mrb[0].mxu0
  %v640 = vadd.f32 0.0, %v639
  %v641 = vpop.f32.mrb[0].mxu0
  %642 = vmatprep.mubr.bf16.mxu0 0
  %643 = vmatmul.mubr.bf16.gmra.mrb[0].mxu0 %v361
  %v644 = vpop.f32.mrb[0].mxu0
  %v645 = vadd.f32 0.0, %v644
  %v646 = vpop.f32.mrb[0].mxu0
  %v647 = vpop.f32.mrb[0].mxu0
  %v648 = vadd.f32 0.0, %v647
  %v649 = vpop.f32.mrb[0].mxu0
  %650 = vmatprep.mubr.bf16.mxu0 0
  %651 = vmatmul.mubr.bf16.gmra.mrb[0].mxu0 %v364
  %v652 = vpop.f32.mrb[0].mxu0
  %v653 = vadd.f32 0.0, %v652
  %v654 = vpop.f32.mrb[0].mxu0
  %v655 = vpop.f32.mrb[0].mxu0
  %v656 = vadd.f32 0.0, %v655
  %v657 = vpop.f32.mrb[0].mxu0
  %658 = vdwg.mxu0
  %v663 = vunpack.c.l.b16 %v27
  %v664 = vunpack.c.l.b16 %v28
  %v665 = vunpack.c.l.b16 %v63
  %v666 = vunpack.c.l.b16 %v64
  %v667 = vpack.c.b16 %v664, %v663
  %v668 = vpack.c.b16 %v666, %v665
  %v671 = vunpack.c.l.b16 %v99
  %v672 = vunpack.c.l.b16 %v100
  %v673 = vpack.c.b16 %v672, %v671
  %v675 = vsel %vm269, %v667, 0
  %v678 = vsel %vm269, %v668, 0
  %v681 = vsel %vm366, %v673, 0
  %683 = vmatprep.subr.bf16.mxu0 0
  %684 = vmatpush1.bf16.msra.mxu0 %v681
  %685 = vmatprep.subr.bf16.mxu0 0
  %686 = vmatpush1.bf16.msra.mxu0 0
  %687 = vmatprep.subr.bf16.mxu0 0
  %688 = vmatpush1.bf16.msra.mxu0 0
  %689 = vmatprep.subr.bf16.mxu0 0
  %690 = vmatpush1.bf16.msra.mxu0 0
  %691 = vmatprep.subr.bf16.mxu0 0
  %692 = vmatpush1.bf16.msra.mxu0 0
  %693 = vmatprep.subr.bf16.mxu0 0
  %694 = vmatpush1.bf16.msra.mxu0 0
  %695 = vmatprep.subr.bf16.mxu0 0
  %696 = vmatpush1.bf16.msra.mxu0 0
  %697 = vmatprep.subr.bf16.mxu0 0
  %698 = vmatpush1.bf16.msra.mxu0 0
  %699 = vmatprep.subr.bf16.mxu0 0
  %700 = vmatpush1.bf16.msra.mxu0 0
  %701 = vmatprep.subr.bf16.mxu0 0
  %702 = vmatpush1.bf16.msra.mxu0 0
  %703 = vmatprep.subr.bf16.mxu0 0
  %704 = vmatpush1.bf16.msra.mxu0 0
  %705 = vmatprep.subr.bf16.mxu0 0
  %706 = vmatpush1.bf16.msra.mxu0 0
  %707 = vmatprep.subr.bf16.mxu0 0
  %708 = vmatpush1.bf16.msra.mxu0 0
  %709 = vmatprep.subr.bf16.mxu0 0
  %710 = vmatpush1.bf16.msra.mxu0 0
  %711 = vmatprep.subr.bf16.mxu0 0
  %712 = vmatpush1.bf16.msra.mxu0 0
  %713 = vmatprep.subr.bf16.mxu0 0
  %714 = vmatpush1.bf16.msra.mxu0 0
  %715 = vmatprep.mubr.bf16.mxu0 0
  %716 = vmatmul.mubr.bf16.gmra.mrb[0].mxu0 %v675
  %v717 = vpop.f32.mrb[0].mxu0
  %v718 = vadd.f32 %v405, %v717
  %v719 = vpop.f32.mrb[0].mxu0
  %v720 = vpop.f32.mrb[0].mxu0
  %v721 = vadd.f32 %v408, %v720
  %v722 = vpop.f32.mrb[0].mxu0
  %723 = vmatprep.mubr.bf16.mxu0 0
  %724 = vmatmul.mubr.bf16.gmra.mrb[0].mxu0 %v271
  %v725 = vpop.f32.mrb[0].mxu0
  %v726 = vadd.f32 %v413, %v725
  %v727 = vpop.f32.mrb[0].mxu0
  %v728 = vpop.f32.mrb[0].mxu0
  %v729 = vadd.f32 %v416, %v728
  %v730 = vpop.f32.mrb[0].mxu0
  %731 = vmatprep.mubr.bf16.mxu0 0
  %732 = vmatmul.mubr.bf16.gmra.mrb[0].mxu0 %v274
  %v733 = vpop.f32.mrb[0].mxu0
  %v734 = vadd.f32 %v421, %v733
  %v735 = vpop.f32.mrb[0].mxu0
  %v736 = vpop.f32.mrb[0].mxu0
  %v737 = vadd.f32 %v424, %v736
  %v738 = vpop.f32.mrb[0].mxu0
  %739 = vmatprep.mubr.bf16.mxu0 0
  %740 = vmatmul.mubr.bf16.gmra.mrb[0].mxu0 %v277
  %v741 = vpop.f32.mrb[0].mxu0
  %v742 = vadd.f32 %v429, %v741
  %v743 = vpop.f32.mrb[0].mxu0
  %v744 = vpop.f32.mrb[0].mxu0
  %v745 = vadd.f32 %v432, %v744
  %v746 = vpop.f32.mrb[0].mxu0
  %747 = vmatprep.mubr.bf16.mxu0 0
  %748 = vmatmul.mubr.bf16.gmra.mrb[0].mxu0 %v280
  %v749 = vpop.f32.mrb[0].mxu0
  %v750 = vadd.f32 %v437, %v749
  %v751 = vpop.f32.mrb[0].mxu0
  %v752 = vpop.f32.mrb[0].mxu0
  %v753 = vadd.f32 %v440, %v752
  %v754 = vpop.f32.mrb[0].mxu0
  %755 = vmatprep.mubr.bf16.mxu0 0
  %756 = vmatmul.mubr.bf16.gmra.mrb[0].mxu0 %v283
  %v757 = vpop.f32.mrb[0].mxu0
  %v758 = vadd.f32 %v445, %v757
  %v759 = vpop.f32.mrb[0].mxu0
  %v760 = vpop.f32.mrb[0].mxu0
  %v761 = vadd.f32 %v448, %v760
  %v762 = vpop.f32.mrb[0].mxu0
  %763 = vmatprep.mubr.bf16.mxu0 0
  %764 = vmatmul.mubr.bf16.gmra.mrb[0].mxu0 %v286
  %v765 = vpop.f32.mrb[0].mxu0
  %v766 = vadd.f32 %v453, %v765
  %v767 = vpop.f32.mrb[0].mxu0
  %v768 = vpop.f32.mrb[0].mxu0
  %v769 = vadd.f32 %v456, %v768
  %v770 = vpop.f32.mrb[0].mxu0
  %771 = vmatprep.mubr.bf16.mxu0 0
  %772 = vmatmul.mubr.bf16.gmra.mrb[0].mxu0 %v289
  %v773 = vpop.f32.mrb[0].mxu0
  %v774 = vadd.f32 %v461, %v773
  %v775 = vpop.f32.mrb[0].mxu0
  %v776 = vpop.f32.mrb[0].mxu0
  %v777 = vadd.f32 %v464, %v776
  %v778 = vpop.f32.mrb[0].mxu0
  %779 = vmatprep.mubr.bf16.mxu0 0
  %780 = vmatmul.mubr.bf16.gmra.mrb[0].mxu0 %v292
  %v781 = vpop.f32.mrb[0].mxu0
  %v782 = vadd.f32 %v469, %v781
  %v783 = vpop.f32.mrb[0].mxu0
  %v784 = vpop.f32.mrb[0].mxu0
  %v785 = vadd.f32 %v472, %v784
  %v786 = vpop.f32.mrb[0].mxu0
  %787 = vmatprep.mubr.bf16.mxu0 0
  %788 = vmatmul.mubr.bf16.gmra.mrb[0].mxu0 %v295
  %v789 = vpop.f32.mrb[0].mxu0
  %v790 = vadd.f32 %v477, %v789
  %v791 = vpop.f32.mrb[0].mxu0
  %v792 = vpop.f32.mrb[0].mxu0
  %v793 = vadd.f32 %v480, %v792
  %v794 = vpop.f32.mrb[0].mxu0
  %795 = vmatprep.mubr.bf16.mxu0 0
  %796 = vmatmul.mubr.bf16.gmra.mrb[0].mxu0 %v298
  %v797 = vpop.f32.mrb[0].mxu0
  %v798 = vadd.f32 %v485, %v797
  %v799 = vpop.f32.mrb[0].mxu0
  %v800 = vpop.f32.mrb[0].mxu0
  %v801 = vadd.f32 %v488, %v800
  %v802 = vpop.f32.mrb[0].mxu0
  %803 = vmatprep.mubr.bf16.mxu0 0
  %804 = vmatmul.mubr.bf16.gmra.mrb[0].mxu0 %v301
  %v805 = vpop.f32.mrb[0].mxu0
  %v806 = vadd.f32 %v493, %v805
  %v807 = vpop.f32.mrb[0].mxu0
  %v808 = vpop.f32.mrb[0].mxu0
  %v809 = vadd.f32 %v496, %v808
  %v810 = vpop.f32.mrb[0].mxu0
  %811 = vmatprep.mubr.bf16.mxu0 0
  %812 = vmatmul.mubr.bf16.gmra.mrb[0].mxu0 %v304
  %v813 = vpop.f32.mrb[0].mxu0
  %v814 = vadd.f32 %v501, %v813
  %v815 = vpop.f32.mrb[0].mxu0
  %v816 = vpop.f32.mrb[0].mxu0
  %v817 = vadd.f32 %v504, %v816
  %v818 = vpop.f32.mrb[0].mxu0
  %819 = vmatprep.mubr.bf16.mxu0 0
  %820 = vmatmul.mubr.bf16.gmra.mrb[0].mxu0 %v307
  %v821 = vpop.f32.mrb[0].mxu0
  %v822 = vadd.f32 %v509, %v821
  %v823 = vpop.f32.mrb[0].mxu0
  %v824 = vpop.f32.mrb[0].mxu0
  %v825 = vadd.f32 %v512, %v824
  %v826 = vpop.f32.mrb[0].mxu0
  %827 = vmatprep.mubr.bf16.mxu0 0
  %828 = vmatmul.mubr.bf16.gmra.mrb[0].mxu0 %v310
  %v829 = vpop.f32.mrb[0].mxu0
  %v830 = vadd.f32 %v517, %v829
  %v831 = vpop.f32.mrb[0].mxu0
  %v832 = vpop.f32.mrb[0].mxu0
  %v833 = vadd.f32 %v520, %v832
  %v834 = vpop.f32.mrb[0].mxu0
  %835 = vmatprep.mubr.bf16.mxu0 0
  %836 = vmatmul.mubr.bf16.gmra.mrb[0].mxu0 %v313
  %v837 = vpop.f32.mrb[0].mxu0
  %v838 = vadd.f32 %v525, %v837
  %v839 = vpop.f32.mrb[0].mxu0
  %v840 = vpop.f32.mrb[0].mxu0
  %v841 = vadd.f32 %v528, %v840
  %v842 = vpop.f32.mrb[0].mxu0
  %843 = vmatprep.mubr.bf16.mxu0 0
  %844 = vmatmul.mubr.bf16.gmra.mrb[0].mxu0 %v678
  %v845 = vpop.f32.mrb[0].mxu0
  %v846 = vadd.f32 %v533, %v845
  %v847 = vpop.f32.mrb[0].mxu0
  %v848 = vpop.f32.mrb[0].mxu0
  %v849 = vadd.f32 %v536, %v848
  %v850 = vpop.f32.mrb[0].mxu0
  %851 = vmatprep.mubr.bf16.mxu0 0
  %852 = vmatmul.mubr.bf16.gmra.mrb[0].mxu0 %v319
  %v853 = vpop.f32.mrb[0].mxu0
  %v854 = vadd.f32 %v541, %v853
  %v855 = vpop.f32.mrb[0].mxu0
  %v856 = vpop.f32.mrb[0].mxu0
  %v857 = vadd.f32 %v544, %v856
  %v858 = vpop.f32.mrb[0].mxu0
  %859 = vmatprep.mubr.bf16.mxu0 0
  %860 = vmatmul.mubr.bf16.gmra.mrb[0].mxu0 %v322
  %v861 = vpop.f32.mrb[0].mxu0
  %v862 = vadd.f32 %v549, %v861
  %v863 = vpop.f32.mrb[0].mxu0
  %v864 = vpop.f32.mrb[0].mxu0
  %v865 = vadd.f32 %v552, %v864
  %v866 = vpop.f32.mrb[0].mxu0
  %867 = vmatprep.mubr.bf16.mxu0 0
  %868 = vmatmul.mubr.bf16.gmra.mrb[0].mxu0 %v325
  %v869 = vpop.f32.mrb[0].mxu0
  %v870 = vadd.f32 %v557, %v869
  %v871 = vpop.f32.mrb[0].mxu0
  %v872 = vpop.f32.mrb[0].mxu0
  %v873 = vadd.f32 %v560, %v872
  %v874 = vpop.f32.mrb[0].mxu0
  %875 = vmatprep.mubr.bf16.mxu0 0
  %876 = vmatmul.mubr.bf16.gmra.mrb[0].mxu0 %v328
  %v877 = vpop.f32.mrb[0].mxu0
  %v878 = vadd.f32 %v565, %v877
  %v879 = vpop.f32.mrb[0].mxu0
  %v880 = vpop.f32.mrb[0].mxu0
  %v881 = vadd.f32 %v568, %v880
  %v882 = vpop.f32.mrb[0].mxu0
  %883 = vmatprep.mubr.bf16.mxu0 0
  %884 = vmatmul.mubr.bf16.gmra.mrb[0].mxu0 %v331
  %v885 = vpop.f32.mrb[0].mxu0
  %v886 = vadd.f32 %v573, %v885
  %v887 = vpop.f32.mrb[0].mxu0
  %v888 = vpop.f32.mrb[0].mxu0
  %v889 = vadd.f32 %v576, %v888
  %v890 = vpop.f32.mrb[0].mxu0
  %891 = vmatprep.mubr.bf16.mxu0 0
  %892 = vmatmul.mubr.bf16.gmra.mrb[0].mxu0 %v334
  %v893 = vpop.f32.mrb[0].mxu0
  %v894 = vadd.f32 %v581, %v893
  %v895 = vpop.f32.mrb[0].mxu0
  %v896 = vpop.f32.mrb[0].mxu0
  %v897 = vadd.f32 %v584, %v896
  %v898 = vpop.f32.mrb[0].mxu0
  %899 = vmatprep.mubr.bf16.mxu0 0
  %900 = vmatmul.mubr.bf16.gmra.mrb[0].mxu0 %v337
  %v901 = vpop.f32.mrb[0].mxu0
  %v902 = vadd.f32 %v589, %v901
  %v903 = vpop.f32.mrb[0].mxu0
  %v904 = vpop.f32.mrb[0].mxu0
  %v905 = vadd.f32 %v592, %v904
  %v906 = vpop.f32.mrb[0].mxu0
  %907 = vmatprep.mubr.bf16.mxu0 0
  %908 = vmatmul.mubr.bf16.gmra.mrb[0].mxu0 %v340
  %v909 = vpop.f32.mrb[0].mxu0
  %v910 = vadd.f32 %v597, %v909
  %v911 = vpop.f32.mrb[0].mxu0
  %v912 = vpop.f32.mrb[0].mxu0
  %v913 = vadd.f32 %v600, %v912
  %v914 = vpop.f32.mrb[0].mxu0
  %915 = vmatprep.mubr.bf16.mxu0 0
  %916 = vmatmul.mubr.bf16.gmra.mrb[0].mxu0 %v343
  %v917 = vpop.f32.mrb[0].mxu0
  %v918 = vadd.f32 %v605, %v917
  %v919 = vpop.f32.mrb[0].mxu0
  %v920 = vpop.f32.mrb[0].mxu0
  %v921 = vadd.f32 %v608, %v920
  %v922 = vpop.f32.mrb[0].mxu0
  %923 = vmatprep.mubr.bf16.mxu0 0
  %924 = vmatmul.mubr.bf16.gmra.mrb[0].mxu0 %v346
  %v925 = vpop.f32.mrb[0].mxu0
  %v926 = vadd.f32 %v613, %v925
  %v927 = vpop.f32.mrb[0].mxu0
  %v928 = vpop.f32.mrb[0].mxu0
  %v929 = vadd.f32 %v616, %v928
  %v930 = vpop.f32.mrb[0].mxu0
  %931 = vmatprep.mubr.bf16.mxu0 0
  %932 = vmatmul.mubr.bf16.gmra.mrb[0].mxu0 %v349
  %v933 = vpop.f32.mrb[0].mxu0
  %v934 = vadd.f32 %v621, %v933
  %v935 = vpop.f32.mrb[0].mxu0
  %v936 = vpop.f32.mrb[0].mxu0
  %v937 = vadd.f32 %v624, %v936
  %v938 = vpop.f32.mrb[0].mxu0
  %939 = vmatprep.mubr.bf16.mxu0 0
  %940 = vmatmul.mubr.bf16.gmra.mrb[0].mxu0 %v352
  %v941 = vpop.f32.mrb[0].mxu0
  %v942 = vadd.f32 %v629, %v941
  %v943 = vpop.f32.mrb[0].mxu0
  %v944 = vpop.f32.mrb[0].mxu0
  %v945 = vadd.f32 %v632, %v944
  %v946 = vpop.f32.mrb[0].mxu0
  %947 = vmatprep.mubr.bf16.mxu0 0
  %948 = vmatmul.mubr.bf16.gmra.mrb[0].mxu0 %v355
  %v949 = vpop.f32.mrb[0].mxu0
  %v950 = vadd.f32 %v637, %v949
  %v951 = vpop.f32.mrb[0].mxu0
  %v952 = vpop.f32.mrb[0].mxu0
  %v953 = vadd.f32 %v640, %v952
  %v954 = vpop.f32.mrb[0].mxu0
  %955 = vmatprep.mubr.bf16.mxu0 0
  %956 = vmatmul.mubr.bf16.gmra.mrb[0].mxu0 %v358
  %v957 = vpop.f32.mrb[0].mxu0
  %v958 = vadd.f32 %v645, %v957
  %v959 = vpop.f32.mrb[0].mxu0
  %v960 = vpop.f32.mrb[0].mxu0
  %v961 = vadd.f32 %v648, %v960
  %v962 = vpop.f32.mrb[0].mxu0
  %963 = vmatprep.mubr.bf16.mxu0 0
  %964 = vmatmul.mubr.bf16.gmra.mrb[0].mxu0 %v361
  %v965 = vpop.f32.mrb[0].mxu0
  %v966 = vadd.f32 %v653, %v965
  %v967 = vpop.f32.mrb[0].mxu0
  %v968 = vpop.f32.mrb[0].mxu0
  %v969 = vadd.f32 %v656, %v968
  %v970 = vpop.f32.mrb[0].mxu0
  %971 = vdwg.mxu0
  %s972 = scalar_lea.vmem %s1, 16
  %v973 = vld [vmem:[%s972] sm:$0xf]
  %v974 = vld [vmem:[%s972 + $0x4] sm:$0x3]
  %v979 = vunpack.c.l.b16 %v61
  %v980 = vunpack.c.l.b16 %v62
  %v981 = vunpack.c.l.b16 %v97
  %v982 = vunpack.c.l.b16 %v98
  %v983 = vpack.c.b16 %v980, %v979
  %v984 = vpack.c.b16 %v982, %v981
  %v987 = vunpack.c.l.b16 %v973
  %v988 = vunpack.c.l.b16 %v974
  %v989 = vpack.c.b16 %v988, %v987
  %v991 = vsel %vm269, %v983, 0
  %v994 = vsel %vm269, %v984, 0
  %v997 = vsel %vm366, %v989, 0
  %999 = vmatprep.subr.bf16.mxu0 0
  %1000 = vmatpush1.bf16.msra.mxu0 %v997
  %1001 = vmatprep.subr.bf16.mxu0 0
  %1002 = vmatpush1.bf16.msra.mxu0 0
  %1003 = vmatprep.subr.bf16.mxu0 0
  %1004 = vmatpush1.bf16.msra.mxu0 0
  %1005 = vmatprep.subr.bf16.mxu0 0
  %1006 = vmatpush1.bf16.msra.mxu0 0
  %1007 = vmatprep.subr.bf16.mxu0 0
  %1008 = vmatpush1.bf16.msra.mxu0 0
  %1009 = vmatprep.subr.bf16.mxu0 0
  %1010 = vmatpush1.bf16.msra.mxu0 0
  %1011 = vmatprep.subr.bf16.mxu0 0
  %1012 = vmatpush1.bf16.msra.mxu0 0
  %1013 = vmatprep.subr.bf16.mxu0 0
  %1014 = vmatpush1.bf16.msra.mxu0 0
  %1015 = vmatprep.subr.bf16.mxu0 0
  %1016 = vmatpush1.bf16.msra.mxu0 0
  %1017 = vmatprep.subr.bf16.mxu0 0
  %1018 = vmatpush1.bf16.msra.mxu0 0
  %1019 = vmatprep.subr.bf16.mxu0 0
  %1020 = vmatpush1.bf16.msra.mxu0 0
  %1021 = vmatprep.subr.bf16.mxu0 0
  %1022 = vmatpush1.bf16.msra.mxu0 0
  %1023 = vmatprep.subr.bf16.mxu0 0
  %1024 = vmatpush1.bf16.msra.mxu0 0
  %1025 = vmatprep.subr.bf16.mxu0 0
  %1026 = vmatpush1.bf16.msra.mxu0 0
  %1027 = vmatprep.subr.bf16.mxu0 0
  %1028 = vmatpush1.bf16.msra.mxu0 0
  %1029 = vmatprep.subr.bf16.mxu0 0
  %1030 = vmatpush1.bf16.msra.mxu0 0
  %1031 = vmatprep.mubr.bf16.mxu0 0
  %1032 = vmatmul.mubr.bf16.gmra.mrb[0].mxu0 %v274
  %v1033 = vpop.f32.mrb[0].mxu0
  %v1034 = vadd.f32 0.0, %v1033
  %v1035 = vpop.f32.mrb[0].mxu0
  %v1036 = vpop.f32.mrb[0].mxu0
  %v1037 = vadd.f32 0.0, %v1036
  %v1038 = vpop.f32.mrb[0].mxu0
  %1039 = vmatprep.mubr.bf16.mxu0 0
  %1040 = vmatmul.mubr.bf16.gmra.mrb[0].mxu0 %v277
  %v1041 = vpop.f32.mrb[0].mxu0
  %v1042 = vadd.f32 0.0, %v1041
  %v1043 = vpop.f32.mrb[0].mxu0
  %v1044 = vpop.f32.mrb[0].mxu0
  %v1045 = vadd.f32 0.0, %v1044
  %v1046 = vpop.f32.mrb[0].mxu0
  %1047 = vmatprep.mubr.bf16.mxu0 0
  %1048 = vmatmul.mubr.bf16.gmra.mrb[0].mxu0 %v280
  %v1049 = vpop.f32.mrb[0].mxu0
  %v1050 = vadd.f32 0.0, %v1049
  %v1051 = vpop.f32.mrb[0].mxu0
  %v1052 = vpop.f32.mrb[0].mxu0
  %v1053 = vadd.f32 0.0, %v1052
  %v1054 = vpop.f32.mrb[0].mxu0
  %1055 = vmatprep.mubr.bf16.mxu0 0
  %1056 = vmatmul.mubr.bf16.gmra.mrb[0].mxu0 %v283
  %v1057 = vpop.f32.mrb[0].mxu0
  %v1058 = vadd.f32 0.0, %v1057
  %v1059 = vpop.f32.mrb[0].mxu0
  %v1060 = vpop.f32.mrb[0].mxu0
  %v1061 = vadd.f32 0.0, %v1060
  %v1062 = vpop.f32.mrb[0].mxu0
  %1063 = vmatprep.mubr.bf16.mxu0 0
  %1064 = vmatmul.mubr.bf16.gmra.mrb[0].mxu0 %v286
  %v1065 = vpop.f32.mrb[0].mxu0
  %v1066 = vadd.f32 0.0, %v1065
  %v1067 = vpop.f32.mrb[0].mxu0
  %v1068 = vpop.f32.mrb[0].mxu0
  %v1069 = vadd.f32 0.0, %v1068
  %v1070 = vpop.f32.mrb[0].mxu0
  %1071 = vmatprep.mubr.bf16.mxu0 0
  %1072 = vmatmul.mubr.bf16.gmra.mrb[0].mxu0 %v289
  %v1073 = vpop.f32.mrb[0].mxu0
  %v1074 = vadd.f32 0.0, %v1073
  %v1075 = vpop.f32.mrb[0].mxu0
  %v1076 = vpop.f32.mrb[0].mxu0
  %v1077 = vadd.f32 0.0, %v1076
  %v1078 = vpop.f32.mrb[0].mxu0
  %1079 = vmatprep.mubr.bf16.mxu0 0
  %1080 = vmatmul.mubr.bf16.gmra.mrb[0].mxu0 %v292
  %v1081 = vpop.f32.mrb[0].mxu0
  %v1082 = vadd.f32 0.0, %v1081
  %v1083 = vpop.f32.mrb[0].mxu0
  %v1084 = vpop.f32.mrb[0].mxu0
  %v1085 = vadd.f32 0.0, %v1084
  %v1086 = vpop.f32.mrb[0].mxu0
  %1087 = vmatprep.mubr.bf16.mxu0 0
  %1088 = vmatmul.mubr.bf16.gmra.mrb[0].mxu0 %v295
  %v1089 = vpop.f32.mrb[0].mxu0
  %v1090 = vadd.f32 0.0, %v1089
  %v1091 = vpop.f32.mrb[0].mxu0
  %v1092 = vpop.f32.mrb[0].mxu0
  %v1093 = vadd.f32 0.0, %v1092
  %v1094 = vpop.f32.mrb[0].mxu0
  %1095 = vmatprep.mubr.bf16.mxu0 0
  %1096 = vmatmul.mubr.bf16.gmra.mrb[0].mxu0 %v298
  %v1097 = vpop.f32.mrb[0].mxu0
  %v1098 = vadd.f32 0.0, %v1097
  %v1099 = vpop.f32.mrb[0].mxu0
  %v1100 = vpop.f32.mrb[0].mxu0
  %v1101 = vadd.f32 0.0, %v1100
  %v1102 = vpop.f32.mrb[0].mxu0
  %1103 = vmatprep.mubr.bf16.mxu0 0
  %1104 = vmatmul.mubr.bf16.gmra.mrb[0].mxu0 %v301
  %v1105 = vpop.f32.mrb[0].mxu0
  %v1106 = vadd.f32 0.0, %v1105
  %v1107 = vpop.f32.mrb[0].mxu0
  %v1108 = vpop.f32.mrb[0].mxu0
  %v1109 = vadd.f32 0.0, %v1108
  %v1110 = vpop.f32.mrb[0].mxu0
  %1111 = vmatprep.mubr.bf16.mxu0 0
  %1112 = vmatmul.mubr.bf16.gmra.mrb[0].mxu0 %v304
  %v1113 = vpop.f32.mrb[0].mxu0
  %v1114 = vadd.f32 0.0, %v1113
  %v1115 = vpop.f32.mrb[0].mxu0
  %v1116 = vpop.f32.mrb[0].mxu0
  %v1117 = vadd.f32 0.0, %v1116
  %v1118 = vpop.f32.mrb[0].mxu0
  %1119 = vmatprep.mubr.bf16.mxu0 0
  %1120 = vmatmul.mubr.bf16.gmra.mrb[0].mxu0 %v307
  %v1121 = vpop.f32.mrb[0].mxu0
  %v1122 = vadd.f32 0.0, %v1121
  %v1123 = vpop.f32.mrb[0].mxu0
  %v1124 = vpop.f32.mrb[0].mxu0
  %v1125 = vadd.f32 0.0, %v1124
  %v1126 = vpop.f32.mrb[0].mxu0
  %1127 = vmatprep.mubr.bf16.mxu0 0
  %1128 = vmatmul.mubr.bf16.gmra.mrb[0].mxu0 %v310
  %v1129 = vpop.f32.mrb[0].mxu0
  %v1130 = vadd.f32 0.0, %v1129
  %v1131 = vpop.f32.mrb[0].mxu0
  %v1132 = vpop.f32.mrb[0].mxu0
  %v1133 = vadd.f32 0.0, %v1132
  %v1134 = vpop.f32.mrb[0].mxu0
  %1135 = vmatprep.mubr.bf16.mxu0 0
  %1136 = vmatmul.mubr.bf16.gmra.mrb[0].mxu0 %v313
  %v1137 = vpop.f32.mrb[0].mxu0
  %v1138 = vadd.f32 0.0, %v1137
  %v1139 = vpop.f32.mrb[0].mxu0
  %v1140 = vpop.f32.mrb[0].mxu0
  %v1141 = vadd.f32 0.0, %v1140
  %v1142 = vpop.f32.mrb[0].mxu0
  %1143 = vmatprep.mubr.bf16.mxu0 0
  %1144 = vmatmul.mubr.bf16.gmra.mrb[0].mxu0 %v316
  %v1145 = vpop.f32.mrb[0].mxu0
  %v1146 = vadd.f32 0.0, %v1145
  %v1147 = vpop.f32.mrb[0].mxu0
  %v1148 = vpop.f32.mrb[0].mxu0
  %v1149 = vadd.f32 0.0, %v1148
  %v1150 = vpop.f32.mrb[0].mxu0
  %1151 = vmatprep.mubr.bf16.mxu0 0
  %1152 = vmatmul.mubr.bf16.gmra.mrb[0].mxu0 %v991
  %v1153 = vpop.f32.mrb[0].mxu0
  %v1154 = vadd.f32 0.0, %v1153
  %v1155 = vpop.f32.mrb[0].mxu0
  %v1156 = vpop.f32.mrb[0].mxu0
  %v1157 = vadd.f32 0.0, %v1156
  %v1158 = vpop.f32.mrb[0].mxu0
  %1159 = vmatprep.mubr.bf16.mxu0 0
  %1160 = vmatmul.mubr.bf16.gmra.mrb[0].mxu0 %v322
  %v1161 = vpop.f32.mrb[0].mxu0
  %v1162 = vadd.f32 0.0, %v1161
  %v1163 = vpop.f32.mrb[0].mxu0
  %v1164 = vpop.f32.mrb[0].mxu0
  %v1165 = vadd.f32 0.0, %v1164
  %v1166 = vpop.f32.mrb[0].mxu0
  %1167 = vmatprep.mubr.bf16.mxu0 0
  %1168 = vmatmul.mubr.bf16.gmra.mrb[0].mxu0 %v325
  %v1169 = vpop.f32.mrb[0].mxu0
  %v1170 = vadd.f32 0.0, %v1169
  %v1171 = vpop.f32.mrb[0].mxu0
  %v1172 = vpop.f32.mrb[0].mxu0
  %v1173 = vadd.f32 0.0, %v1172
  %v1174 = vpop.f32.mrb[0].mxu0
  %1175 = vmatprep.mubr.bf16.mxu0 0
  %1176 = vmatmul.mubr.bf16.gmra.mrb[0].mxu0 %v328
  %v1177 = vpop.f32.mrb[0].mxu0
  %v1178 = vadd.f32 0.0, %v1177
  %v1179 = vpop.f32.mrb[0].mxu0
  %v1180 = vpop.f32.mrb[0].mxu0
  %v1181 = vadd.f32 0.0, %v1180
  %v1182 = vpop.f32.mrb[0].mxu0
  %1183 = vmatprep.mubr.bf16.mxu0 0
  %1184 = vmatmul.mubr.bf16.gmra.mrb[0].mxu0 %v331
  %v1185 = vpop.f32.mrb[0].mxu0
  %v1186 = vadd.f32 0.0, %v1185
  %v1187 = vpop.f32.mrb[0].mxu0
  %v1188 = vpop.f32.mrb[0].mxu0
  %v1189 = vadd.f32 0.0, %v1188
  %v1190 = vpop.f32.mrb[0].mxu0
  %1191 = vmatprep.mubr.bf16.mxu0 0
  %1192 = vmatmul.mubr.bf16.gmra.mrb[0].mxu0 %v334
  %v1193 = vpop.f32.mrb[0].mxu0
  %v1194 = vadd.f32 0.0, %v1193
  %v1195 = vpop.f32.mrb[0].mxu0
  %v1196 = vpop.f32.mrb[0].mxu0
  %v1197 = vadd.f32 0.0, %v1196
  %v1198 = vpop.f32.mrb[0].mxu0
  %1199 = vmatprep.mubr.bf16.mxu0 0
  %1200 = vmatmul.mubr.bf16.gmra.mrb[0].mxu0 %v337
  %v1201 = vpop.f32.mrb[0].mxu0
  %v1202 = vadd.f32 0.0, %v1201
  %v1203 = vpop.f32.mrb[0].mxu0
  %v1204 = vpop.f32.mrb[0].mxu0
  %v1205 = vadd.f32 0.0, %v1204
  %v1206 = vpop.f32.mrb[0].mxu0
  %1207 = vmatprep.mubr.bf16.mxu0 0
  %1208 = vmatmul.mubr.bf16.gmra.mrb[0].mxu0 %v340
  %v1209 = vpop.f32.mrb[0].mxu0
  %v1210 = vadd.f32 0.0, %v1209
  %v1211 = vpop.f32.mrb[0].mxu0
  %v1212 = vpop.f32.mrb[0].mxu0
  %v1213 = vadd.f32 0.0, %v1212
  %v1214 = vpop.f32.mrb[0].mxu0
  %1215 = vmatprep.mubr.bf16.mxu0 0
  %1216 = vmatmul.mubr.bf16.gmra.mrb[0].mxu0 %v343
  %v1217 = vpop.f32.mrb[0].mxu0
  %v1218 = vadd.f32 0.0, %v1217
  %v1219 = vpop.f32.mrb[0].mxu0
  %v1220 = vpop.f32.mrb[0].mxu0
  %v1221 = vadd.f32 0.0, %v1220
  %v1222 = vpop.f32.mrb[0].mxu0
  %1223 = vmatprep.mubr.bf16.mxu0 0
  %1224 = vmatmul.mubr.bf16.gmra.mrb[0].mxu0 %v346
  %v1225 = vpop.f32.mrb[0].mxu0
  %v1226 = vadd.f32 0.0, %v1225
  %v1227 = vpop.f32.mrb[0].mxu0
  %v1228 = vpop.f32.mrb[0].mxu0
  %v1229 = vadd.f32 0.0, %v1228
  %v1230 = vpop.f32.mrb[0].mxu0
  %1231 = vmatprep.mubr.bf16.mxu0 0
  %1232 = vmatmul.mubr.bf16.gmra.mrb[0].mxu0 %v349
  %v1233 = vpop.f32.mrb[0].mxu0
  %v1234 = vadd.f32 0.0, %v1233
  %v1235 = vpop.f32.mrb[0].mxu0
  %v1236 = vpop.f32.mrb[0].mxu0
  %v1237 = vadd.f32 0.0, %v1236
  %v1238 = vpop.f32.mrb[0].mxu0
  %1239 = vmatprep.mubr.bf16.mxu0 0
  %1240 = vmatmul.mubr.bf16.gmra.mrb[0].mxu0 %v352
  %v1241 = vpop.f32.mrb[0].mxu0
  %v1242 = vadd.f32 0.0, %v1241
  %v1243 = vpop.f32.mrb[0].mxu0
  %v1244 = vpop.f32.mrb[0].mxu0
  %v1245 = vadd.f32 0.0, %v1244
  %v1246 = vpop.f32.mrb[0].mxu0
  %1247 = vmatprep.mubr.bf16.mxu0 0
  %1248 = vmatmul.mubr.bf16.gmra.mrb[0].mxu0 %v355
  %v1249 = vpop.f32.mrb[0].mxu0
  %v1250 = vadd.f32 0.0, %v1249
  %v1251 = vpop.f32.mrb[0].mxu0
  %v1252 = vpop.f32.mrb[0].mxu0
  %v1253 = vadd.f32 0.0, %v1252
  %v1254 = vpop.f32.mrb[0].mxu0
  %1255 = vmatprep.mubr.bf16.mxu0 0
  %1256 = vmatmul.mubr.bf16.gmra.mrb[0].mxu0 %v358
  %v1257 = vpop.f32.mrb[0].mxu0
  %v1258 = vadd.f32 0.0, %v1257
  %v1259 = vpop.f32.mrb[0].mxu0
  %v1260 = vpop.f32.mrb[0].mxu0
  %v1261 = vadd.f32 0.0, %v1260
  %v1262 = vpop.f32.mrb[0].mxu0
  %1263 = vmatprep.mubr.bf16.mxu0 0
  %1264 = vmatmul.mubr.bf16.gmra.mrb[0].mxu0 %v361
  %v1265 = vpop.f32.mrb[0].mxu0
  %v1266 = vadd.f32 0.0, %v1265
  %v1267 = vpop.f32.mrb[0].mxu0
  %v1268 = vpop.f32.mrb[0].mxu0
  %v1269 = vadd.f32 0.0, %v1268
  %v1270 = vpop.f32.mrb[0].mxu0
  %1271 = vmatprep.mubr.bf16.mxu0 0
  %1272 = vmatmul.mubr.bf16.gmra.mrb[0].mxu0 %v364
  %v1273 = vpop.f32.mrb[0].mxu0
  %v1274 = vadd.f32 0.0, %v1273
  %v1275 = vpop.f32.mrb[0].mxu0
  %v1276 = vpop.f32.mrb[0].mxu0
  %v1277 = vadd.f32 0.0, %v1276
  %v1278 = vpop.f32.mrb[0].mxu0
  %1279 = vmatprep.mubr.bf16.mxu0 0
  %1280 = vmatmul.mubr.bf16.gmra.mrb[0].mxu0 %v994
  %v1281 = vpop.f32.mrb[0].mxu0
  %v1282 = vadd.f32 0.0, %v1281
  %v1283 = vpop.f32.mrb[0].mxu0
  %v1284 = vpop.f32.mrb[0].mxu0
  %v1285 = vadd.f32 0.0, %v1284
  %v1286 = vpop.f32.mrb[0].mxu0
  %1287 = vdwg.mxu0
  %v1288 = vadd.f32 %v718, %v1034
  %v1289 = vadd.f32 %v721, %v1037
  %v1290 = vadd.f32 %v726, %v1042
  %v1291 = vadd.f32 %v729, %v1045
  %v1292 = vadd.f32 %v734, %v1050
  %v1293 = vadd.f32 %v737, %v1053
  %v1294 = vadd.f32 %v742, %v1058
  %v1295 = vadd.f32 %v745, %v1061
  %v1296 = vadd.f32 %v750, %v1066
  %v1297 = vadd.f32 %v753, %v1069
  %v1298 = vadd.f32 %v758, %v1074
  %v1299 = vadd.f32 %v761, %v1077
  %v1300 = vadd.f32 %v766, %v1082
  %v1301 = vadd.f32 %v769, %v1085
  %v1302 = vadd.f32 %v774, %v1090
  %v1303 = vadd.f32 %v777, %v1093
  %v1304 = vadd.f32 %v782, %v1098
  %v1305 = vadd.f32 %v785, %v1101
  %v1306 = vadd.f32 %v790, %v1106
  %v1307 = vadd.f32 %v793, %v1109
  %v1308 = vadd.f32 %v798, %v1114
  %v1309 = vadd.f32 %v801, %v1117
  %v1310 = vadd.f32 %v806, %v1122
  %v1311 = vadd.f32 %v809, %v1125
  %v1312 = vadd.f32 %v814, %v1130
  %v1313 = vadd.f32 %v817, %v1133
  %v1314 = vadd.f32 %v822, %v1138
  %v1315 = vadd.f32 %v825, %v1141
  %v1316 = vadd.f32 %v830, %v1146
  %v1317 = vadd.f32 %v833, %v1149
  %v1318 = vadd.f32 %v838, %v1154
  %v1319 = vadd.f32 %v841, %v1157
  %v1320 = vadd.f32 %v846, %v1162
  %v1321 = vadd.f32 %v849, %v1165
  %v1322 = vadd.f32 %v854, %v1170
  %v1323 = vadd.f32 %v857, %v1173
  %v1324 = vadd.f32 %v862, %v1178
  %v1325 = vadd.f32 %v865, %v1181
  %v1326 = vadd.f32 %v870, %v1186
  %v1327 = vadd.f32 %v873, %v1189
  %v1328 = vadd.f32 %v878, %v1194
  %v1329 = vadd.f32 %v881, %v1197
  %v1330 = vadd.f32 %v886, %v1202
  %v1331 = vadd.f32 %v889, %v1205
  %v1332 = vadd.f32 %v894, %v1210
  %v1333 = vadd.f32 %v897, %v1213
  %v1334 = vadd.f32 %v902, %v1218
  %v1335 = vadd.f32 %v905, %v1221
  %v1336 = vadd.f32 %v910, %v1226
  %v1337 = vadd.f32 %v913, %v1229
  %v1338 = vadd.f32 %v918, %v1234
  %v1339 = vadd.f32 %v921, %v1237
  %v1340 = vadd.f32 %v926, %v1242
  %v1341 = vadd.f32 %v929, %v1245
  %v1342 = vadd.f32 %v934, %v1250
  %v1343 = vadd.f32 %v937, %v1253
  %v1344 = vadd.f32 %v942, %v1258
  %v1345 = vadd.f32 %v945, %v1261
  %v1346 = vadd.f32 %v950, %v1266
  %v1347 = vadd.f32 %v953, %v1269
  %v1348 = vadd.f32 %v958, %v1274
  %v1349 = vadd.f32 %v961, %v1277
  %v1350 = vadd.f32 %v966, %v1282
  %v1351 = vadd.f32 %v969, %v1285
  %v1352 = vld [vmem:[%s2] sm:$0x1]
  %v1353 = vld [vmem:[%s3] sm:$0x1]
  %vm1354 = vcmask 64512
  %v1355 = vsel %vm1354, %v1288, 0.0
  %v1356 = vsel %vm1354, %v1289, 0.0
  %v1357 = vadd.f32 %v1355, %v1356
  %v1358 = vsel %vm1354, %v1290, 0.0
  %v1359 = vadd.f32 %v1357, %v1358
  %v1360 = vsel %vm1354, %v1291, 0.0
  %v1361 = vadd.f32 %v1359, %v1360
  %v1362 = vsel %vm1354, %v1292, 0.0
  %v1363 = vadd.f32 %v1361, %v1362
  %v1364 = vsel %vm1354, %v1293, 0.0
  %v1365 = vadd.f32 %v1363, %v1364
  %v1366 = vsel %vm1354, %v1294, 0.0
  %v1367 = vadd.f32 %v1365, %v1366
  %v1368 = vsel %vm1354, %v1295, 0.0
  %v1369 = vadd.f32 %v1367, %v1368
  %v1370 = vsel %vm1354, %v1296, 0.0
  %v1371 = vadd.f32 %v1369, %v1370
  %v1372 = vsel %vm1354, %v1297, 0.0
  %v1373 = vadd.f32 %v1371, %v1372
  %v1374 = vsel %vm1354, %v1298, 0.0
  %v1375 = vadd.f32 %v1373, %v1374
  %v1376 = vsel %vm1354, %v1299, 0.0
  %v1377 = vadd.f32 %v1375, %v1376
  %v1378 = vsel %vm1354, %v1300, 0.0
  %v1379 = vadd.f32 %v1377, %v1378
  %v1380 = vsel %vm1354, %v1301, 0.0
  %v1381 = vadd.f32 %v1379, %v1380
  %v1382 = vsel %vm1354, %v1302, 0.0
  %v1383 = vadd.f32 %v1381, %v1382
  %v1384 = vsel %vm1354, %v1303, 0.0
  %v1385 = vadd.f32 %v1383, %v1384
  %v1386 = vsel %vm1354, %v1304, 0.0
  %v1387 = vadd.f32 %v1385, %v1386
  %v1388 = vsel %vm1354, %v1305, 0.0
  %v1389 = vadd.f32 %v1387, %v1388
  %v1390 = vsel %vm1354, %v1306, 0.0
  %v1391 = vadd.f32 %v1389, %v1390
  %v1392 = vsel %vm1354, %v1307, 0.0
  %v1393 = vadd.f32 %v1391, %v1392
  %v1394 = vsel %vm1354, %v1308, 0.0
  %v1395 = vadd.f32 %v1393, %v1394
  %v1396 = vsel %vm1354, %v1309, 0.0
  %v1397 = vadd.f32 %v1395, %v1396
  %v1398 = vsel %vm1354, %v1310, 0.0
  %v1399 = vadd.f32 %v1397, %v1398
  %v1400 = vsel %vm1354, %v1311, 0.0
  %v1401 = vadd.f32 %v1399, %v1400
  %v1402 = vsel %vm1354, %v1312, 0.0
  %v1403 = vadd.f32 %v1401, %v1402
  %v1404 = vsel %vm1354, %v1313, 0.0
  %v1405 = vadd.f32 %v1403, %v1404
  %v1406 = vsel %vm1354, %v1314, 0.0
  %v1407 = vadd.f32 %v1405, %v1406
  %v1408 = vsel %vm1354, %v1315, 0.0
  %v1409 = vadd.f32 %v1407, %v1408
  %v1410 = vsel %vm1354, %v1316, 0.0
  %v1411 = vadd.f32 %v1409, %v1410
  %v1412 = vsel %vm1354, %v1317, 0.0
  %v1413 = vadd.f32 %v1411, %v1412
  %v1414 = vsel %vm1354, %v1318, 0.0
  %v1415 = vadd.f32 %v1413, %v1414
  %v1416 = vsel %vm1354, %v1319, 0.0
  %v1417 = vadd.f32 %v1415, %v1416
  %v1418 = vsel %vm1354, %v1320, 0.0
  %v1419 = vadd.f32 %v1417, %v1418
  %v1420 = vsel %vm1354, %v1321, 0.0
  %v1421 = vadd.f32 %v1419, %v1420
  %v1422 = vsel %vm1354, %v1322, 0.0
  %v1423 = vadd.f32 %v1421, %v1422
  %v1424 = vsel %vm1354, %v1323, 0.0
  %v1425 = vadd.f32 %v1423, %v1424
  %v1426 = vsel %vm1354, %v1324, 0.0
  %v1427 = vadd.f32 %v1425, %v1426
  %v1428 = vsel %vm1354, %v1325, 0.0
  %v1429 = vadd.f32 %v1427, %v1428
  %v1430 = vsel %vm1354, %v1326, 0.0
  %v1431 = vadd.f32 %v1429, %v1430
  %v1432 = vsel %vm1354, %v1327, 0.0
  %v1433 = vadd.f32 %v1431, %v1432
  %v1434 = vsel %vm1354, %v1328, 0.0
  %v1435 = vadd.f32 %v1433, %v1434
  %v1436 = vsel %vm1354, %v1329, 0.0
  %v1437 = vadd.f32 %v1435, %v1436
  %v1438 = vsel %vm1354, %v1330, 0.0
  %v1439 = vadd.f32 %v1437, %v1438
  %v1440 = vsel %vm1354, %v1331, 0.0
  %v1441 = vadd.f32 %v1439, %v1440
  %v1442 = vsel %vm1354, %v1332, 0.0
  %v1443 = vadd.f32 %v1441, %v1442
  %v1444 = vsel %vm1354, %v1333, 0.0
  %v1445 = vadd.f32 %v1443, %v1444
  %v1446 = vsel %vm1354, %v1334, 0.0
  %v1447 = vadd.f32 %v1445, %v1446
  %v1448 = vsel %vm1354, %v1335, 0.0
  %v1449 = vadd.f32 %v1447, %v1448
  %v1450 = vsel %vm1354, %v1336, 0.0
  %v1451 = vadd.f32 %v1449, %v1450
  %v1452 = vsel %vm1354, %v1337, 0.0
  %v1453 = vadd.f32 %v1451, %v1452
  %v1454 = vsel %vm1354, %v1338, 0.0
  %v1455 = vadd.f32 %v1453, %v1454
  %v1456 = vsel %vm1354, %v1339, 0.0
  %v1457 = vadd.f32 %v1455, %v1456
  %v1458 = vsel %vm1354, %v1340, 0.0
  %v1459 = vadd.f32 %v1457, %v1458
  %v1460 = vsel %vm1354, %v1341, 0.0
  %v1461 = vadd.f32 %v1459, %v1460
  %v1462 = vsel %vm1354, %v1342, 0.0
  %v1463 = vadd.f32 %v1461, %v1462
  %v1464 = vsel %vm1354, %v1343, 0.0
  %v1465 = vadd.f32 %v1463, %v1464
  %v1466 = vsel %vm1354, %v1344, 0.0
  %v1467 = vadd.f32 %v1465, %v1466
  %v1468 = vsel %vm1354, %v1345, 0.0
  %v1469 = vadd.f32 %v1467, %v1468
  %v1470 = vsel %vm1354, %v1346, 0.0
  %v1471 = vadd.f32 %v1469, %v1470
  %v1472 = vsel %vm1354, %v1347, 0.0
  %v1473 = vadd.f32 %v1471, %v1472
  %v1474 = vsel %vm1354, %v1348, 0.0
  %v1475 = vadd.f32 %v1473, %v1474
  %v1476 = vsel %vm1354, %v1349, 0.0
  %v1477 = vadd.f32 %v1475, %v1476
  %v1478 = vsel %vm1354, %v1350, 0.0
  %v1479 = vadd.f32 %v1477, %v1478
  %v1480 = vsel %vm1354, %v1351, 0.0
  %v1481 = vadd.f32 %v1479, %v1480
  %v1482 = vrot.slane %v1481, 4
  %v1483 = vadd.f32 %v1481, %v1482
  %v1484 = vrot.slane %v1483, 2
  %v1485 = vadd.f32 %v1483, %v1484
  %v1486 = vrot.slane %v1485, 1
  %v1487 = vadd.f32 %v1485, %v1486
  %v1488 = vmul.f32 %v1487, 0.001953125
  %v1489 = vsub.f32 %v1288, %v1488
  %v1490 = vsub.f32 %v1289, %v1488
  %v1491 = vsub.f32 %v1290, %v1488
  %v1492 = vsub.f32 %v1291, %v1488
  %v1493 = vsub.f32 %v1292, %v1488
  %v1494 = vsub.f32 %v1293, %v1488
  %v1495 = vsub.f32 %v1294, %v1488
  %v1496 = vsub.f32 %v1295, %v1488
  %v1497 = vsub.f32 %v1296, %v1488
  %v1498 = vsub.f32 %v1297, %v1488
  %v1499 = vsub.f32 %v1298, %v1488
  %v1500 = vsub.f32 %v1299, %v1488
  %v1501 = vsub.f32 %v1300, %v1488
  %v1502 = vsub.f32 %v1301, %v1488
  %v1503 = vsub.f32 %v1302, %v1488
  %v1504 = vsub.f32 %v1303, %v1488
  %v1505 = vsub.f32 %v1304, %v1488
  %v1506 = vsub.f32 %v1305, %v1488
  %v1507 = vsub.f32 %v1306, %v1488
  %v1508 = vsub.f32 %v1307, %v1488
  %v1509 = vsub.f32 %v1308, %v1488
  %v1510 = vsub.f32 %v1309, %v1488
  %v1511 = vsub.f32 %v1310, %v1488
  %v1512 = vsub.f32 %v1311, %v1488
  %v1513 = vsub.f32 %v1312, %v1488
  %v1514 = vsub.f32 %v1313, %v1488
  %v1515 = vsub.f32 %v1314, %v1488
  %v1516 = vsub.f32 %v1315, %v1488
  %v1517 = vsub.f32 %v1316, %v1488
  %v1518 = vsub.f32 %v1317, %v1488
  %v1519 = vsub.f32 %v1318, %v1488
  %v1520 = vsub.f32 %v1319, %v1488
  %v1521 = vsub.f32 %v1320, %v1488
  %v1522 = vsub.f32 %v1321, %v1488
  %v1523 = vsub.f32 %v1322, %v1488
  %v1524 = vsub.f32 %v1323, %v1488
  %v1525 = vsub.f32 %v1324, %v1488
  %v1526 = vsub.f32 %v1325, %v1488
  %v1527 = vsub.f32 %v1326, %v1488
  %v1528 = vsub.f32 %v1327, %v1488
  %v1529 = vsub.f32 %v1328, %v1488
  %v1530 = vsub.f32 %v1329, %v1488
  %v1531 = vsub.f32 %v1330, %v1488
  %v1532 = vsub.f32 %v1331, %v1488
  %v1533 = vsub.f32 %v1332, %v1488
  %v1534 = vsub.f32 %v1333, %v1488
  %v1535 = vsub.f32 %v1334, %v1488
  %v1536 = vsub.f32 %v1335, %v1488
  %v1537 = vsub.f32 %v1336, %v1488
  %v1538 = vsub.f32 %v1337, %v1488
  %v1539 = vsub.f32 %v1338, %v1488
  %v1540 = vsub.f32 %v1339, %v1488
  %v1541 = vsub.f32 %v1340, %v1488
  %v1542 = vsub.f32 %v1341, %v1488
  %v1543 = vsub.f32 %v1342, %v1488
  %v1544 = vsub.f32 %v1343, %v1488
  %v1545 = vsub.f32 %v1344, %v1488
  %v1546 = vsub.f32 %v1345, %v1488
  %v1547 = vsub.f32 %v1346, %v1488
  %v1548 = vsub.f32 %v1347, %v1488
  %v1549 = vsub.f32 %v1348, %v1488
  %v1550 = vsub.f32 %v1349, %v1488
  %v1551 = vsub.f32 %v1350, %v1488
  %v1552 = vsub.f32 %v1351, %v1488
  %v1553 = vmul.f32 %v1489, %v1489
  %v1554 = vmul.f32 %v1490, %v1490
  %v1555 = vmul.f32 %v1491, %v1491
  %v1556 = vmul.f32 %v1492, %v1492
  %v1557 = vmul.f32 %v1493, %v1493
  %v1558 = vmul.f32 %v1494, %v1494
  %v1559 = vmul.f32 %v1495, %v1495
  %v1560 = vmul.f32 %v1496, %v1496
  %v1561 = vmul.f32 %v1497, %v1497
  %v1562 = vmul.f32 %v1498, %v1498
  %v1563 = vmul.f32 %v1499, %v1499
  %v1564 = vmul.f32 %v1500, %v1500
  %v1565 = vmul.f32 %v1501, %v1501
  %v1566 = vmul.f32 %v1502, %v1502
  %v1567 = vmul.f32 %v1503, %v1503
  %v1568 = vmul.f32 %v1504, %v1504
  %v1569 = vmul.f32 %v1505, %v1505
  %v1570 = vmul.f32 %v1506, %v1506
  %v1571 = vmul.f32 %v1507, %v1507
  %v1572 = vmul.f32 %v1508, %v1508
  %v1573 = vmul.f32 %v1509, %v1509
  %v1574 = vmul.f32 %v1510, %v1510
  %v1575 = vmul.f32 %v1511, %v1511
  %v1576 = vmul.f32 %v1512, %v1512
  %v1577 = vmul.f32 %v1513, %v1513
  %v1578 = vmul.f32 %v1514, %v1514
  %v1579 = vmul.f32 %v1515, %v1515
  %v1580 = vmul.f32 %v1516, %v1516
  %v1581 = vmul.f32 %v1517, %v1517
  %v1582 = vmul.f32 %v1518, %v1518
  %v1583 = vmul.f32 %v1519, %v1519
  %v1584 = vmul.f32 %v1520, %v1520
  %v1585 = vmul.f32 %v1521, %v1521
  %v1586 = vmul.f32 %v1522, %v1522
  %v1587 = vmul.f32 %v1523, %v1523
  %v1588 = vmul.f32 %v1524, %v1524
  %v1589 = vmul.f32 %v1525, %v1525
  %v1590 = vmul.f32 %v1526, %v1526
  %v1591 = vmul.f32 %v1527, %v1527
  %v1592 = vmul.f32 %v1528, %v1528
  %v1593 = vmul.f32 %v1529, %v1529
  %v1594 = vmul.f32 %v1530, %v1530
  %v1595 = vmul.f32 %v1531, %v1531
  %v1596 = vmul.f32 %v1532, %v1532
  %v1597 = vmul.f32 %v1533, %v1533
  %v1598 = vmul.f32 %v1534, %v1534
  %v1599 = vmul.f32 %v1535, %v1535
  %v1600 = vmul.f32 %v1536, %v1536
  %v1601 = vmul.f32 %v1537, %v1537
  %v1602 = vmul.f32 %v1538, %v1538
  %v1603 = vmul.f32 %v1539, %v1539
  %v1604 = vmul.f32 %v1540, %v1540
  %v1605 = vmul.f32 %v1541, %v1541
  %v1606 = vmul.f32 %v1542, %v1542
  %v1607 = vmul.f32 %v1543, %v1543
  %v1608 = vmul.f32 %v1544, %v1544
  %v1609 = vmul.f32 %v1545, %v1545
  %v1610 = vmul.f32 %v1546, %v1546
  %v1611 = vmul.f32 %v1547, %v1547
  %v1612 = vmul.f32 %v1548, %v1548
  %v1613 = vmul.f32 %v1549, %v1549
  %v1614 = vmul.f32 %v1550, %v1550
  %v1615 = vmul.f32 %v1551, %v1551
  %v1616 = vmul.f32 %v1552, %v1552
  %v1617 = vsel %vm1354, %v1553, 0.0
  %v1618 = vsel %vm1354, %v1554, 0.0
  %v1619 = vadd.f32 %v1617, %v1618
  %v1620 = vsel %vm1354, %v1555, 0.0
  %v1621 = vadd.f32 %v1619, %v1620
  %v1622 = vsel %vm1354, %v1556, 0.0
  %v1623 = vadd.f32 %v1621, %v1622
  %v1624 = vsel %vm1354, %v1557, 0.0
  %v1625 = vadd.f32 %v1623, %v1624
  %v1626 = vsel %vm1354, %v1558, 0.0
  %v1627 = vadd.f32 %v1625, %v1626
  %v1628 = vsel %vm1354, %v1559, 0.0
  %v1629 = vadd.f32 %v1627, %v1628
  %v1630 = vsel %vm1354, %v1560, 0.0
  %v1631 = vadd.f32 %v1629, %v1630
  %v1632 = vsel %vm1354, %v1561, 0.0
  %v1633 = vadd.f32 %v1631, %v1632
  %v1634 = vsel %vm1354, %v1562, 0.0
  %v1635 = vadd.f32 %v1633, %v1634
  %v1636 = vsel %vm1354, %v1563, 0.0
  %v1637 = vadd.f32 %v1635, %v1636
  %v1638 = vsel %vm1354, %v1564, 0.0
  %v1639 = vadd.f32 %v1637, %v1638
  %v1640 = vsel %vm1354, %v1565, 0.0
  %v1641 = vadd.f32 %v1639, %v1640
  %v1642 = vsel %vm1354, %v1566, 0.0
  %v1643 = vadd.f32 %v1641, %v1642
  %v1644 = vsel %vm1354, %v1567, 0.0
  %v1645 = vadd.f32 %v1643, %v1644
  %v1646 = vsel %vm1354, %v1568, 0.0
  %v1647 = vadd.f32 %v1645, %v1646
  %v1648 = vsel %vm1354, %v1569, 0.0
  %v1649 = vadd.f32 %v1647, %v1648
  %v1650 = vsel %vm1354, %v1570, 0.0
  %v1651 = vadd.f32 %v1649, %v1650
  %v1652 = vsel %vm1354, %v1571, 0.0
  %v1653 = vadd.f32 %v1651, %v1652
  %v1654 = vsel %vm1354, %v1572, 0.0
  %v1655 = vadd.f32 %v1653, %v1654
  %v1656 = vsel %vm1354, %v1573, 0.0
  %v1657 = vadd.f32 %v1655, %v1656
  %v1658 = vsel %vm1354, %v1574, 0.0
  %v1659 = vadd.f32 %v1657, %v1658
  %v1660 = vsel %vm1354, %v1575, 0.0
  %v1661 = vadd.f32 %v1659, %v1660
  %v1662 = vsel %vm1354, %v1576, 0.0
  %v1663 = vadd.f32 %v1661, %v1662
  %v1664 = vsel %vm1354, %v1577, 0.0
  %v1665 = vadd.f32 %v1663, %v1664
  %v1666 = vsel %vm1354, %v1578, 0.0
  %v1667 = vadd.f32 %v1665, %v1666
  %v1668 = vsel %vm1354, %v1579, 0.0
  %v1669 = vadd.f32 %v1667, %v1668
  %v1670 = vsel %vm1354, %v1580, 0.0
  %v1671 = vadd.f32 %v1669, %v1670
  %v1672 = vsel %vm1354, %v1581, 0.0
  %v1673 = vadd.f32 %v1671, %v1672
  %v1674 = vsel %vm1354, %v1582, 0.0
  %v1675 = vadd.f32 %v1673, %v1674
  %v1676 = vsel %vm1354, %v1583, 0.0
  %v1677 = vadd.f32 %v1675, %v1676
  %v1678 = vsel %vm1354, %v1584, 0.0
  %v1679 = vadd.f32 %v1677, %v1678
  %v1680 = vsel %vm1354, %v1585, 0.0
  %v1681 = vadd.f32 %v1679, %v1680
  %v1682 = vsel %vm1354, %v1586, 0.0
  %v1683 = vadd.f32 %v1681, %v1682
  %v1684 = vsel %vm1354, %v1587, 0.0
  %v1685 = vadd.f32 %v1683, %v1684
  %v1686 = vsel %vm1354, %v1588, 0.0
  %v1687 = vadd.f32 %v1685, %v1686
  %v1688 = vsel %vm1354, %v1589, 0.0
  %v1689 = vadd.f32 %v1687, %v1688
  %v1690 = vsel %vm1354, %v1590, 0.0
  %v1691 = vadd.f32 %v1689, %v1690
  %v1692 = vsel %vm1354, %v1591, 0.0
  %v1693 = vadd.f32 %v1691, %v1692
  %v1694 = vsel %vm1354, %v1592, 0.0
  %v1695 = vadd.f32 %v1693, %v1694
  %v1696 = vsel %vm1354, %v1593, 0.0
  %v1697 = vadd.f32 %v1695, %v1696
  %v1698 = vsel %vm1354, %v1594, 0.0
  %v1699 = vadd.f32 %v1697, %v1698
  %v1700 = vsel %vm1354, %v1595, 0.0
  %v1701 = vadd.f32 %v1699, %v1700
  %v1702 = vsel %vm1354, %v1596, 0.0
  %v1703 = vadd.f32 %v1701, %v1702
  %v1704 = vsel %vm1354, %v1597, 0.0
  %v1705 = vadd.f32 %v1703, %v1704
  %v1706 = vsel %vm1354, %v1598, 0.0
  %v1707 = vadd.f32 %v1705, %v1706
  %v1708 = vsel %vm1354, %v1599, 0.0
  %v1709 = vadd.f32 %v1707, %v1708
  %v1710 = vsel %vm1354, %v1600, 0.0
  %v1711 = vadd.f32 %v1709, %v1710
  %v1712 = vsel %vm1354, %v1601, 0.0
  %v1713 = vadd.f32 %v1711, %v1712
  %v1714 = vsel %vm1354, %v1602, 0.0
  %v1715 = vadd.f32 %v1713, %v1714
  %v1716 = vsel %vm1354, %v1603, 0.0
  %v1717 = vadd.f32 %v1715, %v1716
  %v1718 = vsel %vm1354, %v1604, 0.0
  %v1719 = vadd.f32 %v1717, %v1718
  %v1720 = vsel %vm1354, %v1605, 0.0
  %v1721 = vadd.f32 %v1719, %v1720
  %v1722 = vsel %vm1354, %v1606, 0.0
  %v1723 = vadd.f32 %v1721, %v1722
  %v1724 = vsel %vm1354, %v1607, 0.0
  %v1725 = vadd.f32 %v1723, %v1724
  %v1726 = vsel %vm1354, %v1608, 0.0
  %v1727 = vadd.f32 %v1725, %v1726
  %v1728 = vsel %vm1354, %v1609, 0.0
  %v1729 = vadd.f32 %v1727, %v1728
  %v1730 = vsel %vm1354, %v1610, 0.0
  %v1731 = vadd.f32 %v1729, %v1730
  %v1732 = vsel %vm1354, %v1611, 0.0
  %v1733 = vadd.f32 %v1731, %v1732
  %v1734 = vsel %vm1354, %v1612, 0.0
  %v1735 = vadd.f32 %v1733, %v1734
  %v1736 = vsel %vm1354, %v1613, 0.0
  %v1737 = vadd.f32 %v1735, %v1736
  %v1738 = vsel %vm1354, %v1614, 0.0
  %v1739 = vadd.f32 %v1737, %v1738
  %v1740 = vsel %vm1354, %v1615, 0.0
  %v1741 = vadd.f32 %v1739, %v1740
  %v1742 = vsel %vm1354, %v1616, 0.0
  %v1743 = vadd.f32 %v1741, %v1742
  %v1744 = vrot.slane %v1743, 4
  %v1745 = vadd.f32 %v1743, %v1744
  %v1746 = vrot.slane %v1745, 2
  %v1747 = vadd.f32 %v1745, %v1746
  %v1748 = vrot.slane %v1747, 1
  %v1749 = vadd.f32 %v1747, %v1748
  %v1750 = vmul.f32 %v1749, 0.001953125
  %v1751 = vadd.f32 %v1750, 1e-05
  %v1752 = vrsqrt.pop %v1751
  %v1753 = vmul.f32 %v1352, %v1752
  %v1755 = vlaneseq
  %v1756 = vshrl.u32 %v1755, 7
  %v1757 = vsub.s32 0, %v1756
  %v1758 = vrot.slane %v1753, %v1757
  %v1760 = vmul.f32 %v1489, %v1758
  %v1761 = vmul.f32 %v1490, %v1758
  %v1762 = vmul.f32 %v1491, %v1758
  %v1763 = vmul.f32 %v1492, %v1758
  %v1764 = vmul.f32 %v1493, %v1758
  %v1765 = vmul.f32 %v1494, %v1758
  %v1766 = vmul.f32 %v1495, %v1758
  %v1767 = vmul.f32 %v1496, %v1758
  %v1768 = vmul.f32 %v1497, %v1758
  %v1769 = vmul.f32 %v1498, %v1758
  %v1770 = vmul.f32 %v1499, %v1758
  %v1771 = vmul.f32 %v1500, %v1758
  %v1772 = vmul.f32 %v1501, %v1758
  %v1773 = vmul.f32 %v1502, %v1758
  %v1774 = vmul.f32 %v1503, %v1758
  %v1775 = vmul.f32 %v1504, %v1758
  %v1776 = vmul.f32 %v1505, %v1758
  %v1777 = vmul.f32 %v1506, %v1758
  %v1778 = vmul.f32 %v1507, %v1758
  %v1779 = vmul.f32 %v1508, %v1758
  %v1780 = vmul.f32 %v1509, %v1758
  %v1781 = vmul.f32 %v1510, %v1758
  %v1782 = vmul.f32 %v1511, %v1758
  %v1783 = vmul.f32 %v1512, %v1758
  %v1784 = vmul.f32 %v1513, %v1758
  %v1785 = vmul.f32 %v1514, %v1758
  %v1786 = vmul.f32 %v1515, %v1758
  %v1787 = vmul.f32 %v1516, %v1758
  %v1788 = vmul.f32 %v1517, %v1758
  %v1789 = vmul.f32 %v1518, %v1758
  %v1790 = vmul.f32 %v1519, %v1758
  %v1791 = vmul.f32 %v1520, %v1758
  %v1792 = vmul.f32 %v1521, %v1758
  %v1793 = vmul.f32 %v1522, %v1758
  %v1794 = vmul.f32 %v1523, %v1758
  %v1795 = vmul.f32 %v1524, %v1758
  %v1796 = vmul.f32 %v1525, %v1758
  %v1797 = vmul.f32 %v1526, %v1758
  %v1798 = vmul.f32 %v1527, %v1758
  %v1799 = vmul.f32 %v1528, %v1758
  %v1800 = vmul.f32 %v1529, %v1758
  %v1801 = vmul.f32 %v1530, %v1758
  %v1802 = vmul.f32 %v1531, %v1758
  %v1803 = vmul.f32 %v1532, %v1758
  %v1804 = vmul.f32 %v1533, %v1758
  %v1805 = vmul.f32 %v1534, %v1758
  %v1806 = vmul.f32 %v1535, %v1758
  %v1807 = vmul.f32 %v1536, %v1758
  %v1808 = vmul.f32 %v1537, %v1758
  %v1809 = vmul.f32 %v1538, %v1758
  %v1810 = vmul.f32 %v1539, %v1758
  %v1811 = vmul.f32 %v1540, %v1758
  %v1812 = vmul.f32 %v1541, %v1758
  %v1813 = vmul.f32 %v1542, %v1758
  %v1814 = vmul.f32 %v1543, %v1758
  %v1815 = vmul.f32 %v1544, %v1758
  %v1816 = vmul.f32 %v1545, %v1758
  %v1817 = vmul.f32 %v1546, %v1758
  %v1818 = vmul.f32 %v1547, %v1758
  %v1819 = vmul.f32 %v1548, %v1758
  %v1820 = vmul.f32 %v1549, %v1758
  %v1821 = vmul.f32 %v1550, %v1758
  %v1822 = vmul.f32 %v1551, %v1758
  %v1823 = vmul.f32 %v1552, %v1758
  %v1825 = vlaneseq
  %v1826 = vshrl.u32 %v1825, 7
  %v1827 = vsub.s32 0, %v1826
  %v1828 = vrot.slane %v1353, %v1827
  %v1830 = vadd.f32 %v1760, %v1828
  %v1831 = vadd.f32 %v1761, %v1828
  %v1832 = vadd.f32 %v1762, %v1828
  %v1833 = vadd.f32 %v1763, %v1828
  %v1834 = vadd.f32 %v1764, %v1828
  %v1835 = vadd.f32 %v1765, %v1828
  %v1836 = vadd.f32 %v1766, %v1828
  %v1837 = vadd.f32 %v1767, %v1828
  %v1838 = vadd.f32 %v1768, %v1828
  %v1839 = vadd.f32 %v1769, %v1828
  %v1840 = vadd.f32 %v1770, %v1828
  %v1841 = vadd.f32 %v1771, %v1828
  %v1842 = vadd.f32 %v1772, %v1828
  %v1843 = vadd.f32 %v1773, %v1828
  %v1844 = vadd.f32 %v1774, %v1828
  %v1845 = vadd.f32 %v1775, %v1828
  %v1846 = vadd.f32 %v1776, %v1828
  %v1847 = vadd.f32 %v1777, %v1828
  %v1848 = vadd.f32 %v1778, %v1828
  %v1849 = vadd.f32 %v1779, %v1828
  %v1850 = vadd.f32 %v1780, %v1828
  %v1851 = vadd.f32 %v1781, %v1828
  %v1852 = vadd.f32 %v1782, %v1828
  %v1853 = vadd.f32 %v1783, %v1828
  %v1854 = vadd.f32 %v1784, %v1828
  %v1855 = vadd.f32 %v1785, %v1828
  %v1856 = vadd.f32 %v1786, %v1828
  %v1857 = vadd.f32 %v1787, %v1828
  %v1858 = vadd.f32 %v1788, %v1828
  %v1859 = vadd.f32 %v1789, %v1828
  %v1860 = vadd.f32 %v1790, %v1828
  %v1861 = vadd.f32 %v1791, %v1828
  %v1862 = vadd.f32 %v1792, %v1828
  %v1863 = vadd.f32 %v1793, %v1828
  %v1864 = vadd.f32 %v1794, %v1828
  %v1865 = vadd.f32 %v1795, %v1828
  %v1866 = vadd.f32 %v1796, %v1828
  %v1867 = vadd.f32 %v1797, %v1828
  %v1868 = vadd.f32 %v1798, %v1828
  %v1869 = vadd.f32 %v1799, %v1828
  %v1870 = vadd.f32 %v1800, %v1828
  %v1871 = vadd.f32 %v1801, %v1828
  %v1872 = vadd.f32 %v1802, %v1828
  %v1873 = vadd.f32 %v1803, %v1828
  %v1874 = vadd.f32 %v1804, %v1828
  %v1875 = vadd.f32 %v1805, %v1828
  %v1876 = vadd.f32 %v1806, %v1828
  %v1877 = vadd.f32 %v1807, %v1828
  %v1878 = vadd.f32 %v1808, %v1828
  %v1879 = vadd.f32 %v1809, %v1828
  %v1880 = vadd.f32 %v1810, %v1828
  %v1881 = vadd.f32 %v1811, %v1828
  %v1882 = vadd.f32 %v1812, %v1828
  %v1883 = vadd.f32 %v1813, %v1828
  %v1884 = vadd.f32 %v1814, %v1828
  %v1885 = vadd.f32 %v1815, %v1828
  %v1886 = vadd.f32 %v1816, %v1828
  %v1887 = vadd.f32 %v1817, %v1828
  %v1888 = vadd.f32 %v1818, %v1828
  %v1889 = vadd.f32 %v1819, %v1828
  %v1890 = vadd.f32 %v1820, %v1828
  %v1891 = vadd.f32 %v1821, %v1828
  %v1892 = vadd.f32 %v1822, %v1828
  %v1893 = vadd.f32 %v1823, %v1828
  %v1894 = vmax.f32 %v1830, 0.0
  %v1895 = vmax.f32 %v1831, 0.0
  %v1896 = vmax.f32 %v1832, 0.0
  %v1897 = vmax.f32 %v1833, 0.0
  %v1898 = vmax.f32 %v1834, 0.0
  %v1899 = vmax.f32 %v1835, 0.0
  %v1900 = vmax.f32 %v1836, 0.0
  %v1901 = vmax.f32 %v1837, 0.0
  %v1902 = vmax.f32 %v1838, 0.0
  %v1903 = vmax.f32 %v1839, 0.0
  %v1904 = vmax.f32 %v1840, 0.0
  %v1905 = vmax.f32 %v1841, 0.0
  %v1906 = vmax.f32 %v1842, 0.0
  %v1907 = vmax.f32 %v1843, 0.0
  %v1908 = vmax.f32 %v1844, 0.0
  %v1909 = vmax.f32 %v1845, 0.0
  %v1910 = vmax.f32 %v1846, 0.0
  %v1911 = vmax.f32 %v1847, 0.0
  %v1912 = vmax.f32 %v1848, 0.0
  %v1913 = vmax.f32 %v1849, 0.0
  %v1914 = vmax.f32 %v1850, 0.0
  %v1915 = vmax.f32 %v1851, 0.0
  %v1916 = vmax.f32 %v1852, 0.0
  %v1917 = vmax.f32 %v1853, 0.0
  %v1918 = vmax.f32 %v1854, 0.0
  %v1919 = vmax.f32 %v1855, 0.0
  %v1920 = vmax.f32 %v1856, 0.0
  %v1921 = vmax.f32 %v1857, 0.0
  %v1922 = vmax.f32 %v1858, 0.0
  %v1923 = vmax.f32 %v1859, 0.0
  %v1924 = vmax.f32 %v1860, 0.0
  %v1925 = vmax.f32 %v1861, 0.0
  %v1926 = vmax.f32 %v1862, 0.0
  %v1927 = vmax.f32 %v1863, 0.0
  %v1928 = vmax.f32 %v1864, 0.0
  %v1929 = vmax.f32 %v1865, 0.0
  %v1930 = vmax.f32 %v1866, 0.0
  %v1931 = vmax.f32 %v1867, 0.0
  %v1932 = vmax.f32 %v1868, 0.0
  %v1933 = vmax.f32 %v1869, 0.0
  %v1934 = vmax.f32 %v1870, 0.0
  %v1935 = vmax.f32 %v1871, 0.0
  %v1936 = vmax.f32 %v1872, 0.0
  %v1937 = vmax.f32 %v1873, 0.0
  %v1938 = vmax.f32 %v1874, 0.0
  %v1939 = vmax.f32 %v1875, 0.0
  %v1940 = vmax.f32 %v1876, 0.0
  %v1941 = vmax.f32 %v1877, 0.0
  %v1942 = vmax.f32 %v1878, 0.0
  %v1943 = vmax.f32 %v1879, 0.0
  %v1944 = vmax.f32 %v1880, 0.0
  %v1945 = vmax.f32 %v1881, 0.0
  %v1946 = vmax.f32 %v1882, 0.0
  %v1947 = vmax.f32 %v1883, 0.0
  %v1948 = vmax.f32 %v1884, 0.0
  %v1949 = vmax.f32 %v1885, 0.0
  %v1950 = vmax.f32 %v1886, 0.0
  %v1951 = vmax.f32 %v1887, 0.0
  %v1952 = vmax.f32 %v1888, 0.0
  %v1953 = vmax.f32 %v1889, 0.0
  %v1954 = vmax.f32 %v1890, 0.0
  %v1955 = vmax.f32 %v1891, 0.0
  %v1956 = vmax.f32 %v1892, 0.0
  %v1957 = vmax.f32 %v1893, 0.0
  %1958 = vst.msk [vmem:[#allocation2] sm:$0xff] %vm1354, 0.0
  %1959 = vst.msk [vmem:[#allocation2 + $0x8] sm:$0xff] %vm1354, 0.0
  %vm1960 = vcmask 58368
  %1961 = vst.msk [vmem:[#allocation2 + $0x10] sm:$0x3] %vm1960, 0.0
  %1962 = vst.msk [vmem:[#allocation2 + $0x18] sm:$0xff] %vm1354, 0.0
  %1963 = vst.msk [vmem:[#allocation2 + $0x20] sm:$0xff] %vm1354, 0.0
  %1964 = vst.msk [vmem:[#allocation2 + $0x28] sm:$0x3] %vm1960, 0.0
  %1965 = vst.msk [vmem:[#allocation2 + $0x30] sm:$0xff] %vm1354, 0.0
  %1966 = vst.msk [vmem:[#allocation2 + $0x38] sm:$0xff] %vm1354, 0.0
  %1967 = vst.msk [vmem:[#allocation2 + $0x40] sm:$0x3] %vm1960, 0.0
  %1968 = vst.msk [vmem:[#allocation2 + $0x48] sm:$0xff] %vm1354, 0.0
  %1969 = vst.msk [vmem:[#allocation2 + $0x50] sm:$0xff] %vm1354, 0.0
  %1970 = vst.msk [vmem:[#allocation2 + $0x58] sm:$0x3] %vm1960, 0.0
  %1971 = vst.msk [vmem:[#allocation2 + $0x60] sm:$0xff] %vm1354, 0.0
  %1972 = vst.msk [vmem:[#allocation2 + $0x68] sm:$0xff] %vm1354, 0.0
  %1973 = vst.msk [vmem:[#allocation2 + $0x70] sm:$0x3] %vm1960, 0.0
  %1974 = vst.msk [vmem:[#allocation2 + $0x78] sm:$0xff] %vm1354, 0.0
  %1975 = vst.msk [vmem:[#allocation2 + $0x80] sm:$0xff] %vm1354, 0.0
  %1976 = vst.msk [vmem:[#allocation2 + $0x88] sm:$0x3] %vm1960, 0.0
  %1977 = vst.msk [vmem:[#allocation2 + $0x90] sm:$0xff] %vm1354, 0.0
  %1978 = vst.msk [vmem:[#allocation2 + $0x98] sm:$0xff] %vm1354, 0.0
  %1979 = vst.msk [vmem:[#allocation2 + $0xa0] sm:$0x3] %vm1960, 0.0
  %1980 = vst.msk [vmem:[#allocation2 + $0xa8] sm:$0xff] %vm1354, 0.0
  %1981 = vst.msk [vmem:[#allocation2 + $0xb0] sm:$0xff] %vm1354, 0.0
  %1982 = vst.msk [vmem:[#allocation2 + $0xb8] sm:$0x3] %vm1960, 0.0
  %1983 = vst.msk [vmem:[#allocation2 + $0xc0] sm:$0xff] %vm1354, 0.0
  %1984 = vst.msk [vmem:[#allocation2 + $0xc8] sm:$0xff] %vm1354, 0.0
  %1985 = vst.msk [vmem:[#allocation2 + $0xd0] sm:$0x3] %vm1960, 0.0
  %1986 = vst.msk [vmem:[#allocation2 + $0xd8] sm:$0xff] %vm1354, 0.0
  %1987 = vst.msk [vmem:[#allocation2 + $0xe0] sm:$0xff] %vm1354, 0.0
  %1988 = vst.msk [vmem:[#allocation2 + $0xe8] sm:$0x3] %vm1960, 0.0
  %1989 = vst.msk [vmem:[#allocation2 + $0xf0] sm:$0xff] %vm1354, 0.0
  %1990 = vst.msk [vmem:[#allocation2 + $0xf8] sm:$0xff] %vm1354, 0.0
  %1991 = vst.msk [vmem:[#allocation2 + $0x100] sm:$0x3] %vm1960, 0.0
  %1992 = vst.msk [vmem:[#allocation2 + $0x108] sm:$0xff] %vm1354, 0.0
  %1993 = vst.msk [vmem:[#allocation2 + $0x110] sm:$0xff] %vm1354, 0.0
  %1994 = vst.msk [vmem:[#allocation2 + $0x118] sm:$0x3] %vm1960, 0.0
  %1995 = vst.msk [vmem:[#allocation2 + $0x120] sm:$0xff] %vm1354, 0.0
  %1996 = vst.msk [vmem:[#allocation2 + $0x128] sm:$0xff] %vm1354, 0.0
  %1997 = vst.msk [vmem:[#allocation2 + $0x130] sm:$0x3] %vm1960, 0.0
  %1998 = vst.msk [vmem:[#allocation2 + $0x138] sm:$0xff] %vm1354, 0.0
  %1999 = vst.msk [vmem:[#allocation2 + $0x140] sm:$0xff] %vm1354, 0.0
  %2000 = vst.msk [vmem:[#allocation2 + $0x148] sm:$0x3] %vm1960, 0.0
  %2001 = vst.msk [vmem:[#allocation2 + $0x150] sm:$0xff] %vm1354, 0.0
  %2002 = vst.msk [vmem:[#allocation2 + $0x158] sm:$0xff] %vm1354, 0.0
  %2003 = vst.msk [vmem:[#allocation2 + $0x160] sm:$0x3] %vm1960, 0.0
  %2004 = vst.msk [vmem:[#allocation2 + $0x168] sm:$0xff] %vm1354, 0.0
  %2005 = vst.msk [vmem:[#allocation2 + $0x170] sm:$0xff] %vm1354, 0.0
  %2006 = vst.msk [vmem:[#allocation2 + $0x178] sm:$0x3] %vm1960, 0.0
  %2007 = vst.msk [vmem:[#allocation2 + $0x180] sm:$0xff] %vm1354, 0.0
  %2008 = vst.msk [vmem:[#allocation2 + $0x188] sm:$0xff] %vm1354, 0.0
  %2009 = vst.msk [vmem:[#allocation2 + $0x190] sm:$0x3] %vm1960, 0.0
  %2010 = vst.msk [vmem:[#allocation2 + $0x198] sm:$0xff] %vm1354, 0.0
  %2011 = vst.msk [vmem:[#allocation2 + $0x1a0] sm:$0xff] %vm1354, 0.0
  %2012 = vst.msk [vmem:[#allocation2 + $0x1a8] sm:$0x3] %vm1960, 0.0
  %2013 = vst.msk [vmem:[#allocation2 + $0x1b0] sm:$0xff] %vm1354, 0.0
  %2014 = vst.msk [vmem:[#allocation2 + $0x1b8] sm:$0xff] %vm1354, 0.0
  %2015 = vst.msk [vmem:[#allocation2 + $0x1c0] sm:$0x3] %vm1960, 0.0
  %2016 = vst.msk [vmem:[#allocation2 + $0x1c8] sm:$0xff] %vm1354, 0.0
  %2017 = vst.msk [vmem:[#allocation2 + $0x1d0] sm:$0xff] %vm1354, 0.0
  %2018 = vst.msk [vmem:[#allocation2 + $0x1d8] sm:$0x3] %vm1960, 0.0
  %2019 = vst.msk [vmem:[#allocation2 + $0x1e0] sm:$0xff] %vm1354, 0.0
  %2020 = vst.msk [vmem:[#allocation2 + $0x1e8] sm:$0xff] %vm1354, 0.0
  %2021 = vst.msk [vmem:[#allocation2 + $0x1f0] sm:$0x3] %vm1960, 0.0
  %2022 = vst.msk [vmem:[#allocation2 + $0x1f8] sm:$0xff] %vm1354, 0.0
  %2023 = vst.msk [vmem:[#allocation2 + $0x200] sm:$0xff] %vm1354, 0.0
  %2024 = vst.msk [vmem:[#allocation2 + $0x208] sm:$0x3] %vm1960, 0.0
  %2025 = vst.msk [vmem:[#allocation2 + $0x210] sm:$0xff] %vm1354, 0.0
  %2026 = vst.msk [vmem:[#allocation2 + $0x218] sm:$0xff] %vm1354, 0.0
  %2027 = vst.msk [vmem:[#allocation2 + $0x220] sm:$0x3] %vm1960, 0.0
  %2028 = vst.msk [vmem:[#allocation2 + $0x228] sm:$0xff] %vm1354, 0.0
  %2029 = vst.msk [vmem:[#allocation2 + $0x230] sm:$0xff] %vm1354, 0.0
  %2030 = vst.msk [vmem:[#allocation2 + $0x238] sm:$0x3] %vm1960, 0.0
  %2031 = vst.msk [vmem:[#allocation2 + $0x240] sm:$0xff] %vm1354, 0.0
  %2032 = vst.msk [vmem:[#allocation2 + $0x248] sm:$0xff] %vm1354, 0.0
  %2033 = vst.msk [vmem:[#allocation2 + $0x250] sm:$0x3] %vm1960, 0.0
  %2034 = vst.msk [vmem:[#allocation2 + $0x258] sm:$0xff] %vm1354, 0.0
  %2035 = vst.msk [vmem:[#allocation2 + $0x260] sm:$0xff] %vm1354, 0.0
  %2036 = vst.msk [vmem:[#allocation2 + $0x268] sm:$0x3] %vm1960, 0.0
  %2037 = vst.msk [vmem:[#allocation2 + $0x270] sm:$0xff] %vm1354, 0.0
  %2038 = vst.msk [vmem:[#allocation2 + $0x278] sm:$0xff] %vm1354, 0.0
  %2039 = vst.msk [vmem:[#allocation2 + $0x280] sm:$0x3] %vm1960, 0.0
  %2040 = vst.msk [vmem:[#allocation2 + $0x288] sm:$0xff] %vm1354, 0.0
  %2041 = vst.msk [vmem:[#allocation2 + $0x290] sm:$0xff] %vm1354, 0.0
  %2042 = vst.msk [vmem:[#allocation2 + $0x298] sm:$0x3] %vm1960, 0.0
  %2043 = vst.msk [vmem:[#allocation2 + $0x2a0] sm:$0xff] %vm1354, 0.0
  %2044 = vst.msk [vmem:[#allocation2 + $0x2a8] sm:$0xff] %vm1354, 0.0
  %2045 = vst.msk [vmem:[#allocation2 + $0x2b0] sm:$0x3] %vm1960, 0.0
  %2046 = vst.msk [vmem:[#allocation2 + $0x2b8] sm:$0xff] %vm1354, 0.0
  %2047 = vst.msk [vmem:[#allocation2 + $0x2c0] sm:$0xff] %vm1354, 0.0
  %2048 = vst.msk [vmem:[#allocation2 + $0x2c8] sm:$0x3] %vm1960, 0.0
  %2049 = vst.msk [vmem:[#allocation2 + $0x2d0] sm:$0xff] %vm1354, 0.0
  %2050 = vst.msk [vmem:[#allocation2 + $0x2d8] sm:$0xff] %vm1354, 0.0
  %2051 = vst.msk [vmem:[#allocation2 + $0x2e0] sm:$0x3] %vm1960, 0.0
  %2052 = vst.msk [vmem:[#allocation2 + $0x2e8] sm:$0xff] %vm1354, 0.0
  %2053 = vst.msk [vmem:[#allocation2 + $0x2f0] sm:$0xff] %vm1354, 0.0
  %2054 = vst.msk [vmem:[#allocation2 + $0x2f8] sm:$0x3] %vm1960, 0.0
  %2055 = vst.msk [vmem:[#allocation2 + $0x300] sm:$0xff] %vm1354, 0.0
  %2056 = vst.msk [vmem:[#allocation2 + $0x308] sm:$0xff] %vm1354, 0.0
  %2057 = vst.msk [vmem:[#allocation2 + $0x310] sm:$0x3] %vm1960, 0.0
  %2058 = vst.msk [vmem:[#allocation2 + $0x318] sm:$0xff] %vm1354, 0.0
  %2059 = vst.msk [vmem:[#allocation2 + $0x320] sm:$0xff] %vm1354, 0.0
  %2060 = vst.msk [vmem:[#allocation2 + $0x328] sm:$0x3] %vm1960, 0.0
  %2061 = vst.msk [vmem:[#allocation2 + $0x330] sm:$0xff] %vm1354, 0.0
  %2062 = vst.msk [vmem:[#allocation2 + $0x338] sm:$0xff] %vm1354, 0.0
  %2063 = vst.msk [vmem:[#allocation2 + $0x340] sm:$0x3] %vm1960, 0.0
  %2064 = vst.msk [vmem:[#allocation2 + $0x348] sm:$0xff] %vm1354, 0.0
  %2065 = vst.msk [vmem:[#allocation2 + $0x350] sm:$0xff] %vm1354, 0.0
  %2066 = vst.msk [vmem:[#allocation2 + $0x358] sm:$0x3] %vm1960, 0.0
  %s2067 = scalar_lea.vmem [#allocation2], 24
  %2068 = vst.msk [vmem:[%s2067 + $0x1] sm:$0xff] %vm1354, %v1894
  %2069 = vst.msk [vmem:[%s2067 + $0x9] sm:$0xff] %vm1354, %v1895
  %2070 = vst.msk [vmem:[%s2067 + $0x19] sm:$0xff] %vm1354, %v1896
  %2071 = vst.msk [vmem:[%s2067 + $0x21] sm:$0xff] %vm1354, %v1897
  %2072 = vst.msk [vmem:[%s2067 + $0x31] sm:$0xff] %vm1354, %v1898
  %2073 = vst.msk [vmem:[%s2067 + $0x39] sm:$0xff] %vm1354, %v1899
  %2074 = vst.msk [vmem:[%s2067 + $0x49] sm:$0xff] %vm1354, %v1900
  %2075 = vst.msk [vmem:[%s2067 + $0x51] sm:$0xff] %vm1354, %v1901
  %2076 = vst.msk [vmem:[%s2067 + $0x61] sm:$0xff] %vm1354, %v1902
  %2077 = vst.msk [vmem:[%s2067 + $0x69] sm:$0xff] %vm1354, %v1903
  %2078 = vst.msk [vmem:[%s2067 + $0x79] sm:$0xff] %vm1354, %v1904
  %2079 = vst.msk [vmem:[%s2067 + $0x81] sm:$0xff] %vm1354, %v1905
  %2080 = vst.msk [vmem:[%s2067 + $0x91] sm:$0xff] %vm1354, %v1906
  %2081 = vst.msk [vmem:[%s2067 + $0x99] sm:$0xff] %vm1354, %v1907
  %2082 = vst.msk [vmem:[%s2067 + $0xa9] sm:$0xff] %vm1354, %v1908
  %2083 = vst.msk [vmem:[%s2067 + $0xb1] sm:$0xff] %vm1354, %v1909
  %2084 = vst.msk [vmem:[%s2067 + $0xc1] sm:$0xff] %vm1354, %v1910
  %2085 = vst.msk [vmem:[%s2067 + $0xc9] sm:$0xff] %vm1354, %v1911
  %2086 = vst.msk [vmem:[%s2067 + $0xd9] sm:$0xff] %vm1354, %v1912
  %2087 = vst.msk [vmem:[%s2067 + $0xe1] sm:$0xff] %vm1354, %v1913
  %2088 = vst.msk [vmem:[%s2067 + $0xf1] sm:$0xff] %vm1354, %v1914
  %2089 = vst.msk [vmem:[%s2067 + $0xf9] sm:$0xff] %vm1354, %v1915
  %2090 = vst.msk [vmem:[%s2067 + $0x109] sm:$0xff] %vm1354, %v1916
  %2091 = vst.msk [vmem:[%s2067 + $0x111] sm:$0xff] %vm1354, %v1917
  %2092 = vst.msk [vmem:[%s2067 + $0x121] sm:$0xff] %vm1354, %v1918
  %2093 = vst.msk [vmem:[%s2067 + $0x129] sm:$0xff] %vm1354, %v1919
  %2094 = vst.msk [vmem:[%s2067 + $0x139] sm:$0xff] %vm1354, %v1920
  %2095 = vst.msk [vmem:[%s2067 + $0x141] sm:$0xff] %vm1354, %v1921
  %2096 = vst.msk [vmem:[%s2067 + $0x151] sm:$0xff] %vm1354, %v1922
  %2097 = vst.msk [vmem:[%s2067 + $0x159] sm:$0xff] %vm1354, %v1923
  %2098 = vst.msk [vmem:[%s2067 + $0x169] sm:$0xff] %vm1354, %v1924
  %2099 = vst.msk [vmem:[%s2067 + $0x171] sm:$0xff] %vm1354, %v1925
  %2100 = vst.msk [vmem:[%s2067 + $0x1b1] sm:$0xff] %vm1354, %v1926
  %2101 = vst.msk [vmem:[%s2067 + $0x1b9] sm:$0xff] %vm1354, %v1927
  %2102 = vst.msk [vmem:[%s2067 + $0x1c9] sm:$0xff] %vm1354, %v1928
  %2103 = vst.msk [vmem:[%s2067 + $0x1d1] sm:$0xff] %vm1354, %v1929
  %2104 = vst.msk [vmem:[%s2067 + $0x1e1] sm:$0xff] %vm1354, %v1930
  %2105 = vst.msk [vmem:[%s2067 + $0x1e9] sm:$0xff] %vm1354, %v1931
  %2106 = vst.msk [vmem:[%s2067 + $0x1f9] sm:$0xff] %vm1354, %v1932
  %2107 = vst.msk [vmem:[%s2067 + $0x201] sm:$0xff] %vm1354, %v1933
  %2108 = vst.msk [vmem:[%s2067 + $0x211] sm:$0xff] %vm1354, %v1934
  %2109 = vst.msk [vmem:[%s2067 + $0x219] sm:$0xff] %vm1354, %v1935
  %2110 = vst.msk [vmem:[%s2067 + $0x229] sm:$0xff] %vm1354, %v1936
  %2111 = vst.msk [vmem:[%s2067 + $0x231] sm:$0xff] %vm1354, %v1937
  %2112 = vst.msk [vmem:[%s2067 + $0x241] sm:$0xff] %vm1354, %v1938
  %2113 = vst.msk [vmem:[%s2067 + $0x249] sm:$0xff] %vm1354, %v1939
  %2114 = vst.msk [vmem:[%s2067 + $0x259] sm:$0xff] %vm1354, %v1940
  %2115 = vst.msk [vmem:[%s2067 + $0x261] sm:$0xff] %vm1354, %v1941
  %2116 = vst.msk [vmem:[%s2067 + $0x271] sm:$0xff] %vm1354, %v1942
  %2117 = vst.msk [vmem:[%s2067 + $0x279] sm:$0xff] %vm1354, %v1943
  %2118 = vst.msk [vmem:[%s2067 + $0x289] sm:$0xff] %vm1354, %v1944
  %2119 = vst.msk [vmem:[%s2067 + $0x291] sm:$0xff] %vm1354, %v1945
  %2120 = vst.msk [vmem:[%s2067 + $0x2a1] sm:$0xff] %vm1354, %v1946
  %2121 = vst.msk [vmem:[%s2067 + $0x2a9] sm:$0xff] %vm1354, %v1947
  %2122 = vst.msk [vmem:[%s2067 + $0x2b9] sm:$0xff] %vm1354, %v1948
  %2123 = vst.msk [vmem:[%s2067 + $0x2c1] sm:$0xff] %vm1354, %v1949
  %2124 = vst.msk [vmem:[%s2067 + $0x2d1] sm:$0xff] %vm1354, %v1950
  %2125 = vst.msk [vmem:[%s2067 + $0x2d9] sm:$0xff] %vm1354, %v1951
  %2126 = vst.msk [vmem:[%s2067 + $0x2e9] sm:$0xff] %vm1354, %v1952
  %2127 = vst.msk [vmem:[%s2067 + $0x2f1] sm:$0xff] %vm1354, %v1953
  %2128 = vst.msk [vmem:[%s2067 + $0x301] sm:$0xff] %vm1354, %v1954
  %2129 = vst.msk [vmem:[%s2067 + $0x309] sm:$0xff] %vm1354, %v1955
  %2130 = vst.msk [vmem:[%s2067 + $0x319] sm:$0xff] %vm1354, %v1956
  %2131 = vst.msk [vmem:[%s2067 + $0x321] sm:$0xff] %vm1354, %v1957
  %v2132 = vld [vmem:[#allocation2] sm:$0xff]
  %v2133 = vld [vmem:[#allocation2 + $0x8] sm:$0xff]
  %v2134 = vld [vmem:[#allocation2 + $0x18] sm:$0xff]
  %v2135 = vld [vmem:[#allocation2 + $0x20] sm:$0xff]
  %v2136 = vld [vmem:[#allocation2 + $0x30] sm:$0xff]
  %v2137 = vld [vmem:[#allocation2 + $0x38] sm:$0xff]
  %v2138 = vld [vmem:[#allocation2 + $0x48] sm:$0xff]
  %v2139 = vld [vmem:[#allocation2 + $0x50] sm:$0xff]
  %v2140 = vld [vmem:[#allocation2 + $0x60] sm:$0xff]
  %v2141 = vld [vmem:[#allocation2 + $0x68] sm:$0xff]
  %v2142 = vld [vmem:[#allocation2 + $0x78] sm:$0xff]
  %v2143 = vld [vmem:[#allocation2 + $0x80] sm:$0xff]
  %v2144 = vld [vmem:[#allocation2 + $0x90] sm:$0xff]
  %v2145 = vld [vmem:[#allocation2 + $0x98] sm:$0xff]
  %v2146 = vld [vmem:[#allocation2 + $0xa8] sm:$0xff]
  %v2147 = vld [vmem:[#allocation2 + $0xb0] sm:$0xff]
  %v2148 = vld [vmem:[#allocation2 + $0xc0] sm:$0xff]
  %v2149 = vld [vmem:[#allocation2 + $0xc8] sm:$0xff]
  %v2150 = vld [vmem:[#allocation2 + $0xd8] sm:$0xff]
  %v2151 = vld [vmem:[#allocation2 + $0xe0] sm:$0xff]
  %v2152 = vld [vmem:[#allocation2 + $0xf0] sm:$0xff]
  %v2153 = vld [vmem:[#allocation2 + $0xf8] sm:$0xff]
  %v2154 = vld [vmem:[#allocation2 + $0x108] sm:$0xff]
  %v2155 = vld [vmem:[#allocation2 + $0x110] sm:$0xff]
  %v2156 = vld [vmem:[#allocation2 + $0x120] sm:$0xff]
  %v2157 = vld [vmem:[#allocation2 + $0x128] sm:$0xff]
  %v2158 = vld [vmem:[#allocation2 + $0x138] sm:$0xff]
  %v2159 = vld [vmem:[#allocation2 + $0x140] sm:$0xff]
  %v2160 = vld [vmem:[#allocation2 + $0x150] sm:$0xff]
  %v2161 = vld [vmem:[#allocation2 + $0x158] sm:$0xff]
  %v2162 = vld [vmem:[#allocation2 + $0x168] sm:$0xff]
  %v2163 = vld [vmem:[#allocation2 + $0x170] sm:$0xff]
  %v2164 = vld [vmem:[#allocation2 + $0x1b0] sm:$0xff]
  %v2165 = vld [vmem:[#allocation2 + $0x1b8] sm:$0xff]
  %v2166 = vld [vmem:[#allocation2 + $0x1c8] sm:$0xff]
  %v2167 = vld [vmem:[#allocation2 + $0x1d0] sm:$0xff]
  %v2168 = vld [vmem:[#allocation2 + $0x1e0] sm:$0xff]
  %v2169 = vld [vmem:[#allocation2 + $0x1e8] sm:$0xff]
  %v2170 = vld [vmem:[#allocation2 + $0x1f8] sm:$0xff]
  %v2171 = vld [vmem:[#allocation2 + $0x200] sm:$0xff]
  %v2172 = vld [vmem:[#allocation2 + $0x210] sm:$0xff]
  %v2173 = vld [vmem:[#allocation2 + $0x218] sm:$0xff]
  %v2174 = vld [vmem:[#allocation2 + $0x228] sm:$0xff]
  %v2175 = vld [vmem:[#allocation2 + $0x230] sm:$0xff]
  %v2176 = vld [vmem:[#allocation2 + $0x240] sm:$0xff]
  %v2177 = vld [vmem:[#allocation2 + $0x248] sm:$0xff]
  %v2178 = vld [vmem:[#allocation2 + $0x258] sm:$0xff]
  %v2179 = vld [vmem:[#allocation2 + $0x260] sm:$0xff]
  %v2180 = vld [vmem:[#allocation2 + $0x270] sm:$0xff]
  %v2181 = vld [vmem:[#allocation2 + $0x278] sm:$0xff]
  %v2182 = vld [vmem:[#allocation2 + $0x288] sm:$0xff]
  %v2183 = vld [vmem:[#allocation2 + $0x290] sm:$0xff]
  %v2184 = vld [vmem:[#allocation2 + $0x2a0] sm:$0xff]
  %v2185 = vld [vmem:[#allocation2 + $0x2a8] sm:$0xff]
  %v2186 = vld [vmem:[#allocation2 + $0x2b8] sm:$0xff]
  %v2187 = vld [vmem:[#allocation2 + $0x2c0] sm:$0xff]
  %v2188 = vld [vmem:[#allocation2 + $0x2d0] sm:$0xff]
  %v2189 = vld [vmem:[#allocation2 + $0x2d8] sm:$0xff]
  %v2190 = vld [vmem:[#allocation2 + $0x2e8] sm:$0xff]
  %v2191 = vld [vmem:[#allocation2 + $0x2f0] sm:$0xff]
  %v2192 = vld [vmem:[#allocation2 + $0x300] sm:$0xff]
  %v2193 = vld [vmem:[#allocation2 + $0x308] sm:$0xff]
  %v2194 = vld [vmem:[#allocation2 + $0x318] sm:$0xff]
  %v2195 = vld [vmem:[#allocation2 + $0x320] sm:$0xff]
  %v2196 = vld [vmem:[%s4] sm:$0xff]
  %v2197 = vld [vmem:[#allocation2 + $0x1] sm:$0xff]
  %v2198 = vld [vmem:[#allocation2 + $0x9] sm:$0xff]
  %v2199 = vld [vmem:[#allocation2 + $0x19] sm:$0xff]
  %v2200 = vld [vmem:[#allocation2 + $0x21] sm:$0xff]
  %v2201 = vld [vmem:[#allocation2 + $0x31] sm:$0xff]
  %v2202 = vld [vmem:[#allocation2 + $0x39] sm:$0xff]
  %v2203 = vld [vmem:[#allocation2 + $0x49] sm:$0xff]
  %v2204 = vld [vmem:[#allocation2 + $0x51] sm:$0xff]
  %v2205 = vld [vmem:[#allocation2 + $0x61] sm:$0xff]
  %v2206 = vld [vmem:[#allocation2 + $0x69] sm:$0xff]
  %v2207 = vld [vmem:[#allocation2 + $0x79] sm:$0xff]
  %v2208 = vld [vmem:[#allocation2 + $0x81] sm:$0xff]
  %v2209 = vld [vmem:[#allocation2 + $0x91] sm:$0xff]
  %v2210 = vld [vmem:[#allocation2 + $0x99] sm:$0xff]
  %v2211 = vld [vmem:[#allocation2 + $0xa9] sm:$0xff]
  %v2212 = vld [vmem:[#allocation2 + $0xb1] sm:$0xff]
  %v2213 = vld [vmem:[#allocation2 + $0xc1] sm:$0xff]
  %v2214 = vld [vmem:[#allocation2 + $0xc9] sm:$0xff]
  %v2215 = vld [vmem:[#allocation2 + $0xd9] sm:$0xff]
  %v2216 = vld [vmem:[#allocation2 + $0xe1] sm:$0xff]
  %v2217 = vld [vmem:[#allocation2 + $0xf1] sm:$0xff]
  %v2218 = vld [vmem:[#allocation2 + $0xf9] sm:$0xff]
  %v2219 = vld [vmem:[#allocation2 + $0x109] sm:$0xff]
  %v2220 = vld [vmem:[#allocation2 + $0x111] sm:$0xff]
  %v2221 = vld [vmem:[#allocation2 + $0x121] sm:$0xff]
  %v2222 = vld [vmem:[#allocation2 + $0x129] sm:$0xff]
  %v2223 = vld [vmem:[#allocation2 + $0x139] sm:$0xff]
  %v2224 = vld [vmem:[#allocation2 + $0x141] sm:$0xff]
  %v2225 = vld [vmem:[#allocation2 + $0x151] sm:$0xff]
  %v2226 = vld [vmem:[#allocation2 + $0x159] sm:$0xff]
  %v2227 = vld [vmem:[#allocation2 + $0x169] sm:$0xff]
  %v2228 = vld [vmem:[#allocation2 + $0x171] sm:$0xff]
  %v2229 = vld [vmem:[#allocation2 + $0x1b1] sm:$0xff]
  %v2230 = vld [vmem:[#allocation2 + $0x1b9] sm:$0xff]
  %v2231 = vld [vmem:[#allocation2 + $0x1c9] sm:$0xff]
  %v2232 = vld [vmem:[#allocation2 + $0x1d1] sm:$0xff]
  %v2233 = vld [vmem:[#allocation2 + $0x1e1] sm:$0xff]
  %v2234 = vld [vmem:[#allocation2 + $0x1e9] sm:$0xff]
  %v2235 = vld [vmem:[#allocation2 + $0x1f9] sm:$0xff]
  %v2236 = vld [vmem:[#allocation2 + $0x201] sm:$0xff]
  %v2237 = vld [vmem:[#allocation2 + $0x211] sm:$0xff]
  %v2238 = vld [vmem:[#allocation2 + $0x219] sm:$0xff]
  %v2239 = vld [vmem:[#allocation2 + $0x229] sm:$0xff]
  %v2240 = vld [vmem:[#allocation2 + $0x231] sm:$0xff]
  %v2241 = vld [vmem:[#allocation2 + $0x241] sm:$0xff]
  %v2242 = vld [vmem:[#allocation2 + $0x249] sm:$0xff]
  %v2243 = vld [vmem:[#allocation2 + $0x259] sm:$0xff]
  %v2244 = vld [vmem:[#allocation2 + $0x261] sm:$0xff]
  %v2245 = vld [vmem:[#allocation2 + $0x271] sm:$0xff]
  %v2246 = vld [vmem:[#allocation2 + $0x279] sm:$0xff]
  %v2247 = vld [vmem:[#allocation2 + $0x289] sm:$0xff]
  %v2248 = vld [vmem:[#allocation2 + $0x291] sm:$0xff]
  %v2249 = vld [vmem:[#allocation2 + $0x2a1] sm:$0xff]
  %v2250 = vld [vmem:[#allocation2 + $0x2a9] sm:$0xff]
  %v2251 = vld [vmem:[#allocation2 + $0x2b9] sm:$0xff]
  %v2252 = vld [vmem:[#allocation2 + $0x2c1] sm:$0xff]
  %v2253 = vld [vmem:[#allocation2 + $0x2d1] sm:$0xff]
  %v2254 = vld [vmem:[#allocation2 + $0x2d9] sm:$0xff]
  %v2255 = vld [vmem:[#allocation2 + $0x2e9] sm:$0xff]
  %v2256 = vld [vmem:[#allocation2 + $0x2f1] sm:$0xff]
  %v2257 = vld [vmem:[#allocation2 + $0x301] sm:$0xff]
  %v2258 = vld [vmem:[#allocation2 + $0x309] sm:$0xff]
  %v2259 = vld [vmem:[#allocation2 + $0x319] sm:$0xff]
  %v2260 = vld [vmem:[#allocation2 + $0x321] sm:$0xff]
  %s2261 = scalar_lea.vmem %s4, 8
  %v2262 = vld [vmem:[%s2261] sm:$0xff]
  %v2264 = vsel %vm1354, %v2197, 0
  %v2267 = vsel %vm1354, %v2198, 0
  %v2270 = vsel %vm1354, %v2199, 0
  %v2273 = vsel %vm1354, %v2200, 0
  %v2276 = vsel %vm1354, %v2201, 0
  %v2279 = vsel %vm1354, %v2202, 0
  %v2282 = vsel %vm1354, %v2203, 0
  %v2285 = vsel %vm1354, %v2204, 0
  %v2288 = vsel %vm1354, %v2205, 0
  %v2291 = vsel %vm1354, %v2206, 0
  %v2294 = vsel %vm1354, %v2207, 0
  %v2297 = vsel %vm1354, %v2208, 0
  %v2300 = vsel %vm1354, %v2209, 0
  %v2303 = vsel %vm1354, %v2210, 0
  %v2306 = vsel %vm1354, %v2211, 0
  %v2309 = vsel %vm1354, %v2212, 0
  %v2312 = vsel %vm1354, %v2213, 0
  %v2315 = vsel %vm1354, %v2214, 0
  %v2318 = vsel %vm1354, %v2215, 0
  %v2321 = vsel %vm1354, %v2216, 0
  %v2324 = vsel %vm1354, %v2217, 0
  %v2327 = vsel %vm1354, %v2218, 0
  %v2330 = vsel %vm1354, %v2219, 0
  %v2333 = vsel %vm1354, %v2220, 0
  %v2336 = vsel %vm1354, %v2221, 0
  %v2339 = vsel %vm1354, %v2222, 0
  %v2342 = vsel %vm1354, %v2223, 0
  %v2345 = vsel %vm1354, %v2224, 0
  %v2348 = vsel %vm1354, %v2225, 0
  %v2351 = vsel %vm1354, %v2226, 0
  %v2354 = vsel %vm1354, %v2227, 0
  %v2357 = vsel %vm1354, %v2228, 0
  %v2360 = vsel %vm1354, %v2229, 0
  %v2363 = vsel %vm1354, %v2230, 0
  %v2366 = vsel %vm1354, %v2231, 0
  %v2369 = vsel %vm1354, %v2232, 0
  %v2372 = vsel %vm1354, %v2233, 0
  %v2375 = vsel %vm1354, %v2234, 0
  %v2378 = vsel %vm1354, %v2235, 0
  %v2381 = vsel %vm1354, %v2236, 0
  %v2384 = vsel %vm1354, %v2237, 0
  %v2387 = vsel %vm1354, %v2238, 0
  %v2390 = vsel %vm1354, %v2239, 0
  %v2393 = vsel %vm1354, %v2240, 0
  %v2396 = vsel %vm1354, %v2241, 0
  %v2399 = vsel %vm1354, %v2242, 0
  %v2402 = vsel %vm1354, %v2243, 0
  %v2405 = vsel %vm1354, %v2244, 0
  %v2408 = vsel %vm1354, %v2245, 0
  %v2411 = vsel %vm1354, %v2246, 0
  %v2414 = vsel %vm1354, %v2247, 0
  %v2417 = vsel %vm1354, %v2248, 0
  %v2420 = vsel %vm1354, %v2249, 0
  %v2423 = vsel %vm1354, %v2250, 0
  %v2426 = vsel %vm1354, %v2251, 0
  %v2429 = vsel %vm1354, %v2252, 0
  %v2432 = vsel %vm1354, %v2253, 0
  %v2435 = vsel %vm1354, %v2254, 0
  %v2438 = vsel %vm1354, %v2255, 0
  %v2441 = vsel %vm1354, %v2256, 0
  %v2444 = vsel %vm1354, %v2257, 0
  %v2447 = vsel %vm1354, %v2258, 0
  %v2450 = vsel %vm1354, %v2259, 0
  %v2453 = vsel %vm1354, %v2260, 0
  %2455 = vmatprep.subr.mxu0 0.0
  %2456 = vmatpush1.msra.mxu0 %v2262
  %2457 = vmatprep.subr.mxu0 0.0
  %2458 = vmatpush1.msra.mxu0 0.0
  %2459 = vmatprep.subr.mxu0 0.0
  %2460 = vmatpush1.msra.mxu0 0.0
  %2461 = vmatprep.subr.mxu0 0.0
  %2462 = vmatpush1.msra.mxu0 0.0
  %2463 = vmatprep.subr.mxu0 0.0
  %2464 = vmatpush1.msra.mxu0 0.0
  %2465 = vmatprep.subr.mxu0 0.0
  %2466 = vmatpush1.msra.mxu0 0.0
  %2467 = vmatprep.subr.mxu0 0.0
  %2468 = vmatpush1.msra.mxu0 0.0
  %2469 = vmatprep.subr.mxu0 0.0
  %2470 = vmatpush1.msra.mxu0 0.0
  %2471 = vmatprep.subr.mxu0 0.0
  %2472 = vmatpush1.msra.mxu0 0.0
  %2473 = vmatprep.subr.mxu0 0.0
  %2474 = vmatpush1.msra.mxu0 0.0
  %2475 = vmatprep.subr.mxu0 0.0
  %2476 = vmatpush1.msra.mxu0 0.0
  %2477 = vmatprep.subr.mxu0 0.0
  %2478 = vmatpush1.msra.mxu0 0.0
  %2479 = vmatprep.subr.mxu0 0.0
  %2480 = vmatpush1.msra.mxu0 0.0
  %2481 = vmatprep.subr.mxu0 0.0
  %2482 = vmatpush1.msra.mxu0 0.0
  %2483 = vmatprep.subr.mxu0 0.0
  %2484 = vmatpush1.msra.mxu0 0.0
  %2485 = vmatprep.subr.mxu0 0.0
  %2486 = vmatpush1.msra.mxu0 0.0
  %2487 = vmatprep.subr.mxu0 0.0
  %2488 = vmatpush1.msra.mxu0 0.0
  %2489 = vmatprep.subr.mxu0 0.0
  %2490 = vmatpush1.msra.mxu0 0.0
  %2491 = vmatprep.subr.mxu0 0.0
  %2492 = vmatpush1.msra.mxu0 0.0
  %2493 = vmatprep.subr.mxu0 0.0
  %2494 = vmatpush1.msra.mxu0 0.0
  %2495 = vmatprep.subr.mxu0 0.0
  %2496 = vmatpush1.msra.mxu0 0.0
  %2497 = vmatprep.subr.mxu0 0.0
  %2498 = vmatpush1.msra.mxu0 0.0
  %2499 = vmatprep.subr.mxu0 0.0
  %2500 = vmatpush1.msra.mxu0 0.0
  %2501 = vmatprep.subr.mxu0 0.0
  %2502 = vmatpush1.msra.mxu0 0.0
  %2503 = vmatprep.subr.mxu0 0.0
  %2504 = vmatpush1.msra.mxu0 0.0
  %2505 = vmatprep.subr.mxu0 0.0
  %2506 = vmatpush1.msra.mxu0 0.0
  %2507 = vmatprep.subr.mxu0 0.0
  %2508 = vmatpush1.msra.mxu0 0.0
  %2509 = vmatprep.subr.mxu0 0.0
  %2510 = vmatpush1.msra.mxu0 0.0
  %2511 = vmatprep.subr.mxu0 0.0
  %2512 = vmatpush1.msra.mxu0 0.0
  %2513 = vmatprep.subr.mxu0 0.0
  %2514 = vmatpush1.msra.mxu0 0.0
  %2515 = vmatprep.subr.mxu0 0.0
  %2516 = vmatpush1.msra.mxu0 0.0
  %2517 = vmatprep.subr.mxu0 0.0
  %2518 = vmatpush1.msra.mxu0 0.0
  %2519 = vmatprep.mubr.f32.mxu0 0.0
  %2520 = vmatmul.mubr.f32.gmra.mrb[0].mxu0 %v2264
  %v2521 = vpop.f32.mrb[0].mxu0
  %v2522 = vadd.f32 0.0, %v2521
  %v2523 = vpop.f32.mrb[0].mxu0
  %2524 = vmatprep.mubr.f32.mxu0 0.0
  %2525 = vmatmul.mubr.f32.gmra.mrb[0].mxu0 %v2267
  %v2526 = vpop.f32.mrb[0].mxu0
  %v2527 = vadd.f32 0.0, %v2526
  %v2528 = vpop.f32.mrb[0].mxu0
  %2529 = vmatprep.mubr.f32.mxu0 0.0
  %2530 = vmatmul.mubr.f32.gmra.mrb[0].mxu0 %v2270
  %v2531 = vpop.f32.mrb[0].mxu0
  %v2532 = vadd.f32 0.0, %v2531
  %v2533 = vpop.f32.mrb[0].mxu0
  %2534 = vmatprep.mubr.f32.mxu0 0.0
  %2535 = vmatmul.mubr.f32.gmra.mrb[0].mxu0 %v2273
  %v2536 = vpop.f32.mrb[0].mxu0
  %v2537 = vadd.f32 0.0, %v2536
  %v2538 = vpop.f32.mrb[0].mxu0
  %2539 = vmatprep.mubr.f32.mxu0 0.0
  %2540 = vmatmul.mubr.f32.gmra.mrb[0].mxu0 %v2276
  %v2541 = vpop.f32.mrb[0].mxu0
  %v2542 = vadd.f32 0.0, %v2541
  %v2543 = vpop.f32.mrb[0].mxu0
  %2544 = vmatprep.mubr.f32.mxu0 0.0
  %2545 = vmatmul.mubr.f32.gmra.mrb[0].mxu0 %v2279
  %v2546 = vpop.f32.mrb[0].mxu0
  %v2547 = vadd.f32 0.0, %v2546
  %v2548 = vpop.f32.mrb[0].mxu0
  %2549 = vmatprep.mubr.f32.mxu0 0.0
  %2550 = vmatmul.mubr.f32.gmra.mrb[0].mxu0 %v2282
  %v2551 = vpop.f32.mrb[0].mxu0
  %v2552 = vadd.f32 0.0, %v2551
  %v2553 = vpop.f32.mrb[0].mxu0
  %2554 = vmatprep.mubr.f32.mxu0 0.0
  %2555 = vmatmul.mubr.f32.gmra.mrb[0].mxu0 %v2285
  %v2556 = vpop.f32.mrb[0].mxu0
  %v2557 = vadd.f32 0.0, %v2556
  %v2558 = vpop.f32.mrb[0].mxu0
  %2559 = vmatprep.mubr.f32.mxu0 0.0
  %2560 = vmatmul.mubr.f32.gmra.mrb[0].mxu0 %v2288
  %v2561 = vpop.f32.mrb[0].mxu0
  %v2562 = vadd.f32 0.0, %v2561
  %v2563 = vpop.f32.mrb[0].mxu0
  %2564 = vmatprep.mubr.f32.mxu0 0.0
  %2565 = vmatmul.mubr.f32.gmra.mrb[0].mxu0 %v2291
  %v2566 = vpop.f32.mrb[0].mxu0
  %v2567 = vadd.f32 0.0, %v2566
  %v2568 = vpop.f32.mrb[0].mxu0
  %2569 = vmatprep.mubr.f32.mxu0 0.0
  %2570 = vmatmul.mubr.f32.gmra.mrb[0].mxu0 %v2294
  %v2571 = vpop.f32.mrb[0].mxu0
  %v2572 = vadd.f32 0.0, %v2571
  %v2573 = vpop.f32.mrb[0].mxu0
  %2574 = vmatprep.mubr.f32.mxu0 0.0
  %2575 = vmatmul.mubr.f32.gmra.mrb[0].mxu0 %v2297
  %v2576 = vpop.f32.mrb[0].mxu0
  %v2577 = vadd.f32 0.0, %v2576
  %v2578 = vpop.f32.mrb[0].mxu0
  %2579 = vmatprep.mubr.f32.mxu0 0.0
  %2580 = vmatmul.mubr.f32.gmra.mrb[0].mxu0 %v2300
  %v2581 = vpop.f32.mrb[0].mxu0
  %v2582 = vadd.f32 0.0, %v2581
  %v2583 = vpop.f32.mrb[0].mxu0
  %2584 = vmatprep.mubr.f32.mxu0 0.0
  %2585 = vmatmul.mubr.f32.gmra.mrb[0].mxu0 %v2303
  %v2586 = vpop.f32.mrb[0].mxu0
  %v2587 = vadd.f32 0.0, %v2586
  %v2588 = vpop.f32.mrb[0].mxu0
  %2589 = vmatprep.mubr.f32.mxu0 0.0
  %2590 = vmatmul.mubr.f32.gmra.mrb[0].mxu0 %v2306
  %v2591 = vpop.f32.mrb[0].mxu0
  %v2592 = vadd.f32 0.0, %v2591
  %v2593 = vpop.f32.mrb[0].mxu0
  %2594 = vmatprep.mubr.f32.mxu0 0.0
  %2595 = vmatmul.mubr.f32.gmra.mrb[0].mxu0 %v2309
  %v2596 = vpop.f32.mrb[0].mxu0
  %v2597 = vadd.f32 0.0, %v2596
  %v2598 = vpop.f32.mrb[0].mxu0
  %2599 = vmatprep.mubr.f32.mxu0 0.0
  %2600 = vmatmul.mubr.f32.gmra.mrb[0].mxu0 %v2312
  %v2601 = vpop.f32.mrb[0].mxu0
  %v2602 = vadd.f32 0.0, %v2601
  %v2603 = vpop.f32.mrb[0].mxu0
  %2604 = vmatprep.mubr.f32.mxu0 0.0
  %2605 = vmatmul.mubr.f32.gmra.mrb[0].mxu0 %v2315
  %v2606 = vpop.f32.mrb[0].mxu0
  %v2607 = vadd.f32 0.0, %v2606
  %v2608 = vpop.f32.mrb[0].mxu0
  %2609 = vmatprep.mubr.f32.mxu0 0.0
  %2610 = vmatmul.mubr.f32.gmra.mrb[0].mxu0 %v2318
  %v2611 = vpop.f32.mrb[0].mxu0
  %v2612 = vadd.f32 0.0, %v2611
  %v2613 = vpop.f32.mrb[0].mxu0
  %2614 = vmatprep.mubr.f32.mxu0 0.0
  %2615 = vmatmul.mubr.f32.gmra.mrb[0].mxu0 %v2321
  %v2616 = vpop.f32.mrb[0].mxu0
  %v2617 = vadd.f32 0.0, %v2616
  %v2618 = vpop.f32.mrb[0].mxu0
  %2619 = vmatprep.mubr.f32.mxu0 0.0
  %2620 = vmatmul.mubr.f32.gmra.mrb[0].mxu0 %v2324
  %v2621 = vpop.f32.mrb[0].mxu0
  %v2622 = vadd.f32 0.0, %v2621
  %v2623 = vpop.f32.mrb[0].mxu0
  %2624 = vmatprep.mubr.f32.mxu0 0.0
  %2625 = vmatmul.mubr.f32.gmra.mrb[0].mxu0 %v2327
  %v2626 = vpop.f32.mrb[0].mxu0
  %v2627 = vadd.f32 0.0, %v2626
  %v2628 = vpop.f32.mrb[0].mxu0
  %2629 = vmatprep.mubr.f32.mxu0 0.0
  %2630 = vmatmul.mubr.f32.gmra.mrb[0].mxu0 %v2330
  %v2631 = vpop.f32.mrb[0].mxu0
  %v2632 = vadd.f32 0.0, %v2631
  %v2633 = vpop.f32.mrb[0].mxu0
  %2634 = vmatprep.mubr.f32.mxu0 0.0
  %2635 = vmatmul.mubr.f32.gmra.mrb[0].mxu0 %v2333
  %v2636 = vpop.f32.mrb[0].mxu0
  %v2637 = vadd.f32 0.0, %v2636
  %v2638 = vpop.f32.mrb[0].mxu0
  %2639 = vmatprep.mubr.f32.mxu0 0.0
  %2640 = vmatmul.mubr.f32.gmra.mrb[0].mxu0 %v2336
  %v2641 = vpop.f32.mrb[0].mxu0
  %v2642 = vadd.f32 0.0, %v2641
  %v2643 = vpop.f32.mrb[0].mxu0
  %2644 = vmatprep.mubr.f32.mxu0 0.0
  %2645 = vmatmul.mubr.f32.gmra.mrb[0].mxu0 %v2339
  %v2646 = vpop.f32.mrb[0].mxu0
  %v2647 = vadd.f32 0.0, %v2646
  %v2648 = vpop.f32.mrb[0].mxu0
  %2649 = vmatprep.mubr.f32.mxu0 0.0
  %2650 = vmatmul.mubr.f32.gmra.mrb[0].mxu0 %v2342
  %v2651 = vpop.f32.mrb[0].mxu0
  %v2652 = vadd.f32 0.0, %v2651
  %v2653 = vpop.f32.mrb[0].mxu0
  %2654 = vmatprep.mubr.f32.mxu0 0.0
  %2655 = vmatmul.mubr.f32.gmra.mrb[0].mxu0 %v2345
  %v2656 = vpop.f32.mrb[0].mxu0
  %v2657 = vadd.f32 0.0, %v2656
  %v2658 = vpop.f32.mrb[0].mxu0
  %2659 = vmatprep.mubr.f32.mxu0 0.0
  %2660 = vmatmul.mubr.f32.gmra.mrb[0].mxu0 %v2348
  %v2661 = vpop.f32.mrb[0].mxu0
  %v2662 = vadd.f32 0.0, %v2661
  %v2663 = vpop.f32.mrb[0].mxu0
  %2664 = vmatprep.mubr.f32.mxu0 0.0
  %2665 = vmatmul.mubr.f32.gmra.mrb[0].mxu0 %v2351
  %v2666 = vpop.f32.mrb[0].mxu0
  %v2667 = vadd.f32 0.0, %v2666
  %v2668 = vpop.f32.mrb[0].mxu0
  %2669 = vmatprep.mubr.f32.mxu0 0.0
  %2670 = vmatmul.mubr.f32.gmra.mrb[0].mxu0 %v2354
  %v2671 = vpop.f32.mrb[0].mxu0
  %v2672 = vadd.f32 0.0, %v2671
  %v2673 = vpop.f32.mrb[0].mxu0
  %2674 = vmatprep.mubr.f32.mxu0 0.0
  %2675 = vmatmul.mubr.f32.gmra.mrb[0].mxu0 %v2357
  %v2676 = vpop.f32.mrb[0].mxu0
  %v2677 = vadd.f32 0.0, %v2676
  %v2678 = vpop.f32.mrb[0].mxu0
  %2679 = vmatprep.mubr.f32.mxu0 0.0
  %2680 = vmatmul.mubr.f32.gmra.mrb[0].mxu0 %v2360
  %v2681 = vpop.f32.mrb[0].mxu0
  %v2682 = vadd.f32 0.0, %v2681
  %v2683 = vpop.f32.mrb[0].mxu0
  %2684 = vmatprep.mubr.f32.mxu0 0.0
  %2685 = vmatmul.mubr.f32.gmra.mrb[0].mxu0 %v2363
  %v2686 = vpop.f32.mrb[0].mxu0
  %v2687 = vadd.f32 0.0, %v2686
  %v2688 = vpop.f32.mrb[0].mxu0
  %2689 = vmatprep.mubr.f32.mxu0 0.0
  %2690 = vmatmul.mubr.f32.gmra.mrb[0].mxu0 %v2366
  %v2691 = vpop.f32.mrb[0].mxu0
  %v2692 = vadd.f32 0.0, %v2691
  %v2693 = vpop.f32.mrb[0].mxu0
  %2694 = vmatprep.mubr.f32.mxu0 0.0
  %2695 = vmatmul.mubr.f32.gmra.mrb[0].mxu0 %v2369
  %v2696 = vpop.f32.mrb[0].mxu0
  %v2697 = vadd.f32 0.0, %v2696
  %v2698 = vpop.f32.mrb[0].mxu0
  %2699 = vmatprep.mubr.f32.mxu0 0.0
  %2700 = vmatmul.mubr.f32.gmra.mrb[0].mxu0 %v2372
  %v2701 = vpop.f32.mrb[0].mxu0
  %v2702 = vadd.f32 0.0, %v2701
  %v2703 = vpop.f32.mrb[0].mxu0
  %2704 = vmatprep.mubr.f32.mxu0 0.0
  %2705 = vmatmul.mubr.f32.gmra.mrb[0].mxu0 %v2375
  %v2706 = vpop.f32.mrb[0].mxu0
  %v2707 = vadd.f32 0.0, %v2706
  %v2708 = vpop.f32.mrb[0].mxu0
  %2709 = vmatprep.mubr.f32.mxu0 0.0
  %2710 = vmatmul.mubr.f32.gmra.mrb[0].mxu0 %v2378
  %v2711 = vpop.f32.mrb[0].mxu0
  %v2712 = vadd.f32 0.0, %v2711
  %v2713 = vpop.f32.mrb[0].mxu0
  %2714 = vmatprep.mubr.f32.mxu0 0.0
  %2715 = vmatmul.mubr.f32.gmra.mrb[0].mxu0 %v2381
  %v2716 = vpop.f32.mrb[0].mxu0
  %v2717 = vadd.f32 0.0, %v2716
  %v2718 = vpop.f32.mrb[0].mxu0
  %2719 = vmatprep.mubr.f32.mxu0 0.0
  %2720 = vmatmul.mubr.f32.gmra.mrb[0].mxu0 %v2384
  %v2721 = vpop.f32.mrb[0].mxu0
  %v2722 = vadd.f32 0.0, %v2721
  %v2723 = vpop.f32.mrb[0].mxu0
  %2724 = vmatprep.mubr.f32.mxu0 0.0
  %2725 = vmatmul.mubr.f32.gmra.mrb[0].mxu0 %v2387
  %v2726 = vpop.f32.mrb[0].mxu0
  %v2727 = vadd.f32 0.0, %v2726
  %v2728 = vpop.f32.mrb[0].mxu0
  %2729 = vmatprep.mubr.f32.mxu0 0.0
  %2730 = vmatmul.mubr.f32.gmra.mrb[0].mxu0 %v2390
  %v2731 = vpop.f32.mrb[0].mxu0
  %v2732 = vadd.f32 0.0, %v2731
  %v2733 = vpop.f32.mrb[0].mxu0
  %2734 = vmatprep.mubr.f32.mxu0 0.0
  %2735 = vmatmul.mubr.f32.gmra.mrb[0].mxu0 %v2393
  %v2736 = vpop.f32.mrb[0].mxu0
  %v2737 = vadd.f32 0.0, %v2736
  %v2738 = vpop.f32.mrb[0].mxu0
  %2739 = vmatprep.mubr.f32.mxu0 0.0
  %2740 = vmatmul.mubr.f32.gmra.mrb[0].mxu0 %v2396
  %v2741 = vpop.f32.mrb[0].mxu0
  %v2742 = vadd.f32 0.0, %v2741
  %v2743 = vpop.f32.mrb[0].mxu0
  %2744 = vmatprep.mubr.f32.mxu0 0.0
  %2745 = vmatmul.mubr.f32.gmra.mrb[0].mxu0 %v2399
  %v2746 = vpop.f32.mrb[0].mxu0
  %v2747 = vadd.f32 0.0, %v2746
  %v2748 = vpop.f32.mrb[0].mxu0
  %2749 = vmatprep.mubr.f32.mxu0 0.0
  %2750 = vmatmul.mubr.f32.gmra.mrb[0].mxu0 %v2402
  %v2751 = vpop.f32.mrb[0].mxu0
  %v2752 = vadd.f32 0.0, %v2751
  %v2753 = vpop.f32.mrb[0].mxu0
  %2754 = vmatprep.mubr.f32.mxu0 0.0
  %2755 = vmatmul.mubr.f32.gmra.mrb[0].mxu0 %v2405
  %v2756 = vpop.f32.mrb[0].mxu0
  %v2757 = vadd.f32 0.0, %v2756
  %v2758 = vpop.f32.mrb[0].mxu0
  %2759 = vmatprep.mubr.f32.mxu0 0.0
  %2760 = vmatmul.mubr.f32.gmra.mrb[0].mxu0 %v2408
  %v2761 = vpop.f32.mrb[0].mxu0
  %v2762 = vadd.f32 0.0, %v2761
  %v2763 = vpop.f32.mrb[0].mxu0
  %2764 = vmatprep.mubr.f32.mxu0 0.0
  %2765 = vmatmul.mubr.f32.gmra.mrb[0].mxu0 %v2411
  %v2766 = vpop.f32.mrb[0].mxu0
  %v2767 = vadd.f32 0.0, %v2766
  %v2768 = vpop.f32.mrb[0].mxu0
  %2769 = vmatprep.mubr.f32.mxu0 0.0
  %2770 = vmatmul.mubr.f32.gmra.mrb[0].mxu0 %v2414
  %v2771 = vpop.f32.mrb[0].mxu0
  %v2772 = vadd.f32 0.0, %v2771
  %v2773 = vpop.f32.mrb[0].mxu0
  %2774 = vmatprep.mubr.f32.mxu0 0.0
  %2775 = vmatmul.mubr.f32.gmra.mrb[0].mxu0 %v2417
  %v2776 = vpop.f32.mrb[0].mxu0
  %v2777 = vadd.f32 0.0, %v2776
  %v2778 = vpop.f32.mrb[0].mxu0
  %2779 = vmatprep.mubr.f32.mxu0 0.0
  %2780 = vmatmul.mubr.f32.gmra.mrb[0].mxu0 %v2420
  %v2781 = vpop.f32.mrb[0].mxu0
  %v2782 = vadd.f32 0.0, %v2781
  %v2783 = vpop.f32.mrb[0].mxu0
  %2784 = vmatprep.mubr.f32.mxu0 0.0
  %2785 = vmatmul.mubr.f32.gmra.mrb[0].mxu0 %v2423
  %v2786 = vpop.f32.mrb[0].mxu0
  %v2787 = vadd.f32 0.0, %v2786
  %v2788 = vpop.f32.mrb[0].mxu0
  %2789 = vmatprep.mubr.f32.mxu0 0.0
  %2790 = vmatmul.mubr.f32.gmra.mrb[0].mxu0 %v2426
  %v2791 = vpop.f32.mrb[0].mxu0
  %v2792 = vadd.f32 0.0, %v2791
  %v2793 = vpop.f32.mrb[0].mxu0
  %2794 = vmatprep.mubr.f32.mxu0 0.0
  %2795 = vmatmul.mubr.f32.gmra.mrb[0].mxu0 %v2429
  %v2796 = vpop.f32.mrb[0].mxu0
  %v2797 = vadd.f32 0.0, %v2796
  %v2798 = vpop.f32.mrb[0].mxu0
  %2799 = vmatprep.mubr.f32.mxu0 0.0
  %2800 = vmatmul.mubr.f32.gmra.mrb[0].mxu0 %v2432
  %v2801 = vpop.f32.mrb[0].mxu0
  %v2802 = vadd.f32 0.0, %v2801
  %v2803 = vpop.f32.mrb[0].mxu0
  %2804 = vmatprep.mubr.f32.mxu0 0.0
  %2805 = vmatmul.mubr.f32.gmra.mrb[0].mxu0 %v2435
  %v2806 = vpop.f32.mrb[0].mxu0
  %v2807 = vadd.f32 0.0, %v2806
  %v2808 = vpop.f32.mrb[0].mxu0
  %2809 = vmatprep.mubr.f32.mxu0 0.0
  %2810 = vmatmul.mubr.f32.gmra.mrb[0].mxu0 %v2438
  %v2811 = vpop.f32.mrb[0].mxu0
  %v2812 = vadd.f32 0.0, %v2811
  %v2813 = vpop.f32.mrb[0].mxu0
  %2814 = vmatprep.mubr.f32.mxu0 0.0
  %2815 = vmatmul.mubr.f32.gmra.mrb[0].mxu0 %v2441
  %v2816 = vpop.f32.mrb[0].mxu0
  %v2817 = vadd.f32 0.0, %v2816
  %v2818 = vpop.f32.mrb[0].mxu0
  %2819 = vmatprep.mubr.f32.mxu0 0.0
  %2820 = vmatmul.mubr.f32.gmra.mrb[0].mxu0 %v2444
  %v2821 = vpop.f32.mrb[0].mxu0
  %v2822 = vadd.f32 0.0, %v2821
  %v2823 = vpop.f32.mrb[0].mxu0
  %2824 = vmatprep.mubr.f32.mxu0 0.0
  %2825 = vmatmul.mubr.f32.gmra.mrb[0].mxu0 %v2447
  %v2826 = vpop.f32.mrb[0].mxu0
  %v2827 = vadd.f32 0.0, %v2826
  %v2828 = vpop.f32.mrb[0].mxu0
  %2829 = vmatprep.mubr.f32.mxu0 0.0
  %2830 = vmatmul.mubr.f32.gmra.mrb[0].mxu0 %v2450
  %v2831 = vpop.f32.mrb[0].mxu0
  %v2832 = vadd.f32 0.0, %v2831
  %v2833 = vpop.f32.mrb[0].mxu0
  %2834 = vmatprep.mubr.f32.mxu0 0.0
  %2835 = vmatmul.mubr.f32.gmra.mrb[0].mxu0 %v2453
  %v2836 = vpop.f32.mrb[0].mxu0
  %v2837 = vadd.f32 0.0, %v2836
  %v2838 = vpop.f32.mrb[0].mxu0
  %2839 = vdwg.mxu0
  %v2841 = vsel %vm1354, %v2132, 0
  %v2844 = vsel %vm1354, %v2133, 0
  %v2847 = vsel %vm1354, %v2134, 0
  %v2850 = vsel %vm1354, %v2135, 0
  %v2853 = vsel %vm1354, %v2136, 0
  %v2856 = vsel %vm1354, %v2137, 0
  %v2859 = vsel %vm1354, %v2138, 0
  %v2862 = vsel %vm1354, %v2139, 0
  %v2865 = vsel %vm1354, %v2140, 0
  %v2868 = vsel %vm1354, %v2141, 0
  %v2871 = vsel %vm1354, %v2142, 0
  %v2874 = vsel %vm1354, %v2143, 0
  %v2877 = vsel %vm1354, %v2144, 0
  %v2880 = vsel %vm1354, %v2145, 0
  %v2883 = vsel %vm1354, %v2146, 0
  %v2886 = vsel %vm1354, %v2147, 0
  %v2889 = vsel %vm1354, %v2148, 0
  %v2892 = vsel %vm1354, %v2149, 0
  %v2895 = vsel %vm1354, %v2150, 0
  %v2898 = vsel %vm1354, %v2151, 0
  %v2901 = vsel %vm1354, %v2152, 0
  %v2904 = vsel %vm1354, %v2153, 0
  %v2907 = vsel %vm1354, %v2154, 0
  %v2910 = vsel %vm1354, %v2155, 0
  %v2913 = vsel %vm1354, %v2156, 0
  %v2916 = vsel %vm1354, %v2157, 0
  %v2919 = vsel %vm1354, %v2158, 0
  %v2922 = vsel %vm1354, %v2159, 0
  %v2925 = vsel %vm1354, %v2160, 0
  %v2928 = vsel %vm1354, %v2161, 0
  %v2931 = vsel %vm1354, %v2162, 0
  %v2934 = vsel %vm1354, %v2163, 0
  %v2937 = vsel %vm1354, %v2164, 0
  %v2940 = vsel %vm1354, %v2165, 0
  %v2943 = vsel %vm1354, %v2166, 0
  %v2946 = vsel %vm1354, %v2167, 0
  %v2949 = vsel %vm1354, %v2168, 0
  %v2952 = vsel %vm1354, %v2169, 0
  %v2955 = vsel %vm1354, %v2170, 0
  %v2958 = vsel %vm1354, %v2171, 0
  %v2961 = vsel %vm1354, %v2172, 0
  %v2964 = vsel %vm1354, %v2173, 0
  %v2967 = vsel %vm1354, %v2174, 0
  %v2970 = vsel %vm1354, %v2175, 0
  %v2973 = vsel %vm1354, %v2176, 0
  %v2976 = vsel %vm1354, %v2177, 0
  %v2979 = vsel %vm1354, %v2178, 0
  %v2982 = vsel %vm1354, %v2179, 0
  %v2985 = vsel %vm1354, %v2180, 0
  %v2988 = vsel %vm1354, %v2181, 0
  %v2991 = vsel %vm1354, %v2182, 0
  %v2994 = vsel %vm1354, %v2183, 0
  %v2997 = vsel %vm1354, %v2184, 0
  %v3000 = vsel %vm1354, %v2185, 0
  %v3003 = vsel %vm1354, %v2186, 0
  %v3006 = vsel %vm1354, %v2187, 0
  %v3009 = vsel %vm1354, %v2188, 0
  %v3012 = vsel %vm1354, %v2189, 0
  %v3015 = vsel %vm1354, %v2190, 0
  %v3018 = vsel %vm1354, %v2191, 0
  %v3021 = vsel %vm1354, %v2192, 0
  %v3024 = vsel %vm1354, %v2193, 0
  %v3027 = vsel %vm1354, %v2194, 0
  %v3030 = vsel %vm1354, %v2195, 0
  %3032 = vmatprep.subr.mxu0 0.0
  %3033 = vmatpush1.msra.mxu0 %v2196
  %3034 = vmatprep.subr.mxu0 0.0
  %3035 = vmatpush1.msra.mxu0 0.0
  %3036 = vmatprep.subr.mxu0 0.0
  %3037 = vmatpush1.msra.mxu0 0.0
  %3038 = vmatprep.subr.mxu0 0.0
  %3039 = vmatpush1.msra.mxu0 0.0
  %3040 = vmatprep.subr.mxu0 0.0
  %3041 = vmatpush1.msra.mxu0 0.0
  %3042 = vmatprep.subr.mxu0 0.0
  %3043 = vmatpush1.msra.mxu0 0.0
  %3044 = vmatprep.subr.mxu0 0.0
  %3045 = vmatpush1.msra.mxu0 0.0
  %3046 = vmatprep.subr.mxu0 0.0
  %3047 = vmatpush1.msra.mxu0 0.0
  %3048 = vmatprep.subr.mxu0 0.0
  %3049 = vmatpush1.msra.mxu0 0.0
  %3050 = vmatprep.subr.mxu0 0.0
  %3051 = vmatpush1.msra.mxu0 0.0
  %3052 = vmatprep.subr.mxu0 0.0
  %3053 = vmatpush1.msra.mxu0 0.0
  %3054 = vmatprep.subr.mxu0 0.0
  %3055 = vmatpush1.msra.mxu0 0.0
  %3056 = vmatprep.subr.mxu0 0.0
  %3057 = vmatpush1.msra.mxu0 0.0
  %3058 = vmatprep.subr.mxu0 0.0
  %3059 = vmatpush1.msra.mxu0 0.0
  %3060 = vmatprep.subr.mxu0 0.0
  %3061 = vmatpush1.msra.mxu0 0.0
  %3062 = vmatprep.subr.mxu0 0.0
  %3063 = vmatpush1.msra.mxu0 0.0
  %3064 = vmatprep.subr.mxu0 0.0
  %3065 = vmatpush1.msra.mxu0 0.0
  %3066 = vmatprep.subr.mxu0 0.0
  %3067 = vmatpush1.msra.mxu0 0.0
  %3068 = vmatprep.subr.mxu0 0.0
  %3069 = vmatpush1.msra.mxu0 0.0
  %3070 = vmatprep.subr.mxu0 0.0
  %3071 = vmatpush1.msra.mxu0 0.0
  %3072 = vmatprep.subr.mxu0 0.0
  %3073 = vmatpush1.msra.mxu0 0.0
  %3074 = vmatprep.subr.mxu0 0.0
  %3075 = vmatpush1.msra.mxu0 0.0
  %3076 = vmatprep.subr.mxu0 0.0
  %3077 = vmatpush1.msra.mxu0 0.0
  %3078 = vmatprep.subr.mxu0 0.0
  %3079 = vmatpush1.msra.mxu0 0.0
  %3080 = vmatprep.subr.mxu0 0.0
  %3081 = vmatpush1.msra.mxu0 0.0
  %3082 = vmatprep.subr.mxu0 0.0
  %3083 = vmatpush1.msra.mxu0 0.0
  %3084 = vmatprep.subr.mxu0 0.0
  %3085 = vmatpush1.msra.mxu0 0.0
  %3086 = vmatprep.subr.mxu0 0.0
  %3087 = vmatpush1.msra.mxu0 0.0
  %3088 = vmatprep.subr.mxu0 0.0
  %3089 = vmatpush1.msra.mxu0 0.0
  %3090 = vmatprep.subr.mxu0 0.0
  %3091 = vmatpush1.msra.mxu0 0.0
  %3092 = vmatprep.subr.mxu0 0.0
  %3093 = vmatpush1.msra.mxu0 0.0
  %3094 = vmatprep.subr.mxu0 0.0
  %3095 = vmatpush1.msra.mxu0 0.0
  %3096 = vmatprep.mubr.f32.mxu0 0.0
  %3097 = vmatmul.mubr.f32.gmra.mrb[0].mxu0 %v2841
  %v3098 = vpop.f32.mrb[0].mxu0
  %v3099 = vadd.f32 %v2522, %v3098
  %v3100 = vpop.f32.mrb[0].mxu0
  %3101 = vmatprep.mubr.f32.mxu0 0.0
  %3102 = vmatmul.mubr.f32.gmra.mrb[0].mxu0 %v2844
  %v3103 = vpop.f32.mrb[0].mxu0
  %v3104 = vadd.f32 %v2527, %v3103
  %v3105 = vpop.f32.mrb[0].mxu0
  %3106 = vmatprep.mubr.f32.mxu0 0.0
  %3107 = vmatmul.mubr.f32.gmra.mrb[0].mxu0 %v2847
  %v3108 = vpop.f32.mrb[0].mxu0
  %v3109 = vadd.f32 %v2532, %v3108
  %v3110 = vpop.f32.mrb[0].mxu0
  %3111 = vmatprep.mubr.f32.mxu0 0.0
  %3112 = vmatmul.mubr.f32.gmra.mrb[0].mxu0 %v2850
  %v3113 = vpop.f32.mrb[0].mxu0
  %v3114 = vadd.f32 %v2537, %v3113
  %v3115 = vpop.f32.mrb[0].mxu0
  %3116 = vmatprep.mubr.f32.mxu0 0.0
  %3117 = vmatmul.mubr.f32.gmra.mrb[0].mxu0 %v2853
  %v3118 = vpop.f32.mrb[0].mxu0
  %v3119 = vadd.f32 %v2542, %v3118
  %v3120 = vpop.f32.mrb[0].mxu0
  %3121 = vmatprep.mubr.f32.mxu0 0.0
  %3122 = vmatmul.mubr.f32.gmra.mrb[0].mxu0 %v2856
  %v3123 = vpop.f32.mrb[0].mxu0
  %v3124 = vadd.f32 %v2547, %v3123
  %v3125 = vpop.f32.mrb[0].mxu0
  %3126 = vmatprep.mubr.f32.mxu0 0.0
  %3127 = vmatmul.mubr.f32.gmra.mrb[0].mxu0 %v2859
  %v3128 = vpop.f32.mrb[0].mxu0
  %v3129 = vadd.f32 %v2552, %v3128
  %v3130 = vpop.f32.mrb[0].mxu0
  %3131 = vmatprep.mubr.f32.mxu0 0.0
  %3132 = vmatmul.mubr.f32.gmra.mrb[0].mxu0 %v2862
  %v3133 = vpop.f32.mrb[0].mxu0
  %v3134 = vadd.f32 %v2557, %v3133
  %v3135 = vpop.f32.mrb[0].mxu0
  %3136 = vmatprep.mubr.f32.mxu0 0.0
  %3137 = vmatmul.mubr.f32.gmra.mrb[0].mxu0 %v2865
  %v3138 = vpop.f32.mrb[0].mxu0
  %v3139 = vadd.f32 %v2562, %v3138
  %v3140 = vpop.f32.mrb[0].mxu0
  %3141 = vmatprep.mubr.f32.mxu0 0.0
  %3142 = vmatmul.mubr.f32.gmra.mrb[0].mxu0 %v2868
  %v3143 = vpop.f32.mrb[0].mxu0
  %v3144 = vadd.f32 %v2567, %v3143
  %v3145 = vpop.f32.mrb[0].mxu0
  %3146 = vmatprep.mubr.f32.mxu0 0.0
  %3147 = vmatmul.mubr.f32.gmra.mrb[0].mxu0 %v2871
  %v3148 = vpop.f32.mrb[0].mxu0
  %v3149 = vadd.f32 %v2572, %v3148
  %v3150 = vpop.f32.mrb[0].mxu0
  %3151 = vmatprep.mubr.f32.mxu0 0.0
  %3152 = vmatmul.mubr.f32.gmra.mrb[0].mxu0 %v2874
  %v3153 = vpop.f32.mrb[0].mxu0
  %v3154 = vadd.f32 %v2577, %v3153
  %v3155 = vpop.f32.mrb[0].mxu0
  %3156 = vmatprep.mubr.f32.mxu0 0.0
  %3157 = vmatmul.mubr.f32.gmra.mrb[0].mxu0 %v2877
  %v3158 = vpop.f32.mrb[0].mxu0
  %v3159 = vadd.f32 %v2582, %v3158
  %v3160 = vpop.f32.mrb[0].mxu0
  %3161 = vmatprep.mubr.f32.mxu0 0.0
  %3162 = vmatmul.mubr.f32.gmra.mrb[0].mxu0 %v2880
  %v3163 = vpop.f32.mrb[0].mxu0
  %v3164 = vadd.f32 %v2587, %v3163
  %v3165 = vpop.f32.mrb[0].mxu0
  %3166 = vmatprep.mubr.f32.mxu0 0.0
  %3167 = vmatmul.mubr.f32.gmra.mrb[0].mxu0 %v2883
  %v3168 = vpop.f32.mrb[0].mxu0
  %v3169 = vadd.f32 %v2592, %v3168
  %v3170 = vpop.f32.mrb[0].mxu0
  %3171 = vmatprep.mubr.f32.mxu0 0.0
  %3172 = vmatmul.mubr.f32.gmra.mrb[0].mxu0 %v2886
  %v3173 = vpop.f32.mrb[0].mxu0
  %v3174 = vadd.f32 %v2597, %v3173
  %v3175 = vpop.f32.mrb[0].mxu0
  %3176 = vmatprep.mubr.f32.mxu0 0.0
  %3177 = vmatmul.mubr.f32.gmra.mrb[0].mxu0 %v2889
  %v3178 = vpop.f32.mrb[0].mxu0
  %v3179 = vadd.f32 %v2602, %v3178
  %v3180 = vpop.f32.mrb[0].mxu0
  %3181 = vmatprep.mubr.f32.mxu0 0.0
  %3182 = vmatmul.mubr.f32.gmra.mrb[0].mxu0 %v2892
  %v3183 = vpop.f32.mrb[0].mxu0
  %v3184 = vadd.f32 %v2607, %v3183
  %v3185 = vpop.f32.mrb[0].mxu0
  %3186 = vmatprep.mubr.f32.mxu0 0.0
  %3187 = vmatmul.mubr.f32.gmra.mrb[0].mxu0 %v2895
  %v3188 = vpop.f32.mrb[0].mxu0
  %v3189 = vadd.f32 %v2612, %v3188
  %v3190 = vpop.f32.mrb[0].mxu0
  %3191 = vmatprep.mubr.f32.mxu0 0.0
  %3192 = vmatmul.mubr.f32.gmra.mrb[0].mxu0 %v2898
  %v3193 = vpop.f32.mrb[0].mxu0
  %v3194 = vadd.f32 %v2617, %v3193
  %v3195 = vpop.f32.mrb[0].mxu0
  %3196 = vmatprep.mubr.f32.mxu0 0.0
  %3197 = vmatmul.mubr.f32.gmra.mrb[0].mxu0 %v2901
  %v3198 = vpop.f32.mrb[0].mxu0
  %v3199 = vadd.f32 %v2622, %v3198
  %v3200 = vpop.f32.mrb[0].mxu0
  %3201 = vmatprep.mubr.f32.mxu0 0.0
  %3202 = vmatmul.mubr.f32.gmra.mrb[0].mxu0 %v2904
  %v3203 = vpop.f32.mrb[0].mxu0
  %v3204 = vadd.f32 %v2627, %v3203
  %v3205 = vpop.f32.mrb[0].mxu0
  %3206 = vmatprep.mubr.f32.mxu0 0.0
  %3207 = vmatmul.mubr.f32.gmra.mrb[0].mxu0 %v2907
  %v3208 = vpop.f32.mrb[0].mxu0
  %v3209 = vadd.f32 %v2632, %v3208
  %v3210 = vpop.f32.mrb[0].mxu0
  %3211 = vmatprep.mubr.f32.mxu0 0.0
  %3212 = vmatmul.mubr.f32.gmra.mrb[0].mxu0 %v2910
  %v3213 = vpop.f32.mrb[0].mxu0
  %v3214 = vadd.f32 %v2637, %v3213
  %v3215 = vpop.f32.mrb[0].mxu0
  %3216 = vmatprep.mubr.f32.mxu0 0.0
  %3217 = vmatmul.mubr.f32.gmra.mrb[0].mxu0 %v2913
  %v3218 = vpop.f32.mrb[0].mxu0
  %v3219 = vadd.f32 %v2642, %v3218
  %v3220 = vpop.f32.mrb[0].mxu0
  %3221 = vmatprep.mubr.f32.mxu0 0.0
  %3222 = vmatmul.mubr.f32.gmra.mrb[0].mxu0 %v2916
  %v3223 = vpop.f32.mrb[0].mxu0
  %v3224 = vadd.f32 %v2647, %v3223
  %v3225 = vpop.f32.mrb[0].mxu0
  %3226 = vmatprep.mubr.f32.mxu0 0.0
  %3227 = vmatmul.mubr.f32.gmra.mrb[0].mxu0 %v2919
  %v3228 = vpop.f32.mrb[0].mxu0
  %v3229 = vadd.f32 %v2652, %v3228
  %v3230 = vpop.f32.mrb[0].mxu0
  %3231 = vmatprep.mubr.f32.mxu0 0.0
  %3232 = vmatmul.mubr.f32.gmra.mrb[0].mxu0 %v2922
  %v3233 = vpop.f32.mrb[0].mxu0
  %v3234 = vadd.f32 %v2657, %v3233
  %v3235 = vpop.f32.mrb[0].mxu0
  %3236 = vmatprep.mubr.f32.mxu0 0.0
  %3237 = vmatmul.mubr.f32.gmra.mrb[0].mxu0 %v2925
  %v3238 = vpop.f32.mrb[0].mxu0
  %v3239 = vadd.f32 %v2662, %v3238
  %v3240 = vpop.f32.mrb[0].mxu0
  %3241 = vmatprep.mubr.f32.mxu0 0.0
  %3242 = vmatmul.mubr.f32.gmra.mrb[0].mxu0 %v2928
  %v3243 = vpop.f32.mrb[0].mxu0
  %v3244 = vadd.f32 %v2667, %v3243
  %v3245 = vpop.f32.mrb[0].mxu0
  %3246 = vmatprep.mubr.f32.mxu0 0.0
  %3247 = vmatmul.mubr.f32.gmra.mrb[0].mxu0 %v2931
  %v3248 = vpop.f32.mrb[0].mxu0
  %v3249 = vadd.f32 %v2672, %v3248
  %v3250 = vpop.f32.mrb[0].mxu0
  %3251 = vmatprep.mubr.f32.mxu0 0.0
  %3252 = vmatmul.mubr.f32.gmra.mrb[0].mxu0 %v2934
  %v3253 = vpop.f32.mrb[0].mxu0
  %v3254 = vadd.f32 %v2677, %v3253
  %v3255 = vpop.f32.mrb[0].mxu0
  %3256 = vmatprep.mubr.f32.mxu0 0.0
  %3257 = vmatmul.mubr.f32.gmra.mrb[0].mxu0 %v2937
  %v3258 = vpop.f32.mrb[0].mxu0
  %v3259 = vadd.f32 %v2682, %v3258
  %v3260 = vpop.f32.mrb[0].mxu0
  %3261 = vmatprep.mubr.f32.mxu0 0.0
  %3262 = vmatmul.mubr.f32.gmra.mrb[0].mxu0 %v2940
  %v3263 = vpop.f32.mrb[0].mxu0
  %v3264 = vadd.f32 %v2687, %v3263
  %v3265 = vpop.f32.mrb[0].mxu0
  %3266 = vmatprep.mubr.f32.mxu0 0.0
  %3267 = vmatmul.mubr.f32.gmra.mrb[0].mxu0 %v2943
  %v3268 = vpop.f32.mrb[0].mxu0
  %v3269 = vadd.f32 %v2692, %v3268
  %v3270 = vpop.f32.mrb[0].mxu0
  %3271 = vmatprep.mubr.f32.mxu0 0.0
  %3272 = vmatmul.mubr.f32.gmra.mrb[0].mxu0 %v2946
  %v3273 = vpop.f32.mrb[0].mxu0
  %v3274 = vadd.f32 %v2697, %v3273
  %v3275 = vpop.f32.mrb[0].mxu0
  %3276 = vmatprep.mubr.f32.mxu0 0.0
  %3277 = vmatmul.mubr.f32.gmra.mrb[0].mxu0 %v2949
  %v3278 = vpop.f32.mrb[0].mxu0
  %v3279 = vadd.f32 %v2702, %v3278
  %v3280 = vpop.f32.mrb[0].mxu0
  %3281 = vmatprep.mubr.f32.mxu0 0.0
  %3282 = vmatmul.mubr.f32.gmra.mrb[0].mxu0 %v2952
  %v3283 = vpop.f32.mrb[0].mxu0
  %v3284 = vadd.f32 %v2707, %v3283
  %v3285 = vpop.f32.mrb[0].mxu0
  %3286 = vmatprep.mubr.f32.mxu0 0.0
  %3287 = vmatmul.mubr.f32.gmra.mrb[0].mxu0 %v2955
  %v3288 = vpop.f32.mrb[0].mxu0
  %v3289 = vadd.f32 %v2712, %v3288
  %v3290 = vpop.f32.mrb[0].mxu0
  %3291 = vmatprep.mubr.f32.mxu0 0.0
  %3292 = vmatmul.mubr.f32.gmra.mrb[0].mxu0 %v2958
  %v3293 = vpop.f32.mrb[0].mxu0
  %v3294 = vadd.f32 %v2717, %v3293
  %v3295 = vpop.f32.mrb[0].mxu0
  %3296 = vmatprep.mubr.f32.mxu0 0.0
  %3297 = vmatmul.mubr.f32.gmra.mrb[0].mxu0 %v2961
  %v3298 = vpop.f32.mrb[0].mxu0
  %v3299 = vadd.f32 %v2722, %v3298
  %v3300 = vpop.f32.mrb[0].mxu0
  %3301 = vmatprep.mubr.f32.mxu0 0.0
  %3302 = vmatmul.mubr.f32.gmra.mrb[0].mxu0 %v2964
  %v3303 = vpop.f32.mrb[0].mxu0
  %v3304 = vadd.f32 %v2727, %v3303
  %v3305 = vpop.f32.mrb[0].mxu0
  %3306 = vmatprep.mubr.f32.mxu0 0.0
  %3307 = vmatmul.mubr.f32.gmra.mrb[0].mxu0 %v2967
  %v3308 = vpop.f32.mrb[0].mxu0
  %v3309 = vadd.f32 %v2732, %v3308
  %v3310 = vpop.f32.mrb[0].mxu0
  %3311 = vmatprep.mubr.f32.mxu0 0.0
  %3312 = vmatmul.mubr.f32.gmra.mrb[0].mxu0 %v2970
  %v3313 = vpop.f32.mrb[0].mxu0
  %v3314 = vadd.f32 %v2737, %v3313
  %v3315 = vpop.f32.mrb[0].mxu0
  %3316 = vmatprep.mubr.f32.mxu0 0.0
  %3317 = vmatmul.mubr.f32.gmra.mrb[0].mxu0 %v2973
  %v3318 = vpop.f32.mrb[0].mxu0
  %v3319 = vadd.f32 %v2742, %v3318
  %v3320 = vpop.f32.mrb[0].mxu0
  %3321 = vmatprep.mubr.f32.mxu0 0.0
  %3322 = vmatmul.mubr.f32.gmra.mrb[0].mxu0 %v2976
  %v3323 = vpop.f32.mrb[0].mxu0
  %v3324 = vadd.f32 %v2747, %v3323
  %v3325 = vpop.f32.mrb[0].mxu0
  %3326 = vmatprep.mubr.f32.mxu0 0.0
  %3327 = vmatmul.mubr.f32.gmra.mrb[0].mxu0 %v2979
  %v3328 = vpop.f32.mrb[0].mxu0
  %v3329 = vadd.f32 %v2752, %v3328
  %v3330 = vpop.f32.mrb[0].mxu0
  %3331 = vmatprep.mubr.f32.mxu0 0.0
  %3332 = vmatmul.mubr.f32.gmra.mrb[0].mxu0 %v2982
  %v3333 = vpop.f32.mrb[0].mxu0
  %v3334 = vadd.f32 %v2757, %v3333
  %v3335 = vpop.f32.mrb[0].mxu0
  %3336 = vmatprep.mubr.f32.mxu0 0.0
  %3337 = vmatmul.mubr.f32.gmra.mrb[0].mxu0 %v2985
  %v3338 = vpop.f32.mrb[0].mxu0
  %v3339 = vadd.f32 %v2762, %v3338
  %v3340 = vpop.f32.mrb[0].mxu0
  %3341 = vmatprep.mubr.f32.mxu0 0.0
  %3342 = vmatmul.mubr.f32.gmra.mrb[0].mxu0 %v2988
  %v3343 = vpop.f32.mrb[0].mxu0
  %v3344 = vadd.f32 %v2767, %v3343
  %v3345 = vpop.f32.mrb[0].mxu0
  %3346 = vmatprep.mubr.f32.mxu0 0.0
  %3347 = vmatmul.mubr.f32.gmra.mrb[0].mxu0 %v2991
  %v3348 = vpop.f32.mrb[0].mxu0
  %v3349 = vadd.f32 %v2772, %v3348
  %v3350 = vpop.f32.mrb[0].mxu0
  %3351 = vmatprep.mubr.f32.mxu0 0.0
  %3352 = vmatmul.mubr.f32.gmra.mrb[0].mxu0 %v2994
  %v3353 = vpop.f32.mrb[0].mxu0
  %v3354 = vadd.f32 %v2777, %v3353
  %v3355 = vpop.f32.mrb[0].mxu0
  %3356 = vmatprep.mubr.f32.mxu0 0.0
  %3357 = vmatmul.mubr.f32.gmra.mrb[0].mxu0 %v2997
  %v3358 = vpop.f32.mrb[0].mxu0
  %v3359 = vadd.f32 %v2782, %v3358
  %v3360 = vpop.f32.mrb[0].mxu0
  %3361 = vmatprep.mubr.f32.mxu0 0.0
  %3362 = vmatmul.mubr.f32.gmra.mrb[0].mxu0 %v3000
  %v3363 = vpop.f32.mrb[0].mxu0
  %v3364 = vadd.f32 %v2787, %v3363
  %v3365 = vpop.f32.mrb[0].mxu0
  %3366 = vmatprep.mubr.f32.mxu0 0.0
  %3367 = vmatmul.mubr.f32.gmra.mrb[0].mxu0 %v3003
  %v3368 = vpop.f32.mrb[0].mxu0
  %v3369 = vadd.f32 %v2792, %v3368
  %v3370 = vpop.f32.mrb[0].mxu0
  %3371 = vmatprep.mubr.f32.mxu0 0.0
  %3372 = vmatmul.mubr.f32.gmra.mrb[0].mxu0 %v3006
  %v3373 = vpop.f32.mrb[0].mxu0
  %v3374 = vadd.f32 %v2797, %v3373
  %v3375 = vpop.f32.mrb[0].mxu0
  %3376 = vmatprep.mubr.f32.mxu0 0.0
  %3377 = vmatmul.mubr.f32.gmra.mrb[0].mxu0 %v3009
  %v3378 = vpop.f32.mrb[0].mxu0
  %v3379 = vadd.f32 %v2802, %v3378
  %v3380 = vpop.f32.mrb[0].mxu0
  %3381 = vmatprep.mubr.f32.mxu0 0.0
  %3382 = vmatmul.mubr.f32.gmra.mrb[0].mxu0 %v3012
  %v3383 = vpop.f32.mrb[0].mxu0
  %v3384 = vadd.f32 %v2807, %v3383
  %v3385 = vpop.f32.mrb[0].mxu0
  %3386 = vmatprep.mubr.f32.mxu0 0.0
  %3387 = vmatmul.mubr.f32.gmra.mrb[0].mxu0 %v3015
  %v3388 = vpop.f32.mrb[0].mxu0
  %v3389 = vadd.f32 %v2812, %v3388
  %v3390 = vpop.f32.mrb[0].mxu0
  %3391 = vmatprep.mubr.f32.mxu0 0.0
  %3392 = vmatmul.mubr.f32.gmra.mrb[0].mxu0 %v3018
  %v3393 = vpop.f32.mrb[0].mxu0
  %v3394 = vadd.f32 %v2817, %v3393
  %v3395 = vpop.f32.mrb[0].mxu0
  %3396 = vmatprep.mubr.f32.mxu0 0.0
  %3397 = vmatmul.mubr.f32.gmra.mrb[0].mxu0 %v3021
  %v3398 = vpop.f32.mrb[0].mxu0
  %v3399 = vadd.f32 %v2822, %v3398
  %v3400 = vpop.f32.mrb[0].mxu0
  %3401 = vmatprep.mubr.f32.mxu0 0.0
  %3402 = vmatmul.mubr.f32.gmra.mrb[0].mxu0 %v3024
  %v3403 = vpop.f32.mrb[0].mxu0
  %v3404 = vadd.f32 %v2827, %v3403
  %v3405 = vpop.f32.mrb[0].mxu0
  %3406 = vmatprep.mubr.f32.mxu0 0.0
  %3407 = vmatmul.mubr.f32.gmra.mrb[0].mxu0 %v3027
  %v3408 = vpop.f32.mrb[0].mxu0
  %v3409 = vadd.f32 %v2832, %v3408
  %v3410 = vpop.f32.mrb[0].mxu0
  %3411 = vmatprep.mubr.f32.mxu0 0.0
  %3412 = vmatmul.mubr.f32.gmra.mrb[0].mxu0 %v3030
  %v3413 = vpop.f32.mrb[0].mxu0
  %v3414 = vadd.f32 %v2837, %v3413
  %v3415 = vpop.f32.mrb[0].mxu0
  %3416 = vdwg.mxu0
  %v3417 = vld [vmem:[#allocation2 + $0x2] sm:$0xff]
  %v3418 = vld [vmem:[#allocation2 + $0xa] sm:$0xff]
  %v3419 = vld [vmem:[#allocation2 + $0x1a] sm:$0xff]
  %v3420 = vld [vmem:[#allocation2 + $0x22] sm:$0xff]
  %v3421 = vld [vmem:[#allocation2 + $0x32] sm:$0xff]
  %v3422 = vld [vmem:[#allocation2 + $0x3a] sm:$0xff]
  %v3423 = vld [vmem:[#allocation2 + $0x4a] sm:$0xff]
  %v3424 = vld [vmem:[#allocation2 + $0x52] sm:$0xff]
  %v3425 = vld [vmem:[#allocation2 + $0x62] sm:$0xff]
  %v3426 = vld [vmem:[#allocation2 + $0x6a] sm:$0xff]
  %v3427 = vld [vmem:[#allocation2 + $0x7a] sm:$0xff]
  %v3428 = vld [vmem:[#allocation2 + $0x82] sm:$0xff]
  %v3429 = vld [vmem:[#allocation2 + $0x92] sm:$0xff]
  %v3430 = vld [vmem:[#allocation2 + $0x9a] sm:$0xff]
  %v3431 = vld [vmem:[#allocation2 + $0xaa] sm:$0xff]
  %v3432 = vld [vmem:[#allocation2 + $0xb2] sm:$0xff]
  %v3433 = vld [vmem:[#allocation2 + $0xc2] sm:$0xff]
  %v3434 = vld [vmem:[#allocation2 + $0xca] sm:$0xff]
  %v3435 = vld [vmem:[#allocation2 + $0xda] sm:$0xff]
  %v3436 = vld [vmem:[#allocation2 + $0xe2] sm:$0xff]
  %v3437 = vld [vmem:[#allocation2 + $0xf2] sm:$0xff]
  %v3438 = vld [vmem:[#allocation2 + $0xfa] sm:$0xff]
  %v3439 = vld [vmem:[#allocation2 + $0x10a] sm:$0xff]
  %v3440 = vld [vmem:[#allocation2 + $0x112] sm:$0xff]
  %v3441 = vld [vmem:[#allocation2 + $0x122] sm:$0xff]
  %v3442 = vld [vmem:[#allocation2 + $0x12a] sm:$0xff]
  %v3443 = vld [vmem:[#allocation2 + $0x13a] sm:$0xff]
  %v3444 = vld [vmem:[#allocation2 + $0x142] sm:$0xff]
  %v3445 = vld [vmem:[#allocation2 + $0x152] sm:$0xff]
  %v3446 = vld [vmem:[#allocation2 + $0x15a] sm:$0xff]
  %v3447 = vld [vmem:[#allocation2 + $0x16a] sm:$0xff]
  %v3448 = vld [vmem:[#allocation2 + $0x172] sm:$0xff]
  %v3449 = vld [vmem:[#allocation2 + $0x1b2] sm:$0xff]
  %v3450 = vld [vmem:[#allocation2 + $0x1ba] sm:$0xff]
  %v3451 = vld [vmem:[#allocation2 + $0x1ca] sm:$0xff]
  %v3452 = vld [vmem:[#allocation2 + $0x1d2] sm:$0xff]
  %v3453 = vld [vmem:[#allocation2 + $0x1e2] sm:$0xff]
  %v3454 = vld [vmem:[#allocation2 + $0x1ea] sm:$0xff]
  %v3455 = vld [vmem:[#allocation2 + $0x1fa] sm:$0xff]
  %v3456 = vld [vmem:[#allocation2 + $0x202] sm:$0xff]
  %v3457 = vld [vmem:[#allocation2 + $0x212] sm:$0xff]
  %v3458 = vld [vmem:[#allocation2 + $0x21a] sm:$0xff]
  %v3459 = vld [vmem:[#allocation2 + $0x22a] sm:$0xff]
  %v3460 = vld [vmem:[#allocation2 + $0x232] sm:$0xff]
  %v3461 = vld [vmem:[#allocation2 + $0x242] sm:$0xff]
  %v3462 = vld [vmem:[#allocation2 + $0x24a] sm:$0xff]
  %v3463 = vld [vmem:[#allocation2 + $0x25a] sm:$0xff]
  %v3464 = vld [vmem:[#allocation2 + $0x262] sm:$0xff]
  %v3465 = vld [vmem:[#allocation2 + $0x272] sm:$0xff]
  %v3466 = vld [vmem:[#allocation2 + $0x27a] sm:$0xff]
  %v3467 = vld [vmem:[#allocation2 + $0x28a] sm:$0xff]
  %v3468 = vld [vmem:[#allocation2 + $0x292] sm:$0xff]
  %v3469 = vld [vmem:[#allocation2 + $0x2a2] sm:$0xff]
  %v3470 = vld [vmem:[#allocation2 + $0x2aa] sm:$0xff]
  %v3471 = vld [vmem:[#allocation2 + $0x2ba] sm:$0xff]
  %v3472 = vld [vmem:[#allocation2 + $0x2c2] sm:$0xff]
  %v3473 = vld [vmem:[#allocation2 + $0x2d2] sm:$0xff]
  %v3474 = vld [vmem:[#allocation2 + $0x2da] sm:$0xff]
  %v3475 = vld [vmem:[#allocation2 + $0x2ea] sm:$0xff]
  %v3476 = vld [vmem:[#allocation2 + $0x2f2] sm:$0xff]
  %v3477 = vld [vmem:[#allocation2 + $0x302] sm:$0xff]
  %v3478 = vld [vmem:[#allocation2 + $0x30a] sm:$0xff]
  %v3479 = vld [vmem:[#allocation2 + $0x31a] sm:$0xff]
  %v3480 = vld [vmem:[#allocation2 + $0x322] sm:$0xff]
  %s3481 = scalar_lea.vmem %s4, 16
  %v3482 = vld [vmem:[%s3481] sm:$0xff]
  %v3484 = vsel %vm1354, %v3417, 0
  %v3487 = vsel %vm1354, %v3418, 0
  %v3490 = vsel %vm1354, %v3419, 0
  %v3493 = vsel %vm1354, %v3420, 0
  %v3496 = vsel %vm1354, %v3421, 0
  %v3499 = vsel %vm1354, %v3422, 0
  %v3502 = vsel %vm1354, %v3423, 0
  %v3505 = vsel %vm1354, %v3424, 0
  %v3508 = vsel %vm1354, %v3425, 0
  %v3511 = vsel %vm1354, %v3426, 0
  %v3514 = vsel %vm1354, %v3427, 0
  %v3517 = vsel %vm1354, %v3428, 0
  %v3520 = vsel %vm1354, %v3429, 0
  %v3523 = vsel %vm1354, %v3430, 0
  %v3526 = vsel %vm1354, %v3431, 0
  %v3529 = vsel %vm1354, %v3432, 0
  %v3532 = vsel %vm1354, %v3433, 0
  %v3535 = vsel %vm1354, %v3434, 0
  %v3538 = vsel %vm1354, %v3435, 0
  %v3541 = vsel %vm1354, %v3436, 0
  %v3544 = vsel %vm1354, %v3437, 0
  %v3547 = vsel %vm1354, %v3438, 0
  %v3550 = vsel %vm1354, %v3439, 0
  %v3553 = vsel %vm1354, %v3440, 0
  %v3556 = vsel %vm1354, %v3441, 0
  %v3559 = vsel %vm1354, %v3442, 0
  %v3562 = vsel %vm1354, %v3443, 0
  %v3565 = vsel %vm1354, %v3444, 0
  %v3568 = vsel %vm1354, %v3445, 0
  %v3571 = vsel %vm1354, %v3446, 0
  %v3574 = vsel %vm1354, %v3447, 0
  %v3577 = vsel %vm1354, %v3448, 0
  %v3580 = vsel %vm1354, %v3449, 0
  %v3583 = vsel %vm1354, %v3450, 0
  %v3586 = vsel %vm1354, %v3451, 0
  %v3589 = vsel %vm1354, %v3452, 0
  %v3592 = vsel %vm1354, %v3453, 0
  %v3595 = vsel %vm1354, %v3454, 0
  %v3598 = vsel %vm1354, %v3455, 0
  %v3601 = vsel %vm1354, %v3456, 0
  %v3604 = vsel %vm1354, %v3457, 0
  %v3607 = vsel %vm1354, %v3458, 0
  %v3610 = vsel %vm1354, %v3459, 0
  %v3613 = vsel %vm1354, %v3460, 0
  %v3616 = vsel %vm1354, %v3461, 0
  %v3619 = vsel %vm1354, %v3462, 0
  %v3622 = vsel %vm1354, %v3463, 0
  %v3625 = vsel %vm1354, %v3464, 0
  %v3628 = vsel %vm1354, %v3465, 0
  %v3631 = vsel %vm1354, %v3466, 0
  %v3634 = vsel %vm1354, %v3467, 0
  %v3637 = vsel %vm1354, %v3468, 0
  %v3640 = vsel %vm1354, %v3469, 0
  %v3643 = vsel %vm1354, %v3470, 0
  %v3646 = vsel %vm1354, %v3471, 0
  %v3649 = vsel %vm1354, %v3472, 0
  %v3652 = vsel %vm1354, %v3473, 0
  %v3655 = vsel %vm1354, %v3474, 0
  %v3658 = vsel %vm1354, %v3475, 0
  %v3661 = vsel %vm1354, %v3476, 0
  %v3664 = vsel %vm1354, %v3477, 0
  %v3667 = vsel %vm1354, %v3478, 0
  %v3670 = vsel %vm1354, %v3479, 0
  %v3673 = vsel %vm1354, %v3480, 0
  %3675 = vmatprep.subr.mxu0 0.0
  %3676 = vmatpush1.msra.mxu0 %v3482
  %3677 = vmatprep.subr.mxu0 0.0
  %3678 = vmatpush1.msra.mxu0 0.0
  %3679 = vmatprep.subr.mxu0 0.0
  %3680 = vmatpush1.msra.mxu0 0.0
  %3681 = vmatprep.subr.mxu0 0.0
  %3682 = vmatpush1.msra.mxu0 0.0
  %3683 = vmatprep.subr.mxu0 0.0
  %3684 = vmatpush1.msra.mxu0 0.0
  %3685 = vmatprep.subr.mxu0 0.0
  %3686 = vmatpush1.msra.mxu0 0.0
  %3687 = vmatprep.subr.mxu0 0.0
  %3688 = vmatpush1.msra.mxu0 0.0
  %3689 = vmatprep.subr.mxu0 0.0
  %3690 = vmatpush1.msra.mxu0 0.0
  %3691 = vmatprep.subr.mxu0 0.0
  %3692 = vmatpush1.msra.mxu0 0.0
  %3693 = vmatprep.subr.mxu0 0.0
  %3694 = vmatpush1.msra.mxu0 0.0
  %3695 = vmatprep.subr.mxu0 0.0
  %3696 = vmatpush1.msra.mxu0 0.0
  %3697 = vmatprep.subr.mxu0 0.0
  %3698 = vmatpush1.msra.mxu0 0.0
  %3699 = vmatprep.subr.mxu0 0.0
  %3700 = vmatpush1.msra.mxu0 0.0
  %3701 = vmatprep.subr.mxu0 0.0
  %3702 = vmatpush1.msra.mxu0 0.0
  %3703 = vmatprep.subr.mxu0 0.0
  %3704 = vmatpush1.msra.mxu0 0.0
  %3705 = vmatprep.subr.mxu0 0.0
  %3706 = vmatpush1.msra.mxu0 0.0
  %3707 = vmatprep.subr.mxu0 0.0
  %3708 = vmatpush1.msra.mxu0 0.0
  %3709 = vmatprep.subr.mxu0 0.0
  %3710 = vmatpush1.msra.mxu0 0.0
  %3711 = vmatprep.subr.mxu0 0.0
  %3712 = vmatpush1.msra.mxu0 0.0
  %3713 = vmatprep.subr.mxu0 0.0
  %3714 = vmatpush1.msra.mxu0 0.0
  %3715 = vmatprep.subr.mxu0 0.0
  %3716 = vmatpush1.msra.mxu0 0.0
  %3717 = vmatprep.subr.mxu0 0.0
  %3718 = vmatpush1.msra.mxu0 0.0
  %3719 = vmatprep.subr.mxu0 0.0
  %3720 = vmatpush1.msra.mxu0 0.0
  %3721 = vmatprep.subr.mxu0 0.0
  %3722 = vmatpush1.msra.mxu0 0.0
  %3723 = vmatprep.subr.mxu0 0.0
  %3724 = vmatpush1.msra.mxu0 0.0
  %3725 = vmatprep.subr.mxu0 0.0
  %3726 = vmatpush1.msra.mxu0 0.0
  %3727 = vmatprep.subr.mxu0 0.0
  %3728 = vmatpush1.msra.mxu0 0.0
  %3729 = vmatprep.subr.mxu0 0.0
  %3730 = vmatpush1.msra.mxu0 0.0
  %3731 = vmatprep.subr.mxu0 0.0
  %3732 = vmatpush1.msra.mxu0 0.0
  %3733 = vmatprep.subr.mxu0 0.0
  %3734 = vmatpush1.msra.mxu0 0.0
  %3735 = vmatprep.subr.mxu0 0.0
  %3736 = vmatpush1.msra.mxu0 0.0
  %3737 = vmatprep.subr.mxu0 0.0
  %3738 = vmatpush1.msra.mxu0 0.0
  %3739 = vmatprep.mubr.f32.mxu0 0.0
  %3740 = vmatmul.mubr.f32.gmra.mrb[0].mxu0 %v3484
  %v3741 = vpop.f32.mrb[0].mxu0
  %v3742 = vadd.f32 0.0, %v3741
  %v3743 = vpop.f32.mrb[0].mxu0
  %3744 = vmatprep.mubr.f32.mxu0 0.0
  %3745 = vmatmul.mubr.f32.gmra.mrb[0].mxu0 %v3487
  %v3746 = vpop.f32.mrb[0].mxu0
  %v3747 = vadd.f32 0.0, %v3746
  %v3748 = vpop.f32.mrb[0].mxu0
  %3749 = vmatprep.mubr.f32.mxu0 0.0
  %3750 = vmatmul.mubr.f32.gmra.mrb[0].mxu0 %v3490
  %v3751 = vpop.f32.mrb[0].mxu0
  %v3752 = vadd.f32 0.0, %v3751
  %v3753 = vpop.f32.mrb[0].mxu0
  %3754 = vmatprep.mubr.f32.mxu0 0.0
  %3755 = vmatmul.mubr.f32.gmra.mrb[0].mxu0 %v3493
  %v3756 = vpop.f32.mrb[0].mxu0
  %v3757 = vadd.f32 0.0, %v3756
  %v3758 = vpop.f32.mrb[0].mxu0
  %3759 = vmatprep.mubr.f32.mxu0 0.0
  %3760 = vmatmul.mubr.f32.gmra.mrb[0].mxu0 %v3496
  %v3761 = vpop.f32.mrb[0].mxu0
  %v3762 = vadd.f32 0.0, %v3761
  %v3763 = vpop.f32.mrb[0].mxu0
  %3764 = vmatprep.mubr.f32.mxu0 0.0
  %3765 = vmatmul.mubr.f32.gmra.mrb[0].mxu0 %v3499
  %v3766 = vpop.f32.mrb[0].mxu0
  %v3767 = vadd.f32 0.0, %v3766
  %v3768 = vpop.f32.mrb[0].mxu0
  %3769 = vmatprep.mubr.f32.mxu0 0.0
  %3770 = vmatmul.mubr.f32.gmra.mrb[0].mxu0 %v3502
  %v3771 = vpop.f32.mrb[0].mxu0
  %v3772 = vadd.f32 0.0, %v3771
  %v3773 = vpop.f32.mrb[0].mxu0
  %3774 = vmatprep.mubr.f32.mxu0 0.0
  %3775 = vmatmul.mubr.f32.gmra.mrb[0].mxu0 %v3505
  %v3776 = vpop.f32.mrb[0].mxu0
  %v3777 = vadd.f32 0.0, %v3776
  %v3778 = vpop.f32.mrb[0].mxu0
  %3779 = vmatprep.mubr.f32.mxu0 0.0
  %3780 = vmatmul.mubr.f32.gmra.mrb[0].mxu0 %v3508
  %v3781 = vpop.f32.mrb[0].mxu0
  %v3782 = vadd.f32 0.0, %v3781
  %v3783 = vpop.f32.mrb[0].mxu0
  %3784 = vmatprep.mubr.f32.mxu0 0.0
  %3785 = vmatmul.mubr.f32.gmra.mrb[0].mxu0 %v3511
  %v3786 = vpop.f32.mrb[0].mxu0
  %v3787 = vadd.f32 0.0, %v3786
  %v3788 = vpop.f32.mrb[0].mxu0
  %3789 = vmatprep.mubr.f32.mxu0 0.0
  %3790 = vmatmul.mubr.f32.gmra.mrb[0].mxu0 %v3514
  %v3791 = vpop.f32.mrb[0].mxu0
  %v3792 = vadd.f32 0.0, %v3791
  %v3793 = vpop.f32.mrb[0].mxu0
  %3794 = vmatprep.mubr.f32.mxu0 0.0
  %3795 = vmatmul.mubr.f32.gmra.mrb[0].mxu0 %v3517
  %v3796 = vpop.f32.mrb[0].mxu0
  %v3797 = vadd.f32 0.0, %v3796
  %v3798 = vpop.f32.mrb[0].mxu0
  %3799 = vmatprep.mubr.f32.mxu0 0.0
  %3800 = vmatmul.mubr.f32.gmra.mrb[0].mxu0 %v3520
  %v3801 = vpop.f32.mrb[0].mxu0
  %v3802 = vadd.f32 0.0, %v3801
  %v3803 = vpop.f32.mrb[0].mxu0
  %3804 = vmatprep.mubr.f32.mxu0 0.0
  %3805 = vmatmul.mubr.f32.gmra.mrb[0].mxu0 %v3523
  %v3806 = vpop.f32.mrb[0].mxu0
  %v3807 = vadd.f32 0.0, %v3806
  %v3808 = vpop.f32.mrb[0].mxu0
  %3809 = vmatprep.mubr.f32.mxu0 0.0
  %3810 = vmatmul.mubr.f32.gmra.mrb[0].mxu0 %v3526
  %v3811 = vpop.f32.mrb[0].mxu0
  %v3812 = vadd.f32 0.0, %v3811
  %v3813 = vpop.f32.mrb[0].mxu0
  %3814 = vmatprep.mubr.f32.mxu0 0.0
  %3815 = vmatmul.mubr.f32.gmra.mrb[0].mxu0 %v3529
  %v3816 = vpop.f32.mrb[0].mxu0
  %v3817 = vadd.f32 0.0, %v3816
  %v3818 = vpop.f32.mrb[0].mxu0
  %3819 = vmatprep.mubr.f32.mxu0 0.0
  %3820 = vmatmul.mubr.f32.gmra.mrb[0].mxu0 %v3532
  %v3821 = vpop.f32.mrb[0].mxu0
  %v3822 = vadd.f32 0.0, %v3821
  %v3823 = vpop.f32.mrb[0].mxu0
  %3824 = vmatprep.mubr.f32.mxu0 0.0
  %3825 = vmatmul.mubr.f32.gmra.mrb[0].mxu0 %v3535
  %v3826 = vpop.f32.mrb[0].mxu0
  %v3827 = vadd.f32 0.0, %v3826
  %v3828 = vpop.f32.mrb[0].mxu0
  %3829 = vmatprep.mubr.f32.mxu0 0.0
  %3830 = vmatmul.mubr.f32.gmra.mrb[0].mxu0 %v3538
  %v3831 = vpop.f32.mrb[0].mxu0
  %v3832 = vadd.f32 0.0, %v3831
  %v3833 = vpop.f32.mrb[0].mxu0
  %3834 = vmatprep.mubr.f32.mxu0 0.0
  %3835 = vmatmul.mubr.f32.gmra.mrb[0].mxu0 %v3541
  %v3836 = vpop.f32.mrb[0].mxu0
  %v3837 = vadd.f32 0.0, %v3836
  %v3838 = vpop.f32.mrb[0].mxu0
  %3839 = vmatprep.mubr.f32.mxu0 0.0
  %3840 = vmatmul.mubr.f32.gmra.mrb[0].mxu0 %v3544
  %v3841 = vpop.f32.mrb[0].mxu0
  %v3842 = vadd.f32 0.0, %v3841
  %v3843 = vpop.f32.mrb[0].mxu0
  %3844 = vmatprep.mubr.f32.mxu0 0.0
  %3845 = vmatmul.mubr.f32.gmra.mrb[0].mxu0 %v3547
  %v3846 = vpop.f32.mrb[0].mxu0
  %v3847 = vadd.f32 0.0, %v3846
  %v3848 = vpop.f32.mrb[0].mxu0
  %3849 = vmatprep.mubr.f32.mxu0 0.0
  %3850 = vmatmul.mubr.f32.gmra.mrb[0].mxu0 %v3550
  %v3851 = vpop.f32.mrb[0].mxu0
  %v3852 = vadd.f32 0.0, %v3851
  %v3853 = vpop.f32.mrb[0].mxu0
  %3854 = vmatprep.mubr.f32.mxu0 0.0
  %3855 = vmatmul.mubr.f32.gmra.mrb[0].mxu0 %v3553
  %v3856 = vpop.f32.mrb[0].mxu0
  %v3857 = vadd.f32 0.0, %v3856
  %v3858 = vpop.f32.mrb[0].mxu0
  %3859 = vmatprep.mubr.f32.mxu0 0.0
  %3860 = vmatmul.mubr.f32.gmra.mrb[0].mxu0 %v3556
  %v3861 = vpop.f32.mrb[0].mxu0
  %v3862 = vadd.f32 0.0, %v3861
  %v3863 = vpop.f32.mrb[0].mxu0
  %3864 = vmatprep.mubr.f32.mxu0 0.0
  %3865 = vmatmul.mubr.f32.gmra.mrb[0].mxu0 %v3559
  %v3866 = vpop.f32.mrb[0].mxu0
  %v3867 = vadd.f32 0.0, %v3866
  %v3868 = vpop.f32.mrb[0].mxu0
  %3869 = vmatprep.mubr.f32.mxu0 0.0
  %3870 = vmatmul.mubr.f32.gmra.mrb[0].mxu0 %v3562
  %v3871 = vpop.f32.mrb[0].mxu0
  %v3872 = vadd.f32 0.0, %v3871
  %v3873 = vpop.f32.mrb[0].mxu0
  %3874 = vmatprep.mubr.f32.mxu0 0.0
  %3875 = vmatmul.mubr.f32.gmra.mrb[0].mxu0 %v3565
  %v3876 = vpop.f32.mrb[0].mxu0
  %v3877 = vadd.f32 0.0, %v3876
  %v3878 = vpop.f32.mrb[0].mxu0
  %3879 = vmatprep.mubr.f32.mxu0 0.0
  %3880 = vmatmul.mubr.f32.gmra.mrb[0].mxu0 %v3568
  %v3881 = vpop.f32.mrb[0].mxu0
  %v3882 = vadd.f32 0.0, %v3881
  %v3883 = vpop.f32.mrb[0].mxu0
  %3884 = vmatprep.mubr.f32.mxu0 0.0
  %3885 = vmatmul.mubr.f32.gmra.mrb[0].mxu0 %v3571
  %v3886 = vpop.f32.mrb[0].mxu0
  %v3887 = vadd.f32 0.0, %v3886
  %v3888 = vpop.f32.mrb[0].mxu0
  %3889 = vmatprep.mubr.f32.mxu0 0.0
  %3890 = vmatmul.mubr.f32.gmra.mrb[0].mxu0 %v3574
  %v3891 = vpop.f32.mrb[0].mxu0
  %v3892 = vadd.f32 0.0, %v3891
  %v3893 = vpop.f32.mrb[0].mxu0
  %3894 = vmatprep.mubr.f32.mxu0 0.0
  %3895 = vmatmul.mubr.f32.gmra.mrb[0].mxu0 %v3577
  %v3896 = vpop.f32.mrb[0].mxu0
  %v3897 = vadd.f32 0.0, %v3896
  %v3898 = vpop.f32.mrb[0].mxu0
  %3899 = vmatprep.mubr.f32.mxu0 0.0
  %3900 = vmatmul.mubr.f32.gmra.mrb[0].mxu0 %v3580
  %v3901 = vpop.f32.mrb[0].mxu0
  %v3902 = vadd.f32 0.0, %v3901
  %v3903 = vpop.f32.mrb[0].mxu0
  %3904 = vmatprep.mubr.f32.mxu0 0.0
  %3905 = vmatmul.mubr.f32.gmra.mrb[0].mxu0 %v3583
  %v3906 = vpop.f32.mrb[0].mxu0
  %v3907 = vadd.f32 0.0, %v3906
  %v3908 = vpop.f32.mrb[0].mxu0
  %3909 = vmatprep.mubr.f32.mxu0 0.0
  %3910 = vmatmul.mubr.f32.gmra.mrb[0].mxu0 %v3586
  %v3911 = vpop.f32.mrb[0].mxu0
  %v3912 = vadd.f32 0.0, %v3911
  %v3913 = vpop.f32.mrb[0].mxu0
  %3914 = vmatprep.mubr.f32.mxu0 0.0
  %3915 = vmatmul.mubr.f32.gmra.mrb[0].mxu0 %v3589
  %v3916 = vpop.f32.mrb[0].mxu0
  %v3917 = vadd.f32 0.0, %v3916
  %v3918 = vpop.f32.mrb[0].mxu0
  %3919 = vmatprep.mubr.f32.mxu0 0.0
  %3920 = vmatmul.mubr.f32.gmra.mrb[0].mxu0 %v3592
  %v3921 = vpop.f32.mrb[0].mxu0
  %v3922 = vadd.f32 0.0, %v3921
  %v3923 = vpop.f32.mrb[0].mxu0
  %3924 = vmatprep.mubr.f32.mxu0 0.0
  %3925 = vmatmul.mubr.f32.gmra.mrb[0].mxu0 %v3595
  %v3926 = vpop.f32.mrb[0].mxu0
  %v3927 = vadd.f32 0.0, %v3926
  %v3928 = vpop.f32.mrb[0].mxu0
  %3929 = vmatprep.mubr.f32.mxu0 0.0
  %3930 = vmatmul.mubr.f32.gmra.mrb[0].mxu0 %v3598
  %v3931 = vpop.f32.mrb[0].mxu0
  %v3932 = vadd.f32 0.0, %v3931
  %v3933 = vpop.f32.mrb[0].mxu0
  %3934 = vmatprep.mubr.f32.mxu0 0.0
  %3935 = vmatmul.mubr.f32.gmra.mrb[0].mxu0 %v3601
  %v3936 = vpop.f32.mrb[0].mxu0
  %v3937 = vadd.f32 0.0, %v3936
  %v3938 = vpop.f32.mrb[0].mxu0
  %3939 = vmatprep.mubr.f32.mxu0 0.0
  %3940 = vmatmul.mubr.f32.gmra.mrb[0].mxu0 %v3604
  %v3941 = vpop.f32.mrb[0].mxu0
  %v3942 = vadd.f32 0.0, %v3941
  %v3943 = vpop.f32.mrb[0].mxu0
  %3944 = vmatprep.mubr.f32.mxu0 0.0
  %3945 = vmatmul.mubr.f32.gmra.mrb[0].mxu0 %v3607
  %v3946 = vpop.f32.mrb[0].mxu0
  %v3947 = vadd.f32 0.0, %v3946
  %v3948 = vpop.f32.mrb[0].mxu0
  %3949 = vmatprep.mubr.f32.mxu0 0.0
  %3950 = vmatmul.mubr.f32.gmra.mrb[0].mxu0 %v3610
  %v3951 = vpop.f32.mrb[0].mxu0
  %v3952 = vadd.f32 0.0, %v3951
  %v3953 = vpop.f32.mrb[0].mxu0
  %3954 = vmatprep.mubr.f32.mxu0 0.0
  %3955 = vmatmul.mubr.f32.gmra.mrb[0].mxu0 %v3613
  %v3956 = vpop.f32.mrb[0].mxu0
  %v3957 = vadd.f32 0.0, %v3956
  %v3958 = vpop.f32.mrb[0].mxu0
  %3959 = vmatprep.mubr.f32.mxu0 0.0
  %3960 = vmatmul.mubr.f32.gmra.mrb[0].mxu0 %v3616
  %v3961 = vpop.f32.mrb[0].mxu0
  %v3962 = vadd.f32 0.0, %v3961
  %v3963 = vpop.f32.mrb[0].mxu0
  %3964 = vmatprep.mubr.f32.mxu0 0.0
  %3965 = vmatmul.mubr.f32.gmra.mrb[0].mxu0 %v3619
  %v3966 = vpop.f32.mrb[0].mxu0
  %v3967 = vadd.f32 0.0, %v3966
  %v3968 = vpop.f32.mrb[0].mxu0
  %3969 = vmatprep.mubr.f32.mxu0 0.0
  %3970 = vmatmul.mubr.f32.gmra.mrb[0].mxu0 %v3622
  %v3971 = vpop.f32.mrb[0].mxu0
  %v3972 = vadd.f32 0.0, %v3971
  %v3973 = vpop.f32.mrb[0].mxu0
  %3974 = vmatprep.mubr.f32.mxu0 0.0
  %3975 = vmatmul.mubr.f32.gmra.mrb[0].mxu0 %v3625
  %v3976 = vpop.f32.mrb[0].mxu0
  %v3977 = vadd.f32 0.0, %v3976
  %v3978 = vpop.f32.mrb[0].mxu0
  %3979 = vmatprep.mubr.f32.mxu0 0.0
  %3980 = vmatmul.mubr.f32.gmra.mrb[0].mxu0 %v3628
  %v3981 = vpop.f32.mrb[0].mxu0
  %v3982 = vadd.f32 0.0, %v3981
  %v3983 = vpop.f32.mrb[0].mxu0
  %3984 = vmatprep.mubr.f32.mxu0 0.0
  %3985 = vmatmul.mubr.f32.gmra.mrb[0].mxu0 %v3631
  %v3986 = vpop.f32.mrb[0].mxu0
  %v3987 = vadd.f32 0.0, %v3986
  %v3988 = vpop.f32.mrb[0].mxu0
  %3989 = vmatprep.mubr.f32.mxu0 0.0
  %3990 = vmatmul.mubr.f32.gmra.mrb[0].mxu0 %v3634
  %v3991 = vpop.f32.mrb[0].mxu0
  %v3992 = vadd.f32 0.0, %v3991
  %v3993 = vpop.f32.mrb[0].mxu0
  %3994 = vmatprep.mubr.f32.mxu0 0.0
  %3995 = vmatmul.mubr.f32.gmra.mrb[0].mxu0 %v3637
  %v3996 = vpop.f32.mrb[0].mxu0
  %v3997 = vadd.f32 0.0, %v3996
  %v3998 = vpop.f32.mrb[0].mxu0
  %3999 = vmatprep.mubr.f32.mxu0 0.0
  %4000 = vmatmul.mubr.f32.gmra.mrb[0].mxu0 %v3640
  %v4001 = vpop.f32.mrb[0].mxu0
  %v4002 = vadd.f32 0.0, %v4001
  %v4003 = vpop.f32.mrb[0].mxu0
  %4004 = vmatprep.mubr.f32.mxu0 0.0
  %4005 = vmatmul.mubr.f32.gmra.mrb[0].mxu0 %v3643
  %v4006 = vpop.f32.mrb[0].mxu0
  %v4007 = vadd.f32 0.0, %v4006
  %v4008 = vpop.f32.mrb[0].mxu0
  %4009 = vmatprep.mubr.f32.mxu0 0.0
  %4010 = vmatmul.mubr.f32.gmra.mrb[0].mxu0 %v3646
  %v4011 = vpop.f32.mrb[0].mxu0
  %v4012 = vadd.f32 0.0, %v4011
  %v4013 = vpop.f32.mrb[0].mxu0
  %4014 = vmatprep.mubr.f32.mxu0 0.0
  %4015 = vmatmul.mubr.f32.gmra.mrb[0].mxu0 %v3649
  %v4016 = vpop.f32.mrb[0].mxu0
  %v4017 = vadd.f32 0.0, %v4016
  %v4018 = vpop.f32.mrb[0].mxu0
  %4019 = vmatprep.mubr.f32.mxu0 0.0
  %4020 = vmatmul.mubr.f32.gmra.mrb[0].mxu0 %v3652
  %v4021 = vpop.f32.mrb[0].mxu0
  %v4022 = vadd.f32 0.0, %v4021
  %v4023 = vpop.f32.mrb[0].mxu0
  %4024 = vmatprep.mubr.f32.mxu0 0.0
  %4025 = vmatmul.mubr.f32.gmra.mrb[0].mxu0 %v3655
  %v4026 = vpop.f32.mrb[0].mxu0
  %v4027 = vadd.f32 0.0, %v4026
  %v4028 = vpop.f32.mrb[0].mxu0
  %4029 = vmatprep.mubr.f32.mxu0 0.0
  %4030 = vmatmul.mubr.f32.gmra.mrb[0].mxu0 %v3658
  %v4031 = vpop.f32.mrb[0].mxu0
  %v4032 = vadd.f32 0.0, %v4031
  %v4033 = vpop.f32.mrb[0].mxu0
  %4034 = vmatprep.mubr.f32.mxu0 0.0
  %4035 = vmatmul.mubr.f32.gmra.mrb[0].mxu0 %v3661
  %v4036 = vpop.f32.mrb[0].mxu0
  %v4037 = vadd.f32 0.0, %v4036
  %v4038 = vpop.f32.mrb[0].mxu0
  %4039 = vmatprep.mubr.f32.mxu0 0.0
  %4040 = vmatmul.mubr.f32.gmra.mrb[0].mxu0 %v3664
  %v4041 = vpop.f32.mrb[0].mxu0
  %v4042 = vadd.f32 0.0, %v4041
  %v4043 = vpop.f32.mrb[0].mxu0
  %4044 = vmatprep.mubr.f32.mxu0 0.0
  %4045 = vmatmul.mubr.f32.gmra.mrb[0].mxu0 %v3667
  %v4046 = vpop.f32.mrb[0].mxu0
  %v4047 = vadd.f32 0.0, %v4046
  %v4048 = vpop.f32.mrb[0].mxu0
  %4049 = vmatprep.mubr.f32.mxu0 0.0
  %4050 = vmatmul.mubr.f32.gmra.mrb[0].mxu0 %v3670
  %v4051 = vpop.f32.mrb[0].mxu0
  %v4052 = vadd.f32 0.0, %v4051
  %v4053 = vpop.f32.mrb[0].mxu0
  %4054 = vmatprep.mubr.f32.mxu0 0.0
  %4055 = vmatmul.mubr.f32.gmra.mrb[0].mxu0 %v3673
  %v4056 = vpop.f32.mrb[0].mxu0
  %v4057 = vadd.f32 0.0, %v4056
  %v4058 = vpop.f32.mrb[0].mxu0
  %4059 = vdwg.mxu0
  %v4060 = vadd.f32 %v3099, %v3742
  %v4061 = vadd.f32 %v3104, %v3747
  %v4062 = vadd.f32 %v3109, %v3752
  %v4063 = vadd.f32 %v3114, %v3757
  %v4064 = vadd.f32 %v3119, %v3762
  %v4065 = vadd.f32 %v3124, %v3767
  %v4066 = vadd.f32 %v3129, %v3772
  %v4067 = vadd.f32 %v3134, %v3777
  %v4068 = vadd.f32 %v3139, %v3782
  %v4069 = vadd.f32 %v3144, %v3787
  %v4070 = vadd.f32 %v3149, %v3792
  %v4071 = vadd.f32 %v3154, %v3797
  %v4072 = vadd.f32 %v3159, %v3802
  %v4073 = vadd.f32 %v3164, %v3807
  %v4074 = vadd.f32 %v3169, %v3812
  %v4075 = vadd.f32 %v3174, %v3817
  %v4076 = vadd.f32 %v3179, %v3822
  %v4077 = vadd.f32 %v3184, %v3827
  %v4078 = vadd.f32 %v3189, %v3832
  %v4079 = vadd.f32 %v3194, %v3837
  %v4080 = vadd.f32 %v3199, %v3842
  %v4081 = vadd.f32 %v3204, %v3847
  %v4082 = vadd.f32 %v3209, %v3852
  %v4083 = vadd.f32 %v3214, %v3857
  %v4084 = vadd.f32 %v3219, %v3862
  %v4085 = vadd.f32 %v3224, %v3867
  %v4086 = vadd.f32 %v3229, %v3872
  %v4087 = vadd.f32 %v3234, %v3877
  %v4088 = vadd.f32 %v3239, %v3882
  %v4089 = vadd.f32 %v3244, %v3887
  %v4090 = vadd.f32 %v3249, %v3892
  %v4091 = vadd.f32 %v3254, %v3897
  %v4092 = vadd.f32 %v3259, %v3902
  %v4093 = vadd.f32 %v3264, %v3907
  %v4094 = vadd.f32 %v3269, %v3912
  %v4095 = vadd.f32 %v3274, %v3917
  %v4096 = vadd.f32 %v3279, %v3922
  %v4097 = vadd.f32 %v3284, %v3927
  %v4098 = vadd.f32 %v3289, %v3932
  %v4099 = vadd.f32 %v3294, %v3937
  %v4100 = vadd.f32 %v3299, %v3942
  %v4101 = vadd.f32 %v3304, %v3947
  %v4102 = vadd.f32 %v3309, %v3952
  %v4103 = vadd.f32 %v3314, %v3957
  %v4104 = vadd.f32 %v3319, %v3962
  %v4105 = vadd.f32 %v3324, %v3967
  %v4106 = vadd.f32 %v3329, %v3972
  %v4107 = vadd.f32 %v3334, %v3977
  %v4108 = vadd.f32 %v3339, %v3982
  %v4109 = vadd.f32 %v3344, %v3987
  %v4110 = vadd.f32 %v3349, %v3992
  %v4111 = vadd.f32 %v3354, %v3997
  %v4112 = vadd.f32 %v3359, %v4002
  %v4113 = vadd.f32 %v3364, %v4007
  %v4114 = vadd.f32 %v3369, %v4012
  %v4115 = vadd.f32 %v3374, %v4017
  %v4116 = vadd.f32 %v3379, %v4022
  %v4117 = vadd.f32 %v3384, %v4027
  %v4118 = vadd.f32 %v3389, %v4032
  %v4119 = vadd.f32 %v3394, %v4037
  %v4120 = vadd.f32 %v3399, %v4042
  %v4121 = vadd.f32 %v3404, %v4047
  %v4122 = vadd.f32 %v3409, %v4052
  %v4123 = vadd.f32 %v3414, %v4057
  %v4124 = vld [vmem:[%s2067] sm:$0xff]
  %v4125 = vld [vmem:[%s2067 + $0x8] sm:$0xff]
  %v4126 = vld [vmem:[%s2067 + $0x18] sm:$0xff]
  %v4127 = vld [vmem:[%s2067 + $0x20] sm:$0xff]
  %v4128 = vld [vmem:[%s2067 + $0x30] sm:$0xff]
  %v4129 = vld [vmem:[%s2067 + $0x38] sm:$0xff]
  %v4130 = vld [vmem:[%s2067 + $0x48] sm:$0xff]
  %v4131 = vld [vmem:[%s2067 + $0x50] sm:$0xff]
  %v4132 = vld [vmem:[%s2067 + $0x60] sm:$0xff]
  %v4133 = vld [vmem:[%s2067 + $0x68] sm:$0xff]
  %v4134 = vld [vmem:[%s2067 + $0x78] sm:$0xff]
  %v4135 = vld [vmem:[%s2067 + $0x80] sm:$0xff]
  %v4136 = vld [vmem:[%s2067 + $0x90] sm:$0xff]
  %v4137 = vld [vmem:[%s2067 + $0x98] sm:$0xff]
  %v4138 = vld [vmem:[%s2067 + $0xa8] sm:$0xff]
  %v4139 = vld [vmem:[%s2067 + $0xb0] sm:$0xff]
  %v4140 = vld [vmem:[%s2067 + $0xc0] sm:$0xff]
  %v4141 = vld [vmem:[%s2067 + $0xc8] sm:$0xff]
  %v4142 = vld [vmem:[%s2067 + $0xd8] sm:$0xff]
  %v4143 = vld [vmem:[%s2067 + $0xe0] sm:$0xff]
  %v4144 = vld [vmem:[%s2067 + $0xf0] sm:$0xff]
  %v4145 = vld [vmem:[%s2067 + $0xf8] sm:$0xff]
  %v4146 = vld [vmem:[%s2067 + $0x108] sm:$0xff]
  %v4147 = vld [vmem:[%s2067 + $0x110] sm:$0xff]
  %v4148 = vld [vmem:[%s2067 + $0x120] sm:$0xff]
  %v4149 = vld [vmem:[%s2067 + $0x128] sm:$0xff]
  %v4150 = vld [vmem:[%s2067 + $0x138] sm:$0xff]
  %v4151 = vld [vmem:[%s2067 + $0x140] sm:$0xff]
  %v4152 = vld [vmem:[%s2067 + $0x150] sm:$0xff]
  %v4153 = vld [vmem:[%s2067 + $0x158] sm:$0xff]
  %v4154 = vld [vmem:[%s2067 + $0x168] sm:$0xff]
  %v4155 = vld [vmem:[%s2067 + $0x170] sm:$0xff]
  %v4156 = vld [vmem:[%s2067 + $0x1b0] sm:$0xff]
  %v4157 = vld [vmem:[%s2067 + $0x1b8] sm:$0xff]
  %v4158 = vld [vmem:[%s2067 + $0x1c8] sm:$0xff]
  %v4159 = vld [vmem:[%s2067 + $0x1d0] sm:$0xff]
  %v4160 = vld [vmem:[%s2067 + $0x1e0] sm:$0xff]
  %v4161 = vld [vmem:[%s2067 + $0x1e8] sm:$0xff]
  %v4162 = vld [vmem:[%s2067 + $0x1f8] sm:$0xff]
  %v4163 = vld [vmem:[%s2067 + $0x200] sm:$0xff]
  %v4164 = vld [vmem:[%s2067 + $0x210] sm:$0xff]
  %v4165 = vld [vmem:[%s2067 + $0x218] sm:$0xff]
  %v4166 = vld [vmem:[%s2067 + $0x228] sm:$0xff]
  %v4167 = vld [vmem:[%s2067 + $0x230] sm:$0xff]
  %v4168 = vld [vmem:[%s2067 + $0x240] sm:$0xff]
  %v4169 = vld [vmem:[%s2067 + $0x248] sm:$0xff]
  %v4170 = vld [vmem:[%s2067 + $0x258] sm:$0xff]
  %v4171 = vld [vmem:[%s2067 + $0x260] sm:$0xff]
  %v4172 = vld [vmem:[%s2067 + $0x270] sm:$0xff]
  %v4173 = vld [vmem:[%s2067 + $0x278] sm:$0xff]
  %v4174 = vld [vmem:[%s2067 + $0x288] sm:$0xff]
  %v4175 = vld [vmem:[%s2067 + $0x290] sm:$0xff]
  %v4176 = vld [vmem:[%s2067 + $0x2a0] sm:$0xff]
  %v4177 = vld [vmem:[%s2067 + $0x2a8] sm:$0xff]
  %v4178 = vld [vmem:[%s2067 + $0x2b8] sm:$0xff]
  %v4179 = vld [vmem:[%s2067 + $0x2c0] sm:$0xff]
  %v4180 = vld [vmem:[%s2067 + $0x2d0] sm:$0xff]
  %v4181 = vld [vmem:[%s2067 + $0x2d8] sm:$0xff]
  %v4182 = vld [vmem:[%s2067 + $0x2e8] sm:$0xff]
  %v4183 = vld [vmem:[%s2067 + $0x2f0] sm:$0xff]
  %v4184 = vld [vmem:[%s2067 + $0x300] sm:$0xff]
  %v4185 = vld [vmem:[%s2067 + $0x308] sm:$0xff]
  %v4186 = vld [vmem:[%s2067 + $0x318] sm:$0xff]
  %v4187 = vld [vmem:[%s2067 + $0x320] sm:$0xff]
  %s4188 = scalar_lea.vmem %s4, 24
  %v4189 = vld [vmem:[%s4188] sm:$0xff]
  %v4191 = vsel %vm1354, %v4124, 0
  %v4194 = vsel %vm1354, %v4125, 0
  %v4197 = vsel %vm1354, %v4126, 0
  %v4200 = vsel %vm1354, %v4127, 0
  %v4203 = vsel %vm1354, %v4128, 0
  %v4206 = vsel %vm1354, %v4129, 0
  %v4209 = vsel %vm1354, %v4130, 0
  %v4212 = vsel %vm1354, %v4131, 0
  %v4215 = vsel %vm1354, %v4132, 0
  %v4218 = vsel %vm1354, %v4133, 0
  %v4221 = vsel %vm1354, %v4134, 0
  %v4224 = vsel %vm1354, %v4135, 0
  %v4227 = vsel %vm1354, %v4136, 0
  %v4230 = vsel %vm1354, %v4137, 0
  %v4233 = vsel %vm1354, %v4138, 0
  %v4236 = vsel %vm1354, %v4139, 0
  %v4239 = vsel %vm1354, %v4140, 0
  %v4242 = vsel %vm1354, %v4141, 0
  %v4245 = vsel %vm1354, %v4142, 0
  %v4248 = vsel %vm1354, %v4143, 0
  %v4251 = vsel %vm1354, %v4144, 0
  %v4254 = vsel %vm1354, %v4145, 0
  %v4257 = vsel %vm1354, %v4146, 0
  %v4260 = vsel %vm1354, %v4147, 0
  %v4263 = vsel %vm1354, %v4148, 0
  %v4266 = vsel %vm1354, %v4149, 0
  %v4269 = vsel %vm1354, %v4150, 0
  %v4272 = vsel %vm1354, %v4151, 0
  %v4275 = vsel %vm1354, %v4152, 0
  %v4278 = vsel %vm1354, %v4153, 0
  %v4281 = vsel %vm1354, %v4154, 0
  %v4284 = vsel %vm1354, %v4155, 0
  %v4287 = vsel %vm1354, %v4156, 0
  %v4290 = vsel %vm1354, %v4157, 0
  %v4293 = vsel %vm1354, %v4158, 0
  %v4296 = vsel %vm1354, %v4159, 0
  %v4299 = vsel %vm1354, %v4160, 0
  %v4302 = vsel %vm1354, %v4161, 0
  %v4305 = vsel %vm1354, %v4162, 0
  %v4308 = vsel %vm1354, %v4163, 0
  %v4311 = vsel %vm1354, %v4164, 0
  %v4314 = vsel %vm1354, %v4165, 0
  %v4317 = vsel %vm1354, %v4166, 0
  %v4320 = vsel %vm1354, %v4167, 0
  %v4323 = vsel %vm1354, %v4168, 0
  %v4326 = vsel %vm1354, %v4169, 0
  %v4329 = vsel %vm1354, %v4170, 0
  %v4332 = vsel %vm1354, %v4171, 0
  %v4335 = vsel %vm1354, %v4172, 0
  %v4338 = vsel %vm1354, %v4173, 0
  %v4341 = vsel %vm1354, %v4174, 0
  %v4344 = vsel %vm1354, %v4175, 0
  %v4347 = vsel %vm1354, %v4176, 0
  %v4350 = vsel %vm1354, %v4177, 0
  %v4353 = vsel %vm1354, %v4178, 0
  %v4356 = vsel %vm1354, %v4179, 0
  %v4359 = vsel %vm1354, %v4180, 0
  %v4362 = vsel %vm1354, %v4181, 0
  %v4365 = vsel %vm1354, %v4182, 0
  %v4368 = vsel %vm1354, %v4183, 0
  %v4371 = vsel %vm1354, %v4184, 0
  %v4374 = vsel %vm1354, %v4185, 0
  %v4377 = vsel %vm1354, %v4186, 0
  %v4380 = vsel %vm1354, %v4187, 0
  %4382 = vmatprep.subr.mxu0 0.0
  %4383 = vmatpush1.msra.mxu0 %v4189
  %4384 = vmatprep.subr.mxu0 0.0
  %4385 = vmatpush1.msra.mxu0 0.0
  %4386 = vmatprep.subr.mxu0 0.0
  %4387 = vmatpush1.msra.mxu0 0.0
  %4388 = vmatprep.subr.mxu0 0.0
  %4389 = vmatpush1.msra.mxu0 0.0
  %4390 = vmatprep.subr.mxu0 0.0
  %4391 = vmatpush1.msra.mxu0 0.0
  %4392 = vmatprep.subr.mxu0 0.0
  %4393 = vmatpush1.msra.mxu0 0.0
  %4394 = vmatprep.subr.mxu0 0.0
  %4395 = vmatpush1.msra.mxu0 0.0
  %4396 = vmatprep.subr.mxu0 0.0
  %4397 = vmatpush1.msra.mxu0 0.0
  %4398 = vmatprep.subr.mxu0 0.0
  %4399 = vmatpush1.msra.mxu0 0.0
  %4400 = vmatprep.subr.mxu0 0.0
  %4401 = vmatpush1.msra.mxu0 0.0
  %4402 = vmatprep.subr.mxu0 0.0
  %4403 = vmatpush1.msra.mxu0 0.0
  %4404 = vmatprep.subr.mxu0 0.0
  %4405 = vmatpush1.msra.mxu0 0.0
  %4406 = vmatprep.subr.mxu0 0.0
  %4407 = vmatpush1.msra.mxu0 0.0
  %4408 = vmatprep.subr.mxu0 0.0
  %4409 = vmatpush1.msra.mxu0 0.0
  %4410 = vmatprep.subr.mxu0 0.0
  %4411 = vmatpush1.msra.mxu0 0.0
  %4412 = vmatprep.subr.mxu0 0.0
  %4413 = vmatpush1.msra.mxu0 0.0
  %4414 = vmatprep.subr.mxu0 0.0
  %4415 = vmatpush1.msra.mxu0 0.0
  %4416 = vmatprep.subr.mxu0 0.0
  %4417 = vmatpush1.msra.mxu0 0.0
  %4418 = vmatprep.subr.mxu0 0.0
  %4419 = vmatpush1.msra.mxu0 0.0
  %4420 = vmatprep.subr.mxu0 0.0
  %4421 = vmatpush1.msra.mxu0 0.0
  %4422 = vmatprep.subr.mxu0 0.0
  %4423 = vmatpush1.msra.mxu0 0.0
  %4424 = vmatprep.subr.mxu0 0.0
  %4425 = vmatpush1.msra.mxu0 0.0
  %4426 = vmatprep.subr.mxu0 0.0
  %4427 = vmatpush1.msra.mxu0 0.0
  %4428 = vmatprep.subr.mxu0 0.0
  %4429 = vmatpush1.msra.mxu0 0.0
  %4430 = vmatprep.subr.mxu0 0.0
  %4431 = vmatpush1.msra.mxu0 0.0
  %4432 = vmatprep.subr.mxu0 0.0
  %4433 = vmatpush1.msra.mxu0 0.0
  %4434 = vmatprep.subr.mxu0 0.0
  %4435 = vmatpush1.msra.mxu0 0.0
  %4436 = vmatprep.subr.mxu0 0.0
  %4437 = vmatpush1.msra.mxu0 0.0
  %4438 = vmatprep.subr.mxu0 0.0
  %4439 = vmatpush1.msra.mxu0 0.0
  %4440 = vmatprep.subr.mxu0 0.0
  %4441 = vmatpush1.msra.mxu0 0.0
  %4442 = vmatprep.subr.mxu0 0.0
  %4443 = vmatpush1.msra.mxu0 0.0
  %4444 = vmatprep.subr.mxu0 0.0
  %4445 = vmatpush1.msra.mxu0 0.0
  %4446 = vmatprep.mubr.f32.mxu0 0.0
  %4447 = vmatmul.mubr.f32.gmra.mrb[0].mxu0 %v4191
  %v4448 = vpop.f32.mrb[0].mxu0
  %v4449 = vadd.f32 0.0, %v4448
  %v4450 = vpop.f32.mrb[0].mxu0
  %4451 = vmatprep.mubr.f32.mxu0 0.0
  %4452 = vmatmul.mubr.f32.gmra.mrb[0].mxu0 %v4194
  %v4453 = vpop.f32.mrb[0].mxu0
  %v4454 = vadd.f32 0.0, %v4453
  %v4455 = vpop.f32.mrb[0].mxu0
  %4456 = vmatprep.mubr.f32.mxu0 0.0
  %4457 = vmatmul.mubr.f32.gmra.mrb[0].mxu0 %v4197
  %v4458 = vpop.f32.mrb[0].mxu0
  %v4459 = vadd.f32 0.0, %v4458
  %v4460 = vpop.f32.mrb[0].mxu0
  %4461 = vmatprep.mubr.f32.mxu0 0.0
  %4462 = vmatmul.mubr.f32.gmra.mrb[0].mxu0 %v4200
  %v4463 = vpop.f32.mrb[0].mxu0
  %v4464 = vadd.f32 0.0, %v4463
  %v4465 = vpop.f32.mrb[0].mxu0
  %4466 = vmatprep.mubr.f32.mxu0 0.0
  %4467 = vmatmul.mubr.f32.gmra.mrb[0].mxu0 %v4203
  %v4468 = vpop.f32.mrb[0].mxu0
  %v4469 = vadd.f32 0.0, %v4468
  %v4470 = vpop.f32.mrb[0].mxu0
  %4471 = vmatprep.mubr.f32.mxu0 0.0
  %4472 = vmatmul.mubr.f32.gmra.mrb[0].mxu0 %v4206
  %v4473 = vpop.f32.mrb[0].mxu0
  %v4474 = vadd.f32 0.0, %v4473
  %v4475 = vpop.f32.mrb[0].mxu0
  %4476 = vmatprep.mubr.f32.mxu0 0.0
  %4477 = vmatmul.mubr.f32.gmra.mrb[0].mxu0 %v4209
  %v4478 = vpop.f32.mrb[0].mxu0
  %v4479 = vadd.f32 0.0, %v4478
  %v4480 = vpop.f32.mrb[0].mxu0
  %4481 = vmatprep.mubr.f32.mxu0 0.0
  %4482 = vmatmul.mubr.f32.gmra.mrb[0].mxu0 %v4212
  %v4483 = vpop.f32.mrb[0].mxu0
  %v4484 = vadd.f32 0.0, %v4483
  %v4485 = vpop.f32.mrb[0].mxu0
  %4486 = vmatprep.mubr.f32.mxu0 0.0
  %4487 = vmatmul.mubr.f32.gmra.mrb[0].mxu0 %v4215
  %v4488 = vpop.f32.mrb[0].mxu0
  %v4489 = vadd.f32 0.0, %v4488
  %v4490 = vpop.f32.mrb[0].mxu0
  %4491 = vmatprep.mubr.f32.mxu0 0.0
  %4492 = vmatmul.mubr.f32.gmra.mrb[0].mxu0 %v4218
  %v4493 = vpop.f32.mrb[0].mxu0
  %v4494 = vadd.f32 0.0, %v4493
  %v4495 = vpop.f32.mrb[0].mxu0
  %4496 = vmatprep.mubr.f32.mxu0 0.0
  %4497 = vmatmul.mubr.f32.gmra.mrb[0].mxu0 %v4221
  %v4498 = vpop.f32.mrb[0].mxu0
  %v4499 = vadd.f32 0.0, %v4498
  %v4500 = vpop.f32.mrb[0].mxu0
  %4501 = vmatprep.mubr.f32.mxu0 0.0
  %4502 = vmatmul.mubr.f32.gmra.mrb[0].mxu0 %v4224
  %v4503 = vpop.f32.mrb[0].mxu0
  %v4504 = vadd.f32 0.0, %v4503
  %v4505 = vpop.f32.mrb[0].mxu0
  %4506 = vmatprep.mubr.f32.mxu0 0.0
  %4507 = vmatmul.mubr.f32.gmra.mrb[0].mxu0 %v4227
  %v4508 = vpop.f32.mrb[0].mxu0
  %v4509 = vadd.f32 0.0, %v4508
  %v4510 = vpop.f32.mrb[0].mxu0
  %4511 = vmatprep.mubr.f32.mxu0 0.0
  %4512 = vmatmul.mubr.f32.gmra.mrb[0].mxu0 %v4230
  %v4513 = vpop.f32.mrb[0].mxu0
  %v4514 = vadd.f32 0.0, %v4513
  %v4515 = vpop.f32.mrb[0].mxu0
  %4516 = vmatprep.mubr.f32.mxu0 0.0
  %4517 = vmatmul.mubr.f32.gmra.mrb[0].mxu0 %v4233
  %v4518 = vpop.f32.mrb[0].mxu0
  %v4519 = vadd.f32 0.0, %v4518
  %v4520 = vpop.f32.mrb[0].mxu0
  %4521 = vmatprep.mubr.f32.mxu0 0.0
  %4522 = vmatmul.mubr.f32.gmra.mrb[0].mxu0 %v4236
  %v4523 = vpop.f32.mrb[0].mxu0
  %v4524 = vadd.f32 0.0, %v4523
  %v4525 = vpop.f32.mrb[0].mxu0
  %4526 = vmatprep.mubr.f32.mxu0 0.0
  %4527 = vmatmul.mubr.f32.gmra.mrb[0].mxu0 %v4239
  %v4528 = vpop.f32.mrb[0].mxu0
  %v4529 = vadd.f32 0.0, %v4528
  %v4530 = vpop.f32.mrb[0].mxu0
  %4531 = vmatprep.mubr.f32.mxu0 0.0
  %4532 = vmatmul.mubr.f32.gmra.mrb[0].mxu0 %v4242
  %v4533 = vpop.f32.mrb[0].mxu0
  %v4534 = vadd.f32 0.0, %v4533
  %v4535 = vpop.f32.mrb[0].mxu0
  %4536 = vmatprep.mubr.f32.mxu0 0.0
  %4537 = vmatmul.mubr.f32.gmra.mrb[0].mxu0 %v4245
  %v4538 = vpop.f32.mrb[0].mxu0
  %v4539 = vadd.f32 0.0, %v4538
  %v4540 = vpop.f32.mrb[0].mxu0
  %4541 = vmatprep.mubr.f32.mxu0 0.0
  %4542 = vmatmul.mubr.f32.gmra.mrb[0].mxu0 %v4248
  %v4543 = vpop.f32.mrb[0].mxu0
  %v4544 = vadd.f32 0.0, %v4543
  %v4545 = vpop.f32.mrb[0].mxu0
  %4546 = vmatprep.mubr.f32.mxu0 0.0
  %4547 = vmatmul.mubr.f32.gmra.mrb[0].mxu0 %v4251
  %v4548 = vpop.f32.mrb[0].mxu0
  %v4549 = vadd.f32 0.0, %v4548
  %v4550 = vpop.f32.mrb[0].mxu0
  %4551 = vmatprep.mubr.f32.mxu0 0.0
  %4552 = vmatmul.mubr.f32.gmra.mrb[0].mxu0 %v4254
  %v4553 = vpop.f32.mrb[0].mxu0
  %v4554 = vadd.f32 0.0, %v4553
  %v4555 = vpop.f32.mrb[0].mxu0
  %4556 = vmatprep.mubr.f32.mxu0 0.0
  %4557 = vmatmul.mubr.f32.gmra.mrb[0].mxu0 %v4257
  %v4558 = vpop.f32.mrb[0].mxu0
  %v4559 = vadd.f32 0.0, %v4558
  %v4560 = vpop.f32.mrb[0].mxu0
  %4561 = vmatprep.mubr.f32.mxu0 0.0
  %4562 = vmatmul.mubr.f32.gmra.mrb[0].mxu0 %v4260
  %v4563 = vpop.f32.mrb[0].mxu0
  %v4564 = vadd.f32 0.0, %v4563
  %v4565 = vpop.f32.mrb[0].mxu0
  %4566 = vmatprep.mubr.f32.mxu0 0.0
  %4567 = vmatmul.mubr.f32.gmra.mrb[0].mxu0 %v4263
  %v4568 = vpop.f32.mrb[0].mxu0
  %v4569 = vadd.f32 0.0, %v4568
  %v4570 = vpop.f32.mrb[0].mxu0
  %4571 = vmatprep.mubr.f32.mxu0 0.0
  %4572 = vmatmul.mubr.f32.gmra.mrb[0].mxu0 %v4266
  %v4573 = vpop.f32.mrb[0].mxu0
  %v4574 = vadd.f32 0.0, %v4573
  %v4575 = vpop.f32.mrb[0].mxu0
  %4576 = vmatprep.mubr.f32.mxu0 0.0
  %4577 = vmatmul.mubr.f32.gmra.mrb[0].mxu0 %v4269
  %v4578 = vpop.f32.mrb[0].mxu0
  %v4579 = vadd.f32 0.0, %v4578
  %v4580 = vpop.f32.mrb[0].mxu0
  %4581 = vmatprep.mubr.f32.mxu0 0.0
  %4582 = vmatmul.mubr.f32.gmra.mrb[0].mxu0 %v4272
  %v4583 = vpop.f32.mrb[0].mxu0
  %v4584 = vadd.f32 0.0, %v4583
  %v4585 = vpop.f32.mrb[0].mxu0
  %4586 = vmatprep.mubr.f32.mxu0 0.0
  %4587 = vmatmul.mubr.f32.gmra.mrb[0].mxu0 %v4275
  %v4588 = vpop.f32.mrb[0].mxu0
  %v4589 = vadd.f32 0.0, %v4588
  %v4590 = vpop.f32.mrb[0].mxu0
  %4591 = vmatprep.mubr.f32.mxu0 0.0
  %4592 = vmatmul.mubr.f32.gmra.mrb[0].mxu0 %v4278
  %v4593 = vpop.f32.mrb[0].mxu0
  %v4594 = vadd.f32 0.0, %v4593
  %v4595 = vpop.f32.mrb[0].mxu0
  %4596 = vmatprep.mubr.f32.mxu0 0.0
  %4597 = vmatmul.mubr.f32.gmra.mrb[0].mxu0 %v4281
  %v4598 = vpop.f32.mrb[0].mxu0
  %v4599 = vadd.f32 0.0, %v4598
  %v4600 = vpop.f32.mrb[0].mxu0
  %4601 = vmatprep.mubr.f32.mxu0 0.0
  %4602 = vmatmul.mubr.f32.gmra.mrb[0].mxu0 %v4284
  %v4603 = vpop.f32.mrb[0].mxu0
  %v4604 = vadd.f32 0.0, %v4603
  %v4605 = vpop.f32.mrb[0].mxu0
  %4606 = vmatprep.mubr.f32.mxu0 0.0
  %4607 = vmatmul.mubr.f32.gmra.mrb[0].mxu0 %v4287
  %v4608 = vpop.f32.mrb[0].mxu0
  %v4609 = vadd.f32 0.0, %v4608
  %v4610 = vpop.f32.mrb[0].mxu0
  %4611 = vmatprep.mubr.f32.mxu0 0.0
  %4612 = vmatmul.mubr.f32.gmra.mrb[0].mxu0 %v4290
  %v4613 = vpop.f32.mrb[0].mxu0
  %v4614 = vadd.f32 0.0, %v4613
  %v4615 = vpop.f32.mrb[0].mxu0
  %4616 = vmatprep.mubr.f32.mxu0 0.0
  %4617 = vmatmul.mubr.f32.gmra.mrb[0].mxu0 %v4293
  %v4618 = vpop.f32.mrb[0].mxu0
  %v4619 = vadd.f32 0.0, %v4618
  %v4620 = vpop.f32.mrb[0].mxu0
  %4621 = vmatprep.mubr.f32.mxu0 0.0
  %4622 = vmatmul.mubr.f32.gmra.mrb[0].mxu0 %v4296
  %v4623 = vpop.f32.mrb[0].mxu0
  %v4624 = vadd.f32 0.0, %v4623
  %v4625 = vpop.f32.mrb[0].mxu0
  %4626 = vmatprep.mubr.f32.mxu0 0.0
  %4627 = vmatmul.mubr.f32.gmra.mrb[0].mxu0 %v4299
  %v4628 = vpop.f32.mrb[0].mxu0
  %v4629 = vadd.f32 0.0, %v4628
  %v4630 = vpop.f32.mrb[0].mxu0
  %4631 = vmatprep.mubr.f32.mxu0 0.0
  %4632 = vmatmul.mubr.f32.gmra.mrb[0].mxu0 %v4302
  %v4633 = vpop.f32.mrb[0].mxu0
  %v4634 = vadd.f32 0.0, %v4633
  %v4635 = vpop.f32.mrb[0].mxu0
  %4636 = vmatprep.mubr.f32.mxu0 0.0
  %4637 = vmatmul.mubr.f32.gmra.mrb[0].mxu0 %v4305
  %v4638 = vpop.f32.mrb[0].mxu0
  %v4639 = vadd.f32 0.0, %v4638
  %v4640 = vpop.f32.mrb[0].mxu0
  %4641 = vmatprep.mubr.f32.mxu0 0.0
  %4642 = vmatmul.mubr.f32.gmra.mrb[0].mxu0 %v4308
  %v4643 = vpop.f32.mrb[0].mxu0
  %v4644 = vadd.f32 0.0, %v4643
  %v4645 = vpop.f32.mrb[0].mxu0
  %4646 = vmatprep.mubr.f32.mxu0 0.0
  %4647 = vmatmul.mubr.f32.gmra.mrb[0].mxu0 %v4311
  %v4648 = vpop.f32.mrb[0].mxu0
  %v4649 = vadd.f32 0.0, %v4648
  %v4650 = vpop.f32.mrb[0].mxu0
  %4651 = vmatprep.mubr.f32.mxu0 0.0
  %4652 = vmatmul.mubr.f32.gmra.mrb[0].mxu0 %v4314
  %v4653 = vpop.f32.mrb[0].mxu0
  %v4654 = vadd.f32 0.0, %v4653
  %v4655 = vpop.f32.mrb[0].mxu0
  %4656 = vmatprep.mubr.f32.mxu0 0.0
  %4657 = vmatmul.mubr.f32.gmra.mrb[0].mxu0 %v4317
  %v4658 = vpop.f32.mrb[0].mxu0
  %v4659 = vadd.f32 0.0, %v4658
  %v4660 = vpop.f32.mrb[0].mxu0
  %4661 = vmatprep.mubr.f32.mxu0 0.0
  %4662 = vmatmul.mubr.f32.gmra.mrb[0].mxu0 %v4320
  %v4663 = vpop.f32.mrb[0].mxu0
  %v4664 = vadd.f32 0.0, %v4663
  %v4665 = vpop.f32.mrb[0].mxu0
  %4666 = vmatprep.mubr.f32.mxu0 0.0
  %4667 = vmatmul.mubr.f32.gmra.mrb[0].mxu0 %v4323
  %v4668 = vpop.f32.mrb[0].mxu0
  %v4669 = vadd.f32 0.0, %v4668
  %v4670 = vpop.f32.mrb[0].mxu0
  %4671 = vmatprep.mubr.f32.mxu0 0.0
  %4672 = vmatmul.mubr.f32.gmra.mrb[0].mxu0 %v4326
  %v4673 = vpop.f32.mrb[0].mxu0
  %v4674 = vadd.f32 0.0, %v4673
  %v4675 = vpop.f32.mrb[0].mxu0
  %4676 = vmatprep.mubr.f32.mxu0 0.0
  %4677 = vmatmul.mubr.f32.gmra.mrb[0].mxu0 %v4329
  %v4678 = vpop.f32.mrb[0].mxu0
  %v4679 = vadd.f32 0.0, %v4678
  %v4680 = vpop.f32.mrb[0].mxu0
  %4681 = vmatprep.mubr.f32.mxu0 0.0
  %4682 = vmatmul.mubr.f32.gmra.mrb[0].mxu0 %v4332
  %v4683 = vpop.f32.mrb[0].mxu0
  %v4684 = vadd.f32 0.0, %v4683
  %v4685 = vpop.f32.mrb[0].mxu0
  %4686 = vmatprep.mubr.f32.mxu0 0.0
  %4687 = vmatmul.mubr.f32.gmra.mrb[0].mxu0 %v4335
  %v4688 = vpop.f32.mrb[0].mxu0
  %v4689 = vadd.f32 0.0, %v4688
  %v4690 = vpop.f32.mrb[0].mxu0
  %4691 = vmatprep.mubr.f32.mxu0 0.0
  %4692 = vmatmul.mubr.f32.gmra.mrb[0].mxu0 %v4338
  %v4693 = vpop.f32.mrb[0].mxu0
  %v4694 = vadd.f32 0.0, %v4693
  %v4695 = vpop.f32.mrb[0].mxu0
  %4696 = vmatprep.mubr.f32.mxu0 0.0
  %4697 = vmatmul.mubr.f32.gmra.mrb[0].mxu0 %v4341
  %v4698 = vpop.f32.mrb[0].mxu0
  %v4699 = vadd.f32 0.0, %v4698
  %v4700 = vpop.f32.mrb[0].mxu0
  %4701 = vmatprep.mubr.f32.mxu0 0.0
  %4702 = vmatmul.mubr.f32.gmra.mrb[0].mxu0 %v4344
  %v4703 = vpop.f32.mrb[0].mxu0
  %v4704 = vadd.f32 0.0, %v4703
  %v4705 = vpop.f32.mrb[0].mxu0
  %4706 = vmatprep.mubr.f32.mxu0 0.0
  %4707 = vmatmul.mubr.f32.gmra.mrb[0].mxu0 %v4347
  %v4708 = vpop.f32.mrb[0].mxu0
  %v4709 = vadd.f32 0.0, %v4708
  %v4710 = vpop.f32.mrb[0].mxu0
  %4711 = vmatprep.mubr.f32.mxu0 0.0
  %4712 = vmatmul.mubr.f32.gmra.mrb[0].mxu0 %v4350
  %v4713 = vpop.f32.mrb[0].mxu0
  %v4714 = vadd.f32 0.0, %v4713
  %v4715 = vpop.f32.mrb[0].mxu0
  %4716 = vmatprep.mubr.f32.mxu0 0.0
  %4717 = vmatmul.mubr.f32.gmra.mrb[0].mxu0 %v4353
  %v4718 = vpop.f32.mrb[0].mxu0
  %v4719 = vadd.f32 0.0, %v4718
  %v4720 = vpop.f32.mrb[0].mxu0
  %4721 = vmatprep.mubr.f32.mxu0 0.0
  %4722 = vmatmul.mubr.f32.gmra.mrb[0].mxu0 %v4356
  %v4723 = vpop.f32.mrb[0].mxu0
  %v4724 = vadd.f32 0.0, %v4723
  %v4725 = vpop.f32.mrb[0].mxu0
  %4726 = vmatprep.mubr.f32.mxu0 0.0
  %4727 = vmatmul.mubr.f32.gmra.mrb[0].mxu0 %v4359
  %v4728 = vpop.f32.mrb[0].mxu0
  %v4729 = vadd.f32 0.0, %v4728
  %v4730 = vpop.f32.mrb[0].mxu0
  %4731 = vmatprep.mubr.f32.mxu0 0.0
  %4732 = vmatmul.mubr.f32.gmra.mrb[0].mxu0 %v4362
  %v4733 = vpop.f32.mrb[0].mxu0
  %v4734 = vadd.f32 0.0, %v4733
  %v4735 = vpop.f32.mrb[0].mxu0
  %4736 = vmatprep.mubr.f32.mxu0 0.0
  %4737 = vmatmul.mubr.f32.gmra.mrb[0].mxu0 %v4365
  %v4738 = vpop.f32.mrb[0].mxu0
  %v4739 = vadd.f32 0.0, %v4738
  %v4740 = vpop.f32.mrb[0].mxu0
  %4741 = vmatprep.mubr.f32.mxu0 0.0
  %4742 = vmatmul.mubr.f32.gmra.mrb[0].mxu0 %v4368
  %v4743 = vpop.f32.mrb[0].mxu0
  %v4744 = vadd.f32 0.0, %v4743
  %v4745 = vpop.f32.mrb[0].mxu0
  %4746 = vmatprep.mubr.f32.mxu0 0.0
  %4747 = vmatmul.mubr.f32.gmra.mrb[0].mxu0 %v4371
  %v4748 = vpop.f32.mrb[0].mxu0
  %v4749 = vadd.f32 0.0, %v4748
  %v4750 = vpop.f32.mrb[0].mxu0
  %4751 = vmatprep.mubr.f32.mxu0 0.0
  %4752 = vmatmul.mubr.f32.gmra.mrb[0].mxu0 %v4374
  %v4753 = vpop.f32.mrb[0].mxu0
  %v4754 = vadd.f32 0.0, %v4753
  %v4755 = vpop.f32.mrb[0].mxu0
  %4756 = vmatprep.mubr.f32.mxu0 0.0
  %4757 = vmatmul.mubr.f32.gmra.mrb[0].mxu0 %v4377
  %v4758 = vpop.f32.mrb[0].mxu0
  %v4759 = vadd.f32 0.0, %v4758
  %v4760 = vpop.f32.mrb[0].mxu0
  %4761 = vmatprep.mubr.f32.mxu0 0.0
  %4762 = vmatmul.mubr.f32.gmra.mrb[0].mxu0 %v4380
  %v4763 = vpop.f32.mrb[0].mxu0
  %v4764 = vadd.f32 0.0, %v4763
  %v4765 = vpop.f32.mrb[0].mxu0
  %4766 = vdwg.mxu0
  %v4767 = vadd.f32 %v4060, %v4449
  %v4768 = vadd.f32 %v4061, %v4454
  %v4769 = vadd.f32 %v4062, %v4459
  %v4770 = vadd.f32 %v4063, %v4464
  %v4771 = vadd.f32 %v4064, %v4469
  %v4772 = vadd.f32 %v4065, %v4474
  %v4773 = vadd.f32 %v4066, %v4479
  %v4774 = vadd.f32 %v4067, %v4484
  %v4775 = vadd.f32 %v4068, %v4489
  %v4776 = vadd.f32 %v4069, %v4494
  %v4777 = vadd.f32 %v4070, %v4499
  %v4778 = vadd.f32 %v4071, %v4504
  %v4779 = vadd.f32 %v4072, %v4509
  %v4780 = vadd.f32 %v4073, %v4514
  %v4781 = vadd.f32 %v4074, %v4519
  %v4782 = vadd.f32 %v4075, %v4524
  %v4783 = vadd.f32 %v4076, %v4529
  %v4784 = vadd.f32 %v4077, %v4534
  %v4785 = vadd.f32 %v4078, %v4539
  %v4786 = vadd.f32 %v4079, %v4544
  %v4787 = vadd.f32 %v4080, %v4549
  %v4788 = vadd.f32 %v4081, %v4554
  %v4789 = vadd.f32 %v4082, %v4559
  %v4790 = vadd.f32 %v4083, %v4564
  %v4791 = vadd.f32 %v4084, %v4569
  %v4792 = vadd.f32 %v4085, %v4574
  %v4793 = vadd.f32 %v4086, %v4579
  %v4794 = vadd.f32 %v4087, %v4584
  %v4795 = vadd.f32 %v4088, %v4589
  %v4796 = vadd.f32 %v4089, %v4594
  %v4797 = vadd.f32 %v4090, %v4599
  %v4798 = vadd.f32 %v4091, %v4604
  %v4799 = vadd.f32 %v4092, %v4609
  %v4800 = vadd.f32 %v4093, %v4614
  %v4801 = vadd.f32 %v4094, %v4619
  %v4802 = vadd.f32 %v4095, %v4624
  %v4803 = vadd.f32 %v4096, %v4629
  %v4804 = vadd.f32 %v4097, %v4634
  %v4805 = vadd.f32 %v4098, %v4639
  %v4806 = vadd.f32 %v4099, %v4644
  %v4807 = vadd.f32 %v4100, %v4649
  %v4808 = vadd.f32 %v4101, %v4654
  %v4809 = vadd.f32 %v4102, %v4659
  %v4810 = vadd.f32 %v4103, %v4664
  %v4811 = vadd.f32 %v4104, %v4669
  %v4812 = vadd.f32 %v4105, %v4674
  %v4813 = vadd.f32 %v4106, %v4679
  %v4814 = vadd.f32 %v4107, %v4684
  %v4815 = vadd.f32 %v4108, %v4689
  %v4816 = vadd.f32 %v4109, %v4694
  %v4817 = vadd.f32 %v4110, %v4699
  %v4818 = vadd.f32 %v4111, %v4704
  %v4819 = vadd.f32 %v4112, %v4709
  %v4820 = vadd.f32 %v4113, %v4714
  %v4821 = vadd.f32 %v4114, %v4719
  %v4822 = vadd.f32 %v4115, %v4724
  %v4823 = vadd.f32 %v4116, %v4729
  %v4824 = vadd.f32 %v4117, %v4734
  %v4825 = vadd.f32 %v4118, %v4739
  %v4826 = vadd.f32 %v4119, %v4744
  %v4827 = vadd.f32 %v4120, %v4749
  %v4828 = vadd.f32 %v4121, %v4754
  %v4829 = vadd.f32 %v4122, %v4759
  %v4830 = vadd.f32 %v4123, %v4764
  %v4831 = vld [vmem:[%s2067 + $0x1] sm:$0xff]
  %v4832 = vld [vmem:[%s2067 + $0x9] sm:$0xff]
  %v4833 = vld [vmem:[%s2067 + $0x19] sm:$0xff]
  %v4834 = vld [vmem:[%s2067 + $0x21] sm:$0xff]
  %v4835 = vld [vmem:[%s2067 + $0x31] sm:$0xff]
  %v4836 = vld [vmem:[%s2067 + $0x39] sm:$0xff]
  %v4837 = vld [vmem:[%s2067 + $0x49] sm:$0xff]
  %v4838 = vld [vmem:[%s2067 + $0x51] sm:$0xff]
  %v4839 = vld [vmem:[%s2067 + $0x61] sm:$0xff]
  %v4840 = vld [vmem:[%s2067 + $0x69] sm:$0xff]
  %v4841 = vld [vmem:[%s2067 + $0x79] sm:$0xff]
  %v4842 = vld [vmem:[%s2067 + $0x81] sm:$0xff]
  %v4843 = vld [vmem:[%s2067 + $0x91] sm:$0xff]
  %v4844 = vld [vmem:[%s2067 + $0x99] sm:$0xff]
  %v4845 = vld [vmem:[%s2067 + $0xa9] sm:$0xff]
  %v4846 = vld [vmem:[%s2067 + $0xb1] sm:$0xff]
  %v4847 = vld [vmem:[%s2067 + $0xc1] sm:$0xff]
  %v4848 = vld [vmem:[%s2067 + $0xc9] sm:$0xff]
  %v4849 = vld [vmem:[%s2067 + $0xd9] sm:$0xff]
  %v4850 = vld [vmem:[%s2067 + $0xe1] sm:$0xff]
  %v4851 = vld [vmem:[%s2067 + $0xf1] sm:$0xff]
  %v4852 = vld [vmem:[%s2067 + $0xf9] sm:$0xff]
  %v4853 = vld [vmem:[%s2067 + $0x109] sm:$0xff]
  %v4854 = vld [vmem:[%s2067 + $0x111] sm:$0xff]
  %v4855 = vld [vmem:[%s2067 + $0x121] sm:$0xff]
  %v4856 = vld [vmem:[%s2067 + $0x129] sm:$0xff]
  %v4857 = vld [vmem:[%s2067 + $0x139] sm:$0xff]
  %v4858 = vld [vmem:[%s2067 + $0x141] sm:$0xff]
  %v4859 = vld [vmem:[%s2067 + $0x151] sm:$0xff]
  %v4860 = vld [vmem:[%s2067 + $0x159] sm:$0xff]
  %v4861 = vld [vmem:[%s2067 + $0x169] sm:$0xff]
  %v4862 = vld [vmem:[%s2067 + $0x171] sm:$0xff]
  %v4863 = vld [vmem:[%s2067 + $0x1b1] sm:$0xff]
  %v4864 = vld [vmem:[%s2067 + $0x1b9] sm:$0xff]
  %v4865 = vld [vmem:[%s2067 + $0x1c9] sm:$0xff]
  %v4866 = vld [vmem:[%s2067 + $0x1d1] sm:$0xff]
  %v4867 = vld [vmem:[%s2067 + $0x1e1] sm:$0xff]
  %v4868 = vld [vmem:[%s2067 + $0x1e9] sm:$0xff]
  %v4869 = vld [vmem:[%s2067 + $0x1f9] sm:$0xff]
  %v4870 = vld [vmem:[%s2067 + $0x201] sm:$0xff]
  %v4871 = vld [vmem:[%s2067 + $0x211] sm:$0xff]
  %v4872 = vld [vmem:[%s2067 + $0x219] sm:$0xff]
  %v4873 = vld [vmem:[%s2067 + $0x229] sm:$0xff]
  %v4874 = vld [vmem:[%s2067 + $0x231] sm:$0xff]
  %v4875 = vld [vmem:[%s2067 + $0x241] sm:$0xff]
  %v4876 = vld [vmem:[%s2067 + $0x249] sm:$0xff]
  %v4877 = vld [vmem:[%s2067 + $0x259] sm:$0xff]
  %v4878 = vld [vmem:[%s2067 + $0x261] sm:$0xff]
  %v4879 = vld [vmem:[%s2067 + $0x271] sm:$0xff]
  %v4880 = vld [vmem:[%s2067 + $0x279] sm:$0xff]
  %v4881 = vld [vmem:[%s2067 + $0x289] sm:$0xff]
  %v4882 = vld [vmem:[%s2067 + $0x291] sm:$0xff]
  %v4883 = vld [vmem:[%s2067 + $0x2a1] sm:$0xff]
  %v4884 = vld [vmem:[%s2067 + $0x2a9] sm:$0xff]
  %v4885 = vld [vmem:[%s2067 + $0x2b9] sm:$0xff]
  %v4886 = vld [vmem:[%s2067 + $0x2c1] sm:$0xff]
  %v4887 = vld [vmem:[%s2067 + $0x2d1] sm:$0xff]
  %v4888 = vld [vmem:[%s2067 + $0x2d9] sm:$0xff]
  %v4889 = vld [vmem:[%s2067 + $0x2e9] sm:$0xff]
  %v4890 = vld [vmem:[%s2067 + $0x2f1] sm:$0xff]
  %v4891 = vld [vmem:[%s2067 + $0x301] sm:$0xff]
  %v4892 = vld [vmem:[%s2067 + $0x309] sm:$0xff]
  %v4893 = vld [vmem:[%s2067 + $0x319] sm:$0xff]
  %v4894 = vld [vmem:[%s2067 + $0x321] sm:$0xff]
  %s4895 = scalar_lea.vmem %s4, 32
  %v4896 = vld [vmem:[%s4895] sm:$0xff]
  %v4898 = vsel %vm1354, %v4831, 0
  %v4901 = vsel %vm1354, %v4832, 0
  %v4904 = vsel %vm1354, %v4833, 0
  %v4907 = vsel %vm1354, %v4834, 0
  %v4910 = vsel %vm1354, %v4835, 0
  %v4913 = vsel %vm1354, %v4836, 0
  %v4916 = vsel %vm1354, %v4837, 0
  %v4919 = vsel %vm1354, %v4838, 0
  %v4922 = vsel %vm1354, %v4839, 0
  %v4925 = vsel %vm1354, %v4840, 0
  %v4928 = vsel %vm1354, %v4841, 0
  %v4931 = vsel %vm1354, %v4842, 0
  %v4934 = vsel %vm1354, %v4843, 0
  %v4937 = vsel %vm1354, %v4844, 0
  %v4940 = vsel %vm1354, %v4845, 0
  %v4943 = vsel %vm1354, %v4846, 0
  %v4946 = vsel %vm1354, %v4847, 0
  %v4949 = vsel %vm1354, %v4848, 0
  %v4952 = vsel %vm1354, %v4849, 0
  %v4955 = vsel %vm1354, %v4850, 0
  %v4958 = vsel %vm1354, %v4851, 0
  %v4961 = vsel %vm1354, %v4852, 0
  %v4964 = vsel %vm1354, %v4853, 0
  %v4967 = vsel %vm1354, %v4854, 0
  %v4970 = vsel %vm1354, %v4855, 0
  %v4973 = vsel %vm1354, %v4856, 0
  %v4976 = vsel %vm1354, %v4857, 0
  %v4979 = vsel %vm1354, %v4858, 0
  %v4982 = vsel %vm1354, %v4859, 0
  %v4985 = vsel %vm1354, %v4860, 0
  %v4988 = vsel %vm1354, %v4861, 0
  %v4991 = vsel %vm1354, %v4862, 0
  %v4994 = vsel %vm1354, %v4863, 0
  %v4997 = vsel %vm1354, %v4864, 0
  %v5000 = vsel %vm1354, %v4865, 0
  %v5003 = vsel %vm1354, %v4866, 0
  %v5006 = vsel %vm1354, %v4867, 0
  %v5009 = vsel %vm1354, %v4868, 0
  %v5012 = vsel %vm1354, %v4869, 0
  %v5015 = vsel %vm1354, %v4870, 0
  %v5018 = vsel %vm1354, %v4871, 0
  %v5021 = vsel %vm1354, %v4872, 0
  %v5024 = vsel %vm1354, %v4873, 0
  %v5027 = vsel %vm1354, %v4874, 0
  %v5030 = vsel %vm1354, %v4875, 0
  %v5033 = vsel %vm1354, %v4876, 0
  %v5036 = vsel %vm1354, %v4877, 0
  %v5039 = vsel %vm1354, %v4878, 0
  %v5042 = vsel %vm1354, %v4879, 0
  %v5045 = vsel %vm1354, %v4880, 0
  %v5048 = vsel %vm1354, %v4881, 0
  %v5051 = vsel %vm1354, %v4882, 0
  %v5054 = vsel %vm1354, %v4883, 0
  %v5057 = vsel %vm1354, %v4884, 0
  %v5060 = vsel %vm1354, %v4885, 0
  %v5063 = vsel %vm1354, %v4886, 0
  %v5066 = vsel %vm1354, %v4887, 0
  %v5069 = vsel %vm1354, %v4888, 0
  %v5072 = vsel %vm1354, %v4889, 0
  %v5075 = vsel %vm1354, %v4890, 0
  %v5078 = vsel %vm1354, %v4891, 0
  %v5081 = vsel %vm1354, %v4892, 0
  %v5084 = vsel %vm1354, %v4893, 0
  %v5087 = vsel %vm1354, %v4894, 0
  %5089 = vmatprep.subr.mxu0 0.0
  %5090 = vmatpush1.msra.mxu0 %v4896
  %5091 = vmatprep.subr.mxu0 0.0
  %5092 = vmatpush1.msra.mxu0 0.0
  %5093 = vmatprep.subr.mxu0 0.0
  %5094 = vmatpush1.msra.mxu0 0.0
  %5095 = vmatprep.subr.mxu0 0.0
  %5096 = vmatpush1.msra.mxu0 0.0
  %5097 = vmatprep.subr.mxu0 0.0
  %5098 = vmatpush1.msra.mxu0 0.0
  %5099 = vmatprep.subr.mxu0 0.0
  %5100 = vmatpush1.msra.mxu0 0.0
  %5101 = vmatprep.subr.mxu0 0.0
  %5102 = vmatpush1.msra.mxu0 0.0
  %5103 = vmatprep.subr.mxu0 0.0
  %5104 = vmatpush1.msra.mxu0 0.0
  %5105 = vmatprep.subr.mxu0 0.0
  %5106 = vmatpush1.msra.mxu0 0.0
  %5107 = vmatprep.subr.mxu0 0.0
  %5108 = vmatpush1.msra.mxu0 0.0
  %5109 = vmatprep.subr.mxu0 0.0
  %5110 = vmatpush1.msra.mxu0 0.0
  %5111 = vmatprep.subr.mxu0 0.0
  %5112 = vmatpush1.msra.mxu0 0.0
  %5113 = vmatprep.subr.mxu0 0.0
  %5114 = vmatpush1.msra.mxu0 0.0
  %5115 = vmatprep.subr.mxu0 0.0
  %5116 = vmatpush1.msra.mxu0 0.0
  %5117 = vmatprep.subr.mxu0 0.0
  %5118 = vmatpush1.msra.mxu0 0.0
  %5119 = vmatprep.subr.mxu0 0.0
  %5120 = vmatpush1.msra.mxu0 0.0
  %5121 = vmatprep.subr.mxu0 0.0
  %5122 = vmatpush1.msra.mxu0 0.0
  %5123 = vmatprep.subr.mxu0 0.0
  %5124 = vmatpush1.msra.mxu0 0.0
  %5125 = vmatprep.subr.mxu0 0.0
  %5126 = vmatpush1.msra.mxu0 0.0
  %5127 = vmatprep.subr.mxu0 0.0
  %5128 = vmatpush1.msra.mxu0 0.0
  %5129 = vmatprep.subr.mxu0 0.0
  %5130 = vmatpush1.msra.mxu0 0.0
  %5131 = vmatprep.subr.mxu0 0.0
  %5132 = vmatpush1.msra.mxu0 0.0
  %5133 = vmatprep.subr.mxu0 0.0
  %5134 = vmatpush1.msra.mxu0 0.0
  %5135 = vmatprep.subr.mxu0 0.0
  %5136 = vmatpush1.msra.mxu0 0.0
  %5137 = vmatprep.subr.mxu0 0.0
  %5138 = vmatpush1.msra.mxu0 0.0
  %5139 = vmatprep.subr.mxu0 0.0
  %5140 = vmatpush1.msra.mxu0 0.0
  %5141 = vmatprep.subr.mxu0 0.0
  %5142 = vmatpush1.msra.mxu0 0.0
  %5143 = vmatprep.subr.mxu0 0.0
  %5144 = vmatpush1.msra.mxu0 0.0
  %5145 = vmatprep.subr.mxu0 0.0
  %5146 = vmatpush1.msra.mxu0 0.0
  %5147 = vmatprep.subr.mxu0 0.0
  %5148 = vmatpush1.msra.mxu0 0.0
  %5149 = vmatprep.subr.mxu0 0.0
  %5150 = vmatpush1.msra.mxu0 0.0
  %5151 = vmatprep.subr.mxu0 0.0
  %5152 = vmatpush1.msra.mxu0 0.0
  %5153 = vmatprep.mubr.f32.mxu0 0.0
  %5154 = vmatmul.mubr.f32.gmra.mrb[0].mxu0 %v4898
  %v5155 = vpop.f32.mrb[0].mxu0
  %v5156 = vadd.f32 0.0, %v5155
  %v5157 = vpop.f32.mrb[0].mxu0
  %5158 = vmatprep.mubr.f32.mxu0 0.0
  %5159 = vmatmul.mubr.f32.gmra.mrb[0].mxu0 %v4901
  %v5160 = vpop.f32.mrb[0].mxu0
  %v5161 = vadd.f32 0.0, %v5160
  %v5162 = vpop.f32.mrb[0].mxu0
  %5163 = vmatprep.mubr.f32.mxu0 0.0
  %5164 = vmatmul.mubr.f32.gmra.mrb[0].mxu0 %v4904
  %v5165 = vpop.f32.mrb[0].mxu0
  %v5166 = vadd.f32 0.0, %v5165
  %v5167 = vpop.f32.mrb[0].mxu0
  %5168 = vmatprep.mubr.f32.mxu0 0.0
  %5169 = vmatmul.mubr.f32.gmra.mrb[0].mxu0 %v4907
  %v5170 = vpop.f32.mrb[0].mxu0
  %v5171 = vadd.f32 0.0, %v5170
  %v5172 = vpop.f32.mrb[0].mxu0
  %5173 = vmatprep.mubr.f32.mxu0 0.0
  %5174 = vmatmul.mubr.f32.gmra.mrb[0].mxu0 %v4910
  %v5175 = vpop.f32.mrb[0].mxu0
  %v5176 = vadd.f32 0.0, %v5175
  %v5177 = vpop.f32.mrb[0].mxu0
  %5178 = vmatprep.mubr.f32.mxu0 0.0
  %5179 = vmatmul.mubr.f32.gmra.mrb[0].mxu0 %v4913
  %v5180 = vpop.f32.mrb[0].mxu0
  %v5181 = vadd.f32 0.0, %v5180
  %v5182 = vpop.f32.mrb[0].mxu0
  %5183 = vmatprep.mubr.f32.mxu0 0.0
  %5184 = vmatmul.mubr.f32.gmra.mrb[0].mxu0 %v4916
  %v5185 = vpop.f32.mrb[0].mxu0
  %v5186 = vadd.f32 0.0, %v5185
  %v5187 = vpop.f32.mrb[0].mxu0
  %5188 = vmatprep.mubr.f32.mxu0 0.0
  %5189 = vmatmul.mubr.f32.gmra.mrb[0].mxu0 %v4919
  %v5190 = vpop.f32.mrb[0].mxu0
  %v5191 = vadd.f32 0.0, %v5190
  %v5192 = vpop.f32.mrb[0].mxu0
  %5193 = vmatprep.mubr.f32.mxu0 0.0
  %5194 = vmatmul.mubr.f32.gmra.mrb[0].mxu0 %v4922
  %v5195 = vpop.f32.mrb[0].mxu0
  %v5196 = vadd.f32 0.0, %v5195
  %v5197 = vpop.f32.mrb[0].mxu0
  %5198 = vmatprep.mubr.f32.mxu0 0.0
  %5199 = vmatmul.mubr.f32.gmra.mrb[0].mxu0 %v4925
  %v5200 = vpop.f32.mrb[0].mxu0
  %v5201 = vadd.f32 0.0, %v5200
  %v5202 = vpop.f32.mrb[0].mxu0
  %5203 = vmatprep.mubr.f32.mxu0 0.0
  %5204 = vmatmul.mubr.f32.gmra.mrb[0].mxu0 %v4928
  %v5205 = vpop.f32.mrb[0].mxu0
  %v5206 = vadd.f32 0.0, %v5205
  %v5207 = vpop.f32.mrb[0].mxu0
  %5208 = vmatprep.mubr.f32.mxu0 0.0
  %5209 = vmatmul.mubr.f32.gmra.mrb[0].mxu0 %v4931
  %v5210 = vpop.f32.mrb[0].mxu0
  %v5211 = vadd.f32 0.0, %v5210
  %v5212 = vpop.f32.mrb[0].mxu0
  %5213 = vmatprep.mubr.f32.mxu0 0.0
  %5214 = vmatmul.mubr.f32.gmra.mrb[0].mxu0 %v4934
  %v5215 = vpop.f32.mrb[0].mxu0
  %v5216 = vadd.f32 0.0, %v5215
  %v5217 = vpop.f32.mrb[0].mxu0
  %5218 = vmatprep.mubr.f32.mxu0 0.0
  %5219 = vmatmul.mubr.f32.gmra.mrb[0].mxu0 %v4937
  %v5220 = vpop.f32.mrb[0].mxu0
  %v5221 = vadd.f32 0.0, %v5220
  %v5222 = vpop.f32.mrb[0].mxu0
  %5223 = vmatprep.mubr.f32.mxu0 0.0
  %5224 = vmatmul.mubr.f32.gmra.mrb[0].mxu0 %v4940
  %v5225 = vpop.f32.mrb[0].mxu0
  %v5226 = vadd.f32 0.0, %v5225
  %v5227 = vpop.f32.mrb[0].mxu0
  %5228 = vmatprep.mubr.f32.mxu0 0.0
  %5229 = vmatmul.mubr.f32.gmra.mrb[0].mxu0 %v4943
  %v5230 = vpop.f32.mrb[0].mxu0
  %v5231 = vadd.f32 0.0, %v5230
  %v5232 = vpop.f32.mrb[0].mxu0
  %5233 = vmatprep.mubr.f32.mxu0 0.0
  %5234 = vmatmul.mubr.f32.gmra.mrb[0].mxu0 %v4946
  %v5235 = vpop.f32.mrb[0].mxu0
  %v5236 = vadd.f32 0.0, %v5235
  %v5237 = vpop.f32.mrb[0].mxu0
  %5238 = vmatprep.mubr.f32.mxu0 0.0
  %5239 = vmatmul.mubr.f32.gmra.mrb[0].mxu0 %v4949
  %v5240 = vpop.f32.mrb[0].mxu0
  %v5241 = vadd.f32 0.0, %v5240
  %v5242 = vpop.f32.mrb[0].mxu0
  %5243 = vmatprep.mubr.f32.mxu0 0.0
  %5244 = vmatmul.mubr.f32.gmra.mrb[0].mxu0 %v4952
  %v5245 = vpop.f32.mrb[0].mxu0
  %v5246 = vadd.f32 0.0, %v5245
  %v5247 = vpop.f32.mrb[0].mxu0
  %5248 = vmatprep.mubr.f32.mxu0 0.0
  %5249 = vmatmul.mubr.f32.gmra.mrb[0].mxu0 %v4955
  %v5250 = vpop.f32.mrb[0].mxu0
  %v5251 = vadd.f32 0.0, %v5250
  %v5252 = vpop.f32.mrb[0].mxu0
  %5253 = vmatprep.mubr.f32.mxu0 0.0
  %5254 = vmatmul.mubr.f32.gmra.mrb[0].mxu0 %v4958
  %v5255 = vpop.f32.mrb[0].mxu0
  %v5256 = vadd.f32 0.0, %v5255
  %v5257 = vpop.f32.mrb[0].mxu0
  %5258 = vmatprep.mubr.f32.mxu0 0.0
  %5259 = vmatmul.mubr.f32.gmra.mrb[0].mxu0 %v4961
  %v5260 = vpop.f32.mrb[0].mxu0
  %v5261 = vadd.f32 0.0, %v5260
  %v5262 = vpop.f32.mrb[0].mxu0
  %5263 = vmatprep.mubr.f32.mxu0 0.0
  %5264 = vmatmul.mubr.f32.gmra.mrb[0].mxu0 %v4964
  %v5265 = vpop.f32.mrb[0].mxu0
  %v5266 = vadd.f32 0.0, %v5265
  %v5267 = vpop.f32.mrb[0].mxu0
  %5268 = vmatprep.mubr.f32.mxu0 0.0
  %5269 = vmatmul.mubr.f32.gmra.mrb[0].mxu0 %v4967
  %v5270 = vpop.f32.mrb[0].mxu0
  %v5271 = vadd.f32 0.0, %v5270
  %v5272 = vpop.f32.mrb[0].mxu0
  %5273 = vmatprep.mubr.f32.mxu0 0.0
  %5274 = vmatmul.mubr.f32.gmra.mrb[0].mxu0 %v4970
  %v5275 = vpop.f32.mrb[0].mxu0
  %v5276 = vadd.f32 0.0, %v5275
  %v5277 = vpop.f32.mrb[0].mxu0
  %5278 = vmatprep.mubr.f32.mxu0 0.0
  %5279 = vmatmul.mubr.f32.gmra.mrb[0].mxu0 %v4973
  %v5280 = vpop.f32.mrb[0].mxu0
  %v5281 = vadd.f32 0.0, %v5280
  %v5282 = vpop.f32.mrb[0].mxu0
  %5283 = vmatprep.mubr.f32.mxu0 0.0
  %5284 = vmatmul.mubr.f32.gmra.mrb[0].mxu0 %v4976
  %v5285 = vpop.f32.mrb[0].mxu0
  %v5286 = vadd.f32 0.0, %v5285
  %v5287 = vpop.f32.mrb[0].mxu0
  %5288 = vmatprep.mubr.f32.mxu0 0.0
  %5289 = vmatmul.mubr.f32.gmra.mrb[0].mxu0 %v4979
  %v5290 = vpop.f32.mrb[0].mxu0
  %v5291 = vadd.f32 0.0, %v5290
  %v5292 = vpop.f32.mrb[0].mxu0
  %5293 = vmatprep.mubr.f32.mxu0 0.0
  %5294 = vmatmul.mubr.f32.gmra.mrb[0].mxu0 %v4982
  %v5295 = vpop.f32.mrb[0].mxu0
  %v5296 = vadd.f32 0.0, %v5295
  %v5297 = vpop.f32.mrb[0].mxu0
  %5298 = vmatprep.mubr.f32.mxu0 0.0
  %5299 = vmatmul.mubr.f32.gmra.mrb[0].mxu0 %v4985
  %v5300 = vpop.f32.mrb[0].mxu0
  %v5301 = vadd.f32 0.0, %v5300
  %v5302 = vpop.f32.mrb[0].mxu0
  %5303 = vmatprep.mubr.f32.mxu0 0.0
  %5304 = vmatmul.mubr.f32.gmra.mrb[0].mxu0 %v4988
  %v5305 = vpop.f32.mrb[0].mxu0
  %v5306 = vadd.f32 0.0, %v5305
  %v5307 = vpop.f32.mrb[0].mxu0
  %5308 = vmatprep.mubr.f32.mxu0 0.0
  %5309 = vmatmul.mubr.f32.gmra.mrb[0].mxu0 %v4991
  %v5310 = vpop.f32.mrb[0].mxu0
  %v5311 = vadd.f32 0.0, %v5310
  %v5312 = vpop.f32.mrb[0].mxu0
  %5313 = vmatprep.mubr.f32.mxu0 0.0
  %5314 = vmatmul.mubr.f32.gmra.mrb[0].mxu0 %v4994
  %v5315 = vpop.f32.mrb[0].mxu0
  %v5316 = vadd.f32 0.0, %v5315
  %v5317 = vpop.f32.mrb[0].mxu0
  %5318 = vmatprep.mubr.f32.mxu0 0.0
  %5319 = vmatmul.mubr.f32.gmra.mrb[0].mxu0 %v4997
  %v5320 = vpop.f32.mrb[0].mxu0
  %v5321 = vadd.f32 0.0, %v5320
  %v5322 = vpop.f32.mrb[0].mxu0
  %5323 = vmatprep.mubr.f32.mxu0 0.0
  %5324 = vmatmul.mubr.f32.gmra.mrb[0].mxu0 %v5000
  %v5325 = vpop.f32.mrb[0].mxu0
  %v5326 = vadd.f32 0.0, %v5325
  %v5327 = vpop.f32.mrb[0].mxu0
  %5328 = vmatprep.mubr.f32.mxu0 0.0
  %5329 = vmatmul.mubr.f32.gmra.mrb[0].mxu0 %v5003
  %v5330 = vpop.f32.mrb[0].mxu0
  %v5331 = vadd.f32 0.0, %v5330
  %v5332 = vpop.f32.mrb[0].mxu0
  %5333 = vmatprep.mubr.f32.mxu0 0.0
  %5334 = vmatmul.mubr.f32.gmra.mrb[0].mxu0 %v5006
  %v5335 = vpop.f32.mrb[0].mxu0
  %v5336 = vadd.f32 0.0, %v5335
  %v5337 = vpop.f32.mrb[0].mxu0
  %5338 = vmatprep.mubr.f32.mxu0 0.0
  %5339 = vmatmul.mubr.f32.gmra.mrb[0].mxu0 %v5009
  %v5340 = vpop.f32.mrb[0].mxu0
  %v5341 = vadd.f32 0.0, %v5340
  %v5342 = vpop.f32.mrb[0].mxu0
  %5343 = vmatprep.mubr.f32.mxu0 0.0
  %5344 = vmatmul.mubr.f32.gmra.mrb[0].mxu0 %v5012
  %v5345 = vpop.f32.mrb[0].mxu0
  %v5346 = vadd.f32 0.0, %v5345
  %v5347 = vpop.f32.mrb[0].mxu0
  %5348 = vmatprep.mubr.f32.mxu0 0.0
  %5349 = vmatmul.mubr.f32.gmra.mrb[0].mxu0 %v5015
  %v5350 = vpop.f32.mrb[0].mxu0
  %v5351 = vadd.f32 0.0, %v5350
  %v5352 = vpop.f32.mrb[0].mxu0
  %5353 = vmatprep.mubr.f32.mxu0 0.0
  %5354 = vmatmul.mubr.f32.gmra.mrb[0].mxu0 %v5018
  %v5355 = vpop.f32.mrb[0].mxu0
  %v5356 = vadd.f32 0.0, %v5355
  %v5357 = vpop.f32.mrb[0].mxu0
  %5358 = vmatprep.mubr.f32.mxu0 0.0
  %5359 = vmatmul.mubr.f32.gmra.mrb[0].mxu0 %v5021
  %v5360 = vpop.f32.mrb[0].mxu0
  %v5361 = vadd.f32 0.0, %v5360
  %v5362 = vpop.f32.mrb[0].mxu0
  %5363 = vmatprep.mubr.f32.mxu0 0.0
  %5364 = vmatmul.mubr.f32.gmra.mrb[0].mxu0 %v5024
  %v5365 = vpop.f32.mrb[0].mxu0
  %v5366 = vadd.f32 0.0, %v5365
  %v5367 = vpop.f32.mrb[0].mxu0
  %5368 = vmatprep.mubr.f32.mxu0 0.0
  %5369 = vmatmul.mubr.f32.gmra.mrb[0].mxu0 %v5027
  %v5370 = vpop.f32.mrb[0].mxu0
  %v5371 = vadd.f32 0.0, %v5370
  %v5372 = vpop.f32.mrb[0].mxu0
  %5373 = vmatprep.mubr.f32.mxu0 0.0
  %5374 = vmatmul.mubr.f32.gmra.mrb[0].mxu0 %v5030
  %v5375 = vpop.f32.mrb[0].mxu0
  %v5376 = vadd.f32 0.0, %v5375
  %v5377 = vpop.f32.mrb[0].mxu0
  %5378 = vmatprep.mubr.f32.mxu0 0.0
  %5379 = vmatmul.mubr.f32.gmra.mrb[0].mxu0 %v5033
  %v5380 = vpop.f32.mrb[0].mxu0
  %v5381 = vadd.f32 0.0, %v5380
  %v5382 = vpop.f32.mrb[0].mxu0
  %5383 = vmatprep.mubr.f32.mxu0 0.0
  %5384 = vmatmul.mubr.f32.gmra.mrb[0].mxu0 %v5036
  %v5385 = vpop.f32.mrb[0].mxu0
  %v5386 = vadd.f32 0.0, %v5385
  %v5387 = vpop.f32.mrb[0].mxu0
  %5388 = vmatprep.mubr.f32.mxu0 0.0
  %5389 = vmatmul.mubr.f32.gmra.mrb[0].mxu0 %v5039
  %v5390 = vpop.f32.mrb[0].mxu0
  %v5391 = vadd.f32 0.0, %v5390
  %v5392 = vpop.f32.mrb[0].mxu0
  %5393 = vmatprep.mubr.f32.mxu0 0.0
  %5394 = vmatmul.mubr.f32.gmra.mrb[0].mxu0 %v5042
  %v5395 = vpop.f32.mrb[0].mxu0
  %v5396 = vadd.f32 0.0, %v5395
  %v5397 = vpop.f32.mrb[0].mxu0
  %5398 = vmatprep.mubr.f32.mxu0 0.0
  %5399 = vmatmul.mubr.f32.gmra.mrb[0].mxu0 %v5045
  %v5400 = vpop.f32.mrb[0].mxu0
  %v5401 = vadd.f32 0.0, %v5400
  %v5402 = vpop.f32.mrb[0].mxu0
  %5403 = vmatprep.mubr.f32.mxu0 0.0
  %5404 = vmatmul.mubr.f32.gmra.mrb[0].mxu0 %v5048
  %v5405 = vpop.f32.mrb[0].mxu0
  %v5406 = vadd.f32 0.0, %v5405
  %v5407 = vpop.f32.mrb[0].mxu0
  %5408 = vmatprep.mubr.f32.mxu0 0.0
  %5409 = vmatmul.mubr.f32.gmra.mrb[0].mxu0 %v5051
  %v5410 = vpop.f32.mrb[0].mxu0
  %v5411 = vadd.f32 0.0, %v5410
  %v5412 = vpop.f32.mrb[0].mxu0
  %5413 = vmatprep.mubr.f32.mxu0 0.0
  %5414 = vmatmul.mubr.f32.gmra.mrb[0].mxu0 %v5054
  %v5415 = vpop.f32.mrb[0].mxu0
  %v5416 = vadd.f32 0.0, %v5415
  %v5417 = vpop.f32.mrb[0].mxu0
  %5418 = vmatprep.mubr.f32.mxu0 0.0
  %5419 = vmatmul.mubr.f32.gmra.mrb[0].mxu0 %v5057
  %v5420 = vpop.f32.mrb[0].mxu0
  %v5421 = vadd.f32 0.0, %v5420
  %v5422 = vpop.f32.mrb[0].mxu0
  %5423 = vmatprep.mubr.f32.mxu0 0.0
  %5424 = vmatmul.mubr.f32.gmra.mrb[0].mxu0 %v5060
  %v5425 = vpop.f32.mrb[0].mxu0
  %v5426 = vadd.f32 0.0, %v5425
  %v5427 = vpop.f32.mrb[0].mxu0
  %5428 = vmatprep.mubr.f32.mxu0 0.0
  %5429 = vmatmul.mubr.f32.gmra.mrb[0].mxu0 %v5063
  %v5430 = vpop.f32.mrb[0].mxu0
  %v5431 = vadd.f32 0.0, %v5430
  %v5432 = vpop.f32.mrb[0].mxu0
  %5433 = vmatprep.mubr.f32.mxu0 0.0
  %5434 = vmatmul.mubr.f32.gmra.mrb[0].mxu0 %v5066
  %v5435 = vpop.f32.mrb[0].mxu0
  %v5436 = vadd.f32 0.0, %v5435
  %v5437 = vpop.f32.mrb[0].mxu0
  %5438 = vmatprep.mubr.f32.mxu0 0.0
  %5439 = vmatmul.mubr.f32.gmra.mrb[0].mxu0 %v5069
  %v5440 = vpop.f32.mrb[0].mxu0
  %v5441 = vadd.f32 0.0, %v5440
  %v5442 = vpop.f32.mrb[0].mxu0
  %5443 = vmatprep.mubr.f32.mxu0 0.0
  %5444 = vmatmul.mubr.f32.gmra.mrb[0].mxu0 %v5072
  %v5445 = vpop.f32.mrb[0].mxu0
  %v5446 = vadd.f32 0.0, %v5445
  %v5447 = vpop.f32.mrb[0].mxu0
  %5448 = vmatprep.mubr.f32.mxu0 0.0
  %5449 = vmatmul.mubr.f32.gmra.mrb[0].mxu0 %v5075
  %v5450 = vpop.f32.mrb[0].mxu0
  %v5451 = vadd.f32 0.0, %v5450
  %v5452 = vpop.f32.mrb[0].mxu0
  %5453 = vmatprep.mubr.f32.mxu0 0.0
  %5454 = vmatmul.mubr.f32.gmra.mrb[0].mxu0 %v5078
  %v5455 = vpop.f32.mrb[0].mxu0
  %v5456 = vadd.f32 0.0, %v5455
  %v5457 = vpop.f32.mrb[0].mxu0
  %5458 = vmatprep.mubr.f32.mxu0 0.0
  %5459 = vmatmul.mubr.f32.gmra.mrb[0].mxu0 %v5081
  %v5460 = vpop.f32.mrb[0].mxu0
  %v5461 = vadd.f32 0.0, %v5460
  %v5462 = vpop.f32.mrb[0].mxu0
  %5463 = vmatprep.mubr.f32.mxu0 0.0
  %5464 = vmatmul.mubr.f32.gmra.mrb[0].mxu0 %v5084
  %v5465 = vpop.f32.mrb[0].mxu0
  %v5466 = vadd.f32 0.0, %v5465
  %v5467 = vpop.f32.mrb[0].mxu0
  %5468 = vmatprep.mubr.f32.mxu0 0.0
  %5469 = vmatmul.mubr.f32.gmra.mrb[0].mxu0 %v5087
  %v5470 = vpop.f32.mrb[0].mxu0
  %v5471 = vadd.f32 0.0, %v5470
  %v5472 = vpop.f32.mrb[0].mxu0
  %5473 = vdwg.mxu0
  %v5474 = vadd.f32 %v4767, %v5156
  %v5475 = vadd.f32 %v4768, %v5161
  %v5476 = vadd.f32 %v4769, %v5166
  %v5477 = vadd.f32 %v4770, %v5171
  %v5478 = vadd.f32 %v4771, %v5176
  %v5479 = vadd.f32 %v4772, %v5181
  %v5480 = vadd.f32 %v4773, %v5186
  %v5481 = vadd.f32 %v4774, %v5191
  %v5482 = vadd.f32 %v4775, %v5196
  %v5483 = vadd.f32 %v4776, %v5201
  %v5484 = vadd.f32 %v4777, %v5206
  %v5485 = vadd.f32 %v4778, %v5211
  %v5486 = vadd.f32 %v4779, %v5216
  %v5487 = vadd.f32 %v4780, %v5221
  %v5488 = vadd.f32 %v4781, %v5226
  %v5489 = vadd.f32 %v4782, %v5231
  %v5490 = vadd.f32 %v4783, %v5236
  %v5491 = vadd.f32 %v4784, %v5241
  %v5492 = vadd.f32 %v4785, %v5246
  %v5493 = vadd.f32 %v4786, %v5251
  %v5494 = vadd.f32 %v4787, %v5256
  %v5495 = vadd.f32 %v4788, %v5261
  %v5496 = vadd.f32 %v4789, %v5266
  %v5497 = vadd.f32 %v4790, %v5271
  %v5498 = vadd.f32 %v4791, %v5276
  %v5499 = vadd.f32 %v4792, %v5281
  %v5500 = vadd.f32 %v4793, %v5286
  %v5501 = vadd.f32 %v4794, %v5291
  %v5502 = vadd.f32 %v4795, %v5296
  %v5503 = vadd.f32 %v4796, %v5301
  %v5504 = vadd.f32 %v4797, %v5306
  %v5505 = vadd.f32 %v4798, %v5311
  %v5506 = vadd.f32 %v4799, %v5316
  %v5507 = vadd.f32 %v4800, %v5321
  %v5508 = vadd.f32 %v4801, %v5326
  %v5509 = vadd.f32 %v4802, %v5331
  %v5510 = vadd.f32 %v4803, %v5336
  %v5511 = vadd.f32 %v4804, %v5341
  %v5512 = vadd.f32 %v4805, %v5346
  %v5513 = vadd.f32 %v4806, %v5351
  %v5514 = vadd.f32 %v4807, %v5356
  %v5515 = vadd.f32 %v4808, %v5361
  %v5516 = vadd.f32 %v4809, %v5366
  %v5517 = vadd.f32 %v4810, %v5371
  %v5518 = vadd.f32 %v4811, %v5376
  %v5519 = vadd.f32 %v4812, %v5381
  %v5520 = vadd.f32 %v4813, %v5386
  %v5521 = vadd.f32 %v4814, %v5391
  %v5522 = vadd.f32 %v4815, %v5396
  %v5523 = vadd.f32 %v4816, %v5401
  %v5524 = vadd.f32 %v4817, %v5406
  %v5525 = vadd.f32 %v4818, %v5411
  %v5526 = vadd.f32 %v4819, %v5416
  %v5527 = vadd.f32 %v4820, %v5421
  %v5528 = vadd.f32 %v4821, %v5426
  %v5529 = vadd.f32 %v4822, %v5431
  %v5530 = vadd.f32 %v4823, %v5436
  %v5531 = vadd.f32 %v4824, %v5441
  %v5532 = vadd.f32 %v4825, %v5446
  %v5533 = vadd.f32 %v4826, %v5451
  %v5534 = vadd.f32 %v4827, %v5456
  %v5535 = vadd.f32 %v4828, %v5461
  %v5536 = vadd.f32 %v4829, %v5466
  %v5537 = vadd.f32 %v4830, %v5471
  %v5538 = vld [vmem:[%s2067 + $0x2] sm:$0xff]
  %v5539 = vld [vmem:[%s2067 + $0xa] sm:$0xff]
  %v5540 = vld [vmem:[%s2067 + $0x1a] sm:$0xff]
  %v5541 = vld [vmem:[%s2067 + $0x22] sm:$0xff]
  %v5542 = vld [vmem:[%s2067 + $0x32] sm:$0xff]
  %v5543 = vld [vmem:[%s2067 + $0x3a] sm:$0xff]
  %v5544 = vld [vmem:[%s2067 + $0x4a] sm:$0xff]
  %v5545 = vld [vmem:[%s2067 + $0x52] sm:$0xff]
  %v5546 = vld [vmem:[%s2067 + $0x62] sm:$0xff]
  %v5547 = vld [vmem:[%s2067 + $0x6a] sm:$0xff]
  %v5548 = vld [vmem:[%s2067 + $0x7a] sm:$0xff]
  %v5549 = vld [vmem:[%s2067 + $0x82] sm:$0xff]
  %v5550 = vld [vmem:[%s2067 + $0x92] sm:$0xff]
  %v5551 = vld [vmem:[%s2067 + $0x9a] sm:$0xff]
  %v5552 = vld [vmem:[%s2067 + $0xaa] sm:$0xff]
  %v5553 = vld [vmem:[%s2067 + $0xb2] sm:$0xff]
  %v5554 = vld [vmem:[%s2067 + $0xc2] sm:$0xff]
  %v5555 = vld [vmem:[%s2067 + $0xca] sm:$0xff]
  %v5556 = vld [vmem:[%s2067 + $0xda] sm:$0xff]
  %v5557 = vld [vmem:[%s2067 + $0xe2] sm:$0xff]
  %v5558 = vld [vmem:[%s2067 + $0xf2] sm:$0xff]
  %v5559 = vld [vmem:[%s2067 + $0xfa] sm:$0xff]
  %v5560 = vld [vmem:[%s2067 + $0x10a] sm:$0xff]
  %v5561 = vld [vmem:[%s2067 + $0x112] sm:$0xff]
  %v5562 = vld [vmem:[%s2067 + $0x122] sm:$0xff]
  %v5563 = vld [vmem:[%s2067 + $0x12a] sm:$0xff]
  %v5564 = vld [vmem:[%s2067 + $0x13a] sm:$0xff]
  %v5565 = vld [vmem:[%s2067 + $0x142] sm:$0xff]
  %v5566 = vld [vmem:[%s2067 + $0x152] sm:$0xff]
  %v5567 = vld [vmem:[%s2067 + $0x15a] sm:$0xff]
  %v5568 = vld [vmem:[%s2067 + $0x16a] sm:$0xff]
  %v5569 = vld [vmem:[%s2067 + $0x172] sm:$0xff]
  %v5570 = vld [vmem:[%s2067 + $0x1b2] sm:$0xff]
  %v5571 = vld [vmem:[%s2067 + $0x1ba] sm:$0xff]
  %v5572 = vld [vmem:[%s2067 + $0x1ca] sm:$0xff]
  %v5573 = vld [vmem:[%s2067 + $0x1d2] sm:$0xff]
  %v5574 = vld [vmem:[%s2067 + $0x1e2] sm:$0xff]
  %v5575 = vld [vmem:[%s2067 + $0x1ea] sm:$0xff]
  %v5576 = vld [vmem:[%s2067 + $0x1fa] sm:$0xff]
  %v5577 = vld [vmem:[%s2067 + $0x202] sm:$0xff]
  %v5578 = vld [vmem:[%s2067 + $0x212] sm:$0xff]
  %v5579 = vld [vmem:[%s2067 + $0x21a] sm:$0xff]
  %v5580 = vld [vmem:[%s2067 + $0x22a] sm:$0xff]
  %v5581 = vld [vmem:[%s2067 + $0x232] sm:$0xff]
  %v5582 = vld [vmem:[%s2067 + $0x242] sm:$0xff]
  %v5583 = vld [vmem:[%s2067 + $0x24a] sm:$0xff]
  %v5584 = vld [vmem:[%s2067 + $0x25a] sm:$0xff]
  %v5585 = vld [vmem:[%s2067 + $0x262] sm:$0xff]
  %v5586 = vld [vmem:[%s2067 + $0x272] sm:$0xff]
  %v5587 = vld [vmem:[%s2067 + $0x27a] sm:$0xff]
  %v5588 = vld [vmem:[%s2067 + $0x28a] sm:$0xff]
  %v5589 = vld [vmem:[%s2067 + $0x292] sm:$0xff]
  %v5590 = vld [vmem:[%s2067 + $0x2a2] sm:$0xff]
  %v5591 = vld [vmem:[%s2067 + $0x2aa] sm:$0xff]
  %v5592 = vld [vmem:[%s2067 + $0x2ba] sm:$0xff]
  %v5593 = vld [vmem:[%s2067 + $0x2c2] sm:$0xff]
  %v5594 = vld [vmem:[%s2067 + $0x2d2] sm:$0xff]
  %v5595 = vld [vmem:[%s2067 + $0x2da] sm:$0xff]
  %v5596 = vld [vmem:[%s2067 + $0x2ea] sm:$0xff]
  %v5597 = vld [vmem:[%s2067 + $0x2f2] sm:$0xff]
  %v5598 = vld [vmem:[%s2067 + $0x302] sm:$0xff]
  %v5599 = vld [vmem:[%s2067 + $0x30a] sm:$0xff]
  %v5600 = vld [vmem:[%s2067 + $0x31a] sm:$0xff]
  %v5601 = vld [vmem:[%s2067 + $0x322] sm:$0xff]
  %s5602 = scalar_lea.vmem %s4, 40
  %v5603 = vld [vmem:[%s5602] sm:$0xff]
  %v5605 = vsel %vm1354, %v5538, 0
  %v5608 = vsel %vm1354, %v5539, 0
  %v5611 = vsel %vm1354, %v5540, 0
  %v5614 = vsel %vm1354, %v5541, 0
  %v5617 = vsel %vm1354, %v5542, 0
  %v5620 = vsel %vm1354, %v5543, 0
  %v5623 = vsel %vm1354, %v5544, 0
  %v5626 = vsel %vm1354, %v5545, 0
  %v5629 = vsel %vm1354, %v5546, 0
  %v5632 = vsel %vm1354, %v5547, 0
  %v5635 = vsel %vm1354, %v5548, 0
  %v5638 = vsel %vm1354, %v5549, 0
  %v5641 = vsel %vm1354, %v5550, 0
  %v5644 = vsel %vm1354, %v5551, 0
  %v5647 = vsel %vm1354, %v5552, 0
  %v5650 = vsel %vm1354, %v5553, 0
  %v5653 = vsel %vm1354, %v5554, 0
  %v5656 = vsel %vm1354, %v5555, 0
  %v5659 = vsel %vm1354, %v5556, 0
  %v5662 = vsel %vm1354, %v5557, 0
  %v5665 = vsel %vm1354, %v5558, 0
  %v5668 = vsel %vm1354, %v5559, 0
  %v5671 = vsel %vm1354, %v5560, 0
  %v5674 = vsel %vm1354, %v5561, 0
  %v5677 = vsel %vm1354, %v5562, 0
  %v5680 = vsel %vm1354, %v5563, 0
  %v5683 = vsel %vm1354, %v5564, 0
  %v5686 = vsel %vm1354, %v5565, 0
  %v5689 = vsel %vm1354, %v5566, 0
  %v5692 = vsel %vm1354, %v5567, 0
  %v5695 = vsel %vm1354, %v5568, 0
  %v5698 = vsel %vm1354, %v5569, 0
  %v5701 = vsel %vm1354, %v5570, 0
  %v5704 = vsel %vm1354, %v5571, 0
  %v5707 = vsel %vm1354, %v5572, 0
  %v5710 = vsel %vm1354, %v5573, 0
  %v5713 = vsel %vm1354, %v5574, 0
  %v5716 = vsel %vm1354, %v5575, 0
  %v5719 = vsel %vm1354, %v5576, 0
  %v5722 = vsel %vm1354, %v5577, 0
  %v5725 = vsel %vm1354, %v5578, 0
  %v5728 = vsel %vm1354, %v5579, 0
  %v5731 = vsel %vm1354, %v5580, 0
  %v5734 = vsel %vm1354, %v5581, 0
  %v5737 = vsel %vm1354, %v5582, 0
  %v5740 = vsel %vm1354, %v5583, 0
  %v5743 = vsel %vm1354, %v5584, 0
  %v5746 = vsel %vm1354, %v5585, 0
  %v5749 = vsel %vm1354, %v5586, 0
  %v5752 = vsel %vm1354, %v5587, 0
  %v5755 = vsel %vm1354, %v5588, 0
  %v5758 = vsel %vm1354, %v5589, 0
  %v5761 = vsel %vm1354, %v5590, 0
  %v5764 = vsel %vm1354, %v5591, 0
  %v5767 = vsel %vm1354, %v5592, 0
  %v5770 = vsel %vm1354, %v5593, 0
  %v5773 = vsel %vm1354, %v5594, 0
  %v5776 = vsel %vm1354, %v5595, 0
  %v5779 = vsel %vm1354, %v5596, 0
  %v5782 = vsel %vm1354, %v5597, 0
  %v5785 = vsel %vm1354, %v5598, 0
  %v5788 = vsel %vm1354, %v5599, 0
  %v5791 = vsel %vm1354, %v5600, 0
  %v5794 = vsel %vm1354, %v5601, 0
  %5796 = vmatprep.subr.mxu0 0.0
  %5797 = vmatpush1.msra.mxu0 %v5603
  %5798 = vmatprep.subr.mxu0 0.0
  %5799 = vmatpush1.msra.mxu0 0.0
  %5800 = vmatprep.subr.mxu0 0.0
  %5801 = vmatpush1.msra.mxu0 0.0
  %5802 = vmatprep.subr.mxu0 0.0
  %5803 = vmatpush1.msra.mxu0 0.0
  %5804 = vmatprep.subr.mxu0 0.0
  %5805 = vmatpush1.msra.mxu0 0.0
  %5806 = vmatprep.subr.mxu0 0.0
  %5807 = vmatpush1.msra.mxu0 0.0
  %5808 = vmatprep.subr.mxu0 0.0
  %5809 = vmatpush1.msra.mxu0 0.0
  %5810 = vmatprep.subr.mxu0 0.0
  %5811 = vmatpush1.msra.mxu0 0.0
  %5812 = vmatprep.subr.mxu0 0.0
  %5813 = vmatpush1.msra.mxu0 0.0
  %5814 = vmatprep.subr.mxu0 0.0
  %5815 = vmatpush1.msra.mxu0 0.0
  %5816 = vmatprep.subr.mxu0 0.0
  %5817 = vmatpush1.msra.mxu0 0.0
  %5818 = vmatprep.subr.mxu0 0.0
  %5819 = vmatpush1.msra.mxu0 0.0
  %5820 = vmatprep.subr.mxu0 0.0
  %5821 = vmatpush1.msra.mxu0 0.0
  %5822 = vmatprep.subr.mxu0 0.0
  %5823 = vmatpush1.msra.mxu0 0.0
  %5824 = vmatprep.subr.mxu0 0.0
  %5825 = vmatpush1.msra.mxu0 0.0
  %5826 = vmatprep.subr.mxu0 0.0
  %5827 = vmatpush1.msra.mxu0 0.0
  %5828 = vmatprep.subr.mxu0 0.0
  %5829 = vmatpush1.msra.mxu0 0.0
  %5830 = vmatprep.subr.mxu0 0.0
  %5831 = vmatpush1.msra.mxu0 0.0
  %5832 = vmatprep.subr.mxu0 0.0
  %5833 = vmatpush1.msra.mxu0 0.0
  %5834 = vmatprep.subr.mxu0 0.0
  %5835 = vmatpush1.msra.mxu0 0.0
  %5836 = vmatprep.subr.mxu0 0.0
  %5837 = vmatpush1.msra.mxu0 0.0
  %5838 = vmatprep.subr.mxu0 0.0
  %5839 = vmatpush1.msra.mxu0 0.0
  %5840 = vmatprep.subr.mxu0 0.0
  %5841 = vmatpush1.msra.mxu0 0.0
  %5842 = vmatprep.subr.mxu0 0.0
  %5843 = vmatpush1.msra.mxu0 0.0
  %5844 = vmatprep.subr.mxu0 0.0
  %5845 = vmatpush1.msra.mxu0 0.0
  %5846 = vmatprep.subr.mxu0 0.0
  %5847 = vmatpush1.msra.mxu0 0.0
  %5848 = vmatprep.subr.mxu0 0.0
  %5849 = vmatpush1.msra.mxu0 0.0
  %5850 = vmatprep.subr.mxu0 0.0
  %5851 = vmatpush1.msra.mxu0 0.0
  %5852 = vmatprep.subr.mxu0 0.0
  %5853 = vmatpush1.msra.mxu0 0.0
  %5854 = vmatprep.subr.mxu0 0.0
  %5855 = vmatpush1.msra.mxu0 0.0
  %5856 = vmatprep.subr.mxu0 0.0
  %5857 = vmatpush1.msra.mxu0 0.0
  %5858 = vmatprep.subr.mxu0 0.0
  %5859 = vmatpush1.msra.mxu0 0.0
  %5860 = vmatprep.mubr.f32.mxu0 0.0
  %5861 = vmatmul.mubr.f32.gmra.mrb[0].mxu0 %v5605
  %v5862 = vpop.f32.mrb[0].mxu0
  %v5863 = vadd.f32 0.0, %v5862
  %v5864 = vpop.f32.mrb[0].mxu0
  %5865 = vmatprep.mubr.f32.mxu0 0.0
  %5866 = vmatmul.mubr.f32.gmra.mrb[0].mxu0 %v5608
  %v5867 = vpop.f32.mrb[0].mxu0
  %v5868 = vadd.f32 0.0, %v5867
  %v5869 = vpop.f32.mrb[0].mxu0
  %5870 = vmatprep.mubr.f32.mxu0 0.0
  %5871 = vmatmul.mubr.f32.gmra.mrb[0].mxu0 %v5611
  %v5872 = vpop.f32.mrb[0].mxu0
  %v5873 = vadd.f32 0.0, %v5872
  %v5874 = vpop.f32.mrb[0].mxu0
  %5875 = vmatprep.mubr.f32.mxu0 0.0
  %5876 = vmatmul.mubr.f32.gmra.mrb[0].mxu0 %v5614
  %v5877 = vpop.f32.mrb[0].mxu0
  %v5878 = vadd.f32 0.0, %v5877
  %v5879 = vpop.f32.mrb[0].mxu0
  %5880 = vmatprep.mubr.f32.mxu0 0.0
  %5881 = vmatmul.mubr.f32.gmra.mrb[0].mxu0 %v5617
  %v5882 = vpop.f32.mrb[0].mxu0
  %v5883 = vadd.f32 0.0, %v5882
  %v5884 = vpop.f32.mrb[0].mxu0
  %5885 = vmatprep.mubr.f32.mxu0 0.0
  %5886 = vmatmul.mubr.f32.gmra.mrb[0].mxu0 %v5620
  %v5887 = vpop.f32.mrb[0].mxu0
  %v5888 = vadd.f32 0.0, %v5887
  %v5889 = vpop.f32.mrb[0].mxu0
  %5890 = vmatprep.mubr.f32.mxu0 0.0
  %5891 = vmatmul.mubr.f32.gmra.mrb[0].mxu0 %v5623
  %v5892 = vpop.f32.mrb[0].mxu0
  %v5893 = vadd.f32 0.0, %v5892
  %v5894 = vpop.f32.mrb[0].mxu0
  %5895 = vmatprep.mubr.f32.mxu0 0.0
  %5896 = vmatmul.mubr.f32.gmra.mrb[0].mxu0 %v5626
  %v5897 = vpop.f32.mrb[0].mxu0
  %v5898 = vadd.f32 0.0, %v5897
  %v5899 = vpop.f32.mrb[0].mxu0
  %5900 = vmatprep.mubr.f32.mxu0 0.0
  %5901 = vmatmul.mubr.f32.gmra.mrb[0].mxu0 %v5629
  %v5902 = vpop.f32.mrb[0].mxu0
  %v5903 = vadd.f32 0.0, %v5902
  %v5904 = vpop.f32.mrb[0].mxu0
  %5905 = vmatprep.mubr.f32.mxu0 0.0
  %5906 = vmatmul.mubr.f32.gmra.mrb[0].mxu0 %v5632
  %v5907 = vpop.f32.mrb[0].mxu0
  %v5908 = vadd.f32 0.0, %v5907
  %v5909 = vpop.f32.mrb[0].mxu0
  %5910 = vmatprep.mubr.f32.mxu0 0.0
  %5911 = vmatmul.mubr.f32.gmra.mrb[0].mxu0 %v5635
  %v5912 = vpop.f32.mrb[0].mxu0
  %v5913 = vadd.f32 0.0, %v5912
  %v5914 = vpop.f32.mrb[0].mxu0
  %5915 = vmatprep.mubr.f32.mxu0 0.0
  %5916 = vmatmul.mubr.f32.gmra.mrb[0].mxu0 %v5638
  %v5917 = vpop.f32.mrb[0].mxu0
  %v5918 = vadd.f32 0.0, %v5917
  %v5919 = vpop.f32.mrb[0].mxu0
  %5920 = vmatprep.mubr.f32.mxu0 0.0
  %5921 = vmatmul.mubr.f32.gmra.mrb[0].mxu0 %v5641
  %v5922 = vpop.f32.mrb[0].mxu0
  %v5923 = vadd.f32 0.0, %v5922
  %v5924 = vpop.f32.mrb[0].mxu0
  %5925 = vmatprep.mubr.f32.mxu0 0.0
  %5926 = vmatmul.mubr.f32.gmra.mrb[0].mxu0 %v5644
  %v5927 = vpop.f32.mrb[0].mxu0
  %v5928 = vadd.f32 0.0, %v5927
  %v5929 = vpop.f32.mrb[0].mxu0
  %5930 = vmatprep.mubr.f32.mxu0 0.0
  %5931 = vmatmul.mubr.f32.gmra.mrb[0].mxu0 %v5647
  %v5932 = vpop.f32.mrb[0].mxu0
  %v5933 = vadd.f32 0.0, %v5932
  %v5934 = vpop.f32.mrb[0].mxu0
  %5935 = vmatprep.mubr.f32.mxu0 0.0
  %5936 = vmatmul.mubr.f32.gmra.mrb[0].mxu0 %v5650
  %v5937 = vpop.f32.mrb[0].mxu0
  %v5938 = vadd.f32 0.0, %v5937
  %v5939 = vpop.f32.mrb[0].mxu0
  %5940 = vmatprep.mubr.f32.mxu0 0.0
  %5941 = vmatmul.mubr.f32.gmra.mrb[0].mxu0 %v5653
  %v5942 = vpop.f32.mrb[0].mxu0
  %v5943 = vadd.f32 0.0, %v5942
  %v5944 = vpop.f32.mrb[0].mxu0
  %5945 = vmatprep.mubr.f32.mxu0 0.0
  %5946 = vmatmul.mubr.f32.gmra.mrb[0].mxu0 %v5656
  %v5947 = vpop.f32.mrb[0].mxu0
  %v5948 = vadd.f32 0.0, %v5947
  %v5949 = vpop.f32.mrb[0].mxu0
  %5950 = vmatprep.mubr.f32.mxu0 0.0
  %5951 = vmatmul.mubr.f32.gmra.mrb[0].mxu0 %v5659
  %v5952 = vpop.f32.mrb[0].mxu0
  %v5953 = vadd.f32 0.0, %v5952
  %v5954 = vpop.f32.mrb[0].mxu0
  %5955 = vmatprep.mubr.f32.mxu0 0.0
  %5956 = vmatmul.mubr.f32.gmra.mrb[0].mxu0 %v5662
  %v5957 = vpop.f32.mrb[0].mxu0
  %v5958 = vadd.f32 0.0, %v5957
  %v5959 = vpop.f32.mrb[0].mxu0
  %5960 = vmatprep.mubr.f32.mxu0 0.0
  %5961 = vmatmul.mubr.f32.gmra.mrb[0].mxu0 %v5665
  %v5962 = vpop.f32.mrb[0].mxu0
  %v5963 = vadd.f32 0.0, %v5962
  %v5964 = vpop.f32.mrb[0].mxu0
  %5965 = vmatprep.mubr.f32.mxu0 0.0
  %5966 = vmatmul.mubr.f32.gmra.mrb[0].mxu0 %v5668
  %v5967 = vpop.f32.mrb[0].mxu0
  %v5968 = vadd.f32 0.0, %v5967
  %v5969 = vpop.f32.mrb[0].mxu0
  %5970 = vmatprep.mubr.f32.mxu0 0.0
  %5971 = vmatmul.mubr.f32.gmra.mrb[0].mxu0 %v5671
  %v5972 = vpop.f32.mrb[0].mxu0
  %v5973 = vadd.f32 0.0, %v5972
  %v5974 = vpop.f32.mrb[0].mxu0
  %5975 = vmatprep.mubr.f32.mxu0 0.0
  %5976 = vmatmul.mubr.f32.gmra.mrb[0].mxu0 %v5674
  %v5977 = vpop.f32.mrb[0].mxu0
  %v5978 = vadd.f32 0.0, %v5977
  %v5979 = vpop.f32.mrb[0].mxu0
  %5980 = vmatprep.mubr.f32.mxu0 0.0
  %5981 = vmatmul.mubr.f32.gmra.mrb[0].mxu0 %v5677
  %v5982 = vpop.f32.mrb[0].mxu0
  %v5983 = vadd.f32 0.0, %v5982
  %v5984 = vpop.f32.mrb[0].mxu0
  %5985 = vmatprep.mubr.f32.mxu0 0.0
  %5986 = vmatmul.mubr.f32.gmra.mrb[0].mxu0 %v5680
  %v5987 = vpop.f32.mrb[0].mxu0
  %v5988 = vadd.f32 0.0, %v5987
  %v5989 = vpop.f32.mrb[0].mxu0
  %5990 = vmatprep.mubr.f32.mxu0 0.0
  %5991 = vmatmul.mubr.f32.gmra.mrb[0].mxu0 %v5683
  %v5992 = vpop.f32.mrb[0].mxu0
  %v5993 = vadd.f32 0.0, %v5992
  %v5994 = vpop.f32.mrb[0].mxu0
  %5995 = vmatprep.mubr.f32.mxu0 0.0
  %5996 = vmatmul.mubr.f32.gmra.mrb[0].mxu0 %v5686
  %v5997 = vpop.f32.mrb[0].mxu0
  %v5998 = vadd.f32 0.0, %v5997
  %v5999 = vpop.f32.mrb[0].mxu0
  %6000 = vmatprep.mubr.f32.mxu0 0.0
  %6001 = vmatmul.mubr.f32.gmra.mrb[0].mxu0 %v5689
  %v6002 = vpop.f32.mrb[0].mxu0
  %v6003 = vadd.f32 0.0, %v6002
  %v6004 = vpop.f32.mrb[0].mxu0
  %6005 = vmatprep.mubr.f32.mxu0 0.0
  %6006 = vmatmul.mubr.f32.gmra.mrb[0].mxu0 %v5692
  %v6007 = vpop.f32.mrb[0].mxu0
  %v6008 = vadd.f32 0.0, %v6007
  %v6009 = vpop.f32.mrb[0].mxu0
  %6010 = vmatprep.mubr.f32.mxu0 0.0
  %6011 = vmatmul.mubr.f32.gmra.mrb[0].mxu0 %v5695
  %v6012 = vpop.f32.mrb[0].mxu0
  %v6013 = vadd.f32 0.0, %v6012
  %v6014 = vpop.f32.mrb[0].mxu0
  %6015 = vmatprep.mubr.f32.mxu0 0.0
  %6016 = vmatmul.mubr.f32.gmra.mrb[0].mxu0 %v5698
  %v6017 = vpop.f32.mrb[0].mxu0
  %v6018 = vadd.f32 0.0, %v6017
  %v6019 = vpop.f32.mrb[0].mxu0
  %6020 = vmatprep.mubr.f32.mxu0 0.0
  %6021 = vmatmul.mubr.f32.gmra.mrb[0].mxu0 %v5701
  %v6022 = vpop.f32.mrb[0].mxu0
  %v6023 = vadd.f32 0.0, %v6022
  %v6024 = vpop.f32.mrb[0].mxu0
  %6025 = vmatprep.mubr.f32.mxu0 0.0
  %6026 = vmatmul.mubr.f32.gmra.mrb[0].mxu0 %v5704
  %v6027 = vpop.f32.mrb[0].mxu0
  %v6028 = vadd.f32 0.0, %v6027
  %v6029 = vpop.f32.mrb[0].mxu0
  %6030 = vmatprep.mubr.f32.mxu0 0.0
  %6031 = vmatmul.mubr.f32.gmra.mrb[0].mxu0 %v5707
  %v6032 = vpop.f32.mrb[0].mxu0
  %v6033 = vadd.f32 0.0, %v6032
  %v6034 = vpop.f32.mrb[0].mxu0
  %6035 = vmatprep.mubr.f32.mxu0 0.0
  %6036 = vmatmul.mubr.f32.gmra.mrb[0].mxu0 %v5710
  %v6037 = vpop.f32.mrb[0].mxu0
  %v6038 = vadd.f32 0.0, %v6037
  %v6039 = vpop.f32.mrb[0].mxu0
  %6040 = vmatprep.mubr.f32.mxu0 0.0
  %6041 = vmatmul.mubr.f32.gmra.mrb[0].mxu0 %v5713
  %v6042 = vpop.f32.mrb[0].mxu0
  %v6043 = vadd.f32 0.0, %v6042
  %v6044 = vpop.f32.mrb[0].mxu0
  %6045 = vmatprep.mubr.f32.mxu0 0.0
  %6046 = vmatmul.mubr.f32.gmra.mrb[0].mxu0 %v5716
  %v6047 = vpop.f32.mrb[0].mxu0
  %v6048 = vadd.f32 0.0, %v6047
  %v6049 = vpop.f32.mrb[0].mxu0
  %6050 = vmatprep.mubr.f32.mxu0 0.0
  %6051 = vmatmul.mubr.f32.gmra.mrb[0].mxu0 %v5719
  %v6052 = vpop.f32.mrb[0].mxu0
  %v6053 = vadd.f32 0.0, %v6052
  %v6054 = vpop.f32.mrb[0].mxu0
  %6055 = vmatprep.mubr.f32.mxu0 0.0
  %6056 = vmatmul.mubr.f32.gmra.mrb[0].mxu0 %v5722
  %v6057 = vpop.f32.mrb[0].mxu0
  %v6058 = vadd.f32 0.0, %v6057
  %v6059 = vpop.f32.mrb[0].mxu0
  %6060 = vmatprep.mubr.f32.mxu0 0.0
  %6061 = vmatmul.mubr.f32.gmra.mrb[0].mxu0 %v5725
  %v6062 = vpop.f32.mrb[0].mxu0
  %v6063 = vadd.f32 0.0, %v6062
  %v6064 = vpop.f32.mrb[0].mxu0
  %6065 = vmatprep.mubr.f32.mxu0 0.0
  %6066 = vmatmul.mubr.f32.gmra.mrb[0].mxu0 %v5728
  %v6067 = vpop.f32.mrb[0].mxu0
  %v6068 = vadd.f32 0.0, %v6067
  %v6069 = vpop.f32.mrb[0].mxu0
  %6070 = vmatprep.mubr.f32.mxu0 0.0
  %6071 = vmatmul.mubr.f32.gmra.mrb[0].mxu0 %v5731
  %v6072 = vpop.f32.mrb[0].mxu0
  %v6073 = vadd.f32 0.0, %v6072
  %v6074 = vpop.f32.mrb[0].mxu0
  %6075 = vmatprep.mubr.f32.mxu0 0.0
  %6076 = vmatmul.mubr.f32.gmra.mrb[0].mxu0 %v5734
  %v6077 = vpop.f32.mrb[0].mxu0
  %v6078 = vadd.f32 0.0, %v6077
  %v6079 = vpop.f32.mrb[0].mxu0
  %6080 = vmatprep.mubr.f32.mxu0 0.0
  %6081 = vmatmul.mubr.f32.gmra.mrb[0].mxu0 %v5737
  %v6082 = vpop.f32.mrb[0].mxu0
  %v6083 = vadd.f32 0.0, %v6082
  %v6084 = vpop.f32.mrb[0].mxu0
  %6085 = vmatprep.mubr.f32.mxu0 0.0
  %6086 = vmatmul.mubr.f32.gmra.mrb[0].mxu0 %v5740
  %v6087 = vpop.f32.mrb[0].mxu0
  %v6088 = vadd.f32 0.0, %v6087
  %v6089 = vpop.f32.mrb[0].mxu0
  %6090 = vmatprep.mubr.f32.mxu0 0.0
  %6091 = vmatmul.mubr.f32.gmra.mrb[0].mxu0 %v5743
  %v6092 = vpop.f32.mrb[0].mxu0
  %v6093 = vadd.f32 0.0, %v6092
  %v6094 = vpop.f32.mrb[0].mxu0
  %6095 = vmatprep.mubr.f32.mxu0 0.0
  %6096 = vmatmul.mubr.f32.gmra.mrb[0].mxu0 %v5746
  %v6097 = vpop.f32.mrb[0].mxu0
  %v6098 = vadd.f32 0.0, %v6097
  %v6099 = vpop.f32.mrb[0].mxu0
  %6100 = vmatprep.mubr.f32.mxu0 0.0
  %6101 = vmatmul.mubr.f32.gmra.mrb[0].mxu0 %v5749
  %v6102 = vpop.f32.mrb[0].mxu0
  %v6103 = vadd.f32 0.0, %v6102
  %v6104 = vpop.f32.mrb[0].mxu0
  %6105 = vmatprep.mubr.f32.mxu0 0.0
  %6106 = vmatmul.mubr.f32.gmra.mrb[0].mxu0 %v5752
  %v6107 = vpop.f32.mrb[0].mxu0
  %v6108 = vadd.f32 0.0, %v6107
  %v6109 = vpop.f32.mrb[0].mxu0
  %6110 = vmatprep.mubr.f32.mxu0 0.0
  %6111 = vmatmul.mubr.f32.gmra.mrb[0].mxu0 %v5755
  %v6112 = vpop.f32.mrb[0].mxu0
  %v6113 = vadd.f32 0.0, %v6112
  %v6114 = vpop.f32.mrb[0].mxu0
  %6115 = vmatprep.mubr.f32.mxu0 0.0
  %6116 = vmatmul.mubr.f32.gmra.mrb[0].mxu0 %v5758
  %v6117 = vpop.f32.mrb[0].mxu0
  %v6118 = vadd.f32 0.0, %v6117
  %v6119 = vpop.f32.mrb[0].mxu0
  %6120 = vmatprep.mubr.f32.mxu0 0.0
  %6121 = vmatmul.mubr.f32.gmra.mrb[0].mxu0 %v5761
  %v6122 = vpop.f32.mrb[0].mxu0
  %v6123 = vadd.f32 0.0, %v6122
  %v6124 = vpop.f32.mrb[0].mxu0
  %6125 = vmatprep.mubr.f32.mxu0 0.0
  %6126 = vmatmul.mubr.f32.gmra.mrb[0].mxu0 %v5764
  %v6127 = vpop.f32.mrb[0].mxu0
  %v6128 = vadd.f32 0.0, %v6127
  %v6129 = vpop.f32.mrb[0].mxu0
  %6130 = vmatprep.mubr.f32.mxu0 0.0
  %6131 = vmatmul.mubr.f32.gmra.mrb[0].mxu0 %v5767
  %v6132 = vpop.f32.mrb[0].mxu0
  %v6133 = vadd.f32 0.0, %v6132
  %v6134 = vpop.f32.mrb[0].mxu0
  %6135 = vmatprep.mubr.f32.mxu0 0.0
  %6136 = vmatmul.mubr.f32.gmra.mrb[0].mxu0 %v5770
  %v6137 = vpop.f32.mrb[0].mxu0
  %v6138 = vadd.f32 0.0, %v6137
  %v6139 = vpop.f32.mrb[0].mxu0
  %6140 = vmatprep.mubr.f32.mxu0 0.0
  %6141 = vmatmul.mubr.f32.gmra.mrb[0].mxu0 %v5773
  %v6142 = vpop.f32.mrb[0].mxu0
  %v6143 = vadd.f32 0.0, %v6142
  %v6144 = vpop.f32.mrb[0].mxu0
  %6145 = vmatprep.mubr.f32.mxu0 0.0
  %6146 = vmatmul.mubr.f32.gmra.mrb[0].mxu0 %v5776
  %v6147 = vpop.f32.mrb[0].mxu0
  %v6148 = vadd.f32 0.0, %v6147
  %v6149 = vpop.f32.mrb[0].mxu0
  %6150 = vmatprep.mubr.f32.mxu0 0.0
  %6151 = vmatmul.mubr.f32.gmra.mrb[0].mxu0 %v5779
  %v6152 = vpop.f32.mrb[0].mxu0
  %v6153 = vadd.f32 0.0, %v6152
  %v6154 = vpop.f32.mrb[0].mxu0
  %6155 = vmatprep.mubr.f32.mxu0 0.0
  %6156 = vmatmul.mubr.f32.gmra.mrb[0].mxu0 %v5782
  %v6157 = vpop.f32.mrb[0].mxu0
  %v6158 = vadd.f32 0.0, %v6157
  %v6159 = vpop.f32.mrb[0].mxu0
  %6160 = vmatprep.mubr.f32.mxu0 0.0
  %6161 = vmatmul.mubr.f32.gmra.mrb[0].mxu0 %v5785
  %v6162 = vpop.f32.mrb[0].mxu0
  %v6163 = vadd.f32 0.0, %v6162
  %v6164 = vpop.f32.mrb[0].mxu0
  %6165 = vmatprep.mubr.f32.mxu0 0.0
  %6166 = vmatmul.mubr.f32.gmra.mrb[0].mxu0 %v5788
  %v6167 = vpop.f32.mrb[0].mxu0
  %v6168 = vadd.f32 0.0, %v6167
  %v6169 = vpop.f32.mrb[0].mxu0
  %6170 = vmatprep.mubr.f32.mxu0 0.0
  %6171 = vmatmul.mubr.f32.gmra.mrb[0].mxu0 %v5791
  %v6172 = vpop.f32.mrb[0].mxu0
  %v6173 = vadd.f32 0.0, %v6172
  %v6174 = vpop.f32.mrb[0].mxu0
  %6175 = vmatprep.mubr.f32.mxu0 0.0
  %6176 = vmatmul.mubr.f32.gmra.mrb[0].mxu0 %v5794
  %v6177 = vpop.f32.mrb[0].mxu0
  %v6178 = vadd.f32 0.0, %v6177
  %v6179 = vpop.f32.mrb[0].mxu0
  %6180 = vdwg.mxu0
  %v6181 = vadd.f32 %v5474, %v5863
  %v6182 = vadd.f32 %v5475, %v5868
  %v6183 = vadd.f32 %v5476, %v5873
  %v6184 = vadd.f32 %v5477, %v5878
  %v6185 = vadd.f32 %v5478, %v5883
  %v6186 = vadd.f32 %v5479, %v5888
  %v6187 = vadd.f32 %v5480, %v5893
  %v6188 = vadd.f32 %v5481, %v5898
  %v6189 = vadd.f32 %v5482, %v5903
  %v6190 = vadd.f32 %v5483, %v5908
  %v6191 = vadd.f32 %v5484, %v5913
  %v6192 = vadd.f32 %v5485, %v5918
  %v6193 = vadd.f32 %v5486, %v5923
  %v6194 = vadd.f32 %v5487, %v5928
  %v6195 = vadd.f32 %v5488, %v5933
  %v6196 = vadd.f32 %v5489, %v5938
  %v6197 = vadd.f32 %v5490, %v5943
  %v6198 = vadd.f32 %v5491, %v5948
  %v6199 = vadd.f32 %v5492, %v5953
  %v6200 = vadd.f32 %v5493, %v5958
  %v6201 = vadd.f32 %v5494, %v5963
  %v6202 = vadd.f32 %v5495, %v5968
  %v6203 = vadd.f32 %v5496, %v5973
  %v6204 = vadd.f32 %v5497, %v5978
  %v6205 = vadd.f32 %v5498, %v5983
  %v6206 = vadd.f32 %v5499, %v5988
  %v6207 = vadd.f32 %v5500, %v5993
  %v6208 = vadd.f32 %v5501, %v5998
  %v6209 = vadd.f32 %v5502, %v6003
  %v6210 = vadd.f32 %v5503, %v6008
  %v6211 = vadd.f32 %v5504, %v6013
  %v6212 = vadd.f32 %v5505, %v6018
  %v6213 = vadd.f32 %v5506, %v6023
  %v6214 = vadd.f32 %v5507, %v6028
  %v6215 = vadd.f32 %v5508, %v6033
  %v6216 = vadd.f32 %v5509, %v6038
  %v6217 = vadd.f32 %v5510, %v6043
  %v6218 = vadd.f32 %v5511, %v6048
  %v6219 = vadd.f32 %v5512, %v6053
  %v6220 = vadd.f32 %v5513, %v6058
  %v6221 = vadd.f32 %v5514, %v6063
  %v6222 = vadd.f32 %v5515, %v6068
  %v6223 = vadd.f32 %v5516, %v6073
  %v6224 = vadd.f32 %v5517, %v6078
  %v6225 = vadd.f32 %v5518, %v6083
  %v6226 = vadd.f32 %v5519, %v6088
  %v6227 = vadd.f32 %v5520, %v6093
  %v6228 = vadd.f32 %v5521, %v6098
  %v6229 = vadd.f32 %v5522, %v6103
  %v6230 = vadd.f32 %v5523, %v6108
  %v6231 = vadd.f32 %v5524, %v6113
  %v6232 = vadd.f32 %v5525, %v6118
  %v6233 = vadd.f32 %v5526, %v6123
  %v6234 = vadd.f32 %v5527, %v6128
  %v6235 = vadd.f32 %v5528, %v6133
  %v6236 = vadd.f32 %v5529, %v6138
  %v6237 = vadd.f32 %v5530, %v6143
  %v6238 = vadd.f32 %v5531, %v6148
  %v6239 = vadd.f32 %v5532, %v6153
  %v6240 = vadd.f32 %v5533, %v6158
  %v6241 = vadd.f32 %v5534, %v6163
  %v6242 = vadd.f32 %v5535, %v6168
  %v6243 = vadd.f32 %v5536, %v6173
  %v6244 = vadd.f32 %v5537, %v6178
  %s6245 = scalar_lea.vmem [#allocation2], 48
  %v6246 = vld [vmem:[%s6245] sm:$0xff]
  %v6247 = vld [vmem:[%s6245 + $0x8] sm:$0xff]
  %v6248 = vld [vmem:[%s6245 + $0x18] sm:$0xff]
  %v6249 = vld [vmem:[%s6245 + $0x20] sm:$0xff]
  %v6250 = vld [vmem:[%s6245 + $0x30] sm:$0xff]
  %v6251 = vld [vmem:[%s6245 + $0x38] sm:$0xff]
  %v6252 = vld [vmem:[%s6245 + $0x48] sm:$0xff]
  %v6253 = vld [vmem:[%s6245 + $0x50] sm:$0xff]
  %v6254 = vld [vmem:[%s6245 + $0x60] sm:$0xff]
  %v6255 = vld [vmem:[%s6245 + $0x68] sm:$0xff]
  %v6256 = vld [vmem:[%s6245 + $0x78] sm:$0xff]
  %v6257 = vld [vmem:[%s6245 + $0x80] sm:$0xff]
  %v6258 = vld [vmem:[%s6245 + $0x90] sm:$0xff]
  %v6259 = vld [vmem:[%s6245 + $0x98] sm:$0xff]
  %v6260 = vld [vmem:[%s6245 + $0xa8] sm:$0xff]
  %v6261 = vld [vmem:[%s6245 + $0xb0] sm:$0xff]
  %v6262 = vld [vmem:[%s6245 + $0xc0] sm:$0xff]
  %v6263 = vld [vmem:[%s6245 + $0xc8] sm:$0xff]
  %v6264 = vld [vmem:[%s6245 + $0xd8] sm:$0xff]
  %v6265 = vld [vmem:[%s6245 + $0xe0] sm:$0xff]
  %v6266 = vld [vmem:[%s6245 + $0xf0] sm:$0xff]
  %v6267 = vld [vmem:[%s6245 + $0xf8] sm:$0xff]
  %v6268 = vld [vmem:[%s6245 + $0x108] sm:$0xff]
  %v6269 = vld [vmem:[%s6245 + $0x110] sm:$0xff]
  %v6270 = vld [vmem:[%s6245 + $0x120] sm:$0xff]
  %v6271 = vld [vmem:[%s6245 + $0x128] sm:$0xff]
  %v6272 = vld [vmem:[%s6245 + $0x138] sm:$0xff]
  %v6273 = vld [vmem:[%s6245 + $0x140] sm:$0xff]
  %v6274 = vld [vmem:[%s6245 + $0x150] sm:$0xff]
  %v6275 = vld [vmem:[%s6245 + $0x158] sm:$0xff]
  %v6276 = vld [vmem:[%s6245 + $0x168] sm:$0xff]
  %v6277 = vld [vmem:[%s6245 + $0x170] sm:$0xff]
  %v6278 = vld [vmem:[%s6245 + $0x1b0] sm:$0xff]
  %v6279 = vld [vmem:[%s6245 + $0x1b8] sm:$0xff]
  %v6280 = vld [vmem:[%s6245 + $0x1c8] sm:$0xff]
  %v6281 = vld [vmem:[%s6245 + $0x1d0] sm:$0xff]
  %v6282 = vld [vmem:[%s6245 + $0x1e0] sm:$0xff]
  %v6283 = vld [vmem:[%s6245 + $0x1e8] sm:$0xff]
  %v6284 = vld [vmem:[%s6245 + $0x1f8] sm:$0xff]
  %v6285 = vld [vmem:[%s6245 + $0x200] sm:$0xff]
  %v6286 = vld [vmem:[%s6245 + $0x210] sm:$0xff]
  %v6287 = vld [vmem:[%s6245 + $0x218] sm:$0xff]
  %v6288 = vld [vmem:[%s6245 + $0x228] sm:$0xff]
  %v6289 = vld [vmem:[%s6245 + $0x230] sm:$0xff]
  %v6290 = vld [vmem:[%s6245 + $0x240] sm:$0xff]
  %v6291 = vld [vmem:[%s6245 + $0x248] sm:$0xff]
  %v6292 = vld [vmem:[%s6245 + $0x258] sm:$0xff]
  %v6293 = vld [vmem:[%s6245 + $0x260] sm:$0xff]
  %v6294 = vld [vmem:[%s6245 + $0x270] sm:$0xff]
  %v6295 = vld [vmem:[%s6245 + $0x278] sm:$0xff]
  %v6296 = vld [vmem:[%s6245 + $0x288] sm:$0xff]
  %v6297 = vld [vmem:[%s6245 + $0x290] sm:$0xff]
  %v6298 = vld [vmem:[%s6245 + $0x2a0] sm:$0xff]
  %v6299 = vld [vmem:[%s6245 + $0x2a8] sm:$0xff]
  %v6300 = vld [vmem:[%s6245 + $0x2b8] sm:$0xff]
  %v6301 = vld [vmem:[%s6245 + $0x2c0] sm:$0xff]
  %v6302 = vld [vmem:[%s6245 + $0x2d0] sm:$0xff]
  %v6303 = vld [vmem:[%s6245 + $0x2d8] sm:$0xff]
  %v6304 = vld [vmem:[%s6245 + $0x2e8] sm:$0xff]
  %v6305 = vld [vmem:[%s6245 + $0x2f0] sm:$0xff]
  %v6306 = vld [vmem:[%s6245 + $0x300] sm:$0xff]
  %v6307 = vld [vmem:[%s6245 + $0x308] sm:$0xff]
  %v6308 = vld [vmem:[%s6245 + $0x318] sm:$0xff]
  %v6309 = vld [vmem:[%s6245 + $0x320] sm:$0xff]
  %s6310 = scalar_lea.vmem %s4, 48
  %v6311 = vld [vmem:[%s6310] sm:$0xff]
  %v6313 = vsel %vm1354, %v6246, 0
  %v6316 = vsel %vm1354, %v6247, 0
  %v6319 = vsel %vm1354, %v6248, 0
  %v6322 = vsel %vm1354, %v6249, 0
  %v6325 = vsel %vm1354, %v6250, 0
  %v6328 = vsel %vm1354, %v6251, 0
  %v6331 = vsel %vm1354, %v6252, 0
  %v6334 = vsel %vm1354, %v6253, 0
  %v6337 = vsel %vm1354, %v6254, 0
  %v6340 = vsel %vm1354, %v6255, 0
  %v6343 = vsel %vm1354, %v6256, 0
  %v6346 = vsel %vm1354, %v6257, 0
  %v6349 = vsel %vm1354, %v6258, 0
  %v6352 = vsel %vm1354, %v6259, 0
  %v6355 = vsel %vm1354, %v6260, 0
  %v6358 = vsel %vm1354, %v6261, 0
  %v6361 = vsel %vm1354, %v6262, 0
  %v6364 = vsel %vm1354, %v6263, 0
  %v6367 = vsel %vm1354, %v6264, 0
  %v6370 = vsel %vm1354, %v6265, 0
  %v6373 = vsel %vm1354, %v6266, 0
  %v6376 = vsel %vm1354, %v6267, 0
  %v6379 = vsel %vm1354, %v6268, 0
  %v6382 = vsel %vm1354, %v6269, 0
  %v6385 = vsel %vm1354, %v6270, 0
  %v6388 = vsel %vm1354, %v6271, 0
  %v6391 = vsel %vm1354, %v6272, 0
  %v6394 = vsel %vm1354, %v6273, 0
  %v6397 = vsel %vm1354, %v6274, 0
  %v6400 = vsel %vm1354, %v6275, 0
  %v6403 = vsel %vm1354, %v6276, 0
  %v6406 = vsel %vm1354, %v6277, 0
  %v6409 = vsel %vm1354, %v6278, 0
  %v6412 = vsel %vm1354, %v6279, 0
  %v6415 = vsel %vm1354, %v6280, 0
  %v6418 = vsel %vm1354, %v6281, 0
  %v6421 = vsel %vm1354, %v6282, 0
  %v6424 = vsel %vm1354, %v6283, 0
  %v6427 = vsel %vm1354, %v6284, 0
  %v6430 = vsel %vm1354, %v6285, 0
  %v6433 = vsel %vm1354, %v6286, 0
  %v6436 = vsel %vm1354, %v6287, 0
  %v6439 = vsel %vm1354, %v6288, 0
  %v6442 = vsel %vm1354, %v6289, 0
  %v6445 = vsel %vm1354, %v6290, 0
  %v6448 = vsel %vm1354, %v6291, 0
  %v6451 = vsel %vm1354, %v6292, 0
  %v6454 = vsel %vm1354, %v6293, 0
  %v6457 = vsel %vm1354, %v6294, 0
  %v6460 = vsel %vm1354, %v6295, 0
  %v6463 = vsel %vm1354, %v6296, 0
  %v6466 = vsel %vm1354, %v6297, 0
  %v6469 = vsel %vm1354, %v6298, 0
  %v6472 = vsel %vm1354, %v6299, 0
  %v6475 = vsel %vm1354, %v6300, 0
  %v6478 = vsel %vm1354, %v6301, 0
  %v6481 = vsel %vm1354, %v6302, 0
  %v6484 = vsel %vm1354, %v6303, 0
  %v6487 = vsel %vm1354, %v6304, 0
  %v6490 = vsel %vm1354, %v6305, 0
  %v6493 = vsel %vm1354, %v6306, 0
  %v6496 = vsel %vm1354, %v6307, 0
  %v6499 = vsel %vm1354, %v6308, 0
  %v6502 = vsel %vm1354, %v6309, 0
  %6504 = vmatprep.subr.mxu0 0.0
  %6505 = vmatpush1.msra.mxu0 %v6311
  %6506 = vmatprep.subr.mxu0 0.0
  %6507 = vmatpush1.msra.mxu0 0.0
  %6508 = vmatprep.subr.mxu0 0.0
  %6509 = vmatpush1.msra.mxu0 0.0
  %6510 = vmatprep.subr.mxu0 0.0
  %6511 = vmatpush1.msra.mxu0 0.0
  %6512 = vmatprep.subr.mxu0 0.0
  %6513 = vmatpush1.msra.mxu0 0.0
  %6514 = vmatprep.subr.mxu0 0.0
  %6515 = vmatpush1.msra.mxu0 0.0
  %6516 = vmatprep.subr.mxu0 0.0
  %6517 = vmatpush1.msra.mxu0 0.0
  %6518 = vmatprep.subr.mxu0 0.0
  %6519 = vmatpush1.msra.mxu0 0.0
  %6520 = vmatprep.subr.mxu0 0.0
  %6521 = vmatpush1.msra.mxu0 0.0
  %6522 = vmatprep.subr.mxu0 0.0
  %6523 = vmatpush1.msra.mxu0 0.0
  %6524 = vmatprep.subr.mxu0 0.0
  %6525 = vmatpush1.msra.mxu0 0.0
  %6526 = vmatprep.subr.mxu0 0.0
  %6527 = vmatpush1.msra.mxu0 0.0
  %6528 = vmatprep.subr.mxu0 0.0
  %6529 = vmatpush1.msra.mxu0 0.0
  %6530 = vmatprep.subr.mxu0 0.0
  %6531 = vmatpush1.msra.mxu0 0.0
  %6532 = vmatprep.subr.mxu0 0.0
  %6533 = vmatpush1.msra.mxu0 0.0
  %6534 = vmatprep.subr.mxu0 0.0
  %6535 = vmatpush1.msra.mxu0 0.0
  %6536 = vmatprep.subr.mxu0 0.0
  %6537 = vmatpush1.msra.mxu0 0.0
  %6538 = vmatprep.subr.mxu0 0.0
  %6539 = vmatpush1.msra.mxu0 0.0
  %6540 = vmatprep.subr.mxu0 0.0
  %6541 = vmatpush1.msra.mxu0 0.0
  %6542 = vmatprep.subr.mxu0 0.0
  %6543 = vmatpush1.msra.mxu0 0.0
  %6544 = vmatprep.subr.mxu0 0.0
  %6545 = vmatpush1.msra.mxu0 0.0
  %6546 = vmatprep.subr.mxu0 0.0
  %6547 = vmatpush1.msra.mxu0 0.0
  %6548 = vmatprep.subr.mxu0 0.0
  %6549 = vmatpush1.msra.mxu0 0.0
  %6550 = vmatprep.subr.mxu0 0.0
  %6551 = vmatpush1.msra.mxu0 0.0
  %6552 = vmatprep.subr.mxu0 0.0
  %6553 = vmatpush1.msra.mxu0 0.0
  %6554 = vmatprep.subr.mxu0 0.0
  %6555 = vmatpush1.msra.mxu0 0.0
  %6556 = vmatprep.subr.mxu0 0.0
  %6557 = vmatpush1.msra.mxu0 0.0
  %6558 = vmatprep.subr.mxu0 0.0
  %6559 = vmatpush1.msra.mxu0 0.0
  %6560 = vmatprep.subr.mxu0 0.0
  %6561 = vmatpush1.msra.mxu0 0.0
  %6562 = vmatprep.subr.mxu0 0.0
  %6563 = vmatpush1.msra.mxu0 0.0
  %6564 = vmatprep.subr.mxu0 0.0
  %6565 = vmatpush1.msra.mxu0 0.0
  %6566 = vmatprep.subr.mxu0 0.0
  %6567 = vmatpush1.msra.mxu0 0.0
  %6568 = vmatprep.mubr.f32.mxu0 0.0
  %6569 = vmatmul.mubr.f32.gmra.mrb[0].mxu0 %v6313
  %v6570 = vpop.f32.mrb[0].mxu0
  %v6571 = vadd.f32 0.0, %v6570
  %v6572 = vpop.f32.mrb[0].mxu0
  %6573 = vmatprep.mubr.f32.mxu0 0.0
  %6574 = vmatmul.mubr.f32.gmra.mrb[0].mxu0 %v6316
  %v6575 = vpop.f32.mrb[0].mxu0
  %v6576 = vadd.f32 0.0, %v6575
  %v6577 = vpop.f32.mrb[0].mxu0
  %6578 = vmatprep.mubr.f32.mxu0 0.0
  %6579 = vmatmul.mubr.f32.gmra.mrb[0].mxu0 %v6319
  %v6580 = vpop.f32.mrb[0].mxu0
  %v6581 = vadd.f32 0.0, %v6580
  %v6582 = vpop.f32.mrb[0].mxu0
  %6583 = vmatprep.mubr.f32.mxu0 0.0
  %6584 = vmatmul.mubr.f32.gmra.mrb[0].mxu0 %v6322
  %v6585 = vpop.f32.mrb[0].mxu0
  %v6586 = vadd.f32 0.0, %v6585
  %v6587 = vpop.f32.mrb[0].mxu0
  %6588 = vmatprep.mubr.f32.mxu0 0.0
  %6589 = vmatmul.mubr.f32.gmra.mrb[0].mxu0 %v6325
  %v6590 = vpop.f32.mrb[0].mxu0
  %v6591 = vadd.f32 0.0, %v6590
  %v6592 = vpop.f32.mrb[0].mxu0
  %6593 = vmatprep.mubr.f32.mxu0 0.0
  %6594 = vmatmul.mubr.f32.gmra.mrb[0].mxu0 %v6328
  %v6595 = vpop.f32.mrb[0].mxu0
  %v6596 = vadd.f32 0.0, %v6595
  %v6597 = vpop.f32.mrb[0].mxu0
  %6598 = vmatprep.mubr.f32.mxu0 0.0
  %6599 = vmatmul.mubr.f32.gmra.mrb[0].mxu0 %v6331
  %v6600 = vpop.f32.mrb[0].mxu0
  %v6601 = vadd.f32 0.0, %v6600
  %v6602 = vpop.f32.mrb[0].mxu0
  %6603 = vmatprep.mubr.f32.mxu0 0.0
  %6604 = vmatmul.mubr.f32.gmra.mrb[0].mxu0 %v6334
  %v6605 = vpop.f32.mrb[0].mxu0
  %v6606 = vadd.f32 0.0, %v6605
  %v6607 = vpop.f32.mrb[0].mxu0
  %6608 = vmatprep.mubr.f32.mxu0 0.0
  %6609 = vmatmul.mubr.f32.gmra.mrb[0].mxu0 %v6337
  %v6610 = vpop.f32.mrb[0].mxu0
  %v6611 = vadd.f32 0.0, %v6610
  %v6612 = vpop.f32.mrb[0].mxu0
  %6613 = vmatprep.mubr.f32.mxu0 0.0
  %6614 = vmatmul.mubr.f32.gmra.mrb[0].mxu0 %v6340
  %v6615 = vpop.f32.mrb[0].mxu0
  %v6616 = vadd.f32 0.0, %v6615
  %v6617 = vpop.f32.mrb[0].mxu0
  %6618 = vmatprep.mubr.f32.mxu0 0.0
  %6619 = vmatmul.mubr.f32.gmra.mrb[0].mxu0 %v6343
  %v6620 = vpop.f32.mrb[0].mxu0
  %v6621 = vadd.f32 0.0, %v6620
  %v6622 = vpop.f32.mrb[0].mxu0
  %6623 = vmatprep.mubr.f32.mxu0 0.0
  %6624 = vmatmul.mubr.f32.gmra.mrb[0].mxu0 %v6346
  %v6625 = vpop.f32.mrb[0].mxu0
  %v6626 = vadd.f32 0.0, %v6625
  %v6627 = vpop.f32.mrb[0].mxu0
  %6628 = vmatprep.mubr.f32.mxu0 0.0
  %6629 = vmatmul.mubr.f32.gmra.mrb[0].mxu0 %v6349
  %v6630 = vpop.f32.mrb[0].mxu0
  %v6631 = vadd.f32 0.0, %v6630
  %v6632 = vpop.f32.mrb[0].mxu0
  %6633 = vmatprep.mubr.f32.mxu0 0.0
  %6634 = vmatmul.mubr.f32.gmra.mrb[0].mxu0 %v6352
  %v6635 = vpop.f32.mrb[0].mxu0
  %v6636 = vadd.f32 0.0, %v6635
  %v6637 = vpop.f32.mrb[0].mxu0
  %6638 = vmatprep.mubr.f32.mxu0 0.0
  %6639 = vmatmul.mubr.f32.gmra.mrb[0].mxu0 %v6355
  %v6640 = vpop.f32.mrb[0].mxu0
  %v6641 = vadd.f32 0.0, %v6640
  %v6642 = vpop.f32.mrb[0].mxu0
  %6643 = vmatprep.mubr.f32.mxu0 0.0
  %6644 = vmatmul.mubr.f32.gmra.mrb[0].mxu0 %v6358
  %v6645 = vpop.f32.mrb[0].mxu0
  %v6646 = vadd.f32 0.0, %v6645
  %v6647 = vpop.f32.mrb[0].mxu0
  %6648 = vmatprep.mubr.f32.mxu0 0.0
  %6649 = vmatmul.mubr.f32.gmra.mrb[0].mxu0 %v6361
  %v6650 = vpop.f32.mrb[0].mxu0
  %v6651 = vadd.f32 0.0, %v6650
  %v6652 = vpop.f32.mrb[0].mxu0
  %6653 = vmatprep.mubr.f32.mxu0 0.0
  %6654 = vmatmul.mubr.f32.gmra.mrb[0].mxu0 %v6364
  %v6655 = vpop.f32.mrb[0].mxu0
  %v6656 = vadd.f32 0.0, %v6655
  %v6657 = vpop.f32.mrb[0].mxu0
  %6658 = vmatprep.mubr.f32.mxu0 0.0
  %6659 = vmatmul.mubr.f32.gmra.mrb[0].mxu0 %v6367
  %v6660 = vpop.f32.mrb[0].mxu0
  %v6661 = vadd.f32 0.0, %v6660
  %v6662 = vpop.f32.mrb[0].mxu0
  %6663 = vmatprep.mubr.f32.mxu0 0.0
  %6664 = vmatmul.mubr.f32.gmra.mrb[0].mxu0 %v6370
  %v6665 = vpop.f32.mrb[0].mxu0
  %v6666 = vadd.f32 0.0, %v6665
  %v6667 = vpop.f32.mrb[0].mxu0
  %6668 = vmatprep.mubr.f32.mxu0 0.0
  %6669 = vmatmul.mubr.f32.gmra.mrb[0].mxu0 %v6373
  %v6670 = vpop.f32.mrb[0].mxu0
  %v6671 = vadd.f32 0.0, %v6670
  %v6672 = vpop.f32.mrb[0].mxu0
  %6673 = vmatprep.mubr.f32.mxu0 0.0
  %6674 = vmatmul.mubr.f32.gmra.mrb[0].mxu0 %v6376
  %v6675 = vpop.f32.mrb[0].mxu0
  %v6676 = vadd.f32 0.0, %v6675
  %v6677 = vpop.f32.mrb[0].mxu0
  %6678 = vmatprep.mubr.f32.mxu0 0.0
  %6679 = vmatmul.mubr.f32.gmra.mrb[0].mxu0 %v6379
  %v6680 = vpop.f32.mrb[0].mxu0
  %v6681 = vadd.f32 0.0, %v6680
  %v6682 = vpop.f32.mrb[0].mxu0
  %6683 = vmatprep.mubr.f32.mxu0 0.0
  %6684 = vmatmul.mubr.f32.gmra.mrb[0].mxu0 %v6382
  %v6685 = vpop.f32.mrb[0].mxu0
  %v6686 = vadd.f32 0.0, %v6685
  %v6687 = vpop.f32.mrb[0].mxu0
  %6688 = vmatprep.mubr.f32.mxu0 0.0
  %6689 = vmatmul.mubr.f32.gmra.mrb[0].mxu0 %v6385
  %v6690 = vpop.f32.mrb[0].mxu0
  %v6691 = vadd.f32 0.0, %v6690
  %v6692 = vpop.f32.mrb[0].mxu0
  %6693 = vmatprep.mubr.f32.mxu0 0.0
  %6694 = vmatmul.mubr.f32.gmra.mrb[0].mxu0 %v6388
  %v6695 = vpop.f32.mrb[0].mxu0
  %v6696 = vadd.f32 0.0, %v6695
  %v6697 = vpop.f32.mrb[0].mxu0
  %6698 = vmatprep.mubr.f32.mxu0 0.0
  %6699 = vmatmul.mubr.f32.gmra.mrb[0].mxu0 %v6391
  %v6700 = vpop.f32.mrb[0].mxu0
  %v6701 = vadd.f32 0.0, %v6700
  %v6702 = vpop.f32.mrb[0].mxu0
  %6703 = vmatprep.mubr.f32.mxu0 0.0
  %6704 = vmatmul.mubr.f32.gmra.mrb[0].mxu0 %v6394
  %v6705 = vpop.f32.mrb[0].mxu0
  %v6706 = vadd.f32 0.0, %v6705
  %v6707 = vpop.f32.mrb[0].mxu0
  %6708 = vmatprep.mubr.f32.mxu0 0.0
  %6709 = vmatmul.mubr.f32.gmra.mrb[0].mxu0 %v6397
  %v6710 = vpop.f32.mrb[0].mxu0
  %v6711 = vadd.f32 0.0, %v6710
  %v6712 = vpop.f32.mrb[0].mxu0
  %6713 = vmatprep.mubr.f32.mxu0 0.0
  %6714 = vmatmul.mubr.f32.gmra.mrb[0].mxu0 %v6400
  %v6715 = vpop.f32.mrb[0].mxu0
  %v6716 = vadd.f32 0.0, %v6715
  %v6717 = vpop.f32.mrb[0].mxu0
  %6718 = vmatprep.mubr.f32.mxu0 0.0
  %6719 = vmatmul.mubr.f32.gmra.mrb[0].mxu0 %v6403
  %v6720 = vpop.f32.mrb[0].mxu0
  %v6721 = vadd.f32 0.0, %v6720
  %v6722 = vpop.f32.mrb[0].mxu0
  %6723 = vmatprep.mubr.f32.mxu0 0.0
  %6724 = vmatmul.mubr.f32.gmra.mrb[0].mxu0 %v6406
  %v6725 = vpop.f32.mrb[0].mxu0
  %v6726 = vadd.f32 0.0, %v6725
  %v6727 = vpop.f32.mrb[0].mxu0
  %6728 = vmatprep.mubr.f32.mxu0 0.0
  %6729 = vmatmul.mubr.f32.gmra.mrb[0].mxu0 %v6409
  %v6730 = vpop.f32.mrb[0].mxu0
  %v6731 = vadd.f32 0.0, %v6730
  %v6732 = vpop.f32.mrb[0].mxu0
  %6733 = vmatprep.mubr.f32.mxu0 0.0
  %6734 = vmatmul.mubr.f32.gmra.mrb[0].mxu0 %v6412
  %v6735 = vpop.f32.mrb[0].mxu0
  %v6736 = vadd.f32 0.0, %v6735
  %v6737 = vpop.f32.mrb[0].mxu0
  %6738 = vmatprep.mubr.f32.mxu0 0.0
  %6739 = vmatmul.mubr.f32.gmra.mrb[0].mxu0 %v6415
  %v6740 = vpop.f32.mrb[0].mxu0
  %v6741 = vadd.f32 0.0, %v6740
  %v6742 = vpop.f32.mrb[0].mxu0
  %6743 = vmatprep.mubr.f32.mxu0 0.0
  %6744 = vmatmul.mubr.f32.gmra.mrb[0].mxu0 %v6418
  %v6745 = vpop.f32.mrb[0].mxu0
  %v6746 = vadd.f32 0.0, %v6745
  %v6747 = vpop.f32.mrb[0].mxu0
  %6748 = vmatprep.mubr.f32.mxu0 0.0
  %6749 = vmatmul.mubr.f32.gmra.mrb[0].mxu0 %v6421
  %v6750 = vpop.f32.mrb[0].mxu0
  %v6751 = vadd.f32 0.0, %v6750
  %v6752 = vpop.f32.mrb[0].mxu0
  %6753 = vmatprep.mubr.f32.mxu0 0.0
  %6754 = vmatmul.mubr.f32.gmra.mrb[0].mxu0 %v6424
  %v6755 = vpop.f32.mrb[0].mxu0
  %v6756 = vadd.f32 0.0, %v6755
  %v6757 = vpop.f32.mrb[0].mxu0
  %6758 = vmatprep.mubr.f32.mxu0 0.0
  %6759 = vmatmul.mubr.f32.gmra.mrb[0].mxu0 %v6427
  %v6760 = vpop.f32.mrb[0].mxu0
  %v6761 = vadd.f32 0.0, %v6760
  %v6762 = vpop.f32.mrb[0].mxu0
  %6763 = vmatprep.mubr.f32.mxu0 0.0
  %6764 = vmatmul.mubr.f32.gmra.mrb[0].mxu0 %v6430
  %v6765 = vpop.f32.mrb[0].mxu0
  %v6766 = vadd.f32 0.0, %v6765
  %v6767 = vpop.f32.mrb[0].mxu0
  %6768 = vmatprep.mubr.f32.mxu0 0.0
  %6769 = vmatmul.mubr.f32.gmra.mrb[0].mxu0 %v6433
  %v6770 = vpop.f32.mrb[0].mxu0
  %v6771 = vadd.f32 0.0, %v6770
  %v6772 = vpop.f32.mrb[0].mxu0
  %6773 = vmatprep.mubr.f32.mxu0 0.0
  %6774 = vmatmul.mubr.f32.gmra.mrb[0].mxu0 %v6436
  %v6775 = vpop.f32.mrb[0].mxu0
  %v6776 = vadd.f32 0.0, %v6775
  %v6777 = vpop.f32.mrb[0].mxu0
  %6778 = vmatprep.mubr.f32.mxu0 0.0
  %6779 = vmatmul.mubr.f32.gmra.mrb[0].mxu0 %v6439
  %v6780 = vpop.f32.mrb[0].mxu0
  %v6781 = vadd.f32 0.0, %v6780
  %v6782 = vpop.f32.mrb[0].mxu0
  %6783 = vmatprep.mubr.f32.mxu0 0.0
  %6784 = vmatmul.mubr.f32.gmra.mrb[0].mxu0 %v6442
  %v6785 = vpop.f32.mrb[0].mxu0
  %v6786 = vadd.f32 0.0, %v6785
  %v6787 = vpop.f32.mrb[0].mxu0
  %6788 = vmatprep.mubr.f32.mxu0 0.0
  %6789 = vmatmul.mubr.f32.gmra.mrb[0].mxu0 %v6445
  %v6790 = vpop.f32.mrb[0].mxu0
  %v6791 = vadd.f32 0.0, %v6790
  %v6792 = vpop.f32.mrb[0].mxu0
  %6793 = vmatprep.mubr.f32.mxu0 0.0
  %6794 = vmatmul.mubr.f32.gmra.mrb[0].mxu0 %v6448
  %v6795 = vpop.f32.mrb[0].mxu0
  %v6796 = vadd.f32 0.0, %v6795
  %v6797 = vpop.f32.mrb[0].mxu0
  %6798 = vmatprep.mubr.f32.mxu0 0.0
  %6799 = vmatmul.mubr.f32.gmra.mrb[0].mxu0 %v6451
  %v6800 = vpop.f32.mrb[0].mxu0
  %v6801 = vadd.f32 0.0, %v6800
  %v6802 = vpop.f32.mrb[0].mxu0
  %6803 = vmatprep.mubr.f32.mxu0 0.0
  %6804 = vmatmul.mubr.f32.gmra.mrb[0].mxu0 %v6454
  %v6805 = vpop.f32.mrb[0].mxu0
  %v6806 = vadd.f32 0.0, %v6805
  %v6807 = vpop.f32.mrb[0].mxu0
  %6808 = vmatprep.mubr.f32.mxu0 0.0
  %6809 = vmatmul.mubr.f32.gmra.mrb[0].mxu0 %v6457
  %v6810 = vpop.f32.mrb[0].mxu0
  %v6811 = vadd.f32 0.0, %v6810
  %v6812 = vpop.f32.mrb[0].mxu0
  %6813 = vmatprep.mubr.f32.mxu0 0.0
  %6814 = vmatmul.mubr.f32.gmra.mrb[0].mxu0 %v6460
  %v6815 = vpop.f32.mrb[0].mxu0
  %v6816 = vadd.f32 0.0, %v6815
  %v6817 = vpop.f32.mrb[0].mxu0
  %6818 = vmatprep.mubr.f32.mxu0 0.0
  %6819 = vmatmul.mubr.f32.gmra.mrb[0].mxu0 %v6463
  %v6820 = vpop.f32.mrb[0].mxu0
  %v6821 = vadd.f32 0.0, %v6820
  %v6822 = vpop.f32.mrb[0].mxu0
  %6823 = vmatprep.mubr.f32.mxu0 0.0
  %6824 = vmatmul.mubr.f32.gmra.mrb[0].mxu0 %v6466
  %v6825 = vpop.f32.mrb[0].mxu0
  %v6826 = vadd.f32 0.0, %v6825
  %v6827 = vpop.f32.mrb[0].mxu0
  %6828 = vmatprep.mubr.f32.mxu0 0.0
  %6829 = vmatmul.mubr.f32.gmra.mrb[0].mxu0 %v6469
  %v6830 = vpop.f32.mrb[0].mxu0
  %v6831 = vadd.f32 0.0, %v6830
  %v6832 = vpop.f32.mrb[0].mxu0
  %6833 = vmatprep.mubr.f32.mxu0 0.0
  %6834 = vmatmul.mubr.f32.gmra.mrb[0].mxu0 %v6472
  %v6835 = vpop.f32.mrb[0].mxu0
  %v6836 = vadd.f32 0.0, %v6835
  %v6837 = vpop.f32.mrb[0].mxu0
  %6838 = vmatprep.mubr.f32.mxu0 0.0
  %6839 = vmatmul.mubr.f32.gmra.mrb[0].mxu0 %v6475
  %v6840 = vpop.f32.mrb[0].mxu0
  %v6841 = vadd.f32 0.0, %v6840
  %v6842 = vpop.f32.mrb[0].mxu0
  %6843 = vmatprep.mubr.f32.mxu0 0.0
  %6844 = vmatmul.mubr.f32.gmra.mrb[0].mxu0 %v6478
  %v6845 = vpop.f32.mrb[0].mxu0
  %v6846 = vadd.f32 0.0, %v6845
  %v6847 = vpop.f32.mrb[0].mxu0
  %6848 = vmatprep.mubr.f32.mxu0 0.0
  %6849 = vmatmul.mubr.f32.gmra.mrb[0].mxu0 %v6481
  %v6850 = vpop.f32.mrb[0].mxu0
  %v6851 = vadd.f32 0.0, %v6850
  %v6852 = vpop.f32.mrb[0].mxu0
  %6853 = vmatprep.mubr.f32.mxu0 0.0
  %6854 = vmatmul.mubr.f32.gmra.mrb[0].mxu0 %v6484
  %v6855 = vpop.f32.mrb[0].mxu0
  %v6856 = vadd.f32 0.0, %v6855
  %v6857 = vpop.f32.mrb[0].mxu0
  %6858 = vmatprep.mubr.f32.mxu0 0.0
  %6859 = vmatmul.mubr.f32.gmra.mrb[0].mxu0 %v6487
  %v6860 = vpop.f32.mrb[0].mxu0
  %v6861 = vadd.f32 0.0, %v6860
  %v6862 = vpop.f32.mrb[0].mxu0
  %6863 = vmatprep.mubr.f32.mxu0 0.0
  %6864 = vmatmul.mubr.f32.gmra.mrb[0].mxu0 %v6490
  %v6865 = vpop.f32.mrb[0].mxu0
  %v6866 = vadd.f32 0.0, %v6865
  %v6867 = vpop.f32.mrb[0].mxu0
  %6868 = vmatprep.mubr.f32.mxu0 0.0
  %6869 = vmatmul.mubr.f32.gmra.mrb[0].mxu0 %v6493
  %v6870 = vpop.f32.mrb[0].mxu0
  %v6871 = vadd.f32 0.0, %v6870
  %v6872 = vpop.f32.mrb[0].mxu0
  %6873 = vmatprep.mubr.f32.mxu0 0.0
  %6874 = vmatmul.mubr.f32.gmra.mrb[0].mxu0 %v6496
  %v6875 = vpop.f32.mrb[0].mxu0
  %v6876 = vadd.f32 0.0, %v6875
  %v6877 = vpop.f32.mrb[0].mxu0
  %6878 = vmatprep.mubr.f32.mxu0 0.0
  %6879 = vmatmul.mubr.f32.gmra.mrb[0].mxu0 %v6499
  %v6880 = vpop.f32.mrb[0].mxu0
  %v6881 = vadd.f32 0.0, %v6880
  %v6882 = vpop.f32.mrb[0].mxu0
  %6883 = vmatprep.mubr.f32.mxu0 0.0
  %6884 = vmatmul.mubr.f32.gmra.mrb[0].mxu0 %v6502
  %v6885 = vpop.f32.mrb[0].mxu0
  %v6886 = vadd.f32 0.0, %v6885
  %v6887 = vpop.f32.mrb[0].mxu0
  %6888 = vdwg.mxu0
  %v6889 = vadd.f32 %v6181, %v6571
  %v6890 = vadd.f32 %v6182, %v6576
  %v6891 = vadd.f32 %v6183, %v6581
  %v6892 = vadd.f32 %v6184, %v6586
  %v6893 = vadd.f32 %v6185, %v6591
  %v6894 = vadd.f32 %v6186, %v6596
  %v6895 = vadd.f32 %v6187, %v6601
  %v6896 = vadd.f32 %v6188, %v6606
  %v6897 = vadd.f32 %v6189, %v6611
  %v6898 = vadd.f32 %v6190, %v6616
  %v6899 = vadd.f32 %v6191, %v6621
  %v6900 = vadd.f32 %v6192, %v6626
  %v6901 = vadd.f32 %v6193, %v6631
  %v6902 = vadd.f32 %v6194, %v6636
  %v6903 = vadd.f32 %v6195, %v6641
  %v6904 = vadd.f32 %v6196, %v6646
  %v6905 = vadd.f32 %v6197, %v6651
  %v6906 = vadd.f32 %v6198, %v6656
  %v6907 = vadd.f32 %v6199, %v6661
  %v6908 = vadd.f32 %v6200, %v6666
  %v6909 = vadd.f32 %v6201, %v6671
  %v6910 = vadd.f32 %v6202, %v6676
  %v6911 = vadd.f32 %v6203, %v6681
  %v6912 = vadd.f32 %v6204, %v6686
  %v6913 = vadd.f32 %v6205, %v6691
  %v6914 = vadd.f32 %v6206, %v6696
  %v6915 = vadd.f32 %v6207, %v6701
  %v6916 = vadd.f32 %v6208, %v6706
  %v6917 = vadd.f32 %v6209, %v6711
  %v6918 = vadd.f32 %v6210, %v6716
  %v6919 = vadd.f32 %v6211, %v6721
  %v6920 = vadd.f32 %v6212, %v6726
  %v6921 = vadd.f32 %v6213, %v6731
  %v6922 = vadd.f32 %v6214, %v6736
  %v6923 = vadd.f32 %v6215, %v6741
  %v6924 = vadd.f32 %v6216, %v6746
  %v6925 = vadd.f32 %v6217, %v6751
  %v6926 = vadd.f32 %v6218, %v6756
  %v6927 = vadd.f32 %v6219, %v6761
  %v6928 = vadd.f32 %v6220, %v6766
  %v6929 = vadd.f32 %v6221, %v6771
  %v6930 = vadd.f32 %v6222, %v6776
  %v6931 = vadd.f32 %v6223, %v6781
  %v6932 = vadd.f32 %v6224, %v6786
  %v6933 = vadd.f32 %v6225, %v6791
  %v6934 = vadd.f32 %v6226, %v6796
  %v6935 = vadd.f32 %v6227, %v6801
  %v6936 = vadd.f32 %v6228, %v6806
  %v6937 = vadd.f32 %v6229, %v6811
  %v6938 = vadd.f32 %v6230, %v6816
  %v6939 = vadd.f32 %v6231, %v6821
  %v6940 = vadd.f32 %v6232, %v6826
  %v6941 = vadd.f32 %v6233, %v6831
  %v6942 = vadd.f32 %v6234, %v6836
  %v6943 = vadd.f32 %v6235, %v6841
  %v6944 = vadd.f32 %v6236, %v6846
  %v6945 = vadd.f32 %v6237, %v6851
  %v6946 = vadd.f32 %v6238, %v6856
  %v6947 = vadd.f32 %v6239, %v6861
  %v6948 = vadd.f32 %v6240, %v6866
  %v6949 = vadd.f32 %v6241, %v6871
  %v6950 = vadd.f32 %v6242, %v6876
  %v6951 = vadd.f32 %v6243, %v6881
  %v6952 = vadd.f32 %v6244, %v6886
  %v6953 = vld [vmem:[%s6245 + $0x1] sm:$0xff]
  %v6954 = vld [vmem:[%s6245 + $0x9] sm:$0xff]
  %v6955 = vld [vmem:[%s6245 + $0x19] sm:$0xff]
  %v6956 = vld [vmem:[%s6245 + $0x21] sm:$0xff]
  %v6957 = vld [vmem:[%s6245 + $0x31] sm:$0xff]
  %v6958 = vld [vmem:[%s6245 + $0x39] sm:$0xff]
  %v6959 = vld [vmem:[%s6245 + $0x49] sm:$0xff]
  %v6960 = vld [vmem:[%s6245 + $0x51] sm:$0xff]
  %v6961 = vld [vmem:[%s6245 + $0x61] sm:$0xff]
  %v6962 = vld [vmem:[%s6245 + $0x69] sm:$0xff]
  %v6963 = vld [vmem:[%s6245 + $0x79] sm:$0xff]
  %v6964 = vld [vmem:[%s6245 + $0x81] sm:$0xff]
  %v6965 = vld [vmem:[%s6245 + $0x91] sm:$0xff]
  %v6966 = vld [vmem:[%s6245 + $0x99] sm:$0xff]
  %v6967 = vld [vmem:[%s6245 + $0xa9] sm:$0xff]
  %v6968 = vld [vmem:[%s6245 + $0xb1] sm:$0xff]
  %v6969 = vld [vmem:[%s6245 + $0xc1] sm:$0xff]
  %v6970 = vld [vmem:[%s6245 + $0xc9] sm:$0xff]
  %v6971 = vld [vmem:[%s6245 + $0xd9] sm:$0xff]
  %v6972 = vld [vmem:[%s6245 + $0xe1] sm:$0xff]
  %v6973 = vld [vmem:[%s6245 + $0xf1] sm:$0xff]
  %v6974 = vld [vmem:[%s6245 + $0xf9] sm:$0xff]
  %v6975 = vld [vmem:[%s6245 + $0x109] sm:$0xff]
  %v6976 = vld [vmem:[%s6245 + $0x111] sm:$0xff]
  %v6977 = vld [vmem:[%s6245 + $0x121] sm:$0xff]
  %v6978 = vld [vmem:[%s6245 + $0x129] sm:$0xff]
  %v6979 = vld [vmem:[%s6245 + $0x139] sm:$0xff]
  %v6980 = vld [vmem:[%s6245 + $0x141] sm:$0xff]
  %v6981 = vld [vmem:[%s6245 + $0x151] sm:$0xff]
  %v6982 = vld [vmem:[%s6245 + $0x159] sm:$0xff]
  %v6983 = vld [vmem:[%s6245 + $0x169] sm:$0xff]
  %v6984 = vld [vmem:[%s6245 + $0x171] sm:$0xff]
  %v6985 = vld [vmem:[%s6245 + $0x1b1] sm:$0xff]
  %v6986 = vld [vmem:[%s6245 + $0x1b9] sm:$0xff]
  %v6987 = vld [vmem:[%s6245 + $0x1c9] sm:$0xff]
  %v6988 = vld [vmem:[%s6245 + $0x1d1] sm:$0xff]
  %v6989 = vld [vmem:[%s6245 + $0x1e1] sm:$0xff]
  %v6990 = vld [vmem:[%s6245 + $0x1e9] sm:$0xff]
  %v6991 = vld [vmem:[%s6245 + $0x1f9] sm:$0xff]
  %v6992 = vld [vmem:[%s6245 + $0x201] sm:$0xff]
  %v6993 = vld [vmem:[%s6245 + $0x211] sm:$0xff]
  %v6994 = vld [vmem:[%s6245 + $0x219] sm:$0xff]
  %v6995 = vld [vmem:[%s6245 + $0x229] sm:$0xff]
  %v6996 = vld [vmem:[%s6245 + $0x231] sm:$0xff]
  %v6997 = vld [vmem:[%s6245 + $0x241] sm:$0xff]
  %v6998 = vld [vmem:[%s6245 + $0x249] sm:$0xff]
  %v6999 = vld [vmem:[%s6245 + $0x259] sm:$0xff]
  %v7000 = vld [vmem:[%s6245 + $0x261] sm:$0xff]
  %v7001 = vld [vmem:[%s6245 + $0x271] sm:$0xff]
  %v7002 = vld [vmem:[%s6245 + $0x279] sm:$0xff]
  %v7003 = vld [vmem:[%s6245 + $0x289] sm:$0xff]
  %v7004 = vld [vmem:[%s6245 + $0x291] sm:$0xff]
  %v7005 = vld [vmem:[%s6245 + $0x2a1] sm:$0xff]
  %v7006 = vld [vmem:[%s6245 + $0x2a9] sm:$0xff]
  %v7007 = vld [vmem:[%s6245 + $0x2b9] sm:$0xff]
  %v7008 = vld [vmem:[%s6245 + $0x2c1] sm:$0xff]
  %v7009 = vld [vmem:[%s6245 + $0x2d1] sm:$0xff]
  %v7010 = vld [vmem:[%s6245 + $0x2d9] sm:$0xff]
  %v7011 = vld [vmem:[%s6245 + $0x2e9] sm:$0xff]
  %v7012 = vld [vmem:[%s6245 + $0x2f1] sm:$0xff]
  %v7013 = vld [vmem:[%s6245 + $0x301] sm:$0xff]
  %v7014 = vld [vmem:[%s6245 + $0x309] sm:$0xff]
  %v7015 = vld [vmem:[%s6245 + $0x319] sm:$0xff]
  %v7016 = vld [vmem:[%s6245 + $0x321] sm:$0xff]
  %s7017 = scalar_lea.vmem %s4, 56
  %v7018 = vld [vmem:[%s7017] sm:$0xff]
  %v7020 = vsel %vm1354, %v6953, 0
  %v7023 = vsel %vm1354, %v6954, 0
  %v7026 = vsel %vm1354, %v6955, 0
  %v7029 = vsel %vm1354, %v6956, 0
  %v7032 = vsel %vm1354, %v6957, 0
  %v7035 = vsel %vm1354, %v6958, 0
  %v7038 = vsel %vm1354, %v6959, 0
  %v7041 = vsel %vm1354, %v6960, 0
  %v7044 = vsel %vm1354, %v6961, 0
  %v7047 = vsel %vm1354, %v6962, 0
  %v7050 = vsel %vm1354, %v6963, 0
  %v7053 = vsel %vm1354, %v6964, 0
  %v7056 = vsel %vm1354, %v6965, 0
  %v7059 = vsel %vm1354, %v6966, 0
  %v7062 = vsel %vm1354, %v6967, 0
  %v7065 = vsel %vm1354, %v6968, 0
  %v7068 = vsel %vm1354, %v6969, 0
  %v7071 = vsel %vm1354, %v6970, 0
  %v7074 = vsel %vm1354, %v6971, 0
  %v7077 = vsel %vm1354, %v6972, 0
  %v7080 = vsel %vm1354, %v6973, 0
  %v7083 = vsel %vm1354, %v6974, 0
  %v7086 = vsel %vm1354, %v6975, 0
  %v7089 = vsel %vm1354, %v6976, 0
  %v7092 = vsel %vm1354, %v6977, 0
  %v7095 = vsel %vm1354, %v6978, 0
  %v7098 = vsel %vm1354, %v6979, 0
  %v7101 = vsel %vm1354, %v6980, 0
  %v7104 = vsel %vm1354, %v6981, 0
  %v7107 = vsel %vm1354, %v6982, 0
  %v7110 = vsel %vm1354, %v6983, 0
  %v7113 = vsel %vm1354, %v6984, 0
  %v7116 = vsel %vm1354, %v6985, 0
  %v7119 = vsel %vm1354, %v6986, 0
  %v7122 = vsel %vm1354, %v6987, 0
  %v7125 = vsel %vm1354, %v6988, 0
  %v7128 = vsel %vm1354, %v6989, 0
  %v7131 = vsel %vm1354, %v6990, 0
  %v7134 = vsel %vm1354, %v6991, 0
  %v7137 = vsel %vm1354, %v6992, 0
  %v7140 = vsel %vm1354, %v6993, 0
  %v7143 = vsel %vm1354, %v6994, 0
  %v7146 = vsel %vm1354, %v6995, 0
  %v7149 = vsel %vm1354, %v6996, 0
  %v7152 = vsel %vm1354, %v6997, 0
  %v7155 = vsel %vm1354, %v6998, 0
  %v7158 = vsel %vm1354, %v6999, 0
  %v7161 = vsel %vm1354, %v7000, 0
  %v7164 = vsel %vm1354, %v7001, 0
  %v7167 = vsel %vm1354, %v7002, 0
  %v7170 = vsel %vm1354, %v7003, 0
  %v7173 = vsel %vm1354, %v7004, 0
  %v7176 = vsel %vm1354, %v7005, 0
  %v7179 = vsel %vm1354, %v7006, 0
  %v7182 = vsel %vm1354, %v7007, 0
  %v7185 = vsel %vm1354, %v7008, 0
  %v7188 = vsel %vm1354, %v7009, 0
  %v7191 = vsel %vm1354, %v7010, 0
  %v7194 = vsel %vm1354, %v7011, 0
  %v7197 = vsel %vm1354, %v7012, 0
  %v7200 = vsel %vm1354, %v7013, 0
  %v7203 = vsel %vm1354, %v7014, 0
  %v7206 = vsel %vm1354, %v7015, 0
  %v7209 = vsel %vm1354, %v7016, 0
  %7211 = vmatprep.subr.mxu0 0.0
  %7212 = vmatpush1.msra.mxu0 %v7018
  %7213 = vmatprep.subr.mxu0 0.0
  %7214 = vmatpush1.msra.mxu0 0.0
  %7215 = vmatprep.subr.mxu0 0.0
  %7216 = vmatpush1.msra.mxu0 0.0
  %7217 = vmatprep.subr.mxu0 0.0
  %7218 = vmatpush1.msra.mxu0 0.0
  %7219 = vmatprep.subr.mxu0 0.0
  %7220 = vmatpush1.msra.mxu0 0.0
  %7221 = vmatprep.subr.mxu0 0.0
  %7222 = vmatpush1.msra.mxu0 0.0
  %7223 = vmatprep.subr.mxu0 0.0
  %7224 = vmatpush1.msra.mxu0 0.0
  %7225 = vmatprep.subr.mxu0 0.0
  %7226 = vmatpush1.msra.mxu0 0.0
  %7227 = vmatprep.subr.mxu0 0.0
  %7228 = vmatpush1.msra.mxu0 0.0
  %7229 = vmatprep.subr.mxu0 0.0
  %7230 = vmatpush1.msra.mxu0 0.0
  %7231 = vmatprep.subr.mxu0 0.0
  %7232 = vmatpush1.msra.mxu0 0.0
  %7233 = vmatprep.subr.mxu0 0.0
  %7234 = vmatpush1.msra.mxu0 0.0
  %7235 = vmatprep.subr.mxu0 0.0
  %7236 = vmatpush1.msra.mxu0 0.0
  %7237 = vmatprep.subr.mxu0 0.0
  %7238 = vmatpush1.msra.mxu0 0.0
  %7239 = vmatprep.subr.mxu0 0.0
  %7240 = vmatpush1.msra.mxu0 0.0
  %7241 = vmatprep.subr.mxu0 0.0
  %7242 = vmatpush1.msra.mxu0 0.0
  %7243 = vmatprep.subr.mxu0 0.0
  %7244 = vmatpush1.msra.mxu0 0.0
  %7245 = vmatprep.subr.mxu0 0.0
  %7246 = vmatpush1.msra.mxu0 0.0
  %7247 = vmatprep.subr.mxu0 0.0
  %7248 = vmatpush1.msra.mxu0 0.0
  %7249 = vmatprep.subr.mxu0 0.0
  %7250 = vmatpush1.msra.mxu0 0.0
  %7251 = vmatprep.subr.mxu0 0.0
  %7252 = vmatpush1.msra.mxu0 0.0
  %7253 = vmatprep.subr.mxu0 0.0
  %7254 = vmatpush1.msra.mxu0 0.0
  %7255 = vmatprep.subr.mxu0 0.0
  %7256 = vmatpush1.msra.mxu0 0.0
  %7257 = vmatprep.subr.mxu0 0.0
  %7258 = vmatpush1.msra.mxu0 0.0
  %7259 = vmatprep.subr.mxu0 0.0
  %7260 = vmatpush1.msra.mxu0 0.0
  %7261 = vmatprep.subr.mxu0 0.0
  %7262 = vmatpush1.msra.mxu0 0.0
  %7263 = vmatprep.subr.mxu0 0.0
  %7264 = vmatpush1.msra.mxu0 0.0
  %7265 = vmatprep.subr.mxu0 0.0
  %7266 = vmatpush1.msra.mxu0 0.0
  %7267 = vmatprep.subr.mxu0 0.0
  %7268 = vmatpush1.msra.mxu0 0.0
  %7269 = vmatprep.subr.mxu0 0.0
  %7270 = vmatpush1.msra.mxu0 0.0
  %7271 = vmatprep.subr.mxu0 0.0
  %7272 = vmatpush1.msra.mxu0 0.0
  %7273 = vmatprep.subr.mxu0 0.0
  %7274 = vmatpush1.msra.mxu0 0.0
  %7275 = vmatprep.mubr.f32.mxu0 0.0
  %7276 = vmatmul.mubr.f32.gmra.mrb[0].mxu0 %v7020
  %v7277 = vpop.f32.mrb[0].mxu0
  %v7278 = vadd.f32 0.0, %v7277
  %v7279 = vpop.f32.mrb[0].mxu0
  %7280 = vmatprep.mubr.f32.mxu0 0.0
  %7281 = vmatmul.mubr.f32.gmra.mrb[0].mxu0 %v7023
  %v7282 = vpop.f32.mrb[0].mxu0
  %v7283 = vadd.f32 0.0, %v7282
  %v7284 = vpop.f32.mrb[0].mxu0
  %7285 = vmatprep.mubr.f32.mxu0 0.0
  %7286 = vmatmul.mubr.f32.gmra.mrb[0].mxu0 %v7026
  %v7287 = vpop.f32.mrb[0].mxu0
  %v7288 = vadd.f32 0.0, %v7287
  %v7289 = vpop.f32.mrb[0].mxu0
  %7290 = vmatprep.mubr.f32.mxu0 0.0
  %7291 = vmatmul.mubr.f32.gmra.mrb[0].mxu0 %v7029
  %v7292 = vpop.f32.mrb[0].mxu0
  %v7293 = vadd.f32 0.0, %v7292
  %v7294 = vpop.f32.mrb[0].mxu0
  %7295 = vmatprep.mubr.f32.mxu0 0.0
  %7296 = vmatmul.mubr.f32.gmra.mrb[0].mxu0 %v7032
  %v7297 = vpop.f32.mrb[0].mxu0
  %v7298 = vadd.f32 0.0, %v7297
  %v7299 = vpop.f32.mrb[0].mxu0
  %7300 = vmatprep.mubr.f32.mxu0 0.0
  %7301 = vmatmul.mubr.f32.gmra.mrb[0].mxu0 %v7035
  %v7302 = vpop.f32.mrb[0].mxu0
  %v7303 = vadd.f32 0.0, %v7302
  %v7304 = vpop.f32.mrb[0].mxu0
  %7305 = vmatprep.mubr.f32.mxu0 0.0
  %7306 = vmatmul.mubr.f32.gmra.mrb[0].mxu0 %v7038
  %v7307 = vpop.f32.mrb[0].mxu0
  %v7308 = vadd.f32 0.0, %v7307
  %v7309 = vpop.f32.mrb[0].mxu0
  %7310 = vmatprep.mubr.f32.mxu0 0.0
  %7311 = vmatmul.mubr.f32.gmra.mrb[0].mxu0 %v7041
  %v7312 = vpop.f32.mrb[0].mxu0
  %v7313 = vadd.f32 0.0, %v7312
  %v7314 = vpop.f32.mrb[0].mxu0
  %7315 = vmatprep.mubr.f32.mxu0 0.0
  %7316 = vmatmul.mubr.f32.gmra.mrb[0].mxu0 %v7044
  %v7317 = vpop.f32.mrb[0].mxu0
  %v7318 = vadd.f32 0.0, %v7317
  %v7319 = vpop.f32.mrb[0].mxu0
  %7320 = vmatprep.mubr.f32.mxu0 0.0
  %7321 = vmatmul.mubr.f32.gmra.mrb[0].mxu0 %v7047
  %v7322 = vpop.f32.mrb[0].mxu0
  %v7323 = vadd.f32 0.0, %v7322
  %v7324 = vpop.f32.mrb[0].mxu0
  %7325 = vmatprep.mubr.f32.mxu0 0.0
  %7326 = vmatmul.mubr.f32.gmra.mrb[0].mxu0 %v7050
  %v7327 = vpop.f32.mrb[0].mxu0
  %v7328 = vadd.f32 0.0, %v7327
  %v7329 = vpop.f32.mrb[0].mxu0
  %7330 = vmatprep.mubr.f32.mxu0 0.0
  %7331 = vmatmul.mubr.f32.gmra.mrb[0].mxu0 %v7053
  %v7332 = vpop.f32.mrb[0].mxu0
  %v7333 = vadd.f32 0.0, %v7332
  %v7334 = vpop.f32.mrb[0].mxu0
  %7335 = vmatprep.mubr.f32.mxu0 0.0
  %7336 = vmatmul.mubr.f32.gmra.mrb[0].mxu0 %v7056
  %v7337 = vpop.f32.mrb[0].mxu0
  %v7338 = vadd.f32 0.0, %v7337
  %v7339 = vpop.f32.mrb[0].mxu0
  %7340 = vmatprep.mubr.f32.mxu0 0.0
  %7341 = vmatmul.mubr.f32.gmra.mrb[0].mxu0 %v7059
  %v7342 = vpop.f32.mrb[0].mxu0
  %v7343 = vadd.f32 0.0, %v7342
  %v7344 = vpop.f32.mrb[0].mxu0
  %7345 = vmatprep.mubr.f32.mxu0 0.0
  %7346 = vmatmul.mubr.f32.gmra.mrb[0].mxu0 %v7062
  %v7347 = vpop.f32.mrb[0].mxu0
  %v7348 = vadd.f32 0.0, %v7347
  %v7349 = vpop.f32.mrb[0].mxu0
  %7350 = vmatprep.mubr.f32.mxu0 0.0
  %7351 = vmatmul.mubr.f32.gmra.mrb[0].mxu0 %v7065
  %v7352 = vpop.f32.mrb[0].mxu0
  %v7353 = vadd.f32 0.0, %v7352
  %v7354 = vpop.f32.mrb[0].mxu0
  %7355 = vmatprep.mubr.f32.mxu0 0.0
  %7356 = vmatmul.mubr.f32.gmra.mrb[0].mxu0 %v7068
  %v7357 = vpop.f32.mrb[0].mxu0
  %v7358 = vadd.f32 0.0, %v7357
  %v7359 = vpop.f32.mrb[0].mxu0
  %7360 = vmatprep.mubr.f32.mxu0 0.0
  %7361 = vmatmul.mubr.f32.gmra.mrb[0].mxu0 %v7071
  %v7362 = vpop.f32.mrb[0].mxu0
  %v7363 = vadd.f32 0.0, %v7362
  %v7364 = vpop.f32.mrb[0].mxu0
  %7365 = vmatprep.mubr.f32.mxu0 0.0
  %7366 = vmatmul.mubr.f32.gmra.mrb[0].mxu0 %v7074
  %v7367 = vpop.f32.mrb[0].mxu0
  %v7368 = vadd.f32 0.0, %v7367
  %v7369 = vpop.f32.mrb[0].mxu0
  %7370 = vmatprep.mubr.f32.mxu0 0.0
  %7371 = vmatmul.mubr.f32.gmra.mrb[0].mxu0 %v7077
  %v7372 = vpop.f32.mrb[0].mxu0
  %v7373 = vadd.f32 0.0, %v7372
  %v7374 = vpop.f32.mrb[0].mxu0
  %7375 = vmatprep.mubr.f32.mxu0 0.0
  %7376 = vmatmul.mubr.f32.gmra.mrb[0].mxu0 %v7080
  %v7377 = vpop.f32.mrb[0].mxu0
  %v7378 = vadd.f32 0.0, %v7377
  %v7379 = vpop.f32.mrb[0].mxu0
  %7380 = vmatprep.mubr.f32.mxu0 0.0
  %7381 = vmatmul.mubr.f32.gmra.mrb[0].mxu0 %v7083
  %v7382 = vpop.f32.mrb[0].mxu0
  %v7383 = vadd.f32 0.0, %v7382
  %v7384 = vpop.f32.mrb[0].mxu0
  %7385 = vmatprep.mubr.f32.mxu0 0.0
  %7386 = vmatmul.mubr.f32.gmra.mrb[0].mxu0 %v7086
  %v7387 = vpop.f32.mrb[0].mxu0
  %v7388 = vadd.f32 0.0, %v7387
  %v7389 = vpop.f32.mrb[0].mxu0
  %7390 = vmatprep.mubr.f32.mxu0 0.0
  %7391 = vmatmul.mubr.f32.gmra.mrb[0].mxu0 %v7089
  %v7392 = vpop.f32.mrb[0].mxu0
  %v7393 = vadd.f32 0.0, %v7392
  %v7394 = vpop.f32.mrb[0].mxu0
  %7395 = vmatprep.mubr.f32.mxu0 0.0
  %7396 = vmatmul.mubr.f32.gmra.mrb[0].mxu0 %v7092
  %v7397 = vpop.f32.mrb[0].mxu0
  %v7398 = vadd.f32 0.0, %v7397
  %v7399 = vpop.f32.mrb[0].mxu0
  %7400 = vmatprep.mubr.f32.mxu0 0.0
  %7401 = vmatmul.mubr.f32.gmra.mrb[0].mxu0 %v7095
  %v7402 = vpop.f32.mrb[0].mxu0
  %v7403 = vadd.f32 0.0, %v7402
  %v7404 = vpop.f32.mrb[0].mxu0
  %7405 = vmatprep.mubr.f32.mxu0 0.0
  %7406 = vmatmul.mubr.f32.gmra.mrb[0].mxu0 %v7098
  %v7407 = vpop.f32.mrb[0].mxu0
  %v7408 = vadd.f32 0.0, %v7407
  %v7409 = vpop.f32.mrb[0].mxu0
  %7410 = vmatprep.mubr.f32.mxu0 0.0
  %7411 = vmatmul.mubr.f32.gmra.mrb[0].mxu0 %v7101
  %v7412 = vpop.f32.mrb[0].mxu0
  %v7413 = vadd.f32 0.0, %v7412
  %v7414 = vpop.f32.mrb[0].mxu0
  %7415 = vmatprep.mubr.f32.mxu0 0.0
  %7416 = vmatmul.mubr.f32.gmra.mrb[0].mxu0 %v7104
  %v7417 = vpop.f32.mrb[0].mxu0
  %v7418 = vadd.f32 0.0, %v7417
  %v7419 = vpop.f32.mrb[0].mxu0
  %7420 = vmatprep.mubr.f32.mxu0 0.0
  %7421 = vmatmul.mubr.f32.gmra.mrb[0].mxu0 %v7107
  %v7422 = vpop.f32.mrb[0].mxu0
  %v7423 = vadd.f32 0.0, %v7422
  %v7424 = vpop.f32.mrb[0].mxu0
  %7425 = vmatprep.mubr.f32.mxu0 0.0
  %7426 = vmatmul.mubr.f32.gmra.mrb[0].mxu0 %v7110
  %v7427 = vpop.f32.mrb[0].mxu0
  %v7428 = vadd.f32 0.0, %v7427
  %v7429 = vpop.f32.mrb[0].mxu0
  %7430 = vmatprep.mubr.f32.mxu0 0.0
  %7431 = vmatmul.mubr.f32.gmra.mrb[0].mxu0 %v7113
  %v7432 = vpop.f32.mrb[0].mxu0
  %v7433 = vadd.f32 0.0, %v7432
  %v7434 = vpop.f32.mrb[0].mxu0
  %7435 = vmatprep.mubr.f32.mxu0 0.0
  %7436 = vmatmul.mubr.f32.gmra.mrb[0].mxu0 %v7116
  %v7437 = vpop.f32.mrb[0].mxu0
  %v7438 = vadd.f32 0.0, %v7437
  %v7439 = vpop.f32.mrb[0].mxu0
  %7440 = vmatprep.mubr.f32.mxu0 0.0
  %7441 = vmatmul.mubr.f32.gmra.mrb[0].mxu0 %v7119
  %v7442 = vpop.f32.mrb[0].mxu0
  %v7443 = vadd.f32 0.0, %v7442
  %v7444 = vpop.f32.mrb[0].mxu0
  %7445 = vmatprep.mubr.f32.mxu0 0.0
  %7446 = vmatmul.mubr.f32.gmra.mrb[0].mxu0 %v7122
  %v7447 = vpop.f32.mrb[0].mxu0
  %v7448 = vadd.f32 0.0, %v7447
  %v7449 = vpop.f32.mrb[0].mxu0
  %7450 = vmatprep.mubr.f32.mxu0 0.0
  %7451 = vmatmul.mubr.f32.gmra.mrb[0].mxu0 %v7125
  %v7452 = vpop.f32.mrb[0].mxu0
  %v7453 = vadd.f32 0.0, %v7452
  %v7454 = vpop.f32.mrb[0].mxu0
  %7455 = vmatprep.mubr.f32.mxu0 0.0
  %7456 = vmatmul.mubr.f32.gmra.mrb[0].mxu0 %v7128
  %v7457 = vpop.f32.mrb[0].mxu0
  %v7458 = vadd.f32 0.0, %v7457
  %v7459 = vpop.f32.mrb[0].mxu0
  %7460 = vmatprep.mubr.f32.mxu0 0.0
  %7461 = vmatmul.mubr.f32.gmra.mrb[0].mxu0 %v7131
  %v7462 = vpop.f32.mrb[0].mxu0
  %v7463 = vadd.f32 0.0, %v7462
  %v7464 = vpop.f32.mrb[0].mxu0
  %7465 = vmatprep.mubr.f32.mxu0 0.0
  %7466 = vmatmul.mubr.f32.gmra.mrb[0].mxu0 %v7134
  %v7467 = vpop.f32.mrb[0].mxu0
  %v7468 = vadd.f32 0.0, %v7467
  %v7469 = vpop.f32.mrb[0].mxu0
  %7470 = vmatprep.mubr.f32.mxu0 0.0
  %7471 = vmatmul.mubr.f32.gmra.mrb[0].mxu0 %v7137
  %v7472 = vpop.f32.mrb[0].mxu0
  %v7473 = vadd.f32 0.0, %v7472
  %v7474 = vpop.f32.mrb[0].mxu0
  %7475 = vmatprep.mubr.f32.mxu0 0.0
  %7476 = vmatmul.mubr.f32.gmra.mrb[0].mxu0 %v7140
  %v7477 = vpop.f32.mrb[0].mxu0
  %v7478 = vadd.f32 0.0, %v7477
  %v7479 = vpop.f32.mrb[0].mxu0
  %7480 = vmatprep.mubr.f32.mxu0 0.0
  %7481 = vmatmul.mubr.f32.gmra.mrb[0].mxu0 %v7143
  %v7482 = vpop.f32.mrb[0].mxu0
  %v7483 = vadd.f32 0.0, %v7482
  %v7484 = vpop.f32.mrb[0].mxu0
  %7485 = vmatprep.mubr.f32.mxu0 0.0
  %7486 = vmatmul.mubr.f32.gmra.mrb[0].mxu0 %v7146
  %v7487 = vpop.f32.mrb[0].mxu0
  %v7488 = vadd.f32 0.0, %v7487
  %v7489 = vpop.f32.mrb[0].mxu0
  %7490 = vmatprep.mubr.f32.mxu0 0.0
  %7491 = vmatmul.mubr.f32.gmra.mrb[0].mxu0 %v7149
  %v7492 = vpop.f32.mrb[0].mxu0
  %v7493 = vadd.f32 0.0, %v7492
  %v7494 = vpop.f32.mrb[0].mxu0
  %7495 = vmatprep.mubr.f32.mxu0 0.0
  %7496 = vmatmul.mubr.f32.gmra.mrb[0].mxu0 %v7152
  %v7497 = vpop.f32.mrb[0].mxu0
  %v7498 = vadd.f32 0.0, %v7497
  %v7499 = vpop.f32.mrb[0].mxu0
  %7500 = vmatprep.mubr.f32.mxu0 0.0
  %7501 = vmatmul.mubr.f32.gmra.mrb[0].mxu0 %v7155
  %v7502 = vpop.f32.mrb[0].mxu0
  %v7503 = vadd.f32 0.0, %v7502
  %v7504 = vpop.f32.mrb[0].mxu0
  %7505 = vmatprep.mubr.f32.mxu0 0.0
  %7506 = vmatmul.mubr.f32.gmra.mrb[0].mxu0 %v7158
  %v7507 = vpop.f32.mrb[0].mxu0
  %v7508 = vadd.f32 0.0, %v7507
  %v7509 = vpop.f32.mrb[0].mxu0
  %7510 = vmatprep.mubr.f32.mxu0 0.0
  %7511 = vmatmul.mubr.f32.gmra.mrb[0].mxu0 %v7161
  %v7512 = vpop.f32.mrb[0].mxu0
  %v7513 = vadd.f32 0.0, %v7512
  %v7514 = vpop.f32.mrb[0].mxu0
  %7515 = vmatprep.mubr.f32.mxu0 0.0
  %7516 = vmatmul.mubr.f32.gmra.mrb[0].mxu0 %v7164
  %v7517 = vpop.f32.mrb[0].mxu0
  %v7518 = vadd.f32 0.0, %v7517
  %v7519 = vpop.f32.mrb[0].mxu0
  %7520 = vmatprep.mubr.f32.mxu0 0.0
  %7521 = vmatmul.mubr.f32.gmra.mrb[0].mxu0 %v7167
  %v7522 = vpop.f32.mrb[0].mxu0
  %v7523 = vadd.f32 0.0, %v7522
  %v7524 = vpop.f32.mrb[0].mxu0
  %7525 = vmatprep.mubr.f32.mxu0 0.0
  %7526 = vmatmul.mubr.f32.gmra.mrb[0].mxu0 %v7170
  %v7527 = vpop.f32.mrb[0].mxu0
  %v7528 = vadd.f32 0.0, %v7527
  %v7529 = vpop.f32.mrb[0].mxu0
  %7530 = vmatprep.mubr.f32.mxu0 0.0
  %7531 = vmatmul.mubr.f32.gmra.mrb[0].mxu0 %v7173
  %v7532 = vpop.f32.mrb[0].mxu0
  %v7533 = vadd.f32 0.0, %v7532
  %v7534 = vpop.f32.mrb[0].mxu0
  %7535 = vmatprep.mubr.f32.mxu0 0.0
  %7536 = vmatmul.mubr.f32.gmra.mrb[0].mxu0 %v7176
  %v7537 = vpop.f32.mrb[0].mxu0
  %v7538 = vadd.f32 0.0, %v7537
  %v7539 = vpop.f32.mrb[0].mxu0
  %7540 = vmatprep.mubr.f32.mxu0 0.0
  %7541 = vmatmul.mubr.f32.gmra.mrb[0].mxu0 %v7179
  %v7542 = vpop.f32.mrb[0].mxu0
  %v7543 = vadd.f32 0.0, %v7542
  %v7544 = vpop.f32.mrb[0].mxu0
  %7545 = vmatprep.mubr.f32.mxu0 0.0
  %7546 = vmatmul.mubr.f32.gmra.mrb[0].mxu0 %v7182
  %v7547 = vpop.f32.mrb[0].mxu0
  %v7548 = vadd.f32 0.0, %v7547
  %v7549 = vpop.f32.mrb[0].mxu0
  %7550 = vmatprep.mubr.f32.mxu0 0.0
  %7551 = vmatmul.mubr.f32.gmra.mrb[0].mxu0 %v7185
  %v7552 = vpop.f32.mrb[0].mxu0
  %v7553 = vadd.f32 0.0, %v7552
  %v7554 = vpop.f32.mrb[0].mxu0
  %7555 = vmatprep.mubr.f32.mxu0 0.0
  %7556 = vmatmul.mubr.f32.gmra.mrb[0].mxu0 %v7188
  %v7557 = vpop.f32.mrb[0].mxu0
  %v7558 = vadd.f32 0.0, %v7557
  %v7559 = vpop.f32.mrb[0].mxu0
  %7560 = vmatprep.mubr.f32.mxu0 0.0
  %7561 = vmatmul.mubr.f32.gmra.mrb[0].mxu0 %v7191
  %v7562 = vpop.f32.mrb[0].mxu0
  %v7563 = vadd.f32 0.0, %v7562
  %v7564 = vpop.f32.mrb[0].mxu0
  %7565 = vmatprep.mubr.f32.mxu0 0.0
  %7566 = vmatmul.mubr.f32.gmra.mrb[0].mxu0 %v7194
  %v7567 = vpop.f32.mrb[0].mxu0
  %v7568 = vadd.f32 0.0, %v7567
  %v7569 = vpop.f32.mrb[0].mxu0
  %7570 = vmatprep.mubr.f32.mxu0 0.0
  %7571 = vmatmul.mubr.f32.gmra.mrb[0].mxu0 %v7197
  %v7572 = vpop.f32.mrb[0].mxu0
  %v7573 = vadd.f32 0.0, %v7572
  %v7574 = vpop.f32.mrb[0].mxu0
  %7575 = vmatprep.mubr.f32.mxu0 0.0
  %7576 = vmatmul.mubr.f32.gmra.mrb[0].mxu0 %v7200
  %v7577 = vpop.f32.mrb[0].mxu0
  %v7578 = vadd.f32 0.0, %v7577
  %v7579 = vpop.f32.mrb[0].mxu0
  %7580 = vmatprep.mubr.f32.mxu0 0.0
  %7581 = vmatmul.mubr.f32.gmra.mrb[0].mxu0 %v7203
  %v7582 = vpop.f32.mrb[0].mxu0
  %v7583 = vadd.f32 0.0, %v7582
  %v7584 = vpop.f32.mrb[0].mxu0
  %7585 = vmatprep.mubr.f32.mxu0 0.0
  %7586 = vmatmul.mubr.f32.gmra.mrb[0].mxu0 %v7206
  %v7587 = vpop.f32.mrb[0].mxu0
  %v7588 = vadd.f32 0.0, %v7587
  %v7589 = vpop.f32.mrb[0].mxu0
  %7590 = vmatprep.mubr.f32.mxu0 0.0
  %7591 = vmatmul.mubr.f32.gmra.mrb[0].mxu0 %v7209
  %v7592 = vpop.f32.mrb[0].mxu0
  %v7593 = vadd.f32 0.0, %v7592
  %v7594 = vpop.f32.mrb[0].mxu0
  %7595 = vdwg.mxu0
  %v7596 = vadd.f32 %v6889, %v7278
  %v7597 = vadd.f32 %v6890, %v7283
  %v7598 = vadd.f32 %v6891, %v7288
  %v7599 = vadd.f32 %v6892, %v7293
  %v7600 = vadd.f32 %v6893, %v7298
  %v7601 = vadd.f32 %v6894, %v7303
  %v7602 = vadd.f32 %v6895, %v7308
  %v7603 = vadd.f32 %v6896, %v7313
  %v7604 = vadd.f32 %v6897, %v7318
  %v7605 = vadd.f32 %v6898, %v7323
  %v7606 = vadd.f32 %v6899, %v7328
  %v7607 = vadd.f32 %v6900, %v7333
  %v7608 = vadd.f32 %v6901, %v7338
  %v7609 = vadd.f32 %v6902, %v7343
  %v7610 = vadd.f32 %v6903, %v7348
  %v7611 = vadd.f32 %v6904, %v7353
  %v7612 = vadd.f32 %v6905, %v7358
  %v7613 = vadd.f32 %v6906, %v7363
  %v7614 = vadd.f32 %v6907, %v7368
  %v7615 = vadd.f32 %v6908, %v7373
  %v7616 = vadd.f32 %v6909, %v7378
  %v7617 = vadd.f32 %v6910, %v7383
  %v7618 = vadd.f32 %v6911, %v7388
  %v7619 = vadd.f32 %v6912, %v7393
  %v7620 = vadd.f32 %v6913, %v7398
  %v7621 = vadd.f32 %v6914, %v7403
  %v7622 = vadd.f32 %v6915, %v7408
  %v7623 = vadd.f32 %v6916, %v7413
  %v7624 = vadd.f32 %v6917, %v7418
  %v7625 = vadd.f32 %v6918, %v7423
  %v7626 = vadd.f32 %v6919, %v7428
  %v7627 = vadd.f32 %v6920, %v7433
  %v7628 = vadd.f32 %v6921, %v7438
  %v7629 = vadd.f32 %v6922, %v7443
  %v7630 = vadd.f32 %v6923, %v7448
  %v7631 = vadd.f32 %v6924, %v7453
  %v7632 = vadd.f32 %v6925, %v7458
  %v7633 = vadd.f32 %v6926, %v7463
  %v7634 = vadd.f32 %v6927, %v7468
  %v7635 = vadd.f32 %v6928, %v7473
  %v7636 = vadd.f32 %v6929, %v7478
  %v7637 = vadd.f32 %v6930, %v7483
  %v7638 = vadd.f32 %v6931, %v7488
  %v7639 = vadd.f32 %v6932, %v7493
  %v7640 = vadd.f32 %v6933, %v7498
  %v7641 = vadd.f32 %v6934, %v7503
  %v7642 = vadd.f32 %v6935, %v7508
  %v7643 = vadd.f32 %v6936, %v7513
  %v7644 = vadd.f32 %v6937, %v7518
  %v7645 = vadd.f32 %v6938, %v7523
  %v7646 = vadd.f32 %v6939, %v7528
  %v7647 = vadd.f32 %v6940, %v7533
  %v7648 = vadd.f32 %v6941, %v7538
  %v7649 = vadd.f32 %v6942, %v7543
  %v7650 = vadd.f32 %v6943, %v7548
  %v7651 = vadd.f32 %v6944, %v7553
  %v7652 = vadd.f32 %v6945, %v7558
  %v7653 = vadd.f32 %v6946, %v7563
  %v7654 = vadd.f32 %v6947, %v7568
  %v7655 = vadd.f32 %v6948, %v7573
  %v7656 = vadd.f32 %v6949, %v7578
  %v7657 = vadd.f32 %v6950, %v7583
  %v7658 = vadd.f32 %v6951, %v7588
  %v7659 = vadd.f32 %v6952, %v7593
  %v7660 = vld [vmem:[%s6245 + $0x2] sm:$0xff]
  %v7661 = vld [vmem:[%s6245 + $0xa] sm:$0xff]
  %v7662 = vld [vmem:[%s6245 + $0x1a] sm:$0xff]
  %v7663 = vld [vmem:[%s6245 + $0x22] sm:$0xff]
  %v7664 = vld [vmem:[%s6245 + $0x32] sm:$0xff]
  %v7665 = vld [vmem:[%s6245 + $0x3a] sm:$0xff]
  %v7666 = vld [vmem:[%s6245 + $0x4a] sm:$0xff]
  %v7667 = vld [vmem:[%s6245 + $0x52] sm:$0xff]
  %v7668 = vld [vmem:[%s6245 + $0x62] sm:$0xff]
  %v7669 = vld [vmem:[%s6245 + $0x6a] sm:$0xff]
  %v7670 = vld [vmem:[%s6245 + $0x7a] sm:$0xff]
  %v7671 = vld [vmem:[%s6245 + $0x82] sm:$0xff]
  %v7672 = vld [vmem:[%s6245 + $0x92] sm:$0xff]
  %v7673 = vld [vmem:[%s6245 + $0x9a] sm:$0xff]
  %v7674 = vld [vmem:[%s6245 + $0xaa] sm:$0xff]
  %v7675 = vld [vmem:[%s6245 + $0xb2] sm:$0xff]
  %v7676 = vld [vmem:[%s6245 + $0xc2] sm:$0xff]
  %v7677 = vld [vmem:[%s6245 + $0xca] sm:$0xff]
  %v7678 = vld [vmem:[%s6245 + $0xda] sm:$0xff]
  %v7679 = vld [vmem:[%s6245 + $0xe2] sm:$0xff]
  %v7680 = vld [vmem:[%s6245 + $0xf2] sm:$0xff]
  %v7681 = vld [vmem:[%s6245 + $0xfa] sm:$0xff]
  %v7682 = vld [vmem:[%s6245 + $0x10a] sm:$0xff]
  %v7683 = vld [vmem:[%s6245 + $0x112] sm:$0xff]
  %v7684 = vld [vmem:[%s6245 + $0x122] sm:$0xff]
  %v7685 = vld [vmem:[%s6245 + $0x12a] sm:$0xff]
  %v7686 = vld [vmem:[%s6245 + $0x13a] sm:$0xff]
  %v7687 = vld [vmem:[%s6245 + $0x142] sm:$0xff]
  %v7688 = vld [vmem:[%s6245 + $0x152] sm:$0xff]
  %v7689 = vld [vmem:[%s6245 + $0x15a] sm:$0xff]
  %v7690 = vld [vmem:[%s6245 + $0x16a] sm:$0xff]
  %v7691 = vld [vmem:[%s6245 + $0x172] sm:$0xff]
  %v7692 = vld [vmem:[%s6245 + $0x1b2] sm:$0xff]
  %v7693 = vld [vmem:[%s6245 + $0x1ba] sm:$0xff]
  %v7694 = vld [vmem:[%s6245 + $0x1ca] sm:$0xff]
  %v7695 = vld [vmem:[%s6245 + $0x1d2] sm:$0xff]
  %v7696 = vld [vmem:[%s6245 + $0x1e2] sm:$0xff]
  %v7697 = vld [vmem:[%s6245 + $0x1ea] sm:$0xff]
  %v7698 = vld [vmem:[%s6245 + $0x1fa] sm:$0xff]
  %v7699 = vld [vmem:[%s6245 + $0x202] sm:$0xff]
  %v7700 = vld [vmem:[%s6245 + $0x212] sm:$0xff]
  %v7701 = vld [vmem:[%s6245 + $0x21a] sm:$0xff]
  %v7702 = vld [vmem:[%s6245 + $0x22a] sm:$0xff]
  %v7703 = vld [vmem:[%s6245 + $0x232] sm:$0xff]
  %v7704 = vld [vmem:[%s6245 + $0x242] sm:$0xff]
  %v7705 = vld [vmem:[%s6245 + $0x24a] sm:$0xff]
  %v7706 = vld [vmem:[%s6245 + $0x25a] sm:$0xff]
  %v7707 = vld [vmem:[%s6245 + $0x262] sm:$0xff]
  %v7708 = vld [vmem:[%s6245 + $0x272] sm:$0xff]
  %v7709 = vld [vmem:[%s6245 + $0x27a] sm:$0xff]
  %v7710 = vld [vmem:[%s6245 + $0x28a] sm:$0xff]
  %v7711 = vld [vmem:[%s6245 + $0x292] sm:$0xff]
  %v7712 = vld [vmem:[%s6245 + $0x2a2] sm:$0xff]
  %v7713 = vld [vmem:[%s6245 + $0x2aa] sm:$0xff]
  %v7714 = vld [vmem:[%s6245 + $0x2ba] sm:$0xff]
  %v7715 = vld [vmem:[%s6245 + $0x2c2] sm:$0xff]
  %v7716 = vld [vmem:[%s6245 + $0x2d2] sm:$0xff]
  %v7717 = vld [vmem:[%s6245 + $0x2da] sm:$0xff]
  %v7718 = vld [vmem:[%s6245 + $0x2ea] sm:$0xff]
  %v7719 = vld [vmem:[%s6245 + $0x2f2] sm:$0xff]
  %v7720 = vld [vmem:[%s6245 + $0x302] sm:$0xff]
  %v7721 = vld [vmem:[%s6245 + $0x30a] sm:$0xff]
  %v7722 = vld [vmem:[%s6245 + $0x31a] sm:$0xff]
  %v7723 = vld [vmem:[%s6245 + $0x322] sm:$0xff]
  %s7724 = scalar_lea.vmem %s4, 64
  %v7725 = vld [vmem:[%s7724] sm:$0xff]
  %v7727 = vsel %vm1354, %v7660, 0
  %v7730 = vsel %vm1354, %v7661, 0
  %v7733 = vsel %vm1354, %v7662, 0
  %v7736 = vsel %vm1354, %v7663, 0
  %v7739 = vsel %vm1354, %v7664, 0
  %v7742 = vsel %vm1354, %v7665, 0
  %v7745 = vsel %vm1354, %v7666, 0
  %v7748 = vsel %vm1354, %v7667, 0
  %v7751 = vsel %vm1354, %v7668, 0
  %v7754 = vsel %vm1354, %v7669, 0
  %v7757 = vsel %vm1354, %v7670, 0
  %v7760 = vsel %vm1354, %v7671, 0
  %v7763 = vsel %vm1354, %v7672, 0
  %v7766 = vsel %vm1354, %v7673, 0
  %v7769 = vsel %vm1354, %v7674, 0
  %v7772 = vsel %vm1354, %v7675, 0
  %v7775 = vsel %vm1354, %v7676, 0
  %v7778 = vsel %vm1354, %v7677, 0
  %v7781 = vsel %vm1354, %v7678, 0
  %v7784 = vsel %vm1354, %v7679, 0
  %v7787 = vsel %vm1354, %v7680, 0
  %v7790 = vsel %vm1354, %v7681, 0
  %v7793 = vsel %vm1354, %v7682, 0
  %v7796 = vsel %vm1354, %v7683, 0
  %v7799 = vsel %vm1354, %v7684, 0
  %v7802 = vsel %vm1354, %v7685, 0
  %v7805 = vsel %vm1354, %v7686, 0
  %v7808 = vsel %vm1354, %v7687, 0
  %v7811 = vsel %vm1354, %v7688, 0
  %v7814 = vsel %vm1354, %v7689, 0
  %v7817 = vsel %vm1354, %v7690, 0
  %v7820 = vsel %vm1354, %v7691, 0
  %v7823 = vsel %vm1354, %v7692, 0
  %v7826 = vsel %vm1354, %v7693, 0
  %v7829 = vsel %vm1354, %v7694, 0
  %v7832 = vsel %vm1354, %v7695, 0
  %v7835 = vsel %vm1354, %v7696, 0
  %v7838 = vsel %vm1354, %v7697, 0
  %v7841 = vsel %vm1354, %v7698, 0
  %v7844 = vsel %vm1354, %v7699, 0
  %v7847 = vsel %vm1354, %v7700, 0
  %v7850 = vsel %vm1354, %v7701, 0
  %v7853 = vsel %vm1354, %v7702, 0
  %v7856 = vsel %vm1354, %v7703, 0
  %v7859 = vsel %vm1354, %v7704, 0
  %v7862 = vsel %vm1354, %v7705, 0
  %v7865 = vsel %vm1354, %v7706, 0
  %v7868 = vsel %vm1354, %v7707, 0
  %v7871 = vsel %vm1354, %v7708, 0
  %v7874 = vsel %vm1354, %v7709, 0
  %v7877 = vsel %vm1354, %v7710, 0
  %v7880 = vsel %vm1354, %v7711, 0
  %v7883 = vsel %vm1354, %v7712, 0
  %v7886 = vsel %vm1354, %v7713, 0
  %v7889 = vsel %vm1354, %v7714, 0
  %v7892 = vsel %vm1354, %v7715, 0
  %v7895 = vsel %vm1354, %v7716, 0
  %v7898 = vsel %vm1354, %v7717, 0
  %v7901 = vsel %vm1354, %v7718, 0
  %v7904 = vsel %vm1354, %v7719, 0
  %v7907 = vsel %vm1354, %v7720, 0
  %v7910 = vsel %vm1354, %v7721, 0
  %v7913 = vsel %vm1354, %v7722, 0
  %v7916 = vsel %vm1354, %v7723, 0
  %7918 = vmatprep.subr.mxu0 0.0
  %7919 = vmatpush1.msra.mxu0 %v7725
  %7920 = vmatprep.subr.mxu0 0.0
  %7921 = vmatpush1.msra.mxu0 0.0
  %7922 = vmatprep.subr.mxu0 0.0
  %7923 = vmatpush1.msra.mxu0 0.0
  %7924 = vmatprep.subr.mxu0 0.0
  %7925 = vmatpush1.msra.mxu0 0.0
  %7926 = vmatprep.subr.mxu0 0.0
  %7927 = vmatpush1.msra.mxu0 0.0
  %7928 = vmatprep.subr.mxu0 0.0
  %7929 = vmatpush1.msra.mxu0 0.0
  %7930 = vmatprep.subr.mxu0 0.0
  %7931 = vmatpush1.msra.mxu0 0.0
  %7932 = vmatprep.subr.mxu0 0.0
  %7933 = vmatpush1.msra.mxu0 0.0
  %7934 = vmatprep.subr.mxu0 0.0
  %7935 = vmatpush1.msra.mxu0 0.0
  %7936 = vmatprep.subr.mxu0 0.0
  %7937 = vmatpush1.msra.mxu0 0.0
  %7938 = vmatprep.subr.mxu0 0.0
  %7939 = vmatpush1.msra.mxu0 0.0
  %7940 = vmatprep.subr.mxu0 0.0
  %7941 = vmatpush1.msra.mxu0 0.0
  %7942 = vmatprep.subr.mxu0 0.0
  %7943 = vmatpush1.msra.mxu0 0.0
  %7944 = vmatprep.subr.mxu0 0.0
  %7945 = vmatpush1.msra.mxu0 0.0
  %7946 = vmatprep.subr.mxu0 0.0
  %7947 = vmatpush1.msra.mxu0 0.0
  %7948 = vmatprep.subr.mxu0 0.0
  %7949 = vmatpush1.msra.mxu0 0.0
  %7950 = vmatprep.subr.mxu0 0.0
  %7951 = vmatpush1.msra.mxu0 0.0
  %7952 = vmatprep.subr.mxu0 0.0
  %7953 = vmatpush1.msra.mxu0 0.0
  %7954 = vmatprep.subr.mxu0 0.0
  %7955 = vmatpush1.msra.mxu0 0.0
  %7956 = vmatprep.subr.mxu0 0.0
  %7957 = vmatpush1.msra.mxu0 0.0
  %7958 = vmatprep.subr.mxu0 0.0
  %7959 = vmatpush1.msra.mxu0 0.0
  %7960 = vmatprep.subr.mxu0 0.0
  %7961 = vmatpush1.msra.mxu0 0.0
  %7962 = vmatprep.subr.mxu0 0.0
  %7963 = vmatpush1.msra.mxu0 0.0
  %7964 = vmatprep.subr.mxu0 0.0
  %7965 = vmatpush1.msra.mxu0 0.0
  %7966 = vmatprep.subr.mxu0 0.0
  %7967 = vmatpush1.msra.mxu0 0.0
  %7968 = vmatprep.subr.mxu0 0.0
  %7969 = vmatpush1.msra.mxu0 0.0
  %7970 = vmatprep.subr.mxu0 0.0
  %7971 = vmatpush1.msra.mxu0 0.0
  %7972 = vmatprep.subr.mxu0 0.0
  %7973 = vmatpush1.msra.mxu0 0.0
  %7974 = vmatprep.subr.mxu0 0.0
  %7975 = vmatpush1.msra.mxu0 0.0
  %7976 = vmatprep.subr.mxu0 0.0
  %7977 = vmatpush1.msra.mxu0 0.0
  %7978 = vmatprep.subr.mxu0 0.0
  %7979 = vmatpush1.msra.mxu0 0.0
  %7980 = vmatprep.subr.mxu0 0.0
  %7981 = vmatpush1.msra.mxu0 0.0
  %7982 = vmatprep.mubr.f32.mxu0 0.0
  %7983 = vmatmul.mubr.f32.gmra.mrb[0].mxu0 %v7727
  %v7984 = vpop.f32.mrb[0].mxu0
  %v7985 = vadd.f32 0.0, %v7984
  %v7986 = vpop.f32.mrb[0].mxu0
  %7987 = vmatprep.mubr.f32.mxu0 0.0
  %7988 = vmatmul.mubr.f32.gmra.mrb[0].mxu0 %v7730
  %v7989 = vpop.f32.mrb[0].mxu0
  %v7990 = vadd.f32 0.0, %v7989
  %v7991 = vpop.f32.mrb[0].mxu0
  %7992 = vmatprep.mubr.f32.mxu0 0.0
  %7993 = vmatmul.mubr.f32.gmra.mrb[0].mxu0 %v7733
  %v7994 = vpop.f32.mrb[0].mxu0
  %v7995 = vadd.f32 0.0, %v7994
  %v7996 = vpop.f32.mrb[0].mxu0
  %7997 = vmatprep.mubr.f32.mxu0 0.0
  %7998 = vmatmul.mubr.f32.gmra.mrb[0].mxu0 %v7736
  %v7999 = vpop.f32.mrb[0].mxu0
  %v8000 = vadd.f32 0.0, %v7999
  %v8001 = vpop.f32.mrb[0].mxu0
  %8002 = vmatprep.mubr.f32.mxu0 0.0
  %8003 = vmatmul.mubr.f32.gmra.mrb[0].mxu0 %v7739
  %v8004 = vpop.f32.mrb[0].mxu0
  %v8005 = vadd.f32 0.0, %v8004
  %v8006 = vpop.f32.mrb[0].mxu0
  %8007 = vmatprep.mubr.f32.mxu0 0.0
  %8008 = vmatmul.mubr.f32.gmra.mrb[0].mxu0 %v7742
  %v8009 = vpop.f32.mrb[0].mxu0
  %v8010 = vadd.f32 0.0, %v8009
  %v8011 = vpop.f32.mrb[0].mxu0
  %8012 = vmatprep.mubr.f32.mxu0 0.0
  %8013 = vmatmul.mubr.f32.gmra.mrb[0].mxu0 %v7745
  %v8014 = vpop.f32.mrb[0].mxu0
  %v8015 = vadd.f32 0.0, %v8014
  %v8016 = vpop.f32.mrb[0].mxu0
  %8017 = vmatprep.mubr.f32.mxu0 0.0
  %8018 = vmatmul.mubr.f32.gmra.mrb[0].mxu0 %v7748
  %v8019 = vpop.f32.mrb[0].mxu0
  %v8020 = vadd.f32 0.0, %v8019
  %v8021 = vpop.f32.mrb[0].mxu0
  %8022 = vmatprep.mubr.f32.mxu0 0.0
  %8023 = vmatmul.mubr.f32.gmra.mrb[0].mxu0 %v7751
  %v8024 = vpop.f32.mrb[0].mxu0
  %v8025 = vadd.f32 0.0, %v8024
  %v8026 = vpop.f32.mrb[0].mxu0
  %8027 = vmatprep.mubr.f32.mxu0 0.0
  %8028 = vmatmul.mubr.f32.gmra.mrb[0].mxu0 %v7754
  %v8029 = vpop.f32.mrb[0].mxu0
  %v8030 = vadd.f32 0.0, %v8029
  %v8031 = vpop.f32.mrb[0].mxu0
  %8032 = vmatprep.mubr.f32.mxu0 0.0
  %8033 = vmatmul.mubr.f32.gmra.mrb[0].mxu0 %v7757
  %v8034 = vpop.f32.mrb[0].mxu0
  %v8035 = vadd.f32 0.0, %v8034
  %v8036 = vpop.f32.mrb[0].mxu0
  %8037 = vmatprep.mubr.f32.mxu0 0.0
  %8038 = vmatmul.mubr.f32.gmra.mrb[0].mxu0 %v7760
  %v8039 = vpop.f32.mrb[0].mxu0
  %v8040 = vadd.f32 0.0, %v8039
  %v8041 = vpop.f32.mrb[0].mxu0
  %8042 = vmatprep.mubr.f32.mxu0 0.0
  %8043 = vmatmul.mubr.f32.gmra.mrb[0].mxu0 %v7763
  %v8044 = vpop.f32.mrb[0].mxu0
  %v8045 = vadd.f32 0.0, %v8044
  %v8046 = vpop.f32.mrb[0].mxu0
  %8047 = vmatprep.mubr.f32.mxu0 0.0
  %8048 = vmatmul.mubr.f32.gmra.mrb[0].mxu0 %v7766
  %v8049 = vpop.f32.mrb[0].mxu0
  %v8050 = vadd.f32 0.0, %v8049
  %v8051 = vpop.f32.mrb[0].mxu0
  %8052 = vmatprep.mubr.f32.mxu0 0.0
  %8053 = vmatmul.mubr.f32.gmra.mrb[0].mxu0 %v7769
  %v8054 = vpop.f32.mrb[0].mxu0
  %v8055 = vadd.f32 0.0, %v8054
  %v8056 = vpop.f32.mrb[0].mxu0
  %8057 = vmatprep.mubr.f32.mxu0 0.0
  %8058 = vmatmul.mubr.f32.gmra.mrb[0].mxu0 %v7772
  %v8059 = vpop.f32.mrb[0].mxu0
  %v8060 = vadd.f32 0.0, %v8059
  %v8061 = vpop.f32.mrb[0].mxu0
  %8062 = vmatprep.mubr.f32.mxu0 0.0
  %8063 = vmatmul.mubr.f32.gmra.mrb[0].mxu0 %v7775
  %v8064 = vpop.f32.mrb[0].mxu0
  %v8065 = vadd.f32 0.0, %v8064
  %v8066 = vpop.f32.mrb[0].mxu0
  %8067 = vmatprep.mubr.f32.mxu0 0.0
  %8068 = vmatmul.mubr.f32.gmra.mrb[0].mxu0 %v7778
  %v8069 = vpop.f32.mrb[0].mxu0
  %v8070 = vadd.f32 0.0, %v8069
  %v8071 = vpop.f32.mrb[0].mxu0
  %8072 = vmatprep.mubr.f32.mxu0 0.0
  %8073 = vmatmul.mubr.f32.gmra.mrb[0].mxu0 %v7781
  %v8074 = vpop.f32.mrb[0].mxu0
  %v8075 = vadd.f32 0.0, %v8074
  %v8076 = vpop.f32.mrb[0].mxu0
  %8077 = vmatprep.mubr.f32.mxu0 0.0
  %8078 = vmatmul.mubr.f32.gmra.mrb[0].mxu0 %v7784
  %v8079 = vpop.f32.mrb[0].mxu0
  %v8080 = vadd.f32 0.0, %v8079
  %v8081 = vpop.f32.mrb[0].mxu0
  %8082 = vmatprep.mubr.f32.mxu0 0.0
  %8083 = vmatmul.mubr.f32.gmra.mrb[0].mxu0 %v7787
  %v8084 = vpop.f32.mrb[0].mxu0
  %v8085 = vadd.f32 0.0, %v8084
  %v8086 = vpop.f32.mrb[0].mxu0
  %8087 = vmatprep.mubr.f32.mxu0 0.0
  %8088 = vmatmul.mubr.f32.gmra.mrb[0].mxu0 %v7790
  %v8089 = vpop.f32.mrb[0].mxu0
  %v8090 = vadd.f32 0.0, %v8089
  %v8091 = vpop.f32.mrb[0].mxu0
  %8092 = vmatprep.mubr.f32.mxu0 0.0
  %8093 = vmatmul.mubr.f32.gmra.mrb[0].mxu0 %v7793
  %v8094 = vpop.f32.mrb[0].mxu0
  %v8095 = vadd.f32 0.0, %v8094
  %v8096 = vpop.f32.mrb[0].mxu0
  %8097 = vmatprep.mubr.f32.mxu0 0.0
  %8098 = vmatmul.mubr.f32.gmra.mrb[0].mxu0 %v7796
  %v8099 = vpop.f32.mrb[0].mxu0
  %v8100 = vadd.f32 0.0, %v8099
  %v8101 = vpop.f32.mrb[0].mxu0
  %8102 = vmatprep.mubr.f32.mxu0 0.0
  %8103 = vmatmul.mubr.f32.gmra.mrb[0].mxu0 %v7799
  %v8104 = vpop.f32.mrb[0].mxu0
  %v8105 = vadd.f32 0.0, %v8104
  %v8106 = vpop.f32.mrb[0].mxu0
  %8107 = vmatprep.mubr.f32.mxu0 0.0
  %8108 = vmatmul.mubr.f32.gmra.mrb[0].mxu0 %v7802
  %v8109 = vpop.f32.mrb[0].mxu0
  %v8110 = vadd.f32 0.0, %v8109
  %v8111 = vpop.f32.mrb[0].mxu0
  %8112 = vmatprep.mubr.f32.mxu0 0.0
  %8113 = vmatmul.mubr.f32.gmra.mrb[0].mxu0 %v7805
  %v8114 = vpop.f32.mrb[0].mxu0
  %v8115 = vadd.f32 0.0, %v8114
  %v8116 = vpop.f32.mrb[0].mxu0
  %8117 = vmatprep.mubr.f32.mxu0 0.0
  %8118 = vmatmul.mubr.f32.gmra.mrb[0].mxu0 %v7808
  %v8119 = vpop.f32.mrb[0].mxu0
  %v8120 = vadd.f32 0.0, %v8119
  %v8121 = vpop.f32.mrb[0].mxu0
  %8122 = vmatprep.mubr.f32.mxu0 0.0
  %8123 = vmatmul.mubr.f32.gmra.mrb[0].mxu0 %v7811
  %v8124 = vpop.f32.mrb[0].mxu0
  %v8125 = vadd.f32 0.0, %v8124
  %v8126 = vpop.f32.mrb[0].mxu0
  %8127 = vmatprep.mubr.f32.mxu0 0.0
  %8128 = vmatmul.mubr.f32.gmra.mrb[0].mxu0 %v7814
  %v8129 = vpop.f32.mrb[0].mxu0
  %v8130 = vadd.f32 0.0, %v8129
  %v8131 = vpop.f32.mrb[0].mxu0
  %8132 = vmatprep.mubr.f32.mxu0 0.0
  %8133 = vmatmul.mubr.f32.gmra.mrb[0].mxu0 %v7817
  %v8134 = vpop.f32.mrb[0].mxu0
  %v8135 = vadd.f32 0.0, %v8134
  %v8136 = vpop.f32.mrb[0].mxu0
  %8137 = vmatprep.mubr.f32.mxu0 0.0
  %8138 = vmatmul.mubr.f32.gmra.mrb[0].mxu0 %v7820
  %v8139 = vpop.f32.mrb[0].mxu0
  %v8140 = vadd.f32 0.0, %v8139
  %v8141 = vpop.f32.mrb[0].mxu0
  %8142 = vmatprep.mubr.f32.mxu0 0.0
  %8143 = vmatmul.mubr.f32.gmra.mrb[0].mxu0 %v7823
  %v8144 = vpop.f32.mrb[0].mxu0
  %v8145 = vadd.f32 0.0, %v8144
  %v8146 = vpop.f32.mrb[0].mxu0
  %8147 = vmatprep.mubr.f32.mxu0 0.0
  %8148 = vmatmul.mubr.f32.gmra.mrb[0].mxu0 %v7826
  %v8149 = vpop.f32.mrb[0].mxu0
  %v8150 = vadd.f32 0.0, %v8149
  %v8151 = vpop.f32.mrb[0].mxu0
  %8152 = vmatprep.mubr.f32.mxu0 0.0
  %8153 = vmatmul.mubr.f32.gmra.mrb[0].mxu0 %v7829
  %v8154 = vpop.f32.mrb[0].mxu0
  %v8155 = vadd.f32 0.0, %v8154
  %v8156 = vpop.f32.mrb[0].mxu0
  %8157 = vmatprep.mubr.f32.mxu0 0.0
  %8158 = vmatmul.mubr.f32.gmra.mrb[0].mxu0 %v7832
  %v8159 = vpop.f32.mrb[0].mxu0
  %v8160 = vadd.f32 0.0, %v8159
  %v8161 = vpop.f32.mrb[0].mxu0
  %8162 = vmatprep.mubr.f32.mxu0 0.0
  %8163 = vmatmul.mubr.f32.gmra.mrb[0].mxu0 %v7835
  %v8164 = vpop.f32.mrb[0].mxu0
  %v8165 = vadd.f32 0.0, %v8164
  %v8166 = vpop.f32.mrb[0].mxu0
  %8167 = vmatprep.mubr.f32.mxu0 0.0
  %8168 = vmatmul.mubr.f32.gmra.mrb[0].mxu0 %v7838
  %v8169 = vpop.f32.mrb[0].mxu0
  %v8170 = vadd.f32 0.0, %v8169
  %v8171 = vpop.f32.mrb[0].mxu0
  %8172 = vmatprep.mubr.f32.mxu0 0.0
  %8173 = vmatmul.mubr.f32.gmra.mrb[0].mxu0 %v7841
  %v8174 = vpop.f32.mrb[0].mxu0
  %v8175 = vadd.f32 0.0, %v8174
  %v8176 = vpop.f32.mrb[0].mxu0
  %8177 = vmatprep.mubr.f32.mxu0 0.0
  %8178 = vmatmul.mubr.f32.gmra.mrb[0].mxu0 %v7844
  %v8179 = vpop.f32.mrb[0].mxu0
  %v8180 = vadd.f32 0.0, %v8179
  %v8181 = vpop.f32.mrb[0].mxu0
  %8182 = vmatprep.mubr.f32.mxu0 0.0
  %8183 = vmatmul.mubr.f32.gmra.mrb[0].mxu0 %v7847
  %v8184 = vpop.f32.mrb[0].mxu0
  %v8185 = vadd.f32 0.0, %v8184
  %v8186 = vpop.f32.mrb[0].mxu0
  %8187 = vmatprep.mubr.f32.mxu0 0.0
  %8188 = vmatmul.mubr.f32.gmra.mrb[0].mxu0 %v7850
  %v8189 = vpop.f32.mrb[0].mxu0
  %v8190 = vadd.f32 0.0, %v8189
  %v8191 = vpop.f32.mrb[0].mxu0
  %8192 = vmatprep.mubr.f32.mxu0 0.0
  %8193 = vmatmul.mubr.f32.gmra.mrb[0].mxu0 %v7853
  %v8194 = vpop.f32.mrb[0].mxu0
  %v8195 = vadd.f32 0.0, %v8194
  %v8196 = vpop.f32.mrb[0].mxu0
  %8197 = vmatprep.mubr.f32.mxu0 0.0
  %8198 = vmatmul.mubr.f32.gmra.mrb[0].mxu0 %v7856
  %v8199 = vpop.f32.mrb[0].mxu0
  %v8200 = vadd.f32 0.0, %v8199
  %v8201 = vpop.f32.mrb[0].mxu0
  %8202 = vmatprep.mubr.f32.mxu0 0.0
  %8203 = vmatmul.mubr.f32.gmra.mrb[0].mxu0 %v7859
  %v8204 = vpop.f32.mrb[0].mxu0
  %v8205 = vadd.f32 0.0, %v8204
  %v8206 = vpop.f32.mrb[0].mxu0
  %8207 = vmatprep.mubr.f32.mxu0 0.0
  %8208 = vmatmul.mubr.f32.gmra.mrb[0].mxu0 %v7862
  %v8209 = vpop.f32.mrb[0].mxu0
  %v8210 = vadd.f32 0.0, %v8209
  %v8211 = vpop.f32.mrb[0].mxu0
  %8212 = vmatprep.mubr.f32.mxu0 0.0
  %8213 = vmatmul.mubr.f32.gmra.mrb[0].mxu0 %v7865
  %v8214 = vpop.f32.mrb[0].mxu0
  %v8215 = vadd.f32 0.0, %v8214
  %v8216 = vpop.f32.mrb[0].mxu0
  %8217 = vmatprep.mubr.f32.mxu0 0.0
  %8218 = vmatmul.mubr.f32.gmra.mrb[0].mxu0 %v7868
  %v8219 = vpop.f32.mrb[0].mxu0
  %v8220 = vadd.f32 0.0, %v8219
  %v8221 = vpop.f32.mrb[0].mxu0
  %8222 = vmatprep.mubr.f32.mxu0 0.0
  %8223 = vmatmul.mubr.f32.gmra.mrb[0].mxu0 %v7871
  %v8224 = vpop.f32.mrb[0].mxu0
  %v8225 = vadd.f32 0.0, %v8224
  %v8226 = vpop.f32.mrb[0].mxu0
  %8227 = vmatprep.mubr.f32.mxu0 0.0
  %8228 = vmatmul.mubr.f32.gmra.mrb[0].mxu0 %v7874
  %v8229 = vpop.f32.mrb[0].mxu0
  %v8230 = vadd.f32 0.0, %v8229
  %v8231 = vpop.f32.mrb[0].mxu0
  %8232 = vmatprep.mubr.f32.mxu0 0.0
  %8233 = vmatmul.mubr.f32.gmra.mrb[0].mxu0 %v7877
  %v8234 = vpop.f32.mrb[0].mxu0
  %v8235 = vadd.f32 0.0, %v8234
  %v8236 = vpop.f32.mrb[0].mxu0
  %8237 = vmatprep.mubr.f32.mxu0 0.0
  %8238 = vmatmul.mubr.f32.gmra.mrb[0].mxu0 %v7880
  %v8239 = vpop.f32.mrb[0].mxu0
  %v8240 = vadd.f32 0.0, %v8239
  %v8241 = vpop.f32.mrb[0].mxu0
  %8242 = vmatprep.mubr.f32.mxu0 0.0
  %8243 = vmatmul.mubr.f32.gmra.mrb[0].mxu0 %v7883
  %v8244 = vpop.f32.mrb[0].mxu0
  %v8245 = vadd.f32 0.0, %v8244
  %v8246 = vpop.f32.mrb[0].mxu0
  %8247 = vmatprep.mubr.f32.mxu0 0.0
  %8248 = vmatmul.mubr.f32.gmra.mrb[0].mxu0 %v7886
  %v8249 = vpop.f32.mrb[0].mxu0
  %v8250 = vadd.f32 0.0, %v8249
  %v8251 = vpop.f32.mrb[0].mxu0
  %8252 = vmatprep.mubr.f32.mxu0 0.0
  %8253 = vmatmul.mubr.f32.gmra.mrb[0].mxu0 %v7889
  %v8254 = vpop.f32.mrb[0].mxu0
  %v8255 = vadd.f32 0.0, %v8254
  %v8256 = vpop.f32.mrb[0].mxu0
  %8257 = vmatprep.mubr.f32.mxu0 0.0
  %8258 = vmatmul.mubr.f32.gmra.mrb[0].mxu0 %v7892
  %v8259 = vpop.f32.mrb[0].mxu0
  %v8260 = vadd.f32 0.0, %v8259
  %v8261 = vpop.f32.mrb[0].mxu0
  %8262 = vmatprep.mubr.f32.mxu0 0.0
  %8263 = vmatmul.mubr.f32.gmra.mrb[0].mxu0 %v7895
  %v8264 = vpop.f32.mrb[0].mxu0
  %v8265 = vadd.f32 0.0, %v8264
  %v8266 = vpop.f32.mrb[0].mxu0
  %8267 = vmatprep.mubr.f32.mxu0 0.0
  %8268 = vmatmul.mubr.f32.gmra.mrb[0].mxu0 %v7898
  %v8269 = vpop.f32.mrb[0].mxu0
  %v8270 = vadd.f32 0.0, %v8269
  %v8271 = vpop.f32.mrb[0].mxu0
  %8272 = vmatprep.mubr.f32.mxu0 0.0
  %8273 = vmatmul.mubr.f32.gmra.mrb[0].mxu0 %v7901
  %v8274 = vpop.f32.mrb[0].mxu0
  %v8275 = vadd.f32 0.0, %v8274
  %v8276 = vpop.f32.mrb[0].mxu0
  %8277 = vmatprep.mubr.f32.mxu0 0.0
  %8278 = vmatmul.mubr.f32.gmra.mrb[0].mxu0 %v7904
  %v8279 = vpop.f32.mrb[0].mxu0
  %v8280 = vadd.f32 0.0, %v8279
  %v8281 = vpop.f32.mrb[0].mxu0
  %8282 = vmatprep.mubr.f32.mxu0 0.0
  %8283 = vmatmul.mubr.f32.gmra.mrb[0].mxu0 %v7907
  %v8284 = vpop.f32.mrb[0].mxu0
  %v8285 = vadd.f32 0.0, %v8284
  %v8286 = vpop.f32.mrb[0].mxu0
  %8287 = vmatprep.mubr.f32.mxu0 0.0
  %8288 = vmatmul.mubr.f32.gmra.mrb[0].mxu0 %v7910
  %v8289 = vpop.f32.mrb[0].mxu0
  %v8290 = vadd.f32 0.0, %v8289
  %v8291 = vpop.f32.mrb[0].mxu0
  %8292 = vmatprep.mubr.f32.mxu0 0.0
  %8293 = vmatmul.mubr.f32.gmra.mrb[0].mxu0 %v7913
  %v8294 = vpop.f32.mrb[0].mxu0
  %v8295 = vadd.f32 0.0, %v8294
  %v8296 = vpop.f32.mrb[0].mxu0
  %8297 = vmatprep.mubr.f32.mxu0 0.0
  %8298 = vmatmul.mubr.f32.gmra.mrb[0].mxu0 %v7916
  %v8299 = vpop.f32.mrb[0].mxu0
  %v8300 = vadd.f32 0.0, %v8299
  %v8301 = vpop.f32.mrb[0].mxu0
  %8302 = vdwg.mxu0
  %v8303 = vadd.f32 %v7596, %v7985
  %v8304 = vadd.f32 %v7597, %v7990
  %v8305 = vadd.f32 %v7598, %v7995
  %v8306 = vadd.f32 %v7599, %v8000
  %v8307 = vadd.f32 %v7600, %v8005
  %v8308 = vadd.f32 %v7601, %v8010
  %v8309 = vadd.f32 %v7602, %v8015
  %v8310 = vadd.f32 %v7603, %v8020
  %v8311 = vadd.f32 %v7604, %v8025
  %v8312 = vadd.f32 %v7605, %v8030
  %v8313 = vadd.f32 %v7606, %v8035
  %v8314 = vadd.f32 %v7607, %v8040
  %v8315 = vadd.f32 %v7608, %v8045
  %v8316 = vadd.f32 %v7609, %v8050
  %v8317 = vadd.f32 %v7610, %v8055
  %v8318 = vadd.f32 %v7611, %v8060
  %v8319 = vadd.f32 %v7612, %v8065
  %v8320 = vadd.f32 %v7613, %v8070
  %v8321 = vadd.f32 %v7614, %v8075
  %v8322 = vadd.f32 %v7615, %v8080
  %v8323 = vadd.f32 %v7616, %v8085
  %v8324 = vadd.f32 %v7617, %v8090
  %v8325 = vadd.f32 %v7618, %v8095
  %v8326 = vadd.f32 %v7619, %v8100
  %v8327 = vadd.f32 %v7620, %v8105
  %v8328 = vadd.f32 %v7621, %v8110
  %v8329 = vadd.f32 %v7622, %v8115
  %v8330 = vadd.f32 %v7623, %v8120
  %v8331 = vadd.f32 %v7624, %v8125
  %v8332 = vadd.f32 %v7625, %v8130
  %v8333 = vadd.f32 %v7626, %v8135
  %v8334 = vadd.f32 %v7627, %v8140
  %v8335 = vadd.f32 %v7628, %v8145
  %v8336 = vadd.f32 %v7629, %v8150
  %v8337 = vadd.f32 %v7630, %v8155
  %v8338 = vadd.f32 %v7631, %v8160
  %v8339 = vadd.f32 %v7632, %v8165
  %v8340 = vadd.f32 %v7633, %v8170
  %v8341 = vadd.f32 %v7634, %v8175
  %v8342 = vadd.f32 %v7635, %v8180
  %v8343 = vadd.f32 %v7636, %v8185
  %v8344 = vadd.f32 %v7637, %v8190
  %v8345 = vadd.f32 %v7638, %v8195
  %v8346 = vadd.f32 %v7639, %v8200
  %v8347 = vadd.f32 %v7640, %v8205
  %v8348 = vadd.f32 %v7641, %v8210
  %v8349 = vadd.f32 %v7642, %v8215
  %v8350 = vadd.f32 %v7643, %v8220
  %v8351 = vadd.f32 %v7644, %v8225
  %v8352 = vadd.f32 %v7645, %v8230
  %v8353 = vadd.f32 %v7646, %v8235
  %v8354 = vadd.f32 %v7647, %v8240
  %v8355 = vadd.f32 %v7648, %v8245
  %v8356 = vadd.f32 %v7649, %v8250
  %v8357 = vadd.f32 %v7650, %v8255
  %v8358 = vadd.f32 %v7651, %v8260
  %v8359 = vadd.f32 %v7652, %v8265
  %v8360 = vadd.f32 %v7653, %v8270
  %v8361 = vadd.f32 %v7654, %v8275
  %v8362 = vadd.f32 %v7655, %v8280
  %v8363 = vadd.f32 %v7656, %v8285
  %v8364 = vadd.f32 %v7657, %v8290
  %v8365 = vadd.f32 %v7658, %v8295
  %v8366 = vadd.f32 %v7659, %v8300
  %v8367 = vld [vmem:[%s5] sm:$0x1]
  %v8368 = vld [vmem:[%s6] sm:$0x1]
  %v8369 = vsel %vm1354, %v8303, 0.0
  %v8370 = vsel %vm1354, %v8304, 0.0
  %v8371 = vadd.f32 %v8369, %v8370
  %v8372 = vsel %vm1354, %v8305, 0.0
  %v8373 = vadd.f32 %v8371, %v8372
  %v8374 = vsel %vm1354, %v8306, 0.0
  %v8375 = vadd.f32 %v8373, %v8374
  %v8376 = vsel %vm1354, %v8307, 0.0
  %v8377 = vadd.f32 %v8375, %v8376
  %v8378 = vsel %vm1354, %v8308, 0.0
  %v8379 = vadd.f32 %v8377, %v8378
  %v8380 = vsel %vm1354, %v8309, 0.0
  %v8381 = vadd.f32 %v8379, %v8380
  %v8382 = vsel %vm1354, %v8310, 0.0
  %v8383 = vadd.f32 %v8381, %v8382
  %v8384 = vsel %vm1354, %v8311, 0.0
  %v8385 = vadd.f32 %v8383, %v8384
  %v8386 = vsel %vm1354, %v8312, 0.0
  %v8387 = vadd.f32 %v8385, %v8386
  %v8388 = vsel %vm1354, %v8313, 0.0
  %v8389 = vadd.f32 %v8387, %v8388
  %v8390 = vsel %vm1354, %v8314, 0.0
  %v8391 = vadd.f32 %v8389, %v8390
  %v8392 = vsel %vm1354, %v8315, 0.0
  %v8393 = vadd.f32 %v8391, %v8392
  %v8394 = vsel %vm1354, %v8316, 0.0
  %v8395 = vadd.f32 %v8393, %v8394
  %v8396 = vsel %vm1354, %v8317, 0.0
  %v8397 = vadd.f32 %v8395, %v8396
  %v8398 = vsel %vm1354, %v8318, 0.0
  %v8399 = vadd.f32 %v8397, %v8398
  %v8400 = vsel %vm1354, %v8319, 0.0
  %v8401 = vadd.f32 %v8399, %v8400
  %v8402 = vsel %vm1354, %v8320, 0.0
  %v8403 = vadd.f32 %v8401, %v8402
  %v8404 = vsel %vm1354, %v8321, 0.0
  %v8405 = vadd.f32 %v8403, %v8404
  %v8406 = vsel %vm1354, %v8322, 0.0
  %v8407 = vadd.f32 %v8405, %v8406
  %v8408 = vsel %vm1354, %v8323, 0.0
  %v8409 = vadd.f32 %v8407, %v8408
  %v8410 = vsel %vm1354, %v8324, 0.0
  %v8411 = vadd.f32 %v8409, %v8410
  %v8412 = vsel %vm1354, %v8325, 0.0
  %v8413 = vadd.f32 %v8411, %v8412
  %v8414 = vsel %vm1354, %v8326, 0.0
  %v8415 = vadd.f32 %v8413, %v8414
  %v8416 = vsel %vm1354, %v8327, 0.0
  %v8417 = vadd.f32 %v8415, %v8416
  %v8418 = vsel %vm1354, %v8328, 0.0
  %v8419 = vadd.f32 %v8417, %v8418
  %v8420 = vsel %vm1354, %v8329, 0.0
  %v8421 = vadd.f32 %v8419, %v8420
  %v8422 = vsel %vm1354, %v8330, 0.0
  %v8423 = vadd.f32 %v8421, %v8422
  %v8424 = vsel %vm1354, %v8331, 0.0
  %v8425 = vadd.f32 %v8423, %v8424
  %v8426 = vsel %vm1354, %v8332, 0.0
  %v8427 = vadd.f32 %v8425, %v8426
  %v8428 = vsel %vm1354, %v8333, 0.0
  %v8429 = vadd.f32 %v8427, %v8428
  %v8430 = vsel %vm1354, %v8334, 0.0
  %v8431 = vadd.f32 %v8429, %v8430
  %v8432 = vsel %vm1354, %v8335, 0.0
  %v8433 = vadd.f32 %v8431, %v8432
  %v8434 = vsel %vm1354, %v8336, 0.0
  %v8435 = vadd.f32 %v8433, %v8434
  %v8436 = vsel %vm1354, %v8337, 0.0
  %v8437 = vadd.f32 %v8435, %v8436
  %v8438 = vsel %vm1354, %v8338, 0.0
  %v8439 = vadd.f32 %v8437, %v8438
  %v8440 = vsel %vm1354, %v8339, 0.0
  %v8441 = vadd.f32 %v8439, %v8440
  %v8442 = vsel %vm1354, %v8340, 0.0
  %v8443 = vadd.f32 %v8441, %v8442
  %v8444 = vsel %vm1354, %v8341, 0.0
  %v8445 = vadd.f32 %v8443, %v8444
  %v8446 = vsel %vm1354, %v8342, 0.0
  %v8447 = vadd.f32 %v8445, %v8446
  %v8448 = vsel %vm1354, %v8343, 0.0
  %v8449 = vadd.f32 %v8447, %v8448
  %v8450 = vsel %vm1354, %v8344, 0.0
  %v8451 = vadd.f32 %v8449, %v8450
  %v8452 = vsel %vm1354, %v8345, 0.0
  %v8453 = vadd.f32 %v8451, %v8452
  %v8454 = vsel %vm1354, %v8346, 0.0
  %v8455 = vadd.f32 %v8453, %v8454
  %v8456 = vsel %vm1354, %v8347, 0.0
  %v8457 = vadd.f32 %v8455, %v8456
  %v8458 = vsel %vm1354, %v8348, 0.0
  %v8459 = vadd.f32 %v8457, %v8458
  %v8460 = vsel %vm1354, %v8349, 0.0
  %v8461 = vadd.f32 %v8459, %v8460
  %v8462 = vsel %vm1354, %v8350, 0.0
  %v8463 = vadd.f32 %v8461, %v8462
  %v8464 = vsel %vm1354, %v8351, 0.0
  %v8465 = vadd.f32 %v8463, %v8464
  %v8466 = vsel %vm1354, %v8352, 0.0
  %v8467 = vadd.f32 %v8465, %v8466
  %v8468 = vsel %vm1354, %v8353, 0.0
  %v8469 = vadd.f32 %v8467, %v8468
  %v8470 = vsel %vm1354, %v8354, 0.0
  %v8471 = vadd.f32 %v8469, %v8470
  %v8472 = vsel %vm1354, %v8355, 0.0
  %v8473 = vadd.f32 %v8471, %v8472
  %v8474 = vsel %vm1354, %v8356, 0.0
  %v8475 = vadd.f32 %v8473, %v8474
  %v8476 = vsel %vm1354, %v8357, 0.0
  %v8477 = vadd.f32 %v8475, %v8476
  %v8478 = vsel %vm1354, %v8358, 0.0
  %v8479 = vadd.f32 %v8477, %v8478
  %v8480 = vsel %vm1354, %v8359, 0.0
  %v8481 = vadd.f32 %v8479, %v8480
  %v8482 = vsel %vm1354, %v8360, 0.0
  %v8483 = vadd.f32 %v8481, %v8482
  %v8484 = vsel %vm1354, %v8361, 0.0
  %v8485 = vadd.f32 %v8483, %v8484
  %v8486 = vsel %vm1354, %v8362, 0.0
  %v8487 = vadd.f32 %v8485, %v8486
  %v8488 = vsel %vm1354, %v8363, 0.0
  %v8489 = vadd.f32 %v8487, %v8488
  %v8490 = vsel %vm1354, %v8364, 0.0
  %v8491 = vadd.f32 %v8489, %v8490
  %v8492 = vsel %vm1354, %v8365, 0.0
  %v8493 = vadd.f32 %v8491, %v8492
  %v8494 = vsel %vm1354, %v8366, 0.0
  %v8495 = vadd.f32 %v8493, %v8494
  %v8496 = vrot.slane %v8495, 4
  %v8497 = vadd.f32 %v8495, %v8496
  %v8498 = vrot.slane %v8497, 2
  %v8499 = vadd.f32 %v8497, %v8498
  %v8500 = vrot.slane %v8499, 1
  %v8501 = vadd.f32 %v8499, %v8500
  %v8502 = vmul.f32 %v8501, 0.001953125
  %v8503 = vsub.f32 %v8303, %v8502
  %v8504 = vsub.f32 %v8304, %v8502
  %v8505 = vsub.f32 %v8305, %v8502
  %v8506 = vsub.f32 %v8306, %v8502
  %v8507 = vsub.f32 %v8307, %v8502
  %v8508 = vsub.f32 %v8308, %v8502
  %v8509 = vsub.f32 %v8309, %v8502
  %v8510 = vsub.f32 %v8310, %v8502
  %v8511 = vsub.f32 %v8311, %v8502
  %v8512 = vsub.f32 %v8312, %v8502
  %v8513 = vsub.f32 %v8313, %v8502
  %v8514 = vsub.f32 %v8314, %v8502
  %v8515 = vsub.f32 %v8315, %v8502
  %v8516 = vsub.f32 %v8316, %v8502
  %v8517 = vsub.f32 %v8317, %v8502
  %v8518 = vsub.f32 %v8318, %v8502
  %v8519 = vsub.f32 %v8319, %v8502
  %v8520 = vsub.f32 %v8320, %v8502
  %v8521 = vsub.f32 %v8321, %v8502
  %v8522 = vsub.f32 %v8322, %v8502
  %v8523 = vsub.f32 %v8323, %v8502
  %v8524 = vsub.f32 %v8324, %v8502
  %v8525 = vsub.f32 %v8325, %v8502
  %v8526 = vsub.f32 %v8326, %v8502
  %v8527 = vsub.f32 %v8327, %v8502
  %v8528 = vsub.f32 %v8328, %v8502
  %v8529 = vsub.f32 %v8329, %v8502
  %v8530 = vsub.f32 %v8330, %v8502
  %v8531 = vsub.f32 %v8331, %v8502
  %v8532 = vsub.f32 %v8332, %v8502
  %v8533 = vsub.f32 %v8333, %v8502
  %v8534 = vsub.f32 %v8334, %v8502
  %v8535 = vsub.f32 %v8335, %v8502
  %v8536 = vsub.f32 %v8336, %v8502
  %v8537 = vsub.f32 %v8337, %v8502
  %v8538 = vsub.f32 %v8338, %v8502
  %v8539 = vsub.f32 %v8339, %v8502
  %v8540 = vsub.f32 %v8340, %v8502
  %v8541 = vsub.f32 %v8341, %v8502
  %v8542 = vsub.f32 %v8342, %v8502
  %v8543 = vsub.f32 %v8343, %v8502
  %v8544 = vsub.f32 %v8344, %v8502
  %v8545 = vsub.f32 %v8345, %v8502
  %v8546 = vsub.f32 %v8346, %v8502
  %v8547 = vsub.f32 %v8347, %v8502
  %v8548 = vsub.f32 %v8348, %v8502
  %v8549 = vsub.f32 %v8349, %v8502
  %v8550 = vsub.f32 %v8350, %v8502
  %v8551 = vsub.f32 %v8351, %v8502
  %v8552 = vsub.f32 %v8352, %v8502
  %v8553 = vsub.f32 %v8353, %v8502
  %v8554 = vsub.f32 %v8354, %v8502
  %v8555 = vsub.f32 %v8355, %v8502
  %v8556 = vsub.f32 %v8356, %v8502
  %v8557 = vsub.f32 %v8357, %v8502
  %v8558 = vsub.f32 %v8358, %v8502
  %v8559 = vsub.f32 %v8359, %v8502
  %v8560 = vsub.f32 %v8360, %v8502
  %v8561 = vsub.f32 %v8361, %v8502
  %v8562 = vsub.f32 %v8362, %v8502
  %v8563 = vsub.f32 %v8363, %v8502
  %v8564 = vsub.f32 %v8364, %v8502
  %v8565 = vsub.f32 %v8365, %v8502
  %v8566 = vsub.f32 %v8366, %v8502
  %v8567 = vmul.f32 %v8503, %v8503
  %v8568 = vmul.f32 %v8504, %v8504
  %v8569 = vmul.f32 %v8505, %v8505
  %v8570 = vmul.f32 %v8506, %v8506
  %v8571 = vmul.f32 %v8507, %v8507
  %v8572 = vmul.f32 %v8508, %v8508
  %v8573 = vmul.f32 %v8509, %v8509
  %v8574 = vmul.f32 %v8510, %v8510
  %v8575 = vmul.f32 %v8511, %v8511
  %v8576 = vmul.f32 %v8512, %v8512
  %v8577 = vmul.f32 %v8513, %v8513
  %v8578 = vmul.f32 %v8514, %v8514
  %v8579 = vmul.f32 %v8515, %v8515
  %v8580 = vmul.f32 %v8516, %v8516
  %v8581 = vmul.f32 %v8517, %v8517
  %v8582 = vmul.f32 %v8518, %v8518
  %v8583 = vmul.f32 %v8519, %v8519
  %v8584 = vmul.f32 %v8520, %v8520
  %v8585 = vmul.f32 %v8521, %v8521
  %v8586 = vmul.f32 %v8522, %v8522
  %v8587 = vmul.f32 %v8523, %v8523
  %v8588 = vmul.f32 %v8524, %v8524
  %v8589 = vmul.f32 %v8525, %v8525
  %v8590 = vmul.f32 %v8526, %v8526
  %v8591 = vmul.f32 %v8527, %v8527
  %v8592 = vmul.f32 %v8528, %v8528
  %v8593 = vmul.f32 %v8529, %v8529
  %v8594 = vmul.f32 %v8530, %v8530
  %v8595 = vmul.f32 %v8531, %v8531
  %v8596 = vmul.f32 %v8532, %v8532
  %v8597 = vmul.f32 %v8533, %v8533
  %v8598 = vmul.f32 %v8534, %v8534
  %v8599 = vmul.f32 %v8535, %v8535
  %v8600 = vmul.f32 %v8536, %v8536
  %v8601 = vmul.f32 %v8537, %v8537
  %v8602 = vmul.f32 %v8538, %v8538
  %v8603 = vmul.f32 %v8539, %v8539
  %v8604 = vmul.f32 %v8540, %v8540
  %v8605 = vmul.f32 %v8541, %v8541
  %v8606 = vmul.f32 %v8542, %v8542
  %v8607 = vmul.f32 %v8543, %v8543
  %v8608 = vmul.f32 %v8544, %v8544
  %v8609 = vmul.f32 %v8545, %v8545
  %v8610 = vmul.f32 %v8546, %v8546
  %v8611 = vmul.f32 %v8547, %v8547
  %v8612 = vmul.f32 %v8548, %v8548
  %v8613 = vmul.f32 %v8549, %v8549
  %v8614 = vmul.f32 %v8550, %v8550
  %v8615 = vmul.f32 %v8551, %v8551
  %v8616 = vmul.f32 %v8552, %v8552
  %v8617 = vmul.f32 %v8553, %v8553
  %v8618 = vmul.f32 %v8554, %v8554
  %v8619 = vmul.f32 %v8555, %v8555
  %v8620 = vmul.f32 %v8556, %v8556
  %v8621 = vmul.f32 %v8557, %v8557
  %v8622 = vmul.f32 %v8558, %v8558
  %v8623 = vmul.f32 %v8559, %v8559
  %v8624 = vmul.f32 %v8560, %v8560
  %v8625 = vmul.f32 %v8561, %v8561
  %v8626 = vmul.f32 %v8562, %v8562
  %v8627 = vmul.f32 %v8563, %v8563
  %v8628 = vmul.f32 %v8564, %v8564
  %v8629 = vmul.f32 %v8565, %v8565
  %v8630 = vmul.f32 %v8566, %v8566
  %v8631 = vsel %vm1354, %v8567, 0.0
  %v8632 = vsel %vm1354, %v8568, 0.0
  %v8633 = vadd.f32 %v8631, %v8632
  %v8634 = vsel %vm1354, %v8569, 0.0
  %v8635 = vadd.f32 %v8633, %v8634
  %v8636 = vsel %vm1354, %v8570, 0.0
  %v8637 = vadd.f32 %v8635, %v8636
  %v8638 = vsel %vm1354, %v8571, 0.0
  %v8639 = vadd.f32 %v8637, %v8638
  %v8640 = vsel %vm1354, %v8572, 0.0
  %v8641 = vadd.f32 %v8639, %v8640
  %v8642 = vsel %vm1354, %v8573, 0.0
  %v8643 = vadd.f32 %v8641, %v8642
  %v8644 = vsel %vm1354, %v8574, 0.0
  %v8645 = vadd.f32 %v8643, %v8644
  %v8646 = vsel %vm1354, %v8575, 0.0
  %v8647 = vadd.f32 %v8645, %v8646
  %v8648 = vsel %vm1354, %v8576, 0.0
  %v8649 = vadd.f32 %v8647, %v8648
  %v8650 = vsel %vm1354, %v8577, 0.0
  %v8651 = vadd.f32 %v8649, %v8650
  %v8652 = vsel %vm1354, %v8578, 0.0
  %v8653 = vadd.f32 %v8651, %v8652
  %v8654 = vsel %vm1354, %v8579, 0.0
  %v8655 = vadd.f32 %v8653, %v8654
  %v8656 = vsel %vm1354, %v8580, 0.0
  %v8657 = vadd.f32 %v8655, %v8656
  %v8658 = vsel %vm1354, %v8581, 0.0
  %v8659 = vadd.f32 %v8657, %v8658
  %v8660 = vsel %vm1354, %v8582, 0.0
  %v8661 = vadd.f32 %v8659, %v8660
  %v8662 = vsel %vm1354, %v8583, 0.0
  %v8663 = vadd.f32 %v8661, %v8662
  %v8664 = vsel %vm1354, %v8584, 0.0
  %v8665 = vadd.f32 %v8663, %v8664
  %v8666 = vsel %vm1354, %v8585, 0.0
  %v8667 = vadd.f32 %v8665, %v8666
  %v8668 = vsel %vm1354, %v8586, 0.0
  %v8669 = vadd.f32 %v8667, %v8668
  %v8670 = vsel %vm1354, %v8587, 0.0
  %v8671 = vadd.f32 %v8669, %v8670
  %v8672 = vsel %vm1354, %v8588, 0.0
  %v8673 = vadd.f32 %v8671, %v8672
  %v8674 = vsel %vm1354, %v8589, 0.0
  %v8675 = vadd.f32 %v8673, %v8674
  %v8676 = vsel %vm1354, %v8590, 0.0
  %v8677 = vadd.f32 %v8675, %v8676
  %v8678 = vsel %vm1354, %v8591, 0.0
  %v8679 = vadd.f32 %v8677, %v8678
  %v8680 = vsel %vm1354, %v8592, 0.0
  %v8681 = vadd.f32 %v8679, %v8680
  %v8682 = vsel %vm1354, %v8593, 0.0
  %v8683 = vadd.f32 %v8681, %v8682
  %v8684 = vsel %vm1354, %v8594, 0.0
  %v8685 = vadd.f32 %v8683, %v8684
  %v8686 = vsel %vm1354, %v8595, 0.0
  %v8687 = vadd.f32 %v8685, %v8686
  %v8688 = vsel %vm1354, %v8596, 0.0
  %v8689 = vadd.f32 %v8687, %v8688
  %v8690 = vsel %vm1354, %v8597, 0.0
  %v8691 = vadd.f32 %v8689, %v8690
  %v8692 = vsel %vm1354, %v8598, 0.0
  %v8693 = vadd.f32 %v8691, %v8692
  %v8694 = vsel %vm1354, %v8599, 0.0
  %v8695 = vadd.f32 %v8693, %v8694
  %v8696 = vsel %vm1354, %v8600, 0.0
  %v8697 = vadd.f32 %v8695, %v8696
  %v8698 = vsel %vm1354, %v8601, 0.0
  %v8699 = vadd.f32 %v8697, %v8698
  %v8700 = vsel %vm1354, %v8602, 0.0
  %v8701 = vadd.f32 %v8699, %v8700
  %v8702 = vsel %vm1354, %v8603, 0.0
  %v8703 = vadd.f32 %v8701, %v8702
  %v8704 = vsel %vm1354, %v8604, 0.0
  %v8705 = vadd.f32 %v8703, %v8704
  %v8706 = vsel %vm1354, %v8605, 0.0
  %v8707 = vadd.f32 %v8705, %v8706
  %v8708 = vsel %vm1354, %v8606, 0.0
  %v8709 = vadd.f32 %v8707, %v8708
  %v8710 = vsel %vm1354, %v8607, 0.0
  %v8711 = vadd.f32 %v8709, %v8710
  %v8712 = vsel %vm1354, %v8608, 0.0
  %v8713 = vadd.f32 %v8711, %v8712
  %v8714 = vsel %vm1354, %v8609, 0.0
  %v8715 = vadd.f32 %v8713, %v8714
  %v8716 = vsel %vm1354, %v8610, 0.0
  %v8717 = vadd.f32 %v8715, %v8716
  %v8718 = vsel %vm1354, %v8611, 0.0
  %v8719 = vadd.f32 %v8717, %v8718
  %v8720 = vsel %vm1354, %v8612, 0.0
  %v8721 = vadd.f32 %v8719, %v8720
  %v8722 = vsel %vm1354, %v8613, 0.0
  %v8723 = vadd.f32 %v8721, %v8722
  %v8724 = vsel %vm1354, %v8614, 0.0
  %v8725 = vadd.f32 %v8723, %v8724
  %v8726 = vsel %vm1354, %v8615, 0.0
  %v8727 = vadd.f32 %v8725, %v8726
  %v8728 = vsel %vm1354, %v8616, 0.0
  %v8729 = vadd.f32 %v8727, %v8728
  %v8730 = vsel %vm1354, %v8617, 0.0
  %v8731 = vadd.f32 %v8729, %v8730
  %v8732 = vsel %vm1354, %v8618, 0.0
  %v8733 = vadd.f32 %v8731, %v8732
  %v8734 = vsel %vm1354, %v8619, 0.0
  %v8735 = vadd.f32 %v8733, %v8734
  %v8736 = vsel %vm1354, %v8620, 0.0
  %v8737 = vadd.f32 %v8735, %v8736
  %v8738 = vsel %vm1354, %v8621, 0.0
  %v8739 = vadd.f32 %v8737, %v8738
  %v8740 = vsel %vm1354, %v8622, 0.0
  %v8741 = vadd.f32 %v8739, %v8740
  %v8742 = vsel %vm1354, %v8623, 0.0
  %v8743 = vadd.f32 %v8741, %v8742
  %v8744 = vsel %vm1354, %v8624, 0.0
  %v8745 = vadd.f32 %v8743, %v8744
  %v8746 = vsel %vm1354, %v8625, 0.0
  %v8747 = vadd.f32 %v8745, %v8746
  %v8748 = vsel %vm1354, %v8626, 0.0
  %v8749 = vadd.f32 %v8747, %v8748
  %v8750 = vsel %vm1354, %v8627, 0.0
  %v8751 = vadd.f32 %v8749, %v8750
  %v8752 = vsel %vm1354, %v8628, 0.0
  %v8753 = vadd.f32 %v8751, %v8752
  %v8754 = vsel %vm1354, %v8629, 0.0
  %v8755 = vadd.f32 %v8753, %v8754
  %v8756 = vsel %vm1354, %v8630, 0.0
  %v8757 = vadd.f32 %v8755, %v8756
  %v8758 = vrot.slane %v8757, 4
  %v8759 = vadd.f32 %v8757, %v8758
  %v8760 = vrot.slane %v8759, 2
  %v8761 = vadd.f32 %v8759, %v8760
  %v8762 = vrot.slane %v8761, 1
  %v8763 = vadd.f32 %v8761, %v8762
  %v8764 = vmul.f32 %v8763, 0.001953125
  %v8765 = vadd.f32 %v8764, 1e-05
  %v8766 = vrsqrt.pop %v8765
  %v8767 = vmul.f32 %v8367, %v8766
  %v8769 = vlaneseq
  %v8770 = vshrl.u32 %v8769, 7
  %v8771 = vsub.s32 0, %v8770
  %v8772 = vrot.slane %v8767, %v8771
  %v8774 = vmul.f32 %v8503, %v8772
  %v8775 = vmul.f32 %v8504, %v8772
  %v8776 = vmul.f32 %v8505, %v8772
  %v8777 = vmul.f32 %v8506, %v8772
  %v8778 = vmul.f32 %v8507, %v8772
  %v8779 = vmul.f32 %v8508, %v8772
  %v8780 = vmul.f32 %v8509, %v8772
  %v8781 = vmul.f32 %v8510, %v8772
  %v8782 = vmul.f32 %v8511, %v8772
  %v8783 = vmul.f32 %v8512, %v8772
  %v8784 = vmul.f32 %v8513, %v8772
  %v8785 = vmul.f32 %v8514, %v8772
  %v8786 = vmul.f32 %v8515, %v8772
  %v8787 = vmul.f32 %v8516, %v8772
  %v8788 = vmul.f32 %v8517, %v8772
  %v8789 = vmul.f32 %v8518, %v8772
  %v8790 = vmul.f32 %v8519, %v8772
  %v8791 = vmul.f32 %v8520, %v8772
  %v8792 = vmul.f32 %v8521, %v8772
  %v8793 = vmul.f32 %v8522, %v8772
  %v8794 = vmul.f32 %v8523, %v8772
  %v8795 = vmul.f32 %v8524, %v8772
  %v8796 = vmul.f32 %v8525, %v8772
  %v8797 = vmul.f32 %v8526, %v8772
  %v8798 = vmul.f32 %v8527, %v8772
  %v8799 = vmul.f32 %v8528, %v8772
  %v8800 = vmul.f32 %v8529, %v8772
  %v8801 = vmul.f32 %v8530, %v8772
  %v8802 = vmul.f32 %v8531, %v8772
  %v8803 = vmul.f32 %v8532, %v8772
  %v8804 = vmul.f32 %v8533, %v8772
  %v8805 = vmul.f32 %v8534, %v8772
  %v8806 = vmul.f32 %v8535, %v8772
  %v8807 = vmul.f32 %v8536, %v8772
  %v8808 = vmul.f32 %v8537, %v8772
  %v8809 = vmul.f32 %v8538, %v8772
  %v8810 = vmul.f32 %v8539, %v8772
  %v8811 = vmul.f32 %v8540, %v8772
  %v8812 = vmul.f32 %v8541, %v8772
  %v8813 = vmul.f32 %v8542, %v8772
  %v8814 = vmul.f32 %v8543, %v8772
  %v8815 = vmul.f32 %v8544, %v8772
  %v8816 = vmul.f32 %v8545, %v8772
  %v8817 = vmul.f32 %v8546, %v8772
  %v8818 = vmul.f32 %v8547, %v8772
  %v8819 = vmul.f32 %v8548, %v8772
  %v8820 = vmul.f32 %v8549, %v8772
  %v8821 = vmul.f32 %v8550, %v8772
  %v8822 = vmul.f32 %v8551, %v8772
  %v8823 = vmul.f32 %v8552, %v8772
  %v8824 = vmul.f32 %v8553, %v8772
  %v8825 = vmul.f32 %v8554, %v8772
  %v8826 = vmul.f32 %v8555, %v8772
  %v8827 = vmul.f32 %v8556, %v8772
  %v8828 = vmul.f32 %v8557, %v8772
  %v8829 = vmul.f32 %v8558, %v8772
  %v8830 = vmul.f32 %v8559, %v8772
  %v8831 = vmul.f32 %v8560, %v8772
  %v8832 = vmul.f32 %v8561, %v8772
  %v8833 = vmul.f32 %v8562, %v8772
  %v8834 = vmul.f32 %v8563, %v8772
  %v8835 = vmul.f32 %v8564, %v8772
  %v8836 = vmul.f32 %v8565, %v8772
  %v8837 = vmul.f32 %v8566, %v8772
  %v8839 = vlaneseq
  %v8840 = vshrl.u32 %v8839, 7
  %v8841 = vsub.s32 0, %v8840
  %v8842 = vrot.slane %v8368, %v8841
  %v8844 = vadd.f32 %v8774, %v8842
  %v8845 = vadd.f32 %v8775, %v8842
  %v8846 = vadd.f32 %v8776, %v8842
  %v8847 = vadd.f32 %v8777, %v8842
  %v8848 = vadd.f32 %v8778, %v8842
  %v8849 = vadd.f32 %v8779, %v8842
  %v8850 = vadd.f32 %v8780, %v8842
  %v8851 = vadd.f32 %v8781, %v8842
  %v8852 = vadd.f32 %v8782, %v8842
  %v8853 = vadd.f32 %v8783, %v8842
  %v8854 = vadd.f32 %v8784, %v8842
  %v8855 = vadd.f32 %v8785, %v8842
  %v8856 = vadd.f32 %v8786, %v8842
  %v8857 = vadd.f32 %v8787, %v8842
  %v8858 = vadd.f32 %v8788, %v8842
  %v8859 = vadd.f32 %v8789, %v8842
  %v8860 = vadd.f32 %v8790, %v8842
  %v8861 = vadd.f32 %v8791, %v8842
  %v8862 = vadd.f32 %v8792, %v8842
  %v8863 = vadd.f32 %v8793, %v8842
  %v8864 = vadd.f32 %v8794, %v8842
  %v8865 = vadd.f32 %v8795, %v8842
  %v8866 = vadd.f32 %v8796, %v8842
  %v8867 = vadd.f32 %v8797, %v8842
  %v8868 = vadd.f32 %v8798, %v8842
  %v8869 = vadd.f32 %v8799, %v8842
  %v8870 = vadd.f32 %v8800, %v8842
  %v8871 = vadd.f32 %v8801, %v8842
  %v8872 = vadd.f32 %v8802, %v8842
  %v8873 = vadd.f32 %v8803, %v8842
  %v8874 = vadd.f32 %v8804, %v8842
  %v8875 = vadd.f32 %v8805, %v8842
  %v8876 = vadd.f32 %v8806, %v8842
  %v8877 = vadd.f32 %v8807, %v8842
  %v8878 = vadd.f32 %v8808, %v8842
  %v8879 = vadd.f32 %v8809, %v8842
  %v8880 = vadd.f32 %v8810, %v8842
  %v8881 = vadd.f32 %v8811, %v8842
  %v8882 = vadd.f32 %v8812, %v8842
  %v8883 = vadd.f32 %v8813, %v8842
  %v8884 = vadd.f32 %v8814, %v8842
  %v8885 = vadd.f32 %v8815, %v8842
  %v8886 = vadd.f32 %v8816, %v8842
  %v8887 = vadd.f32 %v8817, %v8842
  %v8888 = vadd.f32 %v8818, %v8842
  %v8889 = vadd.f32 %v8819, %v8842
  %v8890 = vadd.f32 %v8820, %v8842
  %v8891 = vadd.f32 %v8821, %v8842
  %v8892 = vadd.f32 %v8822, %v8842
  %v8893 = vadd.f32 %v8823, %v8842
  %v8894 = vadd.f32 %v8824, %v8842
  %v8895 = vadd.f32 %v8825, %v8842
  %v8896 = vadd.f32 %v8826, %v8842
  %v8897 = vadd.f32 %v8827, %v8842
  %v8898 = vadd.f32 %v8828, %v8842
  %v8899 = vadd.f32 %v8829, %v8842
  %v8900 = vadd.f32 %v8830, %v8842
  %v8901 = vadd.f32 %v8831, %v8842
  %v8902 = vadd.f32 %v8832, %v8842
  %v8903 = vadd.f32 %v8833, %v8842
  %v8904 = vadd.f32 %v8834, %v8842
  %v8905 = vadd.f32 %v8835, %v8842
  %v8906 = vadd.f32 %v8836, %v8842
  %v8907 = vadd.f32 %v8837, %v8842
  %v8908 = vmax.f32 %v8844, 0.0
  %v8909 = vmax.f32 %v8845, 0.0
  %v8910 = vmax.f32 %v8846, 0.0
  %v8911 = vmax.f32 %v8847, 0.0
  %v8912 = vmax.f32 %v8848, 0.0
  %v8913 = vmax.f32 %v8849, 0.0
  %v8914 = vmax.f32 %v8850, 0.0
  %v8915 = vmax.f32 %v8851, 0.0
  %v8916 = vmax.f32 %v8852, 0.0
  %v8917 = vmax.f32 %v8853, 0.0
  %v8918 = vmax.f32 %v8854, 0.0
  %v8919 = vmax.f32 %v8855, 0.0
  %v8920 = vmax.f32 %v8856, 0.0
  %v8921 = vmax.f32 %v8857, 0.0
  %v8922 = vmax.f32 %v8858, 0.0
  %v8923 = vmax.f32 %v8859, 0.0
  %v8924 = vmax.f32 %v8860, 0.0
  %v8925 = vmax.f32 %v8861, 0.0
  %v8926 = vmax.f32 %v8862, 0.0
  %v8927 = vmax.f32 %v8863, 0.0
  %v8928 = vmax.f32 %v8864, 0.0
  %v8929 = vmax.f32 %v8865, 0.0
  %v8930 = vmax.f32 %v8866, 0.0
  %v8931 = vmax.f32 %v8867, 0.0
  %v8932 = vmax.f32 %v8868, 0.0
  %v8933 = vmax.f32 %v8869, 0.0
  %v8934 = vmax.f32 %v8870, 0.0
  %v8935 = vmax.f32 %v8871, 0.0
  %v8936 = vmax.f32 %v8872, 0.0
  %v8937 = vmax.f32 %v8873, 0.0
  %v8938 = vmax.f32 %v8874, 0.0
  %v8939 = vmax.f32 %v8875, 0.0
  %v8940 = vmax.f32 %v8876, 0.0
  %v8941 = vmax.f32 %v8877, 0.0
  %v8942 = vmax.f32 %v8878, 0.0
  %v8943 = vmax.f32 %v8879, 0.0
  %v8944 = vmax.f32 %v8880, 0.0
  %v8945 = vmax.f32 %v8881, 0.0
  %v8946 = vmax.f32 %v8882, 0.0
  %v8947 = vmax.f32 %v8883, 0.0
  %v8948 = vmax.f32 %v8884, 0.0
  %v8949 = vmax.f32 %v8885, 0.0
  %v8950 = vmax.f32 %v8886, 0.0
  %v8951 = vmax.f32 %v8887, 0.0
  %v8952 = vmax.f32 %v8888, 0.0
  %v8953 = vmax.f32 %v8889, 0.0
  %v8954 = vmax.f32 %v8890, 0.0
  %v8955 = vmax.f32 %v8891, 0.0
  %v8956 = vmax.f32 %v8892, 0.0
  %v8957 = vmax.f32 %v8893, 0.0
  %v8958 = vmax.f32 %v8894, 0.0
  %v8959 = vmax.f32 %v8895, 0.0
  %v8960 = vmax.f32 %v8896, 0.0
  %v8961 = vmax.f32 %v8897, 0.0
  %v8962 = vmax.f32 %v8898, 0.0
  %v8963 = vmax.f32 %v8899, 0.0
  %v8964 = vmax.f32 %v8900, 0.0
  %v8965 = vmax.f32 %v8901, 0.0
  %v8966 = vmax.f32 %v8902, 0.0
  %v8967 = vmax.f32 %v8903, 0.0
  %v8968 = vmax.f32 %v8904, 0.0
  %v8969 = vmax.f32 %v8905, 0.0
  %v8970 = vmax.f32 %v8906, 0.0
  %v8971 = vmax.f32 %v8907, 0.0
  %8972 = vst.msk [vmem:[%s7] sm:$0xff] %vm1354, %v8908
  %8973 = vst.msk [vmem:[%s7 + $0x8] sm:$0xff] %vm1354, %v8909
  %8974 = vst.msk [vmem:[%s7 + $0x10] sm:$0xff] %vm1354, %v8910
  %8975 = vst.msk [vmem:[%s7 + $0x18] sm:$0xff] %vm1354, %v8911
  %8976 = vst.msk [vmem:[%s7 + $0x20] sm:$0xff] %vm1354, %v8912
  %8977 = vst.msk [vmem:[%s7 + $0x28] sm:$0xff] %vm1354, %v8913
  %8978 = vst.msk [vmem:[%s7 + $0x30] sm:$0xff] %vm1354, %v8914
  %8979 = vst.msk [vmem:[%s7 + $0x38] sm:$0xff] %vm1354, %v8915
  %8980 = vst.msk [vmem:[%s7 + $0x40] sm:$0xff] %vm1354, %v8916
  %8981 = vst.msk [vmem:[%s7 + $0x48] sm:$0xff] %vm1354, %v8917
  %8982 = vst.msk [vmem:[%s7 + $0x50] sm:$0xff] %vm1354, %v8918
  %8983 = vst.msk [vmem:[%s7 + $0x58] sm:$0xff] %vm1354, %v8919
  %8984 = vst.msk [vmem:[%s7 + $0x60] sm:$0xff] %vm1354, %v8920
  %8985 = vst.msk [vmem:[%s7 + $0x68] sm:$0xff] %vm1354, %v8921
  %8986 = vst.msk [vmem:[%s7 + $0x70] sm:$0xff] %vm1354, %v8922
  %8987 = vst.msk [vmem:[%s7 + $0x78] sm:$0xff] %vm1354, %v8923
  %8988 = vst.msk [vmem:[%s7 + $0x80] sm:$0xff] %vm1354, %v8924
  %8989 = vst.msk [vmem:[%s7 + $0x88] sm:$0xff] %vm1354, %v8925
  %8990 = vst.msk [vmem:[%s7 + $0x90] sm:$0xff] %vm1354, %v8926
  %8991 = vst.msk [vmem:[%s7 + $0x98] sm:$0xff] %vm1354, %v8927
  %8992 = vst.msk [vmem:[%s7 + $0xa0] sm:$0xff] %vm1354, %v8928
  %8993 = vst.msk [vmem:[%s7 + $0xa8] sm:$0xff] %vm1354, %v8929
  %8994 = vst.msk [vmem:[%s7 + $0xb0] sm:$0xff] %vm1354, %v8930
  %8995 = vst.msk [vmem:[%s7 + $0xb8] sm:$0xff] %vm1354, %v8931
  %8996 = vst.msk [vmem:[%s7 + $0xc0] sm:$0xff] %vm1354, %v8932
  %8997 = vst.msk [vmem:[%s7 + $0xc8] sm:$0xff] %vm1354, %v8933
  %8998 = vst.msk [vmem:[%s7 + $0xd0] sm:$0xff] %vm1354, %v8934
  %8999 = vst.msk [vmem:[%s7 + $0xd8] sm:$0xff] %vm1354, %v8935
  %9000 = vst.msk [vmem:[%s7 + $0xe0] sm:$0xff] %vm1354, %v8936
  %9001 = vst.msk [vmem:[%s7 + $0xe8] sm:$0xff] %vm1354, %v8937
  %9002 = vst.msk [vmem:[%s7 + $0xf0] sm:$0xff] %vm1354, %v8938
  %9003 = vst.msk [vmem:[%s7 + $0xf8] sm:$0xff] %vm1354, %v8939
  %9004 = vst.msk [vmem:[%s7 + $0x100] sm:$0xff] %vm1354, %v8940
  %9005 = vst.msk [vmem:[%s7 + $0x108] sm:$0xff] %vm1354, %v8941
  %9006 = vst.msk [vmem:[%s7 + $0x110] sm:$0xff] %vm1354, %v8942
  %9007 = vst.msk [vmem:[%s7 + $0x118] sm:$0xff] %vm1354, %v8943
  %9008 = vst.msk [vmem:[%s7 + $0x120] sm:$0xff] %vm1354, %v8944
  %9009 = vst.msk [vmem:[%s7 + $0x128] sm:$0xff] %vm1354, %v8945
  %9010 = vst.msk [vmem:[%s7 + $0x130] sm:$0xff] %vm1354, %v8946
  %9011 = vst.msk [vmem:[%s7 + $0x138] sm:$0xff] %vm1354, %v8947
  %9012 = vst.msk [vmem:[%s7 + $0x140] sm:$0xff] %vm1354, %v8948
  %9013 = vst.msk [vmem:[%s7 + $0x148] sm:$0xff] %vm1354, %v8949
  %9014 = vst.msk [vmem:[%s7 + $0x150] sm:$0xff] %vm1354, %v8950
  %9015 = vst.msk [vmem:[%s7 + $0x158] sm:$0xff] %vm1354, %v8951
  %9016 = vst.msk [vmem:[%s7 + $0x160] sm:$0xff] %vm1354, %v8952
  %9017 = vst.msk [vmem:[%s7 + $0x168] sm:$0xff] %vm1354, %v8953
  %9018 = vst.msk [vmem:[%s7 + $0x170] sm:$0xff] %vm1354, %v8954
  %9019 = vst.msk [vmem:[%s7 + $0x178] sm:$0xff] %vm1354, %v8955
  %9020 = vst.msk [vmem:[%s7 + $0x180] sm:$0xff] %vm1354, %v8956
  %9021 = vst.msk [vmem:[%s7 + $0x188] sm:$0xff] %vm1354, %v8957
  %9022 = vst.msk [vmem:[%s7 + $0x190] sm:$0xff] %vm1354, %v8958
  %9023 = vst.msk [vmem:[%s7 + $0x198] sm:$0xff] %vm1354, %v8959
  %9024 = vst.msk [vmem:[%s7 + $0x1a0] sm:$0xff] %vm1354, %v8960
  %9025 = vst.msk [vmem:[%s7 + $0x1a8] sm:$0xff] %vm1354, %v8961
  %9026 = vst.msk [vmem:[%s7 + $0x1b0] sm:$0xff] %vm1354, %v8962
  %9027 = vst.msk [vmem:[%s7 + $0x1b8] sm:$0xff] %vm1354, %v8963
  %9028 = vst.msk [vmem:[%s7 + $0x1c0] sm:$0xff] %vm1354, %v8964
  %9029 = vst.msk [vmem:[%s7 + $0x1c8] sm:$0xff] %vm1354, %v8965
  %9030 = vst.msk [vmem:[%s7 + $0x1d0] sm:$0xff] %vm1354, %v8966
  %9031 = vst.msk [vmem:[%s7 + $0x1d8] sm:$0xff] %vm1354, %v8967
  %9032 = vst.msk [vmem:[%s7 + $0x1e0] sm:$0xff] %vm1354, %v8968
  %9033 = vst.msk [vmem:[%s7 + $0x1e8] sm:$0xff] %vm1354, %v8969
  %9034 = vst.msk [vmem:[%s7 + $0x1f0] sm:$0xff] %vm1354, %v8970
  %9035 = vst.msk [vmem:[%s7 + $0x1f8] sm:$0xff] %vm1354, %v8971
  // Predicated region
  $region30: #{tpu_custom_call.1} parent=0 // pred_check
    _
  $region31: #{tpu_custom_call.1} parent=0 // pred_check_branch
    %9037 = sbr.rel (0) target = $region33
  $region32: #{tpu_custom_call.1} parent=0 // pred_region
    _
  $region33: #{tpu_custom_call.1} parent=0 // pred_fallthru
    _
  // Predicated region
  $region34: #{tpu_custom_call.1} parent=0 // pred_check
    _
  $region35: #{tpu_custom_call.1} parent=0 // pred_check_branch
    %9039 = sbr.rel (0) target = $region37
  $region36: #{tpu_custom_call.1} parent=0 // pred_region
    _
  $region37: #{tpu_custom_call.1} parent=0 // pred_fallthru
    _

</llo_original>
